<compile_context>
chip_gen: v7x
topology: tpu7x:2x2x1
jax: 0.10.0
libtpu: 0.0.40
codegen_flags: <defaults>
</compile_context>

<pallas_src>
import functools

import numpy as np
import jax
import jax.numpy as jnp
from jax.experimental import pallas as pl
from jax.experimental.pallas import tpu as pltpu

CP = 128          # lane-padded channel width used throughout the fused kernel
FEAT_CH = 64      # valid channels of the final feature map (num_features here)

# mats_ref slot indices (stacked (CP, CP) weight matrices)
(_M_STEM, _M_B1_SE1, _M_B1_SE2, _M_B1_PW,
 _M_B2_EXP, _M_B2_SE1, _M_B2_SE2, _M_B2_PW, _M_HEAD) = range(9)

# vec_ref row indices: each entry is the first row of a (scale, bias) or
# (se_bias1, se_bias2) pair.
(_V_BN1, _V_B1_DW, _V_B1_SE, _V_B1_PW,
 _V_B2_EXP, _V_B2_DW, _V_B2_SE, _V_B2_PW, _V_BN2) = range(0, 18, 2)


# --------------------------------------------------------------------------
# Fused forward kernel (single grid step, everything VMEM-resident)
# --------------------------------------------------------------------------
def _fused_kernel(patch_ref, sel_ref, mats_ref, dw_ref, vec_ref, out_ref):
    f32 = jnp.float32

    def vec(row):                       # (1, CP) broadcast row (scale/bias)
        return vec_ref[row:row + 1, :]

    def mm(a, widx):                    # (M, CP) @ (CP, CP) on the MXU
        return jnp.dot(a, mats_ref[widx], preferred_element_type=f32)

    def bn(y, vrow, act):               # folded-BN affine (+ optional ReLU)
        y = y * vec(vrow) + vec(vrow + 1)
        return jnp.maximum(y, 0.0) if act else y

    def dwconv3x3(x, block, vrow):
        # Depthwise 3x3 (stride 1, pad 1) as 9 row-selection matmuls.  The tap
        # shift matrices already encode the zero padding; the per-channel tap
        # weight is a lane-dense broadcast multiply.  BN + ReLU fused.
        taps = dw_ref[block]            # (9, CP)
        acc = jnp.zeros_like(x)
        for t in range(9):
            shifted = jnp.dot(sel_ref[t], x, preferred_element_type=f32)
            acc = acc + shifted * taps[t:t + 1, :]
        return bn(acc, vrow, act=True)

    def squeeze_excite(x, w1, w2, vrow):
        # sel_ref[9] is the per-image average-pool + broadcast matrix, so the
        # pooled vector arrives already replicated to every row of its image;
        # the two FCs then run as full-width (M,CP)x(CP,CP) matmuls.
        pooled = jnp.dot(sel_ref[9], x, preferred_element_type=f32)
        h = jnp.maximum(mm(pooled, w1) + vec(vrow), 0.0)
        g = jax.nn.sigmoid(mm(h, w2) + vec(vrow + 1))
        return x * g

    # stem: 3x3/s2 conv (pre-im2col'd patches) + bn1 + ReLU
    x = bn(mm(patch_ref[...], _M_STEM), _V_BN1, act=True)

    # block 1: depthwise-separable (dw3x3 -> SE -> 1x1 project) + residual
    shortcut = x
    x = dwconv3x3(x, 0, _V_B1_DW)
    x = squeeze_excite(x, _M_B1_SE1, _M_B1_SE2, _V_B1_SE)
    x = bn(mm(x, _M_B1_PW), _V_B1_PW, act=False) + shortcut

    # block 2: inverted residual (1x1 expand -> dw3x3 -> SE -> 1x1 project)
    x = bn(mm(x, _M_B2_EXP), _V_B2_EXP, act=True)
    x = dwconv3x3(x, 1, _V_B2_DW)
    x = squeeze_excite(x, _M_B2_SE1, _M_B2_SE2, _V_B2_SE)
    x = bn(mm(x, _M_B2_PW), _V_B2_PW, act=False)

    # conv_head (1x1) + bn2 + ReLU
    x = bn(mm(x, _M_HEAD), _V_BN2, act=True)

    out_ref[...] = x                    # lane-dense (M, 128) store


def _fused_forward(patches, sel, mats, dw, vecs):
    M = patches.shape[0]
    return pl.pallas_call(
        _fused_kernel,
        out_shape=jax.ShapeDtypeStruct((M, CP), jnp.float32),
        grid=(1,),
        in_specs=[
            pl.BlockSpec(patches.shape, lambda i: (0, 0)),
            pl.BlockSpec(sel.shape, lambda i: (0, 0, 0)),
            pl.BlockSpec(mats.shape, lambda i: (0, 0, 0)),
            pl.BlockSpec(dw.shape, lambda i: (0, 0, 0)),
            pl.BlockSpec(vecs.shape, lambda i: (0, 0)),
        ],
        out_specs=pl.BlockSpec((M, CP), lambda i: (0, 0)),
        compiler_params=pltpu.CompilerParams(dimension_semantics=("arbitrary",)),
    )(patches, sel, mats, dw, vecs)


# --------------------------------------------------------------------------
# Host-side packing helpers (trace-time constants / cheap pads)
# --------------------------------------------------------------------------
def _pad_to(a, shape):
    return jnp.pad(a, [(0, t - s) for s, t in zip(a.shape, shape)])


def _selection_matrices(N, H, W):
    """sel[0..8]: dw3x3 tap shift matrices (zero-pad semantics built in).
    sel[9]: per-image average-pool + broadcast matrix."""
    M = N * H * W
    sel = np.zeros((10, M, M), np.float32)
    r = np.arange(M)
    n, h, w = r // (H * W), (r // W) % H, r % W
    for kh in range(3):
        for kw in range(3):
            dh, dw = kh - 1, kw - 1
            hh, ww = h + dh, w + dw
            valid = (hh >= 0) & (hh < H) & (ww >= 0) & (ww < W)
            src = (n * H + hh) * W + ww
            sel[kh * 3 + kw, r[valid], src[valid]] = 1.0
    sel[9] = (n[:, None] == n[None, :]).astype(np.float32) / float(H * W)
    return sel


def pack_params(params):
    """Zero-pad all weights/affines to 128 lanes and stack them into the few
    arrays the fused kernel consumes."""
    def padded_mat(w):
        return _pad_to(w.astype(jnp.float32), (CP, CP))

    mats = jnp.stack([
        padded_mat(params["stem_w"].reshape(-1, params["stem_w"].shape[-1])),  # (27,16)
        padded_mat(params["b1_se_w1"]), padded_mat(params["b1_se_w2"]),
        padded_mat(params["b1_pw_w"]),
        padded_mat(params["b2_exp_w"]),
        padded_mat(params["b2_se_w1"]), padded_mat(params["b2_se_w2"]),
        padded_mat(params["b2_pw_w"]),
        padded_mat(params["head_w"]),
    ])                                                             # (9, CP, CP)

    dw = jnp.stack([
        _pad_to(params["b1_dw_w"].reshape(9, -1).astype(jnp.float32), (9, CP)),
        _pad_to(params["b2_dw_w"].reshape(9, -1).astype(jnp.float32), (9, CP)),
    ])                                                             # (2, 9, CP)

    vec_list = [
        params["bn1_s"], params["bn1_b"],
        params["b1_dw_bn_s"], params["b1_dw_bn_b"],
        params["b1_se_b1"], params["b1_se_b2"],
        params["b1_pw_bn_s"], params["b1_pw_bn_b"],
        params["b2_exp_bn_s"], params["b2_exp_bn_b"],
        params["b2_dw_bn_s"], params["b2_dw_bn_b"],
        params["b2_se_b1"], params["b2_se_b2"],
        params["b2_pw_bn_s"], params["b2_pw_bn_b"],
        params["bn2_s"], params["bn2_b"],
    ]
    vecs = jnp.stack([_pad_to(v.astype(jnp.float32), (CP,)) for v in vec_list])  # (18, CP)
    return mats, dw, vecs


def im2col_3x3_s2(x):
    """3x3 stride-2 conv patches, pad=1 (timm '' pad_type). x: NHWC."""
    N, H, W, C = x.shape
    OH, OW = H // 2, W // 2
    xp = jnp.pad(x, ((0, 0), (1, 1), (1, 1), (0, 0)))
    cols = [xp[:, kh::2, kw::2, :][:, :OH, :OW, :]
            for kh in range(3) for kw in range(3)]
    patches = jnp.concatenate(cols, axis=-1)                       # (N, OH, OW, 9C)
    return patches.reshape(N * OH * OW, 9 * C), (N, OH, OW)


# --------------------------------------------------------------------------
# Public forward (Pallas) and plain-JAX reference
# --------------------------------------------------------------------------
def efficientnet_forward(params, x_nchw):
    """EfficientNet.forward with defaults (desired_output_size=14 -> features)."""
    x = jnp.transpose(x_nchw, (0, 2, 3, 1)).astype(jnp.float32)    # NCHW -> NHWC
    patches, (N, OH, OW) = im2col_3x3_s2(x)                        # (M, 27)
    M = N * OH * OW
    patches = _pad_to(patches, (M, CP))                            # lane-dense K
    sel = jnp.asarray(_selection_matrices(N, OH, OW))              # constants
    mats, dw, vecs = pack_params(params)
    out = _fused_forward(patches, sel, mats, dw, vecs)             # (M, CP)
    feat = out[:, :FEAT_CH].reshape(N, OH, OW, FEAT_CH)
    # desired_output_size == 14 (default) -> forward_head skipped.
    # TODO(synk): global_pool/dropout/classifier path (desired_output_size != 14)
    # not exercised here.
    return jnp.transpose(feat, (0, 3, 1, 2))                       # back to NCHW


def _ref_matmul(a, b, scale, bias, act):
    y = jnp.dot(a, b) * scale.reshape(1, -1) + bias.reshape(1, -1)
    return jnp.maximum(y, 0.0) if act else y


def _ref_pw(x, w, scale, bias, act):
    N, H, W, C = x.shape
    y = _ref_matmul(x.reshape(-1, C), w, scale, bias, act)
    return y.reshape(N, H, W, -1)


def _ref_dwconv(x, w, scale, bias):
    N, H, W, C = x.shape
    xp = jnp.pad(x, ((0, 0), (1, 1), (1, 1), (0, 0)))
    acc = jnp.zeros_like(x)
    for kh in range(3):
        for kw in range(3):
            acc = acc + xp[:, kh:kh + H, kw:kw + W, :] * w[kh, kw]
    return jnp.maximum(acc * scale.reshape(1, 1, 1, C) + bias.reshape(1, 1, 1, C), 0.0)


def _ref_se(x, w1, b1, w2, b2):
    pooled = jnp.mean(x, axis=(1, 2))
    h = jnp.maximum(pooled @ w1 + b1, 0.0)
    g = jax.nn.sigmoid(h @ w2 + b2)
    return x * g[:, None, None, :]


def efficientnet_forward_ref(params, x_nchw):
    x = jnp.transpose(x_nchw, (0, 2, 3, 1)).astype(jnp.float32)
    a, (N, OH, OW) = im2col_3x3_s2(x)
    stem_w = params["stem_w"].reshape(-1, params["stem_w"].shape[-1])
    x = _ref_matmul(a, stem_w, params["bn1_s"], params["bn1_b"], act=True)
    x = x.reshape(N, OH, OW, -1)
    shortcut = x
    x = _ref_dwconv(x, params["b1_dw_w"], params["b1_dw_bn_s"], params["b1_dw_bn_b"])
    x = _ref_se(x, params["b1_se_w1"], params["b1_se_b1"],
                params["b1_se_w2"], params["b1_se_b2"])
    x = _ref_pw(x, params["b1_pw_w"], params["b1_pw_bn_s"], params["b1_pw_bn_b"],
                act=False) + shortcut
    x = _ref_pw(x, params["b2_exp_w"], params["b2_exp_bn_s"], params["b2_exp_bn_b"], act=True)
    x = _ref_dwconv(x, params["b2_dw_w"], params["b2_dw_bn_s"], params["b2_dw_bn_b"])
    x = _ref_se(x, params["b2_se_w1"], params["b2_se_b1"],
                params["b2_se_w2"], params["b2_se_b2"])
    x = _ref_pw(x, params["b2_pw_w"], params["b2_pw_bn_s"], params["b2_pw_bn_b"], act=False)
    x = _ref_pw(x, params["head_w"], params["bn2_s"], params["bn2_b"], act=True)
    return jnp.transpose(x, (0, 3, 1, 2))


# --------------------------------------------------------------------------
# Parameter init (BN folded to affine, inference semantics)
# --------------------------------------------------------------------------
def init_params(key):
    keys = iter(jax.random.split(key, 40))

    def nrm(shape, s=0.1):
        return s * jax.random.normal(next(keys), shape, dtype=jnp.float32)

    C_in, stem, c1, exp, c2, feat = 3, 16, 16, 64, 24, FEAT_CH
    p = {}
    # stem conv 3x3 s2 + folded BN (scale/bias)
    p["stem_w"] = nrm((3, 3, C_in, stem))
    p["bn1_s"] = 1.0 + nrm((stem,))
    p["bn1_b"] = nrm((stem,))
    # block 1: depthwise-separable 16->16, SE, residual
    p["b1_dw_w"] = nrm((3, 3, stem))
    p["b1_dw_bn_s"] = 1.0 + nrm((stem,))
    p["b1_dw_bn_b"] = nrm((stem,))
    se1 = max(4, stem // 4)
    p["b1_se_w1"] = nrm((stem, se1)); p["b1_se_b1"] = nrm((se1,))
    p["b1_se_w2"] = nrm((se1, stem)); p["b1_se_b2"] = nrm((stem,))
    p["b1_pw_w"] = nrm((stem, c1))
    p["b1_pw_bn_s"] = 1.0 + nrm((c1,))
    p["b1_pw_bn_b"] = nrm((c1,))
    # block 2: inverted residual 16 -> (x4 expand) 64 -> 24, SE
    p["b2_exp_w"] = nrm((c1, exp))
    p["b2_exp_bn_s"] = 1.0 + nrm((exp,))
    p["b2_exp_bn_b"] = nrm((exp,))
    p["b2_dw_w"] = nrm((3, 3, exp))
    p["b2_dw_bn_s"] = 1.0 + nrm((exp,))
    p["b2_dw_bn_b"] = nrm((exp,))
    se2 = max(4, c1 // 4)
    p["b2_se_w1"] = nrm((exp, se2)); p["b2_se_b1"] = nrm((se2,))
    p["b2_se_w2"] = nrm((se2, exp)); p["b2_se_b2"] = nrm((exp,))
    p["b2_pw_w"] = nrm((exp, c2))
    p["b2_pw_bn_s"] = 1.0 + nrm((c2,))
    p["b2_pw_bn_b"] = nrm((c2,))
    # conv_head 1x1 24 -> num_features(=64 here) + bn2
    p["head_w"] = nrm((c2, feat))
    p["bn2_s"] = 1.0 + nrm((feat,))
    p["bn2_b"] = nrm((feat,))
    return p


if __name__ == "__main__":
    key = jax.random.PRNGKey(0)
    pkey, xkey = jax.random.split(key)
    params = init_params(pkey)
    x = jax.random.normal(xkey, (2, 3, 16, 16), dtype=jnp.float32)   # NCHW input

    fwd = jax.jit(efficientnet_forward)
    out = jax.block_until_ready(fwd(params, x))

    ref = efficientnet_forward_ref(params, x)
    err = float(jnp.max(jnp.abs(out - ref)))

    assert out.shape == (2, FEAT_CH, 8, 8), out.shape
    assert err < 1e-2, f"max abs error {err}"
    print("KERNEL_OK")
</pallas_src>

<mosaic_0001>
module attributes {stable_mosaic.version = 11 : i64} {
  func.func @_fused_kernel(%arg0: i32, %arg1: memref<128x128xf32, #tpu.memory_space<vmem>>, %arg2: memref<10x128x128xf32, #tpu.memory_space<vmem>>, %arg3: memref<9x128x128xf32, #tpu.memory_space<vmem>>, %arg4: memref<2x9x128xf32, #tpu.memory_space<vmem>>, %arg5: memref<18x128xf32, #tpu.memory_space<vmem>>, %arg6: memref<128x128xf32, #tpu.memory_space<vmem>>) attributes {dimension_semantics = [#tpu.dimension_semantics<arbitrary>], iteration_bounds = array<i64: 1>, scalar_prefetch = 0 : i64, scratch_operands = 0 : i64, tpu.core_type = #tpu.core_type<tc>, window_params = [{pipeline_mode = #tpu.pipeline_mode<synchronous>, transform_indices = @transform_0, window_bounds = array<i64: 128, 128>}, {pipeline_mode = #tpu.pipeline_mode<synchronous>, transform_indices = @transform_1, window_bounds = array<i64: 10, 128, 128>}, {pipeline_mode = #tpu.pipeline_mode<synchronous>, transform_indices = @transform_2, window_bounds = array<i64: 9, 128, 128>}, {pipeline_mode = #tpu.pipeline_mode<synchronous>, transform_indices = @transform_3, window_bounds = array<i64: 2, 9, 128>}, {pipeline_mode = #tpu.pipeline_mode<synchronous>, transform_indices = @transform_4, window_bounds = array<i64: 18, 128>}, {pipeline_mode = #tpu.pipeline_mode<synchronous>, transform_indices = @transform_5, window_bounds = array<i64: 128, 128>}]} {
    %c0 = arith.constant 0 : index
    %c0_0 = arith.constant 0 : index
    %0 = vector.load %arg1[%c0, %c0_0] : memref<128x128xf32, #tpu.memory_space<vmem>>, vector<128x128xf32>
    %c0_1 = arith.constant 0 : index
    %c0_2 = arith.constant 0 : index
    %c0_3 = arith.constant 0 : index
    %1 = vector.load %arg3[%c0_1, %c0_2, %c0_3] : memref<9x128x128xf32, #tpu.memory_space<vmem>>, vector<1x128x128xf32>
    %2 = vector.shape_cast %1 : vector<1x128x128xf32> to vector<128x128xf32>
    %cst = arith.constant dense<0.000000e+00> : vector<128x128xf32>
    %3 = tpu.matmul %0, %2, %cst {dimension_numbers = #tpu.dot_dimension_numbers<[1], [0], [0], [1], [0, 0, 1, 1], [], []>} : vector<128x128xf32>, vector<128x128xf32>, vector<128x128xf32> -> vector<128x128xf32>
    %c0_4 = arith.constant 0 : index
    %c0_5 = arith.constant 0 : index
    %4 = vector.load %arg5[%c0_4, %c0_5] : memref<18x128xf32, #tpu.memory_space<vmem>>, vector<1x128xf32>
    %5 = vector.broadcast %4 : vector<1x128xf32> to vector<128x128xf32>
    %6 = arith.mulf %3, %5 : vector<128x128xf32>
    %c1 = arith.constant 1 : index
    %c0_6 = arith.constant 0 : index
    %7 = vector.load %arg5[%c1, %c0_6] : memref<18x128xf32, #tpu.memory_space<vmem>>, vector<1x128xf32>
    %8 = vector.broadcast %7 : vector<1x128xf32> to vector<128x128xf32>
    %9 = arith.addf %6, %8 : vector<128x128xf32>
    %cst_7 = arith.constant 0.000000e+00 : f32
    %10 = vector.broadcast %cst_7 : f32 to vector<128x128xf32>
    %11 = arith.maximumf %9, %10 : vector<128x128xf32>
    %c0_8 = arith.constant 0 : index
    %c0_9 = arith.constant 0 : index
    %c0_10 = arith.constant 0 : index
    %12 = vector.load %arg4[%c0_8, %c0_9, %c0_10] : memref<2x9x128xf32, #tpu.memory_space<vmem>>, vector<1x9x128xf32>
    %13 = vector.shape_cast %12 : vector<1x9x128xf32> to vector<9x128xf32>
    %cst_11 = arith.constant 0.000000e+00 : f32
    %14 = vector.broadcast %cst_11 : f32 to vector<128x128xf32>
    %c0_12 = arith.constant 0 : index
    %c0_13 = arith.constant 0 : index
    %c0_14 = arith.constant 0 : index
    %15 = vector.load %arg2[%c0_12, %c0_13, %c0_14] : memref<10x128x128xf32, #tpu.memory_space<vmem>>, vector<1x128x128xf32>
    %16 = vector.shape_cast %15 : vector<1x128x128xf32> to vector<128x128xf32>
    %cst_15 = arith.constant dense<0.000000e+00> : vector<128x128xf32>
    %17 = tpu.matmul %16, %11, %cst_15 {dimension_numbers = #tpu.dot_dimension_numbers<[1], [0], [0], [1], [0, 0, 1, 1], [], []>} : vector<128x128xf32>, vector<128x128xf32>, vector<128x128xf32> -> vector<128x128xf32>
    %18 = vector.extract_strided_slice %13 {offsets = [0, 0], sizes = [1, 128], strides = [1, 1]} : vector<9x128xf32> to vector<1x128xf32>
    %19 = vector.broadcast %18 : vector<1x128xf32> to vector<128x128xf32>
    %20 = arith.mulf %17, %19 : vector<128x128xf32>
    %21 = arith.addf %14, %20 : vector<128x128xf32>
    %c1_16 = arith.constant 1 : index
    %c0_17 = arith.constant 0 : index
    %c0_18 = arith.constant 0 : index
    %22 = vector.load %arg2[%c1_16, %c0_17, %c0_18] : memref<10x128x128xf32, #tpu.memory_space<vmem>>, vector<1x128x128xf32>
    %23 = vector.shape_cast %22 : vector<1x128x128xf32> to vector<128x128xf32>
    %cst_19 = arith.constant dense<0.000000e+00> : vector<128x128xf32>
    %24 = tpu.matmul %23, %11, %cst_19 {dimension_numbers = #tpu.dot_dimension_numbers<[1], [0], [0], [1], [0, 0, 1, 1], [], []>} : vector<128x128xf32>, vector<128x128xf32>, vector<128x128xf32> -> vector<128x128xf32>
    %25 = vector.extract_strided_slice %13 {offsets = [1, 0], sizes = [1, 128], strides = [1, 1]} : vector<9x128xf32> to vector<1x128xf32>
    %26 = vector.broadcast %25 : vector<1x128xf32> to vector<128x128xf32>
    %27 = arith.mulf %24, %26 : vector<128x128xf32>
    %28 = arith.addf %21, %27 : vector<128x128xf32>
    %c2 = arith.constant 2 : index
    %c0_20 = arith.constant 0 : index
    %c0_21 = arith.constant 0 : index
    %29 = vector.load %arg2[%c2, %c0_20, %c0_21] : memref<10x128x128xf32, #tpu.memory_space<vmem>>, vector<1x128x128xf32>
    %30 = vector.shape_cast %29 : vector<1x128x128xf32> to vector<128x128xf32>
    %cst_22 = arith.constant dense<0.000000e+00> : vector<128x128xf32>
    %31 = tpu.matmul %30, %11, %cst_22 {dimension_numbers = #tpu.dot_dimension_numbers<[1], [0], [0], [1], [0, 0, 1, 1], [], []>} : vector<128x128xf32>, vector<128x128xf32>, vector<128x128xf32> -> vector<128x128xf32>
    %32 = vector.extract_strided_slice %13 {offsets = [2, 0], sizes = [1, 128], strides = [1, 1]} : vector<9x128xf32> to vector<1x128xf32>
    %33 = vector.broadcast %32 : vector<1x128xf32> to vector<128x128xf32>
    %34 = arith.mulf %31, %33 : vector<128x128xf32>
    %35 = arith.addf %28, %34 : vector<128x128xf32>
    %c3 = arith.constant 3 : index
    %c0_23 = arith.constant 0 : index
    %c0_24 = arith.constant 0 : index
    %36 = vector.load %arg2[%c3, %c0_23, %c0_24] : memref<10x128x128xf32, #tpu.memory_space<vmem>>, vector<1x128x128xf32>
    %37 = vector.shape_cast %36 : vector<1x128x128xf32> to vector<128x128xf32>
    %cst_25 = arith.constant dense<0.000000e+00> : vector<128x128xf32>
    %38 = tpu.matmul %37, %11, %cst_25 {dimension_numbers = #tpu.dot_dimension_numbers<[1], [0], [0], [1], [0, 0, 1, 1], [], []>} : vector<128x128xf32>, vector<128x128xf32>, vector<128x128xf32> -> vector<128x128xf32>
    %39 = vector.extract_strided_slice %13 {offsets = [3, 0], sizes = [1, 128], strides = [1, 1]} : vector<9x128xf32> to vector<1x128xf32>
    %40 = vector.broadcast %39 : vector<1x128xf32> to vector<128x128xf32>
    %41 = arith.mulf %38, %40 : vector<128x128xf32>
    %42 = arith.addf %35, %41 : vector<128x128xf32>
    %c4 = arith.constant 4 : index
    %c0_26 = arith.constant 0 : index
    %c0_27 = arith.constant 0 : index
    %43 = vector.load %arg2[%c4, %c0_26, %c0_27] : memref<10x128x128xf32, #tpu.memory_space<vmem>>, vector<1x128x128xf32>
    %44 = vector.shape_cast %43 : vector<1x128x128xf32> to vector<128x128xf32>
    %cst_28 = arith.constant dense<0.000000e+00> : vector<128x128xf32>
    %45 = tpu.matmul %44, %11, %cst_28 {dimension_numbers = #tpu.dot_dimension_numbers<[1], [0], [0], [1], [0, 0, 1, 1], [], []>} : vector<128x128xf32>, vector<128x128xf32>, vector<128x128xf32> -> vector<128x128xf32>
    %46 = vector.extract_strided_slice %13 {offsets = [4, 0], sizes = [1, 128], strides = [1, 1]} : vector<9x128xf32> to vector<1x128xf32>
    %47 = vector.broadcast %46 : vector<1x128xf32> to vector<128x128xf32>
    %48 = arith.mulf %45, %47 : vector<128x128xf32>
    %49 = arith.addf %42, %48 : vector<128x128xf32>
    %c5 = arith.constant 5 : index
    %c0_29 = arith.constant 0 : index
    %c0_30 = arith.constant 0 : index
    %50 = vector.load %arg2[%c5, %c0_29, %c0_30] : memref<10x128x128xf32, #tpu.memory_space<vmem>>, vector<1x128x128xf32>
    %51 = vector.shape_cast %50 : vector<1x128x128xf32> to vector<128x128xf32>
    %cst_31 = arith.constant dense<0.000000e+00> : vector<128x128xf32>
    %52 = tpu.matmul %51, %11, %cst_31 {dimension_numbers = #tpu.dot_dimension_numbers<[1], [0], [0], [1], [0, 0, 1, 1], [], []>} : vector<128x128xf32>, vector<128x128xf32>, vector<128x128xf32> -> vector<128x128xf32>
    %53 = vector.extract_strided_slice %13 {offsets = [5, 0], sizes = [1, 128], strides = [1, 1]} : vector<9x128xf32> to vector<1x128xf32>
    %54 = vector.broadcast %53 : vector<1x128xf32> to vector<128x128xf32>
    %55 = arith.mulf %52, %54 : vector<128x128xf32>
    %56 = arith.addf %49, %55 : vector<128x128xf32>
    %c6 = arith.constant 6 : index
    %c0_32 = arith.constant 0 : index
    %c0_33 = arith.constant 0 : index
    %57 = vector.load %arg2[%c6, %c0_32, %c0_33] : memref<10x128x128xf32, #tpu.memory_space<vmem>>, vector<1x128x128xf32>
    %58 = vector.shape_cast %57 : vector<1x128x128xf32> to vector<128x128xf32>
    %cst_34 = arith.constant dense<0.000000e+00> : vector<128x128xf32>
    %59 = tpu.matmul %58, %11, %cst_34 {dimension_numbers = #tpu.dot_dimension_numbers<[1], [0], [0], [1], [0, 0, 1, 1], [], []>} : vector<128x128xf32>, vector<128x128xf32>, vector<128x128xf32> -> vector<128x128xf32>
    %60 = vector.extract_strided_slice %13 {offsets = [6, 0], sizes = [1, 128], strides = [1, 1]} : vector<9x128xf32> to vector<1x128xf32>
    %61 = vector.broadcast %60 : vector<1x128xf32> to vector<128x128xf32>
    %62 = arith.mulf %59, %61 : vector<128x128xf32>
    %63 = arith.addf %56, %62 : vector<128x128xf32>
    %c7 = arith.constant 7 : index
    %c0_35 = arith.constant 0 : index
    %c0_36 = arith.constant 0 : index
    %64 = vector.load %arg2[%c7, %c0_35, %c0_36] : memref<10x128x128xf32, #tpu.memory_space<vmem>>, vector<1x128x128xf32>
    %65 = vector.shape_cast %64 : vector<1x128x128xf32> to vector<128x128xf32>
    %cst_37 = arith.constant dense<0.000000e+00> : vector<128x128xf32>
    %66 = tpu.matmul %65, %11, %cst_37 {dimension_numbers = #tpu.dot_dimension_numbers<[1], [0], [0], [1], [0, 0, 1, 1], [], []>} : vector<128x128xf32>, vector<128x128xf32>, vector<128x128xf32> -> vector<128x128xf32>
    %67 = vector.extract_strided_slice %13 {offsets = [7, 0], sizes = [1, 128], strides = [1, 1]} : vector<9x128xf32> to vector<1x128xf32>
    %68 = vector.broadcast %67 : vector<1x128xf32> to vector<128x128xf32>
    %69 = arith.mulf %66, %68 : vector<128x128xf32>
    %70 = arith.addf %63, %69 : vector<128x128xf32>
    %c8 = arith.constant 8 : index
    %c0_38 = arith.constant 0 : index
    %c0_39 = arith.constant 0 : index
    %71 = vector.load %arg2[%c8, %c0_38, %c0_39] : memref<10x128x128xf32, #tpu.memory_space<vmem>>, vector<1x128x128xf32>
    %72 = vector.shape_cast %71 : vector<1x128x128xf32> to vector<128x128xf32>
    %cst_40 = arith.constant dense<0.000000e+00> : vector<128x128xf32>
    %73 = tpu.matmul %72, %11, %cst_40 {dimension_numbers = #tpu.dot_dimension_numbers<[1], [0], [0], [1], [0, 0, 1, 1], [], []>} : vector<128x128xf32>, vector<128x128xf32>, vector<128x128xf32> -> vector<128x128xf32>
    %74 = vector.extract_strided_slice %13 {offsets = [8, 0], sizes = [1, 128], strides = [1, 1]} : vector<9x128xf32> to vector<1x128xf32>
    %75 = vector.broadcast %74 : vector<1x128xf32> to vector<128x128xf32>
    %76 = arith.mulf %73, %75 : vector<128x128xf32>
    %77 = arith.addf %70, %76 : vector<128x128xf32>
    %c2_41 = arith.constant 2 : index
    %c0_42 = arith.constant 0 : index
    %78 = vector.load %arg5[%c2_41, %c0_42] : memref<18x128xf32, #tpu.memory_space<vmem>>, vector<1x128xf32>
    %79 = vector.broadcast %78 : vector<1x128xf32> to vector<128x128xf32>
    %80 = arith.mulf %77, %79 : vector<128x128xf32>
    %c3_43 = arith.constant 3 : index
    %c0_44 = arith.constant 0 : index
    %81 = vector.load %arg5[%c3_43, %c0_44] : memref<18x128xf32, #tpu.memory_space<vmem>>, vector<1x128xf32>
    %82 = vector.broadcast %81 : vector<1x128xf32> to vector<128x128xf32>
    %83 = arith.addf %80, %82 : vector<128x128xf32>
    %cst_45 = arith.constant 0.000000e+00 : f32
    %84 = vector.broadcast %cst_45 : f32 to vector<128x128xf32>
    %85 = arith.maximumf %83, %84 : vector<128x128xf32>
    %c9 = arith.constant 9 : index
    %c0_46 = arith.constant 0 : index
    %c0_47 = arith.constant 0 : index
    %86 = vector.load %arg2[%c9, %c0_46, %c0_47] : memref<10x128x128xf32, #tpu.memory_space<vmem>>, vector<1x128x128xf32>
    %87 = vector.shape_cast %86 : vector<1x128x128xf32> to vector<128x128xf32>
    %cst_48 = arith.constant dense<0.000000e+00> : vector<128x128xf32>
    %88 = tpu.matmul %87, %85, %cst_48 {dimension_numbers = #tpu.dot_dimension_numbers<[1], [0], [0], [1], [0, 0, 1, 1], [], []>} : vector<128x128xf32>, vector<128x128xf32>, vector<128x128xf32> -> vector<128x128xf32>
    %c1_49 = arith.constant 1 : index
    %c0_50 = arith.constant 0 : index
    %c0_51 = arith.constant 0 : index
    %89 = vector.load %arg3[%c1_49, %c0_50, %c0_51] : memref<9x128x128xf32, #tpu.memory_space<vmem>>, vector<1x128x128xf32>
    %90 = vector.shape_cast %89 : vector<1x128x128xf32> to vector<128x128xf32>
    %cst_52 = arith.constant dense<0.000000e+00> : vector<128x128xf32>
    %91 = tpu.matmul %88, %90, %cst_52 {dimension_numbers = #tpu.dot_dimension_numbers<[1], [0], [0], [1], [0, 0, 1, 1], [], []>} : vector<128x128xf32>, vector<128x128xf32>, vector<128x128xf32> -> vector<128x128xf32>
    %c4_53 = arith.constant 4 : index
    %c0_54 = arith.constant 0 : index
    %92 = vector.load %arg5[%c4_53, %c0_54] : memref<18x128xf32, #tpu.memory_space<vmem>>, vector<1x128xf32>
    %93 = vector.broadcast %92 : vector<1x128xf32> to vector<128x128xf32>
    %94 = arith.addf %91, %93 : vector<128x128xf32>
    %cst_55 = arith.constant 0.000000e+00 : f32
    %95 = vector.broadcast %cst_55 : f32 to vector<128x128xf32>
    %96 = arith.maximumf %94, %95 : vector<128x128xf32>
    %c2_56 = arith.constant 2 : index
    %c0_57 = arith.constant 0 : index
    %c0_58 = arith.constant 0 : index
    %97 = vector.load %arg3[%c2_56, %c0_57, %c0_58] : memref<9x128x128xf32, #tpu.memory_space<vmem>>, vector<1x128x128xf32>
    %98 = vector.shape_cast %97 : vector<1x128x128xf32> to vector<128x128xf32>
    %cst_59 = arith.constant dense<0.000000e+00> : vector<128x128xf32>
    %99 = tpu.matmul %96, %98, %cst_59 {dimension_numbers = #tpu.dot_dimension_numbers<[1], [0], [0], [1], [0, 0, 1, 1], [], []>} : vector<128x128xf32>, vector<128x128xf32>, vector<128x128xf32> -> vector<128x128xf32>
    %c5_60 = arith.constant 5 : index
    %c0_61 = arith.constant 0 : index
    %100 = vector.load %arg5[%c5_60, %c0_61] : memref<18x128xf32, #tpu.memory_space<vmem>>, vector<1x128xf32>
    %101 = vector.broadcast %100 : vector<1x128xf32> to vector<128x128xf32>
    %102 = arith.addf %99, %101 : vector<128x128xf32>
    %103 = arith.negf %102 : vector<128x128xf32>
    %104 = math.exp %103 : vector<128x128xf32>
    %cst_62 = arith.constant 1.000000e+00 : f32
    %105 = vector.broadcast %cst_62 : f32 to vector<128x128xf32>
    %106 = arith.addf %105, %104 : vector<128x128xf32>
    %107 = arith.divf %105, %106 : vector<128x128xf32>
    %108 = arith.mulf %85, %107 : vector<128x128xf32>
    %c3_63 = arith.constant 3 : index
    %c0_64 = arith.constant 0 : index
    %c0_65 = arith.constant 0 : index
    %109 = vector.load %arg3[%c3_63, %c0_64, %c0_65] : memref<9x128x128xf32, #tpu.memory_space<vmem>>, vector<1x128x128xf32>
    %110 = vector.shape_cast %109 : vector<1x128x128xf32> to vector<128x128xf32>
    %cst_66 = arith.constant dense<0.000000e+00> : vector<128x128xf32>
    %111 = tpu.matmul %108, %110, %cst_66 {dimension_numbers = #tpu.dot_dimension_numbers<[1], [0], [0], [1], [0, 0, 1, 1], [], []>} : vector<128x128xf32>, vector<128x128xf32>, vector<128x128xf32> -> vector<128x128xf32>
    %c6_67 = arith.constant 6 : index
    %c0_68 = arith.constant 0 : index
    %112 = vector.load %arg5[%c6_67, %c0_68] : memref<18x128xf32, #tpu.memory_space<vmem>>, vector<1x128xf32>
    %113 = vector.broadcast %112 : vector<1x128xf32> to vector<128x128xf32>
    %114 = arith.mulf %111, %113 : vector<128x128xf32>
    %c7_69 = arith.constant 7 : index
    %c0_70 = arith.constant 0 : index
    %115 = vector.load %arg5[%c7_69, %c0_70] : memref<18x128xf32, #tpu.memory_space<vmem>>, vector<1x128xf32>
    %116 = vector.broadcast %115 : vector<1x128xf32> to vector<128x128xf32>
    %117 = arith.addf %114, %116 : vector<128x128xf32>
    %118 = arith.addf %117, %11 : vector<128x128xf32>
    %c4_71 = arith.constant 4 : index
    %c0_72 = arith.constant 0 : index
    %c0_73 = arith.constant 0 : index
    %119 = vector.load %arg3[%c4_71, %c0_72, %c0_73] : memref<9x128x128xf32, #tpu.memory_space<vmem>>, vector<1x128x128xf32>
    %120 = vector.shape_cast %119 : vector<1x128x128xf32> to vector<128x128xf32>
    %cst_74 = arith.constant dense<0.000000e+00> : vector<128x128xf32>
    %121 = tpu.matmul %118, %120, %cst_74 {dimension_numbers = #tpu.dot_dimension_numbers<[1], [0], [0], [1], [0, 0, 1, 1], [], []>} : vector<128x128xf32>, vector<128x128xf32>, vector<128x128xf32> -> vector<128x128xf32>
    %c8_75 = arith.constant 8 : index
    %c0_76 = arith.constant 0 : index
    %122 = vector.load %arg5[%c8_75, %c0_76] : memref<18x128xf32, #tpu.memory_space<vmem>>, vector<1x128xf32>
    %123 = vector.broadcast %122 : vector<1x128xf32> to vector<128x128xf32>
    %124 = arith.mulf %121, %123 : vector<128x128xf32>
    %c9_77 = arith.constant 9 : index
    %c0_78 = arith.constant 0 : index
    %125 = vector.load %arg5[%c9_77, %c0_78] : memref<18x128xf32, #tpu.memory_space<vmem>>, vector<1x128xf32>
    %126 = vector.broadcast %125 : vector<1x128xf32> to vector<128x128xf32>
    %127 = arith.addf %124, %126 : vector<128x128xf32>
    %cst_79 = arith.constant 0.000000e+00 : f32
    %128 = vector.broadcast %cst_79 : f32 to vector<128x128xf32>
    %129 = arith.maximumf %127, %128 : vector<128x128xf32>
    %c1_80 = arith.constant 1 : index
    %c0_81 = arith.constant 0 : index
    %c0_82 = arith.constant 0 : index
    %130 = vector.load %arg4[%c1_80, %c0_81, %c0_82] : memref<2x9x128xf32, #tpu.memory_space<vmem>>, vector<1x9x128xf32>
    %131 = vector.shape_cast %130 : vector<1x9x128xf32> to vector<9x128xf32>
    %cst_83 = arith.constant 0.000000e+00 : f32
    %132 = vector.broadcast %cst_83 : f32 to vector<128x128xf32>
    %c0_84 = arith.constant 0 : index
    %c0_85 = arith.constant 0 : index
    %c0_86 = arith.constant 0 : index
    %133 = vector.load %arg2[%c0_84, %c0_85, %c0_86] : memref<10x128x128xf32, #tpu.memory_space<vmem>>, vector<1x128x128xf32>
    %134 = vector.shape_cast %133 : vector<1x128x128xf32> to vector<128x128xf32>
    %cst_87 = arith.constant dense<0.000000e+00> : vector<128x128xf32>
    %135 = tpu.matmul %134, %129, %cst_87 {dimension_numbers = #tpu.dot_dimension_numbers<[1], [0], [0], [1], [0, 0, 1, 1], [], []>} : vector<128x128xf32>, vector<128x128xf32>, vector<128x128xf32> -> vector<128x128xf32>
    %136 = vector.extract_strided_slice %131 {offsets = [0, 0], sizes = [1, 128], strides = [1, 1]} : vector<9x128xf32> to vector<1x128xf32>
    %137 = vector.broadcast %136 : vector<1x128xf32> to vector<128x128xf32>
    %138 = arith.mulf %135, %137 : vector<128x128xf32>
    %139 = arith.addf %132, %138 : vector<128x128xf32>
    %c1_88 = arith.constant 1 : index
    %c0_89 = arith.constant 0 : index
    %c0_90 = arith.constant 0 : index
    %140 = vector.load %arg2[%c1_88, %c0_89, %c0_90] : memref<10x128x128xf32, #tpu.memory_space<vmem>>, vector<1x128x128xf32>
    %141 = vector.shape_cast %140 : vector<1x128x128xf32> to vector<128x128xf32>
    %cst_91 = arith.constant dense<0.000000e+00> : vector<128x128xf32>
    %142 = tpu.matmul %141, %129, %cst_91 {dimension_numbers = #tpu.dot_dimension_numbers<[1], [0], [0], [1], [0, 0, 1, 1], [], []>} : vector<128x128xf32>, vector<128x128xf32>, vector<128x128xf32> -> vector<128x128xf32>
    %143 = vector.extract_strided_slice %131 {offsets = [1, 0], sizes = [1, 128], strides = [1, 1]} : vector<9x128xf32> to vector<1x128xf32>
    %144 = vector.broadcast %143 : vector<1x128xf32> to vector<128x128xf32>
    %145 = arith.mulf %142, %144 : vector<128x128xf32>
    %146 = arith.addf %139, %145 : vector<128x128xf32>
    %c2_92 = arith.constant 2 : index
    %c0_93 = arith.constant 0 : index
    %c0_94 = arith.constant 0 : index
    %147 = vector.load %arg2[%c2_92, %c0_93, %c0_94] : memref<10x128x128xf32, #tpu.memory_space<vmem>>, vector<1x128x128xf32>
    %148 = vector.shape_cast %147 : vector<1x128x128xf32> to vector<128x128xf32>
    %cst_95 = arith.constant dense<0.000000e+00> : vector<128x128xf32>
    %149 = tpu.matmul %148, %129, %cst_95 {dimension_numbers = #tpu.dot_dimension_numbers<[1], [0], [0], [1], [0, 0, 1, 1], [], []>} : vector<128x128xf32>, vector<128x128xf32>, vector<128x128xf32> -> vector<128x128xf32>
    %150 = vector.extract_strided_slice %131 {offsets = [2, 0], sizes = [1, 128], strides = [1, 1]} : vector<9x128xf32> to vector<1x128xf32>
    %151 = vector.broadcast %150 : vector<1x128xf32> to vector<128x128xf32>
    %152 = arith.mulf %149, %151 : vector<128x128xf32>
    %153 = arith.addf %146, %152 : vector<128x128xf32>
    %c3_96 = arith.constant 3 : index
    %c0_97 = arith.constant 0 : index
    %c0_98 = arith.constant 0 : index
    %154 = vector.load %arg2[%c3_96, %c0_97, %c0_98] : memref<10x128x128xf32, #tpu.memory_space<vmem>>, vector<1x128x128xf32>
    %155 = vector.shape_cast %154 : vector<1x128x128xf32> to vector<128x128xf32>
    %cst_99 = arith.constant dense<0.000000e+00> : vector<128x128xf32>
    %156 = tpu.matmul %155, %129, %cst_99 {dimension_numbers = #tpu.dot_dimension_numbers<[1], [0], [0], [1], [0, 0, 1, 1], [], []>} : vector<128x128xf32>, vector<128x128xf32>, vector<128x128xf32> -> vector<128x128xf32>
    %157 = vector.extract_strided_slice %131 {offsets = [3, 0], sizes = [1, 128], strides = [1, 1]} : vector<9x128xf32> to vector<1x128xf32>
    %158 = vector.broadcast %157 : vector<1x128xf32> to vector<128x128xf32>
    %159 = arith.mulf %156, %158 : vector<128x128xf32>
    %160 = arith.addf %153, %159 : vector<128x128xf32>
    %c4_100 = arith.constant 4 : index
    %c0_101 = arith.constant 0 : index
    %c0_102 = arith.constant 0 : index
    %161 = vector.load %arg2[%c4_100, %c0_101, %c0_102] : memref<10x128x128xf32, #tpu.memory_space<vmem>>, vector<1x128x128xf32>
    %162 = vector.shape_cast %161 : vector<1x128x128xf32> to vector<128x128xf32>
    %cst_103 = arith.constant dense<0.000000e+00> : vector<128x128xf32>
    %163 = tpu.matmul %162, %129, %cst_103 {dimension_numbers = #tpu.dot_dimension_numbers<[1], [0], [0], [1], [0, 0, 1, 1], [], []>} : vector<128x128xf32>, vector<128x128xf32>, vector<128x128xf32> -> vector<128x128xf32>
    %164 = vector.extract_strided_slice %131 {offsets = [4, 0], sizes = [1, 128], strides = [1, 1]} : vector<9x128xf32> to vector<1x128xf32>
    %165 = vector.broadcast %164 : vector<1x128xf32> to vector<128x128xf32>
    %166 = arith.mulf %163, %165 : vector<128x128xf32>
    %167 = arith.addf %160, %166 : vector<128x128xf32>
    %c5_104 = arith.constant 5 : index
    %c0_105 = arith.constant 0 : index
    %c0_106 = arith.constant 0 : index
    %168 = vector.load %arg2[%c5_104, %c0_105, %c0_106] : memref<10x128x128xf32, #tpu.memory_space<vmem>>, vector<1x128x128xf32>
    %169 = vector.shape_cast %168 : vector<1x128x128xf32> to vector<128x128xf32>
    %cst_107 = arith.constant dense<0.000000e+00> : vector<128x128xf32>
    %170 = tpu.matmul %169, %129, %cst_107 {dimension_numbers = #tpu.dot_dimension_numbers<[1], [0], [0], [1], [0, 0, 1, 1], [], []>} : vector<128x128xf32>, vector<128x128xf32>, vector<128x128xf32> -> vector<128x128xf32>
    %171 = vector.extract_strided_slice %131 {offsets = [5, 0], sizes = [1, 128], strides = [1, 1]} : vector<9x128xf32> to vector<1x128xf32>
    %172 = vector.broadcast %171 : vector<1x128xf32> to vector<128x128xf32>
    %173 = arith.mulf %170, %172 : vector<128x128xf32>
    %174 = arith.addf %167, %173 : vector<128x128xf32>
    %c6_108 = arith.constant 6 : index
    %c0_109 = arith.constant 0 : index
    %c0_110 = arith.constant 0 : index
    %175 = vector.load %arg2[%c6_108, %c0_109, %c0_110] : memref<10x128x128xf32, #tpu.memory_space<vmem>>, vector<1x128x128xf32>
    %176 = vector.shape_cast %175 : vector<1x128x128xf32> to vector<128x128xf32>
    %cst_111 = arith.constant dense<0.000000e+00> : vector<128x128xf32>
    %177 = tpu.matmul %176, %129, %cst_111 {dimension_numbers = #tpu.dot_dimension_numbers<[1], [0], [0], [1], [0, 0, 1, 1], [], []>} : vector<128x128xf32>, vector<128x128xf32>, vector<128x128xf32> -> vector<128x128xf32>
    %178 = vector.extract_strided_slice %131 {offsets = [6, 0], sizes = [1, 128], strides = [1, 1]} : vector<9x128xf32> to vector<1x128xf32>
    %179 = vector.broadcast %178 : vector<1x128xf32> to vector<128x128xf32>
    %180 = arith.mulf %177, %179 : vector<128x128xf32>
    %181 = arith.addf %174, %180 : vector<128x128xf32>
    %c7_112 = arith.constant 7 : index
    %c0_113 = arith.constant 0 : index
    %c0_114 = arith.constant 0 : index
    %182 = vector.load %arg2[%c7_112, %c0_113, %c0_114] : memref<10x128x128xf32, #tpu.memory_space<vmem>>, vector<1x128x128xf32>
    %183 = vector.shape_cast %182 : vector<1x128x128xf32> to vector<128x128xf32>
    %cst_115 = arith.constant dense<0.000000e+00> : vector<128x128xf32>
    %184 = tpu.matmul %183, %129, %cst_115 {dimension_numbers = #tpu.dot_dimension_numbers<[1], [0], [0], [1], [0, 0, 1, 1], [], []>} : vector<128x128xf32>, vector<128x128xf32>, vector<128x128xf32> -> vector<128x128xf32>
    %185 = vector.extract_strided_slice %131 {offsets = [7, 0], sizes = [1, 128], strides = [1, 1]} : vector<9x128xf32> to vector<1x128xf32>
    %186 = vector.broadcast %185 : vector<1x128xf32> to vector<128x128xf32>
    %187 = arith.mulf %184, %186 : vector<128x128xf32>
    %188 = arith.addf %181, %187 : vector<128x128xf32>
    %c8_116 = arith.constant 8 : index
    %c0_117 = arith.constant 0 : index
    %c0_118 = arith.constant 0 : index
    %189 = vector.load %arg2[%c8_116, %c0_117, %c0_118] : memref<10x128x128xf32, #tpu.memory_space<vmem>>, vector<1x128x128xf32>
    %190 = vector.shape_cast %189 : vector<1x128x128xf32> to vector<128x128xf32>
    %cst_119 = arith.constant dense<0.000000e+00> : vector<128x128xf32>
    %191 = tpu.matmul %190, %129, %cst_119 {dimension_numbers = #tpu.dot_dimension_numbers<[1], [0], [0], [1], [0, 0, 1, 1], [], []>} : vector<128x128xf32>, vector<128x128xf32>, vector<128x128xf32> -> vector<128x128xf32>
    %192 = vector.extract_strided_slice %131 {offsets = [8, 0], sizes = [1, 128], strides = [1, 1]} : vector<9x128xf32> to vector<1x128xf32>
    %193 = vector.broadcast %192 : vector<1x128xf32> to vector<128x128xf32>
    %194 = arith.mulf %191, %193 : vector<128x128xf32>
    %195 = arith.addf %188, %194 : vector<128x128xf32>
    %c10 = arith.constant 10 : index
    %c0_120 = arith.constant 0 : index
    %196 = vector.load %arg5[%c10, %c0_120] : memref<18x128xf32, #tpu.memory_space<vmem>>, vector<1x128xf32>
    %197 = vector.broadcast %196 : vector<1x128xf32> to vector<128x128xf32>
    %198 = arith.mulf %195, %197 : vector<128x128xf32>
    %c11 = arith.constant 11 : index
    %c0_121 = arith.constant 0 : index
    %199 = vector.load %arg5[%c11, %c0_121] : memref<18x128xf32, #tpu.memory_space<vmem>>, vector<1x128xf32>
    %200 = vector.broadcast %199 : vector<1x128xf32> to vector<128x128xf32>
    %201 = arith.addf %198, %200 : vector<128x128xf32>
    %cst_122 = arith.constant 0.000000e+00 : f32
    %202 = vector.broadcast %cst_122 : f32 to vector<128x128xf32>
    %203 = arith.maximumf %201, %202 : vector<128x128xf32>
    %c9_123 = arith.constant 9 : index
    %c0_124 = arith.constant 0 : index
    %c0_125 = arith.constant 0 : index
    %204 = vector.load %arg2[%c9_123, %c0_124, %c0_125] : memref<10x128x128xf32, #tpu.memory_space<vmem>>, vector<1x128x128xf32>
    %205 = vector.shape_cast %204 : vector<1x128x128xf32> to vector<128x128xf32>
    %cst_126 = arith.constant dense<0.000000e+00> : vector<128x128xf32>
    %206 = tpu.matmul %205, %203, %cst_126 {dimension_numbers = #tpu.dot_dimension_numbers<[1], [0], [0], [1], [0, 0, 1, 1], [], []>} : vector<128x128xf32>, vector<128x128xf32>, vector<128x128xf32> -> vector<128x128xf32>
    %c5_127 = arith.constant 5 : index
    %c0_128 = arith.constant 0 : index
    %c0_129 = arith.constant 0 : index
    %207 = vector.load %arg3[%c5_127, %c0_128, %c0_129] : memref<9x128x128xf32, #tpu.memory_space<vmem>>, vector<1x128x128xf32>
    %208 = vector.shape_cast %207 : vector<1x128x128xf32> to vector<128x128xf32>
    %cst_130 = arith.constant dense<0.000000e+00> : vector<128x128xf32>
    %209 = tpu.matmul %206, %208, %cst_130 {dimension_numbers = #tpu.dot_dimension_numbers<[1], [0], [0], [1], [0, 0, 1, 1], [], []>} : vector<128x128xf32>, vector<128x128xf32>, vector<128x128xf32> -> vector<128x128xf32>
    %c12 = arith.constant 12 : index
    %c0_131 = arith.constant 0 : index
    %210 = vector.load %arg5[%c12, %c0_131] : memref<18x128xf32, #tpu.memory_space<vmem>>, vector<1x128xf32>
    %211 = vector.broadcast %210 : vector<1x128xf32> to vector<128x128xf32>
    %212 = arith.addf %209, %211 : vector<128x128xf32>
    %cst_132 = arith.constant 0.000000e+00 : f32
    %213 = vector.broadcast %cst_132 : f32 to vector<128x128xf32>
    %214 = arith.maximumf %212, %213 : vector<128x128xf32>
    %c6_133 = arith.constant 6 : index
    %c0_134 = arith.constant 0 : index
    %c0_135 = arith.constant 0 : index
    %215 = vector.load %arg3[%c6_133, %c0_134, %c0_135] : memref<9x128x128xf32, #tpu.memory_space<vmem>>, vector<1x128x128xf32>
    %216 = vector.shape_cast %215 : vector<1x128x128xf32> to vector<128x128xf32>
    %cst_136 = arith.constant dense<0.000000e+00> : vector<128x128xf32>
    %217 = tpu.matmul %214, %216, %cst_136 {dimension_numbers = #tpu.dot_dimension_numbers<[1], [0], [0], [1], [0, 0, 1, 1], [], []>} : vector<128x128xf32>, vector<128x128xf32>, vector<128x128xf32> -> vector<128x128xf32>
    %c13 = arith.constant 13 : index
    %c0_137 = arith.constant 0 : index
    %218 = vector.load %arg5[%c13, %c0_137] : memref<18x128xf32, #tpu.memory_space<vmem>>, vector<1x128xf32>
    %219 = vector.broadcast %218 : vector<1x128xf32> to vector<128x128xf32>
    %220 = arith.addf %217, %219 : vector<128x128xf32>
    %221 = arith.negf %220 : vector<128x128xf32>
    %222 = math.exp %221 : vector<128x128xf32>
    %cst_138 = arith.constant 1.000000e+00 : f32
    %223 = vector.broadcast %cst_138 : f32 to vector<128x128xf32>
    %224 = arith.addf %223, %222 : vector<128x128xf32>
    %225 = arith.divf %223, %224 : vector<128x128xf32>
    %226 = arith.mulf %203, %225 : vector<128x128xf32>
    %c7_139 = arith.constant 7 : index
    %c0_140 = arith.constant 0 : index
    %c0_141 = arith.constant 0 : index
    %227 = vector.load %arg3[%c7_139, %c0_140, %c0_141] : memref<9x128x128xf32, #tpu.memory_space<vmem>>, vector<1x128x128xf32>
    %228 = vector.shape_cast %227 : vector<1x128x128xf32> to vector<128x128xf32>
    %cst_142 = arith.constant dense<0.000000e+00> : vector<128x128xf32>
    %229 = tpu.matmul %226, %228, %cst_142 {dimension_numbers = #tpu.dot_dimension_numbers<[1], [0], [0], [1], [0, 0, 1, 1], [], []>} : vector<128x128xf32>, vector<128x128xf32>, vector<128x128xf32> -> vector<128x128xf32>
    %c14 = arith.constant 14 : index
    %c0_143 = arith.constant 0 : index
    %230 = vector.load %arg5[%c14, %c0_143] : memref<18x128xf32, #tpu.memory_space<vmem>>, vector<1x128xf32>
    %231 = vector.broadcast %230 : vector<1x128xf32> to vector<128x128xf32>
    %232 = arith.mulf %229, %231 : vector<128x128xf32>
    %c15 = arith.constant 15 : index
    %c0_144 = arith.constant 0 : index
    %233 = vector.load %arg5[%c15, %c0_144] : memref<18x128xf32, #tpu.memory_space<vmem>>, vector<1x128xf32>
    %234 = vector.broadcast %233 : vector<1x128xf32> to vector<128x128xf32>
    %235 = arith.addf %232, %234 : vector<128x128xf32>
    %c8_145 = arith.constant 8 : index
    %c0_146 = arith.constant 0 : index
    %c0_147 = arith.constant 0 : index
    %236 = vector.load %arg3[%c8_145, %c0_146, %c0_147] : memref<9x128x128xf32, #tpu.memory_space<vmem>>, vector<1x128x128xf32>
    %237 = vector.shape_cast %236 : vector<1x128x128xf32> to vector<128x128xf32>
    %cst_148 = arith.constant dense<0.000000e+00> : vector<128x128xf32>
    %238 = tpu.matmul %235, %237, %cst_148 {dimension_numbers = #tpu.dot_dimension_numbers<[1], [0], [0], [1], [0, 0, 1, 1], [], []>} : vector<128x128xf32>, vector<128x128xf32>, vector<128x128xf32> -> vector<128x128xf32>
    %c16 = arith.constant 16 : index
    %c0_149 = arith.constant 0 : index
    %239 = vector.load %arg5[%c16, %c0_149] : memref<18x128xf32, #tpu.memory_space<vmem>>, vector<1x128xf32>
    %240 = vector.broadcast %239 : vector<1x128xf32> to vector<128x128xf32>
    %241 = arith.mulf %238, %240 : vector<128x128xf32>
    %c17 = arith.constant 17 : index
    %c0_150 = arith.constant 0 : index
    %242 = vector.load %arg5[%c17, %c0_150] : memref<18x128xf32, #tpu.memory_space<vmem>>, vector<1x128xf32>
    %243 = vector.broadcast %242 : vector<1x128xf32> to vector<128x128xf32>
    %244 = arith.addf %241, %243 : vector<128x128xf32>
    %cst_151 = arith.constant 0.000000e+00 : f32
    %245 = vector.broadcast %cst_151 : f32 to vector<128x128xf32>
    %246 = arith.maximumf %244, %245 : vector<128x128xf32>
    %c0_152 = arith.constant 0 : index
    %c0_153 = arith.constant 0 : index
    %247 = vector.load %arg6[%c0_152, %c0_153] : memref<128x128xf32, #tpu.memory_space<vmem>>, vector<128x128xf32>
    tpu.vector_store %arg6[%c0_152, %c0_153], %246 {strides = array<i32>} : memref<128x128xf32, #tpu.memory_space<vmem>>, vector<128x128xf32>,
    return
  }
  func.func @transform_0(%arg0: i32) -> (i32, i32) {
    %c0_i32 = arith.constant 0 : i32
    %c0_i32_0 = arith.constant 0 : i32
    %c0_i32_1 = arith.constant 0 : i32
    return %c0_i32, %c0_i32_0 : i32, i32
  }
  func.func @transform_1(%arg0: i32) -> (i32, i32, i32) {
    %c0_i32 = arith.constant 0 : i32
    %c0_i32_0 = arith.constant 0 : i32
    %c0_i32_1 = arith.constant 0 : i32
    %c0_i32_2 = arith.constant 0 : i32
    return %c0_i32, %c0_i32_0, %c0_i32_1 : i32, i32, i32
  }
  func.func @transform_2(%arg0: i32) -> (i32, i32, i32) {
    %c0_i32 = arith.constant 0 : i32
    %c0_i32_0 = arith.constant 0 : i32
    %c0_i32_1 = arith.constant 0 : i32
    %c0_i32_2 = arith.constant 0 : i32
    return %c0_i32, %c0_i32_0, %c0_i32_1 : i32, i32, i32
  }
  func.func @transform_3(%arg0: i32) -> (i32, i32, i32) {
    %c0_i32 = arith.constant 0 : i32
    %c0_i32_0 = arith.constant 0 : i32
    %c0_i32_1 = arith.constant 0 : i32
    %c0_i32_2 = arith.constant 0 : i32
    return %c0_i32, %c0_i32_0, %c0_i32_1 : i32, i32, i32
  }
  func.func @transform_4(%arg0: i32) -> (i32, i32) {
    %c0_i32 = arith.constant 0 : i32
    %c0_i32_0 = arith.constant 0 : i32
    %c0_i32_1 = arith.constant 0 : i32
    return %c0_i32, %c0_i32_0 : i32, i32
  }
  func.func @transform_5(%arg0: i32) -> (i32, i32) {
    %c0_i32 = arith.constant 0 : i32
    %c0_i32_0 = arith.constant 0 : i32
    %c0_i32_1 = arith.constant 0 : i32
    return %c0_i32, %c0_i32_0 : i32, i32
  }
}

</mosaic_0001>

<llo_original>
// kernel: efficientnet_forward.1
$region0: #{efficientnet_forward.1}
  #allocation0 [shape = 'u32[]', space=smem, size = 0x4, offset = 0x4, fixed_abs, tag = 'smem constant byte address 0x4 - core index']
  #allocation1 [shape = 'u32[144,128]{1,0:T(1,128)}', space=vmem, size = 0x12000, scoped, tag = 'internal scratch']
  %s0 = inlined_call_operand.vmem [shape: f32[128,128], index: 0, kind: input, shape index: {}]
  %s1 = inlined_call_operand.vmem [shape: f32[10,128,128], index: 1, kind: input, shape index: {}]
  %s2 = inlined_call_operand.vmem [shape: f32[9,128,128], index: 2, kind: input, shape index: {}]
  %s3 = inlined_call_operand.vmem [shape: f32[2,9,128], index: 3, kind: input, shape index: {}]
  %s4 = inlined_call_operand.vmem [shape: f32[18,128], index: 4, kind: input, shape index: {}]
  %s5 = inlined_call_operand.hbm [shape: f32[128,128], index: 5, kind: output, shape index: {}]
  %s6 = sld [smem:[#allocation0]]
  $region30: #{efficientnet_forward.1} parent=0
    _
  %s8 = ssub.s32 1, %s6
  %s9 = scalar_select 0, %s8, %s6
  $region1: #{efficientnet_forward.1} parent=0
    #allocation2 [shape = 'u8[65536]{0}', space=vmem, size = 0x10000, scoped, tag = 'output window, operand 0, single buffered']
    #allocation3 [shape = 's32[1]{0}', space=sflag, size = 0x4, scoped, tag = 'scoped memory for efficientnet_forward.1']
    %10 = vsyncpa [#allocation3], 0
    // Predicated region
    $region2: #{efficientnet_forward.1} parent=1 // pred_check
      _
    $region3: #{efficientnet_forward.1} parent=1 // pred_check_branch
      %12 = sbr.rel (0) target = $region5
    $region4: #{efficientnet_forward.1} parent=1 // pred_region
      _
    $region5: #{efficientnet_forward.1} parent=1 // pred_fallthru
      _
    // Predicated region
    $region6: #{efficientnet_forward.1} parent=1 // pred_check
      _
    $region7: #{efficientnet_forward.1} parent=1 // pred_check_branch
      %14 = sbr.rel (0) target = $region9
    $region8: #{efficientnet_forward.1} parent=1 // pred_region
      _
    $region9: #{efficientnet_forward.1} parent=1 // pred_fallthru
      _
    // Predicated region
    $region10: #{efficientnet_forward.1} parent=1 // pred_check
      _
    $region11: #{efficientnet_forward.1} parent=1 // pred_check_branch
      %16 = sbr.rel (0) target = $region13
    $region12: #{efficientnet_forward.1} parent=1 // pred_region
      _
    $region13: #{efficientnet_forward.1} parent=1 // pred_fallthru
      _
    // Predicated region
    $region14: #{efficientnet_forward.1} parent=1 // pred_check
      _
    $region15: #{efficientnet_forward.1} parent=1 // pred_check_branch
      %18 = sbr.rel (0) target = $region17
    $region16: #{efficientnet_forward.1} parent=1 // pred_region
      _
    $region17: #{efficientnet_forward.1} parent=1 // pred_fallthru
      _
    // Predicated region
    $region18: #{efficientnet_forward.1} parent=1 // pred_check
      _
    $region19: #{efficientnet_forward.1} parent=1 // pred_check_branch
      %20 = sbr.rel (0) target = $region21
    $region20: #{efficientnet_forward.1} parent=1 // pred_region
      _
    $region21: #{efficientnet_forward.1} parent=1 // pred_fallthru
      _
    %v21 = vld [vmem:[%s0] sm:$0xff]
    %v22 = vld [vmem:[%s0 + $0x8] sm:$0xff]
    %v23 = vld [vmem:[%s0 + $0x10] sm:$0xff]
    %v24 = vld [vmem:[%s0 + $0x18] sm:$0xff]
    %v25 = vld [vmem:[%s0 + $0x20] sm:$0xff]
    %v26 = vld [vmem:[%s0 + $0x28] sm:$0xff]
    %v27 = vld [vmem:[%s0 + $0x30] sm:$0xff]
    %v28 = vld [vmem:[%s0 + $0x38] sm:$0xff]
    %v29 = vld [vmem:[%s0 + $0x40] sm:$0xff]
    %v30 = vld [vmem:[%s0 + $0x48] sm:$0xff]
    %v31 = vld [vmem:[%s0 + $0x50] sm:$0xff]
    %v32 = vld [vmem:[%s0 + $0x58] sm:$0xff]
    %v33 = vld [vmem:[%s0 + $0x60] sm:$0xff]
    %v34 = vld [vmem:[%s0 + $0x68] sm:$0xff]
    %v35 = vld [vmem:[%s0 + $0x70] sm:$0xff]
    %v36 = vld [vmem:[%s0 + $0x78] sm:$0xff]
    %v37 = vld [vmem:[%s2] sm:$0xff]
    %v38 = vld [vmem:[%s2 + $0x8] sm:$0xff]
    %v39 = vld [vmem:[%s2 + $0x10] sm:$0xff]
    %v40 = vld [vmem:[%s2 + $0x18] sm:$0xff]
    %v41 = vld [vmem:[%s2 + $0x20] sm:$0xff]
    %v42 = vld [vmem:[%s2 + $0x28] sm:$0xff]
    %v43 = vld [vmem:[%s2 + $0x30] sm:$0xff]
    %v44 = vld [vmem:[%s2 + $0x38] sm:$0xff]
    %v45 = vld [vmem:[%s2 + $0x40] sm:$0xff]
    %v46 = vld [vmem:[%s2 + $0x48] sm:$0xff]
    %v47 = vld [vmem:[%s2 + $0x50] sm:$0xff]
    %v48 = vld [vmem:[%s2 + $0x58] sm:$0xff]
    %v49 = vld [vmem:[%s2 + $0x60] sm:$0xff]
    %v50 = vld [vmem:[%s2 + $0x68] sm:$0xff]
    %v51 = vld [vmem:[%s2 + $0x70] sm:$0xff]
    %v52 = vld [vmem:[%s2 + $0x78] sm:$0xff]
    %53 = vmatprep.subr.mxu0 0.0
    %54 = vmatpush1.msra.mxu0 %v37
    %55 = vmatprep.subr.mxu0 0.0
    %56 = vmatpush1.msra.mxu0 %v38
    %57 = vmatprep.subr.mxu0 0.0
    %58 = vmatpush1.msra.mxu0 %v39
    %59 = vmatprep.subr.mxu0 0.0
    %60 = vmatpush1.msra.mxu0 %v40
    %61 = vmatprep.subr.mxu0 0.0
    %62 = vmatpush1.msra.mxu0 %v41
    %63 = vmatprep.subr.mxu0 0.0
    %64 = vmatpush1.msra.mxu0 %v42
    %65 = vmatprep.subr.mxu0 0.0
    %66 = vmatpush1.msra.mxu0 %v43
    %67 = vmatprep.subr.mxu0 0.0
    %68 = vmatpush1.msra.mxu0 %v44
    %69 = vmatprep.subr.mxu0 0.0
    %70 = vmatpush1.msra.mxu0 %v45
    %71 = vmatprep.subr.mxu0 0.0
    %72 = vmatpush1.msra.mxu0 %v46
    %73 = vmatprep.subr.mxu0 0.0
    %74 = vmatpush1.msra.mxu0 %v47
    %75 = vmatprep.subr.mxu0 0.0
    %76 = vmatpush1.msra.mxu0 %v48
    %77 = vmatprep.subr.mxu0 0.0
    %78 = vmatpush1.msra.mxu0 %v49
    %79 = vmatprep.subr.mxu0 0.0
    %80 = vmatpush1.msra.mxu0 %v50
    %81 = vmatprep.subr.mxu0 0.0
    %82 = vmatpush1.msra.mxu0 %v51
    %83 = vmatprep.subr.mxu0 0.0
    %84 = vmatpush1.msra.mxu0 %v52
    %85 = vmatprep.subr.mxu0 0.0
    %86 = vmatpush1.msra.mxu0 0.0
    %87 = vmatprep.subr.mxu0 0.0
    %88 = vmatpush1.msra.mxu0 0.0
    %89 = vmatprep.subr.mxu0 0.0
    %90 = vmatpush1.msra.mxu0 0.0
    %91 = vmatprep.subr.mxu0 0.0
    %92 = vmatpush1.msra.mxu0 0.0
    %93 = vmatprep.subr.mxu0 0.0
    %94 = vmatpush1.msra.mxu0 0.0
    %95 = vmatprep.subr.mxu0 0.0
    %96 = vmatpush1.msra.mxu0 0.0
    %97 = vmatprep.subr.mxu0 0.0
    %98 = vmatpush1.msra.mxu0 0.0
    %99 = vmatprep.subr.mxu0 0.0
    %100 = vmatpush1.msra.mxu0 0.0
    %101 = vmatprep.subr.mxu0 0.0
    %102 = vmatpush1.msra.mxu0 0.0
    %103 = vmatprep.subr.mxu0 0.0
    %104 = vmatpush1.msra.mxu0 0.0
    %105 = vmatprep.subr.mxu0 0.0
    %106 = vmatpush1.msra.mxu0 0.0
    %107 = vmatprep.subr.mxu0 0.0
    %108 = vmatpush1.msra.mxu0 0.0
    %109 = vmatprep.subr.mxu0 0.0
    %110 = vmatpush1.msra.mxu0 0.0
    %111 = vmatprep.subr.mxu0 0.0
    %112 = vmatpush1.msra.mxu0 0.0
    %113 = vmatprep.subr.mxu0 0.0
    %114 = vmatpush1.msra.mxu0 0.0
    %115 = vmatprep.subr.mxu0 0.0
    %116 = vmatpush1.msra.mxu0 0.0
    %117 = vmatprep.mubr.f32.mxu0 0.0
    %118 = vmatmul.mubr.f32.gmra.mrb[0].mxu0 %v21
    %v119 = vpop.f32.mrb[0].mxu0
    %v120 = vadd.f32 0.0, %v119
    %v121 = vpop.f32.mrb[0].mxu0
    %122 = vmatprep.mubr.f32.mxu0 0.0
    %123 = vmatmul.mubr.f32.gmra.mrb[0].mxu0 %v22
    %v124 = vpop.f32.mrb[0].mxu0
    %v125 = vadd.f32 0.0, %v124
    %v126 = vpop.f32.mrb[0].mxu0
    %127 = vmatprep.mubr.f32.mxu0 0.0
    %128 = vmatmul.mubr.f32.gmra.mrb[0].mxu0 %v23
    %v129 = vpop.f32.mrb[0].mxu0
    %v130 = vadd.f32 0.0, %v129
    %v131 = vpop.f32.mrb[0].mxu0
    %132 = vmatprep.mubr.f32.mxu0 0.0
    %133 = vmatmul.mubr.f32.gmra.mrb[0].mxu0 %v24
    %v134 = vpop.f32.mrb[0].mxu0
    %v135 = vadd.f32 0.0, %v134
    %v136 = vpop.f32.mrb[0].mxu0
    %137 = vmatprep.mubr.f32.mxu0 0.0
    %138 = vmatmul.mubr.f32.gmra.mrb[0].mxu0 %v25
    %v139 = vpop.f32.mrb[0].mxu0
    %v140 = vadd.f32 0.0, %v139
    %v141 = vpop.f32.mrb[0].mxu0
    %142 = vmatprep.mubr.f32.mxu0 0.0
    %143 = vmatmul.mubr.f32.gmra.mrb[0].mxu0 %v26
    %v144 = vpop.f32.mrb[0].mxu0
    %v145 = vadd.f32 0.0, %v144
    %v146 = vpop.f32.mrb[0].mxu0
    %147 = vmatprep.mubr.f32.mxu0 0.0
    %148 = vmatmul.mubr.f32.gmra.mrb[0].mxu0 %v27
    %v149 = vpop.f32.mrb[0].mxu0
    %v150 = vadd.f32 0.0, %v149
    %v151 = vpop.f32.mrb[0].mxu0
    %152 = vmatprep.mubr.f32.mxu0 0.0
    %153 = vmatmul.mubr.f32.gmra.mrb[0].mxu0 %v28
    %v154 = vpop.f32.mrb[0].mxu0
    %v155 = vadd.f32 0.0, %v154
    %v156 = vpop.f32.mrb[0].mxu0
    %157 = vmatprep.mubr.f32.mxu0 0.0
    %158 = vmatmul.mubr.f32.gmra.mrb[0].mxu0 %v29
    %v159 = vpop.f32.mrb[0].mxu0
    %v160 = vadd.f32 0.0, %v159
    %v161 = vpop.f32.mrb[0].mxu0
    %162 = vmatprep.mubr.f32.mxu0 0.0
    %163 = vmatmul.mubr.f32.gmra.mrb[0].mxu0 %v30
    %v164 = vpop.f32.mrb[0].mxu0
    %v165 = vadd.f32 0.0, %v164
    %v166 = vpop.f32.mrb[0].mxu0
    %167 = vmatprep.mubr.f32.mxu0 0.0
    %168 = vmatmul.mubr.f32.gmra.mrb[0].mxu0 %v31
    %v169 = vpop.f32.mrb[0].mxu0
    %v170 = vadd.f32 0.0, %v169
    %v171 = vpop.f32.mrb[0].mxu0
    %172 = vmatprep.mubr.f32.mxu0 0.0
    %173 = vmatmul.mubr.f32.gmra.mrb[0].mxu0 %v32
    %v174 = vpop.f32.mrb[0].mxu0
    %v175 = vadd.f32 0.0, %v174
    %v176 = vpop.f32.mrb[0].mxu0
    %177 = vmatprep.mubr.f32.mxu0 0.0
    %178 = vmatmul.mubr.f32.gmra.mrb[0].mxu0 %v33
    %v179 = vpop.f32.mrb[0].mxu0
    %v180 = vadd.f32 0.0, %v179
    %v181 = vpop.f32.mrb[0].mxu0
    %182 = vmatprep.mubr.f32.mxu0 0.0
    %183 = vmatmul.mubr.f32.gmra.mrb[0].mxu0 %v34
    %v184 = vpop.f32.mrb[0].mxu0
    %v185 = vadd.f32 0.0, %v184
    %v186 = vpop.f32.mrb[0].mxu0
    %187 = vmatprep.mubr.f32.mxu0 0.0
    %188 = vmatmul.mubr.f32.gmra.mrb[0].mxu0 %v35
    %v189 = vpop.f32.mrb[0].mxu0
    %v190 = vadd.f32 0.0, %v189
    %v191 = vpop.f32.mrb[0].mxu0
    %192 = vmatprep.mubr.f32.mxu0 0.0
    %193 = vmatmul.mubr.f32.gmra.mrb[0].mxu0 %v36
    %v194 = vpop.f32.mrb[0].mxu0
    %v195 = vadd.f32 0.0, %v194
    %v196 = vpop.f32.mrb[0].mxu0
    %197 = vdwg.mxu0
    %v198 = vld [vmem:[%s4] sm:$0x1]
    %v199 = vlaneseq
    %v200 = vshrl.u32 %v199, 7
    %v201 = vsub.s32 0, %v200
    %v202 = vrot.slane %v198, %v201
    %v203 = vmul.f32 %v120, %v202
    %v204 = vmul.f32 %v125, %v202
    %v205 = vmul.f32 %v130, %v202
    %v206 = vmul.f32 %v135, %v202
    %v207 = vmul.f32 %v140, %v202
    %v208 = vmul.f32 %v145, %v202
    %v209 = vmul.f32 %v150, %v202
    %v210 = vmul.f32 %v155, %v202
    %v211 = vmul.f32 %v160, %v202
    %v212 = vmul.f32 %v165, %v202
    %v213 = vmul.f32 %v170, %v202
    %v214 = vmul.f32 %v175, %v202
    %v215 = vmul.f32 %v180, %v202
    %v216 = vmul.f32 %v185, %v202
    %v217 = vmul.f32 %v190, %v202
    %v218 = vmul.f32 %v195, %v202
    %v219 = vld [vmem:[%s4 + $0x1] sm:$0x1]
    %v220 = vlaneseq
    %v221 = vshrl.u32 %v220, 7
    %v222 = vsub.s32 0, %v221
    %v223 = vrot.slane %v219, %v222
    %v224 = vadd.f32 %v203, %v223
    %v225 = vadd.f32 %v204, %v223
    %v226 = vadd.f32 %v205, %v223
    %v227 = vadd.f32 %v206, %v223
    %v228 = vadd.f32 %v207, %v223
    %v229 = vadd.f32 %v208, %v223
    %v230 = vadd.f32 %v209, %v223
    %v231 = vadd.f32 %v210, %v223
    %v232 = vadd.f32 %v211, %v223
    %v233 = vadd.f32 %v212, %v223
    %v234 = vadd.f32 %v213, %v223
    %v235 = vadd.f32 %v214, %v223
    %v236 = vadd.f32 %v215, %v223
    %v237 = vadd.f32 %v216, %v223
    %v238 = vadd.f32 %v217, %v223
    %v239 = vadd.f32 %v218, %v223
    %v240 = vmax.f32 %v224, 0.0
    %v241 = vmax.f32 %v225, 0.0
    %v242 = vmax.f32 %v226, 0.0
    %v243 = vmax.f32 %v227, 0.0
    %v244 = vmax.f32 %v228, 0.0
    %v245 = vmax.f32 %v229, 0.0
    %v246 = vmax.f32 %v230, 0.0
    %v247 = vmax.f32 %v231, 0.0
    %v248 = vmax.f32 %v232, 0.0
    %v249 = vmax.f32 %v233, 0.0
    %v250 = vmax.f32 %v234, 0.0
    %v251 = vmax.f32 %v235, 0.0
    %v252 = vmax.f32 %v236, 0.0
    %v253 = vmax.f32 %v237, 0.0
    %v254 = vmax.f32 %v238, 0.0
    %v255 = vmax.f32 %v239, 0.0
    %v256 = vld [vmem:[%s3] sm:$0xff]
    %v257 = vld [vmem:[%s3 + $0x8] sm:$0x1]
    %v258 = vld [vmem:[%s1] sm:$0xff]
    %v259 = vld [vmem:[%s1 + $0x8] sm:$0xff]
    %v260 = vld [vmem:[%s1 + $0x10] sm:$0xff]
    %v261 = vld [vmem:[%s1 + $0x18] sm:$0xff]
    %v262 = vld [vmem:[%s1 + $0x20] sm:$0xff]
    %v263 = vld [vmem:[%s1 + $0x28] sm:$0xff]
    %v264 = vld [vmem:[%s1 + $0x30] sm:$0xff]
    %v265 = vld [vmem:[%s1 + $0x38] sm:$0xff]
    %v266 = vld [vmem:[%s1 + $0x40] sm:$0xff]
    %v267 = vld [vmem:[%s1 + $0x48] sm:$0xff]
    %v268 = vld [vmem:[%s1 + $0x50] sm:$0xff]
    %v269 = vld [vmem:[%s1 + $0x58] sm:$0xff]
    %v270 = vld [vmem:[%s1 + $0x60] sm:$0xff]
    %v271 = vld [vmem:[%s1 + $0x68] sm:$0xff]
    %v272 = vld [vmem:[%s1 + $0x70] sm:$0xff]
    %v273 = vld [vmem:[%s1 + $0x78] sm:$0xff]
    %274 = vmatprep.subr.mxu0 0.0
    %275 = vmatpush1.msra.mxu0 %v240
    %276 = vmatprep.subr.mxu0 0.0
    %277 = vmatpush1.msra.mxu0 %v241
    %278 = vmatprep.subr.mxu0 0.0
    %279 = vmatpush1.msra.mxu0 %v242
    %280 = vmatprep.subr.mxu0 0.0
    %281 = vmatpush1.msra.mxu0 %v243
    %282 = vmatprep.subr.mxu0 0.0
    %283 = vmatpush1.msra.mxu0 %v244
    %284 = vmatprep.subr.mxu0 0.0
    %285 = vmatpush1.msra.mxu0 %v245
    %286 = vmatprep.subr.mxu0 0.0
    %287 = vmatpush1.msra.mxu0 %v246
    %288 = vmatprep.subr.mxu0 0.0
    %289 = vmatpush1.msra.mxu0 %v247
    %290 = vmatprep.subr.mxu0 0.0
    %291 = vmatpush1.msra.mxu0 %v248
    %292 = vmatprep.subr.mxu0 0.0
    %293 = vmatpush1.msra.mxu0 %v249
    %294 = vmatprep.subr.mxu0 0.0
    %295 = vmatpush1.msra.mxu0 %v250
    %296 = vmatprep.subr.mxu0 0.0
    %297 = vmatpush1.msra.mxu0 %v251
    %298 = vmatprep.subr.mxu0 0.0
    %299 = vmatpush1.msra.mxu0 %v252
    %300 = vmatprep.subr.mxu0 0.0
    %301 = vmatpush1.msra.mxu0 %v253
    %302 = vmatprep.subr.mxu0 0.0
    %303 = vmatpush1.msra.mxu0 %v254
    %304 = vmatprep.subr.mxu0 0.0
    %305 = vmatpush1.msra.mxu0 %v255
    %306 = vmatprep.subr.mxu0 0.0
    %307 = vmatpush1.msra.mxu0 0.0
    %308 = vmatprep.subr.mxu0 0.0
    %309 = vmatpush1.msra.mxu0 0.0
    %310 = vmatprep.subr.mxu0 0.0
    %311 = vmatpush1.msra.mxu0 0.0
    %312 = vmatprep.subr.mxu0 0.0
    %313 = vmatpush1.msra.mxu0 0.0
    %314 = vmatprep.subr.mxu0 0.0
    %315 = vmatpush1.msra.mxu0 0.0
    %316 = vmatprep.subr.mxu0 0.0
    %317 = vmatpush1.msra.mxu0 0.0
    %318 = vmatprep.subr.mxu0 0.0
    %319 = vmatpush1.msra.mxu0 0.0
    %320 = vmatprep.subr.mxu0 0.0
    %321 = vmatpush1.msra.mxu0 0.0
    %322 = vmatprep.subr.mxu0 0.0
    %323 = vmatpush1.msra.mxu0 0.0
    %324 = vmatprep.subr.mxu0 0.0
    %325 = vmatpush1.msra.mxu0 0.0
    %326 = vmatprep.subr.mxu0 0.0
    %327 = vmatpush1.msra.mxu0 0.0
    %328 = vmatprep.subr.mxu0 0.0
    %329 = vmatpush1.msra.mxu0 0.0
    %330 = vmatprep.subr.mxu0 0.0
    %331 = vmatpush1.msra.mxu0 0.0
    %332 = vmatprep.subr.mxu0 0.0
    %333 = vmatpush1.msra.mxu0 0.0
    %334 = vmatprep.subr.mxu0 0.0
    %335 = vmatpush1.msra.mxu0 0.0
    %336 = vmatprep.subr.mxu0 0.0
    %337 = vmatpush1.msra.mxu0 0.0
    %338 = vmatprep.mubr.f32.mxu0 0.0
    %339 = vmatmul.mubr.f32.gmra.mrb[0].mxu0 %v258
    %v340 = vpop.f32.mrb[0].mxu0
    %v341 = vadd.f32 0.0, %v340
    %v342 = vpop.f32.mrb[0].mxu0
    %343 = vmatprep.mubr.f32.mxu0 0.0
    %344 = vmatmul.mubr.f32.gmra.mrb[0].mxu0 %v259
    %v345 = vpop.f32.mrb[0].mxu0
    %v346 = vadd.f32 0.0, %v345
    %v347 = vpop.f32.mrb[0].mxu0
    %348 = vmatprep.mubr.f32.mxu0 0.0
    %349 = vmatmul.mubr.f32.gmra.mrb[0].mxu0 %v260
    %v350 = vpop.f32.mrb[0].mxu0
    %v351 = vadd.f32 0.0, %v350
    %v352 = vpop.f32.mrb[0].mxu0
    %353 = vmatprep.mubr.f32.mxu0 0.0
    %354 = vmatmul.mubr.f32.gmra.mrb[0].mxu0 %v261
    %v355 = vpop.f32.mrb[0].mxu0
    %v356 = vadd.f32 0.0, %v355
    %v357 = vpop.f32.mrb[0].mxu0
    %358 = vmatprep.mubr.f32.mxu0 0.0
    %359 = vmatmul.mubr.f32.gmra.mrb[0].mxu0 %v262
    %v360 = vpop.f32.mrb[0].mxu0
    %v361 = vadd.f32 0.0, %v360
    %v362 = vpop.f32.mrb[0].mxu0
    %363 = vmatprep.mubr.f32.mxu0 0.0
    %364 = vmatmul.mubr.f32.gmra.mrb[0].mxu0 %v263
    %v365 = vpop.f32.mrb[0].mxu0
    %v366 = vadd.f32 0.0, %v365
    %v367 = vpop.f32.mrb[0].mxu0
    %368 = vmatprep.mubr.f32.mxu0 0.0
    %369 = vmatmul.mubr.f32.gmra.mrb[0].mxu0 %v264
    %v370 = vpop.f32.mrb[0].mxu0
    %v371 = vadd.f32 0.0, %v370
    %v372 = vpop.f32.mrb[0].mxu0
    %373 = vmatprep.mubr.f32.mxu0 0.0
    %374 = vmatmul.mubr.f32.gmra.mrb[0].mxu0 %v265
    %v375 = vpop.f32.mrb[0].mxu0
    %v376 = vadd.f32 0.0, %v375
    %v377 = vpop.f32.mrb[0].mxu0
    %378 = vmatprep.mubr.f32.mxu0 0.0
    %379 = vmatmul.mubr.f32.gmra.mrb[0].mxu0 %v266
    %v380 = vpop.f32.mrb[0].mxu0
    %v381 = vadd.f32 0.0, %v380
    %v382 = vpop.f32.mrb[0].mxu0
    %383 = vmatprep.mubr.f32.mxu0 0.0
    %384 = vmatmul.mubr.f32.gmra.mrb[0].mxu0 %v267
    %v385 = vpop.f32.mrb[0].mxu0
    %v386 = vadd.f32 0.0, %v385
    %v387 = vpop.f32.mrb[0].mxu0
    %388 = vmatprep.mubr.f32.mxu0 0.0
    %389 = vmatmul.mubr.f32.gmra.mrb[0].mxu0 %v268
    %v390 = vpop.f32.mrb[0].mxu0
    %v391 = vadd.f32 0.0, %v390
    %v392 = vpop.f32.mrb[0].mxu0
    %393 = vmatprep.mubr.f32.mxu0 0.0
    %394 = vmatmul.mubr.f32.gmra.mrb[0].mxu0 %v269
    %v395 = vpop.f32.mrb[0].mxu0
    %v396 = vadd.f32 0.0, %v395
    %v397 = vpop.f32.mrb[0].mxu0
    %398 = vmatprep.mubr.f32.mxu0 0.0
    %399 = vmatmul.mubr.f32.gmra.mrb[0].mxu0 %v270
    %v400 = vpop.f32.mrb[0].mxu0
    %v401 = vadd.f32 0.0, %v400
    %v402 = vpop.f32.mrb[0].mxu0
    %403 = vmatprep.mubr.f32.mxu0 0.0
    %404 = vmatmul.mubr.f32.gmra.mrb[0].mxu0 %v271
    %v405 = vpop.f32.mrb[0].mxu0
    %v406 = vadd.f32 0.0, %v405
    %v407 = vpop.f32.mrb[0].mxu0
    %408 = vmatprep.mubr.f32.mxu0 0.0
    %409 = vmatmul.mubr.f32.gmra.mrb[0].mxu0 %v272
    %v410 = vpop.f32.mrb[0].mxu0
    %v411 = vadd.f32 0.0, %v410
    %v412 = vpop.f32.mrb[0].mxu0
    %413 = vmatprep.mubr.f32.mxu0 0.0
    %414 = vmatmul.mubr.f32.gmra.mrb[0].mxu0 %v273
    %v415 = vpop.f32.mrb[0].mxu0
    %v416 = vadd.f32 0.0, %v415
    %v417 = vpop.f32.mrb[0].mxu0
    %418 = vdwg.mxu0
    %v419 = vlaneseq
    %v420 = vshrl.u32 %v419, 7
    %v421 = vsub.s32 0, %v420
    %v422 = vrot.slane %v256, %v421
    %v423 = vmul.f32 %v341, %v422
    %v424 = vmul.f32 %v346, %v422
    %v425 = vmul.f32 %v351, %v422
    %v426 = vmul.f32 %v356, %v422
    %v427 = vmul.f32 %v361, %v422
    %v428 = vmul.f32 %v366, %v422
    %v429 = vmul.f32 %v371, %v422
    %v430 = vmul.f32 %v376, %v422
    %v431 = vmul.f32 %v381, %v422
    %v432 = vmul.f32 %v386, %v422
    %v433 = vmul.f32 %v391, %v422
    %v434 = vmul.f32 %v396, %v422
    %v435 = vmul.f32 %v401, %v422
    %v436 = vmul.f32 %v406, %v422
    %v437 = vmul.f32 %v411, %v422
    %v438 = vmul.f32 %v416, %v422
    %v439 = vadd.f32 %v423, 0.0
    %v440 = vadd.f32 %v424, 0.0
    %v441 = vadd.f32 %v425, 0.0
    %v442 = vadd.f32 %v426, 0.0
    %v443 = vadd.f32 %v427, 0.0
    %v444 = vadd.f32 %v428, 0.0
    %v445 = vadd.f32 %v429, 0.0
    %v446 = vadd.f32 %v430, 0.0
    %v447 = vadd.f32 %v431, 0.0
    %v448 = vadd.f32 %v432, 0.0
    %v449 = vadd.f32 %v433, 0.0
    %v450 = vadd.f32 %v434, 0.0
    %v451 = vadd.f32 %v435, 0.0
    %v452 = vadd.f32 %v436, 0.0
    %v453 = vadd.f32 %v437, 0.0
    %v454 = vadd.f32 %v438, 0.0
    %s455 = scalar_lea.vmem %s1, 128
    %v456 = vld [vmem:[%s455] sm:$0xff]
    %v457 = vld [vmem:[%s455 + $0x8] sm:$0xff]
    %v458 = vld [vmem:[%s455 + $0x10] sm:$0xff]
    %v459 = vld [vmem:[%s455 + $0x18] sm:$0xff]
    %v460 = vld [vmem:[%s455 + $0x20] sm:$0xff]
    %v461 = vld [vmem:[%s455 + $0x28] sm:$0xff]
    %v462 = vld [vmem:[%s455 + $0x30] sm:$0xff]
    %v463 = vld [vmem:[%s455 + $0x38] sm:$0xff]
    %v464 = vld [vmem:[%s455 + $0x40] sm:$0xff]
    %v465 = vld [vmem:[%s455 + $0x48] sm:$0xff]
    %v466 = vld [vmem:[%s455 + $0x50] sm:$0xff]
    %v467 = vld [vmem:[%s455 + $0x58] sm:$0xff]
    %v468 = vld [vmem:[%s455 + $0x60] sm:$0xff]
    %v469 = vld [vmem:[%s455 + $0x68] sm:$0xff]
    %v470 = vld [vmem:[%s455 + $0x70] sm:$0xff]
    %v471 = vld [vmem:[%s455 + $0x78] sm:$0xff]
    %472 = vmatprep.subr.mxu0 0.0
    %473 = vmatpush1.msra.mxu0 %v240
    %474 = vmatprep.subr.mxu0 0.0
    %475 = vmatpush1.msra.mxu0 %v241
    %476 = vmatprep.subr.mxu0 0.0
    %477 = vmatpush1.msra.mxu0 %v242
    %478 = vmatprep.subr.mxu0 0.0
    %479 = vmatpush1.msra.mxu0 %v243
    %480 = vmatprep.subr.mxu0 0.0
    %481 = vmatpush1.msra.mxu0 %v244
    %482 = vmatprep.subr.mxu0 0.0
    %483 = vmatpush1.msra.mxu0 %v245
    %484 = vmatprep.subr.mxu0 0.0
    %485 = vmatpush1.msra.mxu0 %v246
    %486 = vmatprep.subr.mxu0 0.0
    %487 = vmatpush1.msra.mxu0 %v247
    %488 = vmatprep.subr.mxu0 0.0
    %489 = vmatpush1.msra.mxu0 %v248
    %490 = vmatprep.subr.mxu0 0.0
    %491 = vmatpush1.msra.mxu0 %v249
    %492 = vmatprep.subr.mxu0 0.0
    %493 = vmatpush1.msra.mxu0 %v250
    %494 = vmatprep.subr.mxu0 0.0
    %495 = vmatpush1.msra.mxu0 %v251
    %496 = vmatprep.subr.mxu0 0.0
    %497 = vmatpush1.msra.mxu0 %v252
    %498 = vmatprep.subr.mxu0 0.0
    %499 = vmatpush1.msra.mxu0 %v253
    %500 = vmatprep.subr.mxu0 0.0
    %501 = vmatpush1.msra.mxu0 %v254
    %502 = vmatprep.subr.mxu0 0.0
    %503 = vmatpush1.msra.mxu0 %v255
    %504 = vmatprep.subr.mxu0 0.0
    %505 = vmatpush1.msra.mxu0 0.0
    %506 = vmatprep.subr.mxu0 0.0
    %507 = vmatpush1.msra.mxu0 0.0
    %508 = vmatprep.subr.mxu0 0.0
    %509 = vmatpush1.msra.mxu0 0.0
    %510 = vmatprep.subr.mxu0 0.0
    %511 = vmatpush1.msra.mxu0 0.0
    %512 = vmatprep.subr.mxu0 0.0
    %513 = vmatpush1.msra.mxu0 0.0
    %514 = vmatprep.subr.mxu0 0.0
    %515 = vmatpush1.msra.mxu0 0.0
    %516 = vmatprep.subr.mxu0 0.0
    %517 = vmatpush1.msra.mxu0 0.0
    %518 = vmatprep.subr.mxu0 0.0
    %519 = vmatpush1.msra.mxu0 0.0
    %520 = vmatprep.subr.mxu0 0.0
    %521 = vmatpush1.msra.mxu0 0.0
    %522 = vmatprep.subr.mxu0 0.0
    %523 = vmatpush1.msra.mxu0 0.0
    %524 = vmatprep.subr.mxu0 0.0
    %525 = vmatpush1.msra.mxu0 0.0
    %526 = vmatprep.subr.mxu0 0.0
    %527 = vmatpush1.msra.mxu0 0.0
    %528 = vmatprep.subr.mxu0 0.0
    %529 = vmatpush1.msra.mxu0 0.0
    %530 = vmatprep.subr.mxu0 0.0
    %531 = vmatpush1.msra.mxu0 0.0
    %532 = vmatprep.subr.mxu0 0.0
    %533 = vmatpush1.msra.mxu0 0.0
    %534 = vmatprep.subr.mxu0 0.0
    %535 = vmatpush1.msra.mxu0 0.0
    %536 = vmatprep.mubr.f32.mxu0 0.0
    %537 = vmatmul.mubr.f32.gmra.mrb[0].mxu0 %v456
    %v538 = vpop.f32.mrb[0].mxu0
    %v539 = vadd.f32 0.0, %v538
    %v540 = vpop.f32.mrb[0].mxu0
    %541 = vmatprep.mubr.f32.mxu0 0.0
    %542 = vmatmul.mubr.f32.gmra.mrb[0].mxu0 %v457
    %v543 = vpop.f32.mrb[0].mxu0
    %v544 = vadd.f32 0.0, %v543
    %v545 = vpop.f32.mrb[0].mxu0
    %546 = vmatprep.mubr.f32.mxu0 0.0
    %547 = vmatmul.mubr.f32.gmra.mrb[0].mxu0 %v458
    %v548 = vpop.f32.mrb[0].mxu0
    %v549 = vadd.f32 0.0, %v548
    %v550 = vpop.f32.mrb[0].mxu0
    %551 = vmatprep.mubr.f32.mxu0 0.0
    %552 = vmatmul.mubr.f32.gmra.mrb[0].mxu0 %v459
    %v553 = vpop.f32.mrb[0].mxu0
    %v554 = vadd.f32 0.0, %v553
    %v555 = vpop.f32.mrb[0].mxu0
    %556 = vmatprep.mubr.f32.mxu0 0.0
    %557 = vmatmul.mubr.f32.gmra.mrb[0].mxu0 %v460
    %v558 = vpop.f32.mrb[0].mxu0
    %v559 = vadd.f32 0.0, %v558
    %v560 = vpop.f32.mrb[0].mxu0
    %561 = vmatprep.mubr.f32.mxu0 0.0
    %562 = vmatmul.mubr.f32.gmra.mrb[0].mxu0 %v461
    %v563 = vpop.f32.mrb[0].mxu0
    %v564 = vadd.f32 0.0, %v563
    %v565 = vpop.f32.mrb[0].mxu0
    %566 = vmatprep.mubr.f32.mxu0 0.0
    %567 = vmatmul.mubr.f32.gmra.mrb[0].mxu0 %v462
    %v568 = vpop.f32.mrb[0].mxu0
    %v569 = vadd.f32 0.0, %v568
    %v570 = vpop.f32.mrb[0].mxu0
    %571 = vmatprep.mubr.f32.mxu0 0.0
    %572 = vmatmul.mubr.f32.gmra.mrb[0].mxu0 %v463
    %v573 = vpop.f32.mrb[0].mxu0
    %v574 = vadd.f32 0.0, %v573
    %v575 = vpop.f32.mrb[0].mxu0
    %576 = vmatprep.mubr.f32.mxu0 0.0
    %577 = vmatmul.mubr.f32.gmra.mrb[0].mxu0 %v464
    %v578 = vpop.f32.mrb[0].mxu0
    %v579 = vadd.f32 0.0, %v578
    %v580 = vpop.f32.mrb[0].mxu0
    %581 = vmatprep.mubr.f32.mxu0 0.0
    %582 = vmatmul.mubr.f32.gmra.mrb[0].mxu0 %v465
    %v583 = vpop.f32.mrb[0].mxu0
    %v584 = vadd.f32 0.0, %v583
    %v585 = vpop.f32.mrb[0].mxu0
    %586 = vmatprep.mubr.f32.mxu0 0.0
    %587 = vmatmul.mubr.f32.gmra.mrb[0].mxu0 %v466
    %v588 = vpop.f32.mrb[0].mxu0
    %v589 = vadd.f32 0.0, %v588
    %v590 = vpop.f32.mrb[0].mxu0
    %591 = vmatprep.mubr.f32.mxu0 0.0
    %592 = vmatmul.mubr.f32.gmra.mrb[0].mxu0 %v467
    %v593 = vpop.f32.mrb[0].mxu0
    %v594 = vadd.f32 0.0, %v593
    %v595 = vpop.f32.mrb[0].mxu0
    %596 = vmatprep.mubr.f32.mxu0 0.0
    %597 = vmatmul.mubr.f32.gmra.mrb[0].mxu0 %v468
    %v598 = vpop.f32.mrb[0].mxu0
    %v599 = vadd.f32 0.0, %v598
    %v600 = vpop.f32.mrb[0].mxu0
    %601 = vmatprep.mubr.f32.mxu0 0.0
    %602 = vmatmul.mubr.f32.gmra.mrb[0].mxu0 %v469
    %v603 = vpop.f32.mrb[0].mxu0
    %v604 = vadd.f32 0.0, %v603
    %v605 = vpop.f32.mrb[0].mxu0
    %606 = vmatprep.mubr.f32.mxu0 0.0
    %607 = vmatmul.mubr.f32.gmra.mrb[0].mxu0 %v470
    %v608 = vpop.f32.mrb[0].mxu0
    %v609 = vadd.f32 0.0, %v608
    %v610 = vpop.f32.mrb[0].mxu0
    %611 = vmatprep.mubr.f32.mxu0 0.0
    %612 = vmatmul.mubr.f32.gmra.mrb[0].mxu0 %v471
    %v613 = vpop.f32.mrb[0].mxu0
    %v614 = vadd.f32 0.0, %v613
    %v615 = vpop.f32.mrb[0].mxu0
    %616 = vdwg.mxu0
    %v617 = vlaneseq
    %v618 = vshrl.u32 %v617, 7
    %v619 = vsub.s32 1, %v618
    %v620 = vrot.slane %v256, %v619
    %v621 = vmul.f32 %v539, %v620
    %v622 = vmul.f32 %v544, %v620
    %v623 = vmul.f32 %v549, %v620
    %v624 = vmul.f32 %v554, %v620
    %v625 = vmul.f32 %v559, %v620
    %v626 = vmul.f32 %v564, %v620
    %v627 = vmul.f32 %v569, %v620
    %v628 = vmul.f32 %v574, %v620
    %v629 = vmul.f32 %v579, %v620
    %v630 = vmul.f32 %v584, %v620
    %v631 = vmul.f32 %v589, %v620
    %v632 = vmul.f32 %v594, %v620
    %v633 = vmul.f32 %v599, %v620
    %v634 = vmul.f32 %v604, %v620
    %v635 = vmul.f32 %v609, %v620
    %v636 = vmul.f32 %v614, %v620
    %v637 = vadd.f32 %v439, %v621
    %v638 = vadd.f32 %v440, %v622
    %v639 = vadd.f32 %v441, %v623
    %v640 = vadd.f32 %v442, %v624
    %v641 = vadd.f32 %v443, %v625
    %v642 = vadd.f32 %v444, %v626
    %v643 = vadd.f32 %v445, %v627
    %v644 = vadd.f32 %v446, %v628
    %v645 = vadd.f32 %v447, %v629
    %v646 = vadd.f32 %v448, %v630
    %v647 = vadd.f32 %v449, %v631
    %v648 = vadd.f32 %v450, %v632
    %v649 = vadd.f32 %v451, %v633
    %v650 = vadd.f32 %v452, %v634
    %v651 = vadd.f32 %v453, %v635
    %v652 = vadd.f32 %v454, %v636
    %s653 = scalar_lea.vmem %s1, 256
    %v654 = vld [vmem:[%s653] sm:$0xff]
    %v655 = vld [vmem:[%s653 + $0x8] sm:$0xff]
    %v656 = vld [vmem:[%s653 + $0x10] sm:$0xff]
    %v657 = vld [vmem:[%s653 + $0x18] sm:$0xff]
    %v658 = vld [vmem:[%s653 + $0x20] sm:$0xff]
    %v659 = vld [vmem:[%s653 + $0x28] sm:$0xff]
    %v660 = vld [vmem:[%s653 + $0x30] sm:$0xff]
    %v661 = vld [vmem:[%s653 + $0x38] sm:$0xff]
    %v662 = vld [vmem:[%s653 + $0x40] sm:$0xff]
    %v663 = vld [vmem:[%s653 + $0x48] sm:$0xff]
    %v664 = vld [vmem:[%s653 + $0x50] sm:$0xff]
    %v665 = vld [vmem:[%s653 + $0x58] sm:$0xff]
    %v666 = vld [vmem:[%s653 + $0x60] sm:$0xff]
    %v667 = vld [vmem:[%s653 + $0x68] sm:$0xff]
    %v668 = vld [vmem:[%s653 + $0x70] sm:$0xff]
    %v669 = vld [vmem:[%s653 + $0x78] sm:$0xff]
    %670 = vmatprep.subr.mxu0 0.0
    %671 = vmatpush1.msra.mxu0 %v240
    %672 = vmatprep.subr.mxu0 0.0
    %673 = vmatpush1.msra.mxu0 %v241
    %674 = vmatprep.subr.mxu0 0.0
    %675 = vmatpush1.msra.mxu0 %v242
    %676 = vmatprep.subr.mxu0 0.0
    %677 = vmatpush1.msra.mxu0 %v243
    %678 = vmatprep.subr.mxu0 0.0
    %679 = vmatpush1.msra.mxu0 %v244
    %680 = vmatprep.subr.mxu0 0.0
    %681 = vmatpush1.msra.mxu0 %v245
    %682 = vmatprep.subr.mxu0 0.0
    %683 = vmatpush1.msra.mxu0 %v246
    %684 = vmatprep.subr.mxu0 0.0
    %685 = vmatpush1.msra.mxu0 %v247
    %686 = vmatprep.subr.mxu0 0.0
    %687 = vmatpush1.msra.mxu0 %v248
    %688 = vmatprep.subr.mxu0 0.0
    %689 = vmatpush1.msra.mxu0 %v249
    %690 = vmatprep.subr.mxu0 0.0
    %691 = vmatpush1.msra.mxu0 %v250
    %692 = vmatprep.subr.mxu0 0.0
    %693 = vmatpush1.msra.mxu0 %v251
    %694 = vmatprep.subr.mxu0 0.0
    %695 = vmatpush1.msra.mxu0 %v252
    %696 = vmatprep.subr.mxu0 0.0
    %697 = vmatpush1.msra.mxu0 %v253
    %698 = vmatprep.subr.mxu0 0.0
    %699 = vmatpush1.msra.mxu0 %v254
    %700 = vmatprep.subr.mxu0 0.0
    %701 = vmatpush1.msra.mxu0 %v255
    %702 = vmatprep.subr.mxu0 0.0
    %703 = vmatpush1.msra.mxu0 0.0
    %704 = vmatprep.subr.mxu0 0.0
    %705 = vmatpush1.msra.mxu0 0.0
    %706 = vmatprep.subr.mxu0 0.0
    %707 = vmatpush1.msra.mxu0 0.0
    %708 = vmatprep.subr.mxu0 0.0
    %709 = vmatpush1.msra.mxu0 0.0
    %710 = vmatprep.subr.mxu0 0.0
    %711 = vmatpush1.msra.mxu0 0.0
    %712 = vmatprep.subr.mxu0 0.0
    %713 = vmatpush1.msra.mxu0 0.0
    %714 = vmatprep.subr.mxu0 0.0
    %715 = vmatpush1.msra.mxu0 0.0
    %716 = vmatprep.subr.mxu0 0.0
    %717 = vmatpush1.msra.mxu0 0.0
    %718 = vmatprep.subr.mxu0 0.0
    %719 = vmatpush1.msra.mxu0 0.0
    %720 = vmatprep.subr.mxu0 0.0
    %721 = vmatpush1.msra.mxu0 0.0
    %722 = vmatprep.subr.mxu0 0.0
    %723 = vmatpush1.msra.mxu0 0.0
    %724 = vmatprep.subr.mxu0 0.0
    %725 = vmatpush1.msra.mxu0 0.0
    %726 = vmatprep.subr.mxu0 0.0
    %727 = vmatpush1.msra.mxu0 0.0
    %728 = vmatprep.subr.mxu0 0.0
    %729 = vmatpush1.msra.mxu0 0.0
    %730 = vmatprep.subr.mxu0 0.0
    %731 = vmatpush1.msra.mxu0 0.0
    %732 = vmatprep.subr.mxu0 0.0
    %733 = vmatpush1.msra.mxu0 0.0
    %734 = vmatprep.mubr.f32.mxu0 0.0
    %735 = vmatmul.mubr.f32.gmra.mrb[0].mxu0 %v654
    %v736 = vpop.f32.mrb[0].mxu0
    %v737 = vadd.f32 0.0, %v736
    %v738 = vpop.f32.mrb[0].mxu0
    %739 = vmatprep.mubr.f32.mxu0 0.0
    %740 = vmatmul.mubr.f32.gmra.mrb[0].mxu0 %v655
    %v741 = vpop.f32.mrb[0].mxu0
    %v742 = vadd.f32 0.0, %v741
    %v743 = vpop.f32.mrb[0].mxu0
    %744 = vmatprep.mubr.f32.mxu0 0.0
    %745 = vmatmul.mubr.f32.gmra.mrb[0].mxu0 %v656
    %v746 = vpop.f32.mrb[0].mxu0
    %v747 = vadd.f32 0.0, %v746
    %v748 = vpop.f32.mrb[0].mxu0
    %749 = vmatprep.mubr.f32.mxu0 0.0
    %750 = vmatmul.mubr.f32.gmra.mrb[0].mxu0 %v657
    %v751 = vpop.f32.mrb[0].mxu0
    %v752 = vadd.f32 0.0, %v751
    %v753 = vpop.f32.mrb[0].mxu0
    %754 = vmatprep.mubr.f32.mxu0 0.0
    %755 = vmatmul.mubr.f32.gmra.mrb[0].mxu0 %v658
    %v756 = vpop.f32.mrb[0].mxu0
    %v757 = vadd.f32 0.0, %v756
    %v758 = vpop.f32.mrb[0].mxu0
    %759 = vmatprep.mubr.f32.mxu0 0.0
    %760 = vmatmul.mubr.f32.gmra.mrb[0].mxu0 %v659
    %v761 = vpop.f32.mrb[0].mxu0
    %v762 = vadd.f32 0.0, %v761
    %v763 = vpop.f32.mrb[0].mxu0
    %764 = vmatprep.mubr.f32.mxu0 0.0
    %765 = vmatmul.mubr.f32.gmra.mrb[0].mxu0 %v660
    %v766 = vpop.f32.mrb[0].mxu0
    %v767 = vadd.f32 0.0, %v766
    %v768 = vpop.f32.mrb[0].mxu0
    %769 = vmatprep.mubr.f32.mxu0 0.0
    %770 = vmatmul.mubr.f32.gmra.mrb[0].mxu0 %v661
    %v771 = vpop.f32.mrb[0].mxu0
    %v772 = vadd.f32 0.0, %v771
    %v773 = vpop.f32.mrb[0].mxu0
    %774 = vmatprep.mubr.f32.mxu0 0.0
    %775 = vmatmul.mubr.f32.gmra.mrb[0].mxu0 %v662
    %v776 = vpop.f32.mrb[0].mxu0
    %v777 = vadd.f32 0.0, %v776
    %v778 = vpop.f32.mrb[0].mxu0
    %779 = vmatprep.mubr.f32.mxu0 0.0
    %780 = vmatmul.mubr.f32.gmra.mrb[0].mxu0 %v663
    %v781 = vpop.f32.mrb[0].mxu0
    %v782 = vadd.f32 0.0, %v781
    %v783 = vpop.f32.mrb[0].mxu0
    %784 = vmatprep.mubr.f32.mxu0 0.0
    %785 = vmatmul.mubr.f32.gmra.mrb[0].mxu0 %v664
    %v786 = vpop.f32.mrb[0].mxu0
    %v787 = vadd.f32 0.0, %v786
    %v788 = vpop.f32.mrb[0].mxu0
    %789 = vmatprep.mubr.f32.mxu0 0.0
    %790 = vmatmul.mubr.f32.gmra.mrb[0].mxu0 %v665
    %v791 = vpop.f32.mrb[0].mxu0
    %v792 = vadd.f32 0.0, %v791
    %v793 = vpop.f32.mrb[0].mxu0
    %794 = vmatprep.mubr.f32.mxu0 0.0
    %795 = vmatmul.mubr.f32.gmra.mrb[0].mxu0 %v666
    %v796 = vpop.f32.mrb[0].mxu0
    %v797 = vadd.f32 0.0, %v796
    %v798 = vpop.f32.mrb[0].mxu0
    %799 = vmatprep.mubr.f32.mxu0 0.0
    %800 = vmatmul.mubr.f32.gmra.mrb[0].mxu0 %v667
    %v801 = vpop.f32.mrb[0].mxu0
    %v802 = vadd.f32 0.0, %v801
    %v803 = vpop.f32.mrb[0].mxu0
    %804 = vmatprep.mubr.f32.mxu0 0.0
    %805 = vmatmul.mubr.f32.gmra.mrb[0].mxu0 %v668
    %v806 = vpop.f32.mrb[0].mxu0
    %v807 = vadd.f32 0.0, %v806
    %v808 = vpop.f32.mrb[0].mxu0
    %809 = vmatprep.mubr.f32.mxu0 0.0
    %810 = vmatmul.mubr.f32.gmra.mrb[0].mxu0 %v669
    %v811 = vpop.f32.mrb[0].mxu0
    %v812 = vadd.f32 0.0, %v811
    %v813 = vpop.f32.mrb[0].mxu0
    %814 = vdwg.mxu0
    %v815 = vlaneseq
    %v816 = vshrl.u32 %v815, 7
    %v817 = vsub.s32 2, %v816
    %v818 = vrot.slane %v256, %v817
    %v819 = vmul.f32 %v737, %v818
    %v820 = vmul.f32 %v742, %v818
    %v821 = vmul.f32 %v747, %v818
    %v822 = vmul.f32 %v752, %v818
    %v823 = vmul.f32 %v757, %v818
    %v824 = vmul.f32 %v762, %v818
    %v825 = vmul.f32 %v767, %v818
    %v826 = vmul.f32 %v772, %v818
    %v827 = vmul.f32 %v777, %v818
    %v828 = vmul.f32 %v782, %v818
    %v829 = vmul.f32 %v787, %v818
    %v830 = vmul.f32 %v792, %v818
    %v831 = vmul.f32 %v797, %v818
    %v832 = vmul.f32 %v802, %v818
    %v833 = vmul.f32 %v807, %v818
    %v834 = vmul.f32 %v812, %v818
    %v835 = vadd.f32 %v637, %v819
    %v836 = vadd.f32 %v638, %v820
    %v837 = vadd.f32 %v639, %v821
    %v838 = vadd.f32 %v640, %v822
    %v839 = vadd.f32 %v641, %v823
    %v840 = vadd.f32 %v642, %v824
    %v841 = vadd.f32 %v643, %v825
    %v842 = vadd.f32 %v644, %v826
    %v843 = vadd.f32 %v645, %v827
    %v844 = vadd.f32 %v646, %v828
    %v845 = vadd.f32 %v647, %v829
    %v846 = vadd.f32 %v648, %v830
    %v847 = vadd.f32 %v649, %v831
    %v848 = vadd.f32 %v650, %v832
    %v849 = vadd.f32 %v651, %v833
    %v850 = vadd.f32 %v652, %v834
    %s851 = scalar_lea.vmem %s1, 384
    %v852 = vld [vmem:[%s851] sm:$0xff]
    %v853 = vld [vmem:[%s851 + $0x8] sm:$0xff]
    %v854 = vld [vmem:[%s851 + $0x10] sm:$0xff]
    %v855 = vld [vmem:[%s851 + $0x18] sm:$0xff]
    %v856 = vld [vmem:[%s851 + $0x20] sm:$0xff]
    %v857 = vld [vmem:[%s851 + $0x28] sm:$0xff]
    %v858 = vld [vmem:[%s851 + $0x30] sm:$0xff]
    %v859 = vld [vmem:[%s851 + $0x38] sm:$0xff]
    %v860 = vld [vmem:[%s851 + $0x40] sm:$0xff]
    %v861 = vld [vmem:[%s851 + $0x48] sm:$0xff]
    %v862 = vld [vmem:[%s851 + $0x50] sm:$0xff]
    %v863 = vld [vmem:[%s851 + $0x58] sm:$0xff]
    %v864 = vld [vmem:[%s851 + $0x60] sm:$0xff]
    %v865 = vld [vmem:[%s851 + $0x68] sm:$0xff]
    %v866 = vld [vmem:[%s851 + $0x70] sm:$0xff]
    %v867 = vld [vmem:[%s851 + $0x78] sm:$0xff]
    %868 = vmatprep.subr.mxu0 0.0
    %869 = vmatpush1.msra.mxu0 %v240
    %870 = vmatprep.subr.mxu0 0.0
    %871 = vmatpush1.msra.mxu0 %v241
    %872 = vmatprep.subr.mxu0 0.0
    %873 = vmatpush1.msra.mxu0 %v242
    %874 = vmatprep.subr.mxu0 0.0
    %875 = vmatpush1.msra.mxu0 %v243
    %876 = vmatprep.subr.mxu0 0.0
    %877 = vmatpush1.msra.mxu0 %v244
    %878 = vmatprep.subr.mxu0 0.0
    %879 = vmatpush1.msra.mxu0 %v245
    %880 = vmatprep.subr.mxu0 0.0
    %881 = vmatpush1.msra.mxu0 %v246
    %882 = vmatprep.subr.mxu0 0.0
    %883 = vmatpush1.msra.mxu0 %v247
    %884 = vmatprep.subr.mxu0 0.0
    %885 = vmatpush1.msra.mxu0 %v248
    %886 = vmatprep.subr.mxu0 0.0
    %887 = vmatpush1.msra.mxu0 %v249
    %888 = vmatprep.subr.mxu0 0.0
    %889 = vmatpush1.msra.mxu0 %v250
    %890 = vmatprep.subr.mxu0 0.0
    %891 = vmatpush1.msra.mxu0 %v251
    %892 = vmatprep.subr.mxu0 0.0
    %893 = vmatpush1.msra.mxu0 %v252
    %894 = vmatprep.subr.mxu0 0.0
    %895 = vmatpush1.msra.mxu0 %v253
    %896 = vmatprep.subr.mxu0 0.0
    %897 = vmatpush1.msra.mxu0 %v254
    %898 = vmatprep.subr.mxu0 0.0
    %899 = vmatpush1.msra.mxu0 %v255
    %900 = vmatprep.subr.mxu0 0.0
    %901 = vmatpush1.msra.mxu0 0.0
    %902 = vmatprep.subr.mxu0 0.0
    %903 = vmatpush1.msra.mxu0 0.0
    %904 = vmatprep.subr.mxu0 0.0
    %905 = vmatpush1.msra.mxu0 0.0
    %906 = vmatprep.subr.mxu0 0.0
    %907 = vmatpush1.msra.mxu0 0.0
    %908 = vmatprep.subr.mxu0 0.0
    %909 = vmatpush1.msra.mxu0 0.0
    %910 = vmatprep.subr.mxu0 0.0
    %911 = vmatpush1.msra.mxu0 0.0
    %912 = vmatprep.subr.mxu0 0.0
    %913 = vmatpush1.msra.mxu0 0.0
    %914 = vmatprep.subr.mxu0 0.0
    %915 = vmatpush1.msra.mxu0 0.0
    %916 = vmatprep.subr.mxu0 0.0
    %917 = vmatpush1.msra.mxu0 0.0
    %918 = vmatprep.subr.mxu0 0.0
    %919 = vmatpush1.msra.mxu0 0.0
    %920 = vmatprep.subr.mxu0 0.0
    %921 = vmatpush1.msra.mxu0 0.0
    %922 = vmatprep.subr.mxu0 0.0
    %923 = vmatpush1.msra.mxu0 0.0
    %924 = vmatprep.subr.mxu0 0.0
    %925 = vmatpush1.msra.mxu0 0.0
    %926 = vmatprep.subr.mxu0 0.0
    %927 = vmatpush1.msra.mxu0 0.0
    %928 = vmatprep.subr.mxu0 0.0
    %929 = vmatpush1.msra.mxu0 0.0
    %930 = vmatprep.subr.mxu0 0.0
    %931 = vmatpush1.msra.mxu0 0.0
    %932 = vmatprep.mubr.f32.mxu0 0.0
    %933 = vmatmul.mubr.f32.gmra.mrb[0].mxu0 %v852
    %v934 = vpop.f32.mrb[0].mxu0
    %v935 = vadd.f32 0.0, %v934
    %v936 = vpop.f32.mrb[0].mxu0
    %937 = vmatprep.mubr.f32.mxu0 0.0
    %938 = vmatmul.mubr.f32.gmra.mrb[0].mxu0 %v853
    %v939 = vpop.f32.mrb[0].mxu0
    %v940 = vadd.f32 0.0, %v939
    %v941 = vpop.f32.mrb[0].mxu0
    %942 = vmatprep.mubr.f32.mxu0 0.0
    %943 = vmatmul.mubr.f32.gmra.mrb[0].mxu0 %v854
    %v944 = vpop.f32.mrb[0].mxu0
    %v945 = vadd.f32 0.0, %v944
    %v946 = vpop.f32.mrb[0].mxu0
    %947 = vmatprep.mubr.f32.mxu0 0.0
    %948 = vmatmul.mubr.f32.gmra.mrb[0].mxu0 %v855
    %v949 = vpop.f32.mrb[0].mxu0
    %v950 = vadd.f32 0.0, %v949
    %v951 = vpop.f32.mrb[0].mxu0
    %952 = vmatprep.mubr.f32.mxu0 0.0
    %953 = vmatmul.mubr.f32.gmra.mrb[0].mxu0 %v856
    %v954 = vpop.f32.mrb[0].mxu0
    %v955 = vadd.f32 0.0, %v954
    %v956 = vpop.f32.mrb[0].mxu0
    %957 = vmatprep.mubr.f32.mxu0 0.0
    %958 = vmatmul.mubr.f32.gmra.mrb[0].mxu0 %v857
    %v959 = vpop.f32.mrb[0].mxu0
    %v960 = vadd.f32 0.0, %v959
    %v961 = vpop.f32.mrb[0].mxu0
    %962 = vmatprep.mubr.f32.mxu0 0.0
    %963 = vmatmul.mubr.f32.gmra.mrb[0].mxu0 %v858
    %v964 = vpop.f32.mrb[0].mxu0
    %v965 = vadd.f32 0.0, %v964
    %v966 = vpop.f32.mrb[0].mxu0
    %967 = vmatprep.mubr.f32.mxu0 0.0
    %968 = vmatmul.mubr.f32.gmra.mrb[0].mxu0 %v859
    %v969 = vpop.f32.mrb[0].mxu0
    %v970 = vadd.f32 0.0, %v969
    %v971 = vpop.f32.mrb[0].mxu0
    %972 = vmatprep.mubr.f32.mxu0 0.0
    %973 = vmatmul.mubr.f32.gmra.mrb[0].mxu0 %v860
    %v974 = vpop.f32.mrb[0].mxu0
    %v975 = vadd.f32 0.0, %v974
    %v976 = vpop.f32.mrb[0].mxu0
    %977 = vmatprep.mubr.f32.mxu0 0.0
    %978 = vmatmul.mubr.f32.gmra.mrb[0].mxu0 %v861
    %v979 = vpop.f32.mrb[0].mxu0
    %v980 = vadd.f32 0.0, %v979
    %v981 = vpop.f32.mrb[0].mxu0
    %982 = vmatprep.mubr.f32.mxu0 0.0
    %983 = vmatmul.mubr.f32.gmra.mrb[0].mxu0 %v862
    %v984 = vpop.f32.mrb[0].mxu0
    %v985 = vadd.f32 0.0, %v984
    %v986 = vpop.f32.mrb[0].mxu0
    %987 = vmatprep.mubr.f32.mxu0 0.0
    %988 = vmatmul.mubr.f32.gmra.mrb[0].mxu0 %v863
    %v989 = vpop.f32.mrb[0].mxu0
    %v990 = vadd.f32 0.0, %v989
    %v991 = vpop.f32.mrb[0].mxu0
    %992 = vmatprep.mubr.f32.mxu0 0.0
    %993 = vmatmul.mubr.f32.gmra.mrb[0].mxu0 %v864
    %v994 = vpop.f32.mrb[0].mxu0
    %v995 = vadd.f32 0.0, %v994
    %v996 = vpop.f32.mrb[0].mxu0
    %997 = vmatprep.mubr.f32.mxu0 0.0
    %998 = vmatmul.mubr.f32.gmra.mrb[0].mxu0 %v865
    %v999 = vpop.f32.mrb[0].mxu0
    %v1000 = vadd.f32 0.0, %v999
    %v1001 = vpop.f32.mrb[0].mxu0
    %1002 = vmatprep.mubr.f32.mxu0 0.0
    %1003 = vmatmul.mubr.f32.gmra.mrb[0].mxu0 %v866
    %v1004 = vpop.f32.mrb[0].mxu0
    %v1005 = vadd.f32 0.0, %v1004
    %v1006 = vpop.f32.mrb[0].mxu0
    %1007 = vmatprep.mubr.f32.mxu0 0.0
    %1008 = vmatmul.mubr.f32.gmra.mrb[0].mxu0 %v867
    %v1009 = vpop.f32.mrb[0].mxu0
    %v1010 = vadd.f32 0.0, %v1009
    %v1011 = vpop.f32.mrb[0].mxu0
    %1012 = vdwg.mxu0
    %v1013 = vlaneseq
    %v1014 = vshrl.u32 %v1013, 7
    %v1015 = vsub.s32 3, %v1014
    %v1016 = vrot.slane %v256, %v1015
    %v1017 = vmul.f32 %v935, %v1016
    %v1018 = vmul.f32 %v940, %v1016
    %v1019 = vmul.f32 %v945, %v1016
    %v1020 = vmul.f32 %v950, %v1016
    %v1021 = vmul.f32 %v955, %v1016
    %v1022 = vmul.f32 %v960, %v1016
    %v1023 = vmul.f32 %v965, %v1016
    %v1024 = vmul.f32 %v970, %v1016
    %v1025 = vmul.f32 %v975, %v1016
    %v1026 = vmul.f32 %v980, %v1016
    %v1027 = vmul.f32 %v985, %v1016
    %v1028 = vmul.f32 %v990, %v1016
    %v1029 = vmul.f32 %v995, %v1016
    %v1030 = vmul.f32 %v1000, %v1016
    %v1031 = vmul.f32 %v1005, %v1016
    %v1032 = vmul.f32 %v1010, %v1016
    %v1033 = vadd.f32 %v835, %v1017
    %v1034 = vadd.f32 %v836, %v1018
    %v1035 = vadd.f32 %v837, %v1019
    %v1036 = vadd.f32 %v838, %v1020
    %v1037 = vadd.f32 %v839, %v1021
    %v1038 = vadd.f32 %v840, %v1022
    %v1039 = vadd.f32 %v841, %v1023
    %v1040 = vadd.f32 %v842, %v1024
    %v1041 = vadd.f32 %v843, %v1025
    %v1042 = vadd.f32 %v844, %v1026
    %v1043 = vadd.f32 %v845, %v1027
    %v1044 = vadd.f32 %v846, %v1028
    %v1045 = vadd.f32 %v847, %v1029
    %v1046 = vadd.f32 %v848, %v1030
    %v1047 = vadd.f32 %v849, %v1031
    %v1048 = vadd.f32 %v850, %v1032
    %s1049 = scalar_lea.vmem %s1, 512
    %v1050 = vld [vmem:[%s1049] sm:$0xff]
    %v1051 = vld [vmem:[%s1049 + $0x8] sm:$0xff]
    %v1052 = vld [vmem:[%s1049 + $0x10] sm:$0xff]
    %v1053 = vld [vmem:[%s1049 + $0x18] sm:$0xff]
    %v1054 = vld [vmem:[%s1049 + $0x20] sm:$0xff]
    %v1055 = vld [vmem:[%s1049 + $0x28] sm:$0xff]
    %v1056 = vld [vmem:[%s1049 + $0x30] sm:$0xff]
    %v1057 = vld [vmem:[%s1049 + $0x38] sm:$0xff]
    %v1058 = vld [vmem:[%s1049 + $0x40] sm:$0xff]
    %v1059 = vld [vmem:[%s1049 + $0x48] sm:$0xff]
    %v1060 = vld [vmem:[%s1049 + $0x50] sm:$0xff]
    %v1061 = vld [vmem:[%s1049 + $0x58] sm:$0xff]
    %v1062 = vld [vmem:[%s1049 + $0x60] sm:$0xff]
    %v1063 = vld [vmem:[%s1049 + $0x68] sm:$0xff]
    %v1064 = vld [vmem:[%s1049 + $0x70] sm:$0xff]
    %v1065 = vld [vmem:[%s1049 + $0x78] sm:$0xff]
    %1066 = vmatprep.subr.mxu0 0.0
    %1067 = vmatpush1.msra.mxu0 %v240
    %1068 = vmatprep.subr.mxu0 0.0
    %1069 = vmatpush1.msra.mxu0 %v241
    %1070 = vmatprep.subr.mxu0 0.0
    %1071 = vmatpush1.msra.mxu0 %v242
    %1072 = vmatprep.subr.mxu0 0.0
    %1073 = vmatpush1.msra.mxu0 %v243
    %1074 = vmatprep.subr.mxu0 0.0
    %1075 = vmatpush1.msra.mxu0 %v244
    %1076 = vmatprep.subr.mxu0 0.0
    %1077 = vmatpush1.msra.mxu0 %v245
    %1078 = vmatprep.subr.mxu0 0.0
    %1079 = vmatpush1.msra.mxu0 %v246
    %1080 = vmatprep.subr.mxu0 0.0
    %1081 = vmatpush1.msra.mxu0 %v247
    %1082 = vmatprep.subr.mxu0 0.0
    %1083 = vmatpush1.msra.mxu0 %v248
    %1084 = vmatprep.subr.mxu0 0.0
    %1085 = vmatpush1.msra.mxu0 %v249
    %1086 = vmatprep.subr.mxu0 0.0
    %1087 = vmatpush1.msra.mxu0 %v250
    %1088 = vmatprep.subr.mxu0 0.0
    %1089 = vmatpush1.msra.mxu0 %v251
    %1090 = vmatprep.subr.mxu0 0.0
    %1091 = vmatpush1.msra.mxu0 %v252
    %1092 = vmatprep.subr.mxu0 0.0
    %1093 = vmatpush1.msra.mxu0 %v253
    %1094 = vmatprep.subr.mxu0 0.0
    %1095 = vmatpush1.msra.mxu0 %v254
    %1096 = vmatprep.subr.mxu0 0.0
    %1097 = vmatpush1.msra.mxu0 %v255
    %1098 = vmatprep.subr.mxu0 0.0
    %1099 = vmatpush1.msra.mxu0 0.0
    %1100 = vmatprep.subr.mxu0 0.0
    %1101 = vmatpush1.msra.mxu0 0.0
    %1102 = vmatprep.subr.mxu0 0.0
    %1103 = vmatpush1.msra.mxu0 0.0
    %1104 = vmatprep.subr.mxu0 0.0
    %1105 = vmatpush1.msra.mxu0 0.0
    %1106 = vmatprep.subr.mxu0 0.0
    %1107 = vmatpush1.msra.mxu0 0.0
    %1108 = vmatprep.subr.mxu0 0.0
    %1109 = vmatpush1.msra.mxu0 0.0
    %1110 = vmatprep.subr.mxu0 0.0
    %1111 = vmatpush1.msra.mxu0 0.0
    %1112 = vmatprep.subr.mxu0 0.0
    %1113 = vmatpush1.msra.mxu0 0.0
    %1114 = vmatprep.subr.mxu0 0.0
    %1115 = vmatpush1.msra.mxu0 0.0
    %1116 = vmatprep.subr.mxu0 0.0
    %1117 = vmatpush1.msra.mxu0 0.0
    %1118 = vmatprep.subr.mxu0 0.0
    %1119 = vmatpush1.msra.mxu0 0.0
    %1120 = vmatprep.subr.mxu0 0.0
    %1121 = vmatpush1.msra.mxu0 0.0
    %1122 = vmatprep.subr.mxu0 0.0
    %1123 = vmatpush1.msra.mxu0 0.0
    %1124 = vmatprep.subr.mxu0 0.0
    %1125 = vmatpush1.msra.mxu0 0.0
    %1126 = vmatprep.subr.mxu0 0.0
    %1127 = vmatpush1.msra.mxu0 0.0
    %1128 = vmatprep.subr.mxu0 0.0
    %1129 = vmatpush1.msra.mxu0 0.0
    %1130 = vmatprep.mubr.f32.mxu0 0.0
    %1131 = vmatmul.mubr.f32.gmra.mrb[0].mxu0 %v1050
    %v1132 = vpop.f32.mrb[0].mxu0
    %v1133 = vadd.f32 0.0, %v1132
    %v1134 = vpop.f32.mrb[0].mxu0
    %1135 = vmatprep.mubr.f32.mxu0 0.0
    %1136 = vmatmul.mubr.f32.gmra.mrb[0].mxu0 %v1051
    %v1137 = vpop.f32.mrb[0].mxu0
    %v1138 = vadd.f32 0.0, %v1137
    %v1139 = vpop.f32.mrb[0].mxu0
    %1140 = vmatprep.mubr.f32.mxu0 0.0
    %1141 = vmatmul.mubr.f32.gmra.mrb[0].mxu0 %v1052
    %v1142 = vpop.f32.mrb[0].mxu0
    %v1143 = vadd.f32 0.0, %v1142
    %v1144 = vpop.f32.mrb[0].mxu0
    %1145 = vmatprep.mubr.f32.mxu0 0.0
    %1146 = vmatmul.mubr.f32.gmra.mrb[0].mxu0 %v1053
    %v1147 = vpop.f32.mrb[0].mxu0
    %v1148 = vadd.f32 0.0, %v1147
    %v1149 = vpop.f32.mrb[0].mxu0
    %1150 = vmatprep.mubr.f32.mxu0 0.0
    %1151 = vmatmul.mubr.f32.gmra.mrb[0].mxu0 %v1054
    %v1152 = vpop.f32.mrb[0].mxu0
    %v1153 = vadd.f32 0.0, %v1152
    %v1154 = vpop.f32.mrb[0].mxu0
    %1155 = vmatprep.mubr.f32.mxu0 0.0
    %1156 = vmatmul.mubr.f32.gmra.mrb[0].mxu0 %v1055
    %v1157 = vpop.f32.mrb[0].mxu0
    %v1158 = vadd.f32 0.0, %v1157
    %v1159 = vpop.f32.mrb[0].mxu0
    %1160 = vmatprep.mubr.f32.mxu0 0.0
    %1161 = vmatmul.mubr.f32.gmra.mrb[0].mxu0 %v1056
    %v1162 = vpop.f32.mrb[0].mxu0
    %v1163 = vadd.f32 0.0, %v1162
    %v1164 = vpop.f32.mrb[0].mxu0
    %1165 = vmatprep.mubr.f32.mxu0 0.0
    %1166 = vmatmul.mubr.f32.gmra.mrb[0].mxu0 %v1057
    %v1167 = vpop.f32.mrb[0].mxu0
    %v1168 = vadd.f32 0.0, %v1167
    %v1169 = vpop.f32.mrb[0].mxu0
    %1170 = vmatprep.mubr.f32.mxu0 0.0
    %1171 = vmatmul.mubr.f32.gmra.mrb[0].mxu0 %v1058
    %v1172 = vpop.f32.mrb[0].mxu0
    %v1173 = vadd.f32 0.0, %v1172
    %v1174 = vpop.f32.mrb[0].mxu0
    %1175 = vmatprep.mubr.f32.mxu0 0.0
    %1176 = vmatmul.mubr.f32.gmra.mrb[0].mxu0 %v1059
    %v1177 = vpop.f32.mrb[0].mxu0
    %v1178 = vadd.f32 0.0, %v1177
    %v1179 = vpop.f32.mrb[0].mxu0
    %1180 = vmatprep.mubr.f32.mxu0 0.0
    %1181 = vmatmul.mubr.f32.gmra.mrb[0].mxu0 %v1060
    %v1182 = vpop.f32.mrb[0].mxu0
    %v1183 = vadd.f32 0.0, %v1182
    %v1184 = vpop.f32.mrb[0].mxu0
    %1185 = vmatprep.mubr.f32.mxu0 0.0
    %1186 = vmatmul.mubr.f32.gmra.mrb[0].mxu0 %v1061
    %v1187 = vpop.f32.mrb[0].mxu0
    %v1188 = vadd.f32 0.0, %v1187
    %v1189 = vpop.f32.mrb[0].mxu0
    %1190 = vmatprep.mubr.f32.mxu0 0.0
    %1191 = vmatmul.mubr.f32.gmra.mrb[0].mxu0 %v1062
    %v1192 = vpop.f32.mrb[0].mxu0
    %v1193 = vadd.f32 0.0, %v1192
    %v1194 = vpop.f32.mrb[0].mxu0
    %1195 = vmatprep.mubr.f32.mxu0 0.0
    %1196 = vmatmul.mubr.f32.gmra.mrb[0].mxu0 %v1063
    %v1197 = vpop.f32.mrb[0].mxu0
    %v1198 = vadd.f32 0.0, %v1197
    %v1199 = vpop.f32.mrb[0].mxu0
    %1200 = vmatprep.mubr.f32.mxu0 0.0
    %1201 = vmatmul.mubr.f32.gmra.mrb[0].mxu0 %v1064
    %v1202 = vpop.f32.mrb[0].mxu0
    %v1203 = vadd.f32 0.0, %v1202
    %v1204 = vpop.f32.mrb[0].mxu0
    %1205 = vmatprep.mubr.f32.mxu0 0.0
    %1206 = vmatmul.mubr.f32.gmra.mrb[0].mxu0 %v1065
    %v1207 = vpop.f32.mrb[0].mxu0
    %v1208 = vadd.f32 0.0, %v1207
    %v1209 = vpop.f32.mrb[0].mxu0
    %1210 = vdwg.mxu0
    %v1211 = vlaneseq
    %v1212 = vshrl.u32 %v1211, 7
    %v1213 = vsub.s32 4, %v1212
    %v1214 = vrot.slane %v256, %v1213
    %v1215 = vmul.f32 %v1133, %v1214
    %v1216 = vmul.f32 %v1138, %v1214
    %v1217 = vmul.f32 %v1143, %v1214
    %v1218 = vmul.f32 %v1148, %v1214
    %v1219 = vmul.f32 %v1153, %v1214
    %v1220 = vmul.f32 %v1158, %v1214
    %v1221 = vmul.f32 %v1163, %v1214
    %v1222 = vmul.f32 %v1168, %v1214
    %v1223 = vmul.f32 %v1173, %v1214
    %v1224 = vmul.f32 %v1178, %v1214
    %v1225 = vmul.f32 %v1183, %v1214
    %v1226 = vmul.f32 %v1188, %v1214
    %v1227 = vmul.f32 %v1193, %v1214
    %v1228 = vmul.f32 %v1198, %v1214
    %v1229 = vmul.f32 %v1203, %v1214
    %v1230 = vmul.f32 %v1208, %v1214
    %v1231 = vadd.f32 %v1033, %v1215
    %v1232 = vadd.f32 %v1034, %v1216
    %v1233 = vadd.f32 %v1035, %v1217
    %v1234 = vadd.f32 %v1036, %v1218
    %v1235 = vadd.f32 %v1037, %v1219
    %v1236 = vadd.f32 %v1038, %v1220
    %v1237 = vadd.f32 %v1039, %v1221
    %v1238 = vadd.f32 %v1040, %v1222
    %v1239 = vadd.f32 %v1041, %v1223
    %v1240 = vadd.f32 %v1042, %v1224
    %v1241 = vadd.f32 %v1043, %v1225
    %v1242 = vadd.f32 %v1044, %v1226
    %v1243 = vadd.f32 %v1045, %v1227
    %v1244 = vadd.f32 %v1046, %v1228
    %v1245 = vadd.f32 %v1047, %v1229
    %v1246 = vadd.f32 %v1048, %v1230
    %s1247 = scalar_lea.vmem %s1, 640
    %v1248 = vld [vmem:[%s1247] sm:$0xff]
    %v1249 = vld [vmem:[%s1247 + $0x8] sm:$0xff]
    %v1250 = vld [vmem:[%s1247 + $0x10] sm:$0xff]
    %v1251 = vld [vmem:[%s1247 + $0x18] sm:$0xff]
    %v1252 = vld [vmem:[%s1247 + $0x20] sm:$0xff]
    %v1253 = vld [vmem:[%s1247 + $0x28] sm:$0xff]
    %v1254 = vld [vmem:[%s1247 + $0x30] sm:$0xff]
    %v1255 = vld [vmem:[%s1247 + $0x38] sm:$0xff]
    %v1256 = vld [vmem:[%s1247 + $0x40] sm:$0xff]
    %v1257 = vld [vmem:[%s1247 + $0x48] sm:$0xff]
    %v1258 = vld [vmem:[%s1247 + $0x50] sm:$0xff]
    %v1259 = vld [vmem:[%s1247 + $0x58] sm:$0xff]
    %v1260 = vld [vmem:[%s1247 + $0x60] sm:$0xff]
    %v1261 = vld [vmem:[%s1247 + $0x68] sm:$0xff]
    %v1262 = vld [vmem:[%s1247 + $0x70] sm:$0xff]
    %v1263 = vld [vmem:[%s1247 + $0x78] sm:$0xff]
    %1264 = vmatprep.subr.mxu0 0.0
    %1265 = vmatpush1.msra.mxu0 %v240
    %1266 = vmatprep.subr.mxu0 0.0
    %1267 = vmatpush1.msra.mxu0 %v241
    %1268 = vmatprep.subr.mxu0 0.0
    %1269 = vmatpush1.msra.mxu0 %v242
    %1270 = vmatprep.subr.mxu0 0.0
    %1271 = vmatpush1.msra.mxu0 %v243
    %1272 = vmatprep.subr.mxu0 0.0
    %1273 = vmatpush1.msra.mxu0 %v244
    %1274 = vmatprep.subr.mxu0 0.0
    %1275 = vmatpush1.msra.mxu0 %v245
    %1276 = vmatprep.subr.mxu0 0.0
    %1277 = vmatpush1.msra.mxu0 %v246
    %1278 = vmatprep.subr.mxu0 0.0
    %1279 = vmatpush1.msra.mxu0 %v247
    %1280 = vmatprep.subr.mxu0 0.0
    %1281 = vmatpush1.msra.mxu0 %v248
    %1282 = vmatprep.subr.mxu0 0.0
    %1283 = vmatpush1.msra.mxu0 %v249
    %1284 = vmatprep.subr.mxu0 0.0
    %1285 = vmatpush1.msra.mxu0 %v250
    %1286 = vmatprep.subr.mxu0 0.0
    %1287 = vmatpush1.msra.mxu0 %v251
    %1288 = vmatprep.subr.mxu0 0.0
    %1289 = vmatpush1.msra.mxu0 %v252
    %1290 = vmatprep.subr.mxu0 0.0
    %1291 = vmatpush1.msra.mxu0 %v253
    %1292 = vmatprep.subr.mxu0 0.0
    %1293 = vmatpush1.msra.mxu0 %v254
    %1294 = vmatprep.subr.mxu0 0.0
    %1295 = vmatpush1.msra.mxu0 %v255
    %1296 = vmatprep.subr.mxu0 0.0
    %1297 = vmatpush1.msra.mxu0 0.0
    %1298 = vmatprep.subr.mxu0 0.0
    %1299 = vmatpush1.msra.mxu0 0.0
    %1300 = vmatprep.subr.mxu0 0.0
    %1301 = vmatpush1.msra.mxu0 0.0
    %1302 = vmatprep.subr.mxu0 0.0
    %1303 = vmatpush1.msra.mxu0 0.0
    %1304 = vmatprep.subr.mxu0 0.0
    %1305 = vmatpush1.msra.mxu0 0.0
    %1306 = vmatprep.subr.mxu0 0.0
    %1307 = vmatpush1.msra.mxu0 0.0
    %1308 = vmatprep.subr.mxu0 0.0
    %1309 = vmatpush1.msra.mxu0 0.0
    %1310 = vmatprep.subr.mxu0 0.0
    %1311 = vmatpush1.msra.mxu0 0.0
    %1312 = vmatprep.subr.mxu0 0.0
    %1313 = vmatpush1.msra.mxu0 0.0
    %1314 = vmatprep.subr.mxu0 0.0
    %1315 = vmatpush1.msra.mxu0 0.0
    %1316 = vmatprep.subr.mxu0 0.0
    %1317 = vmatpush1.msra.mxu0 0.0
    %1318 = vmatprep.subr.mxu0 0.0
    %1319 = vmatpush1.msra.mxu0 0.0
    %1320 = vmatprep.subr.mxu0 0.0
    %1321 = vmatpush1.msra.mxu0 0.0
    %1322 = vmatprep.subr.mxu0 0.0
    %1323 = vmatpush1.msra.mxu0 0.0
    %1324 = vmatprep.subr.mxu0 0.0
    %1325 = vmatpush1.msra.mxu0 0.0
    %1326 = vmatprep.subr.mxu0 0.0
    %1327 = vmatpush1.msra.mxu0 0.0
    %1328 = vmatprep.mubr.f32.mxu0 0.0
    %1329 = vmatmul.mubr.f32.gmra.mrb[0].mxu0 %v1248
    %v1330 = vpop.f32.mrb[0].mxu0
    %v1331 = vadd.f32 0.0, %v1330
    %v1332 = vpop.f32.mrb[0].mxu0
    %1333 = vmatprep.mubr.f32.mxu0 0.0
    %1334 = vmatmul.mubr.f32.gmra.mrb[0].mxu0 %v1249
    %v1335 = vpop.f32.mrb[0].mxu0
    %v1336 = vadd.f32 0.0, %v1335
    %v1337 = vpop.f32.mrb[0].mxu0
    %1338 = vmatprep.mubr.f32.mxu0 0.0
    %1339 = vmatmul.mubr.f32.gmra.mrb[0].mxu0 %v1250
    %v1340 = vpop.f32.mrb[0].mxu0
    %v1341 = vadd.f32 0.0, %v1340
    %v1342 = vpop.f32.mrb[0].mxu0
    %1343 = vmatprep.mubr.f32.mxu0 0.0
    %1344 = vmatmul.mubr.f32.gmra.mrb[0].mxu0 %v1251
    %v1345 = vpop.f32.mrb[0].mxu0
    %v1346 = vadd.f32 0.0, %v1345
    %v1347 = vpop.f32.mrb[0].mxu0
    %1348 = vmatprep.mubr.f32.mxu0 0.0
    %1349 = vmatmul.mubr.f32.gmra.mrb[0].mxu0 %v1252
    %v1350 = vpop.f32.mrb[0].mxu0
    %v1351 = vadd.f32 0.0, %v1350
    %v1352 = vpop.f32.mrb[0].mxu0
    %1353 = vmatprep.mubr.f32.mxu0 0.0
    %1354 = vmatmul.mubr.f32.gmra.mrb[0].mxu0 %v1253
    %v1355 = vpop.f32.mrb[0].mxu0
    %v1356 = vadd.f32 0.0, %v1355
    %v1357 = vpop.f32.mrb[0].mxu0
    %1358 = vmatprep.mubr.f32.mxu0 0.0
    %1359 = vmatmul.mubr.f32.gmra.mrb[0].mxu0 %v1254
    %v1360 = vpop.f32.mrb[0].mxu0
    %v1361 = vadd.f32 0.0, %v1360
    %v1362 = vpop.f32.mrb[0].mxu0
    %1363 = vmatprep.mubr.f32.mxu0 0.0
    %1364 = vmatmul.mubr.f32.gmra.mrb[0].mxu0 %v1255
    %v1365 = vpop.f32.mrb[0].mxu0
    %v1366 = vadd.f32 0.0, %v1365
    %v1367 = vpop.f32.mrb[0].mxu0
    %1368 = vmatprep.mubr.f32.mxu0 0.0
    %1369 = vmatmul.mubr.f32.gmra.mrb[0].mxu0 %v1256
    %v1370 = vpop.f32.mrb[0].mxu0
    %v1371 = vadd.f32 0.0, %v1370
    %v1372 = vpop.f32.mrb[0].mxu0
    %1373 = vmatprep.mubr.f32.mxu0 0.0
    %1374 = vmatmul.mubr.f32.gmra.mrb[0].mxu0 %v1257
    %v1375 = vpop.f32.mrb[0].mxu0
    %v1376 = vadd.f32 0.0, %v1375
    %v1377 = vpop.f32.mrb[0].mxu0
    %1378 = vmatprep.mubr.f32.mxu0 0.0
    %1379 = vmatmul.mubr.f32.gmra.mrb[0].mxu0 %v1258
    %v1380 = vpop.f32.mrb[0].mxu0
    %v1381 = vadd.f32 0.0, %v1380
    %v1382 = vpop.f32.mrb[0].mxu0
    %1383 = vmatprep.mubr.f32.mxu0 0.0
    %1384 = vmatmul.mubr.f32.gmra.mrb[0].mxu0 %v1259
    %v1385 = vpop.f32.mrb[0].mxu0
    %v1386 = vadd.f32 0.0, %v1385
    %v1387 = vpop.f32.mrb[0].mxu0
    %1388 = vmatprep.mubr.f32.mxu0 0.0
    %1389 = vmatmul.mubr.f32.gmra.mrb[0].mxu0 %v1260
    %v1390 = vpop.f32.mrb[0].mxu0
    %v1391 = vadd.f32 0.0, %v1390
    %v1392 = vpop.f32.mrb[0].mxu0
    %1393 = vmatprep.mubr.f32.mxu0 0.0
    %1394 = vmatmul.mubr.f32.gmra.mrb[0].mxu0 %v1261
    %v1395 = vpop.f32.mrb[0].mxu0
    %v1396 = vadd.f32 0.0, %v1395
    %v1397 = vpop.f32.mrb[0].mxu0
    %1398 = vmatprep.mubr.f32.mxu0 0.0
    %1399 = vmatmul.mubr.f32.gmra.mrb[0].mxu0 %v1262
    %v1400 = vpop.f32.mrb[0].mxu0
    %v1401 = vadd.f32 0.0, %v1400
    %v1402 = vpop.f32.mrb[0].mxu0
    %1403 = vmatprep.mubr.f32.mxu0 0.0
    %1404 = vmatmul.mubr.f32.gmra.mrb[0].mxu0 %v1263
    %v1405 = vpop.f32.mrb[0].mxu0
    %v1406 = vadd.f32 0.0, %v1405
    %v1407 = vpop.f32.mrb[0].mxu0
    %1408 = vdwg.mxu0
    %v1409 = vlaneseq
    %v1410 = vshrl.u32 %v1409, 7
    %v1411 = vsub.s32 5, %v1410
    %v1412 = vrot.slane %v256, %v1411
    %v1413 = vmul.f32 %v1331, %v1412
    %v1414 = vmul.f32 %v1336, %v1412
    %v1415 = vmul.f32 %v1341, %v1412
    %v1416 = vmul.f32 %v1346, %v1412
    %v1417 = vmul.f32 %v1351, %v1412
    %v1418 = vmul.f32 %v1356, %v1412
    %v1419 = vmul.f32 %v1361, %v1412
    %v1420 = vmul.f32 %v1366, %v1412
    %v1421 = vmul.f32 %v1371, %v1412
    %v1422 = vmul.f32 %v1376, %v1412
    %v1423 = vmul.f32 %v1381, %v1412
    %v1424 = vmul.f32 %v1386, %v1412
    %v1425 = vmul.f32 %v1391, %v1412
    %v1426 = vmul.f32 %v1396, %v1412
    %v1427 = vmul.f32 %v1401, %v1412
    %v1428 = vmul.f32 %v1406, %v1412
    %v1429 = vadd.f32 %v1231, %v1413
    %v1430 = vadd.f32 %v1232, %v1414
    %v1431 = vadd.f32 %v1233, %v1415
    %v1432 = vadd.f32 %v1234, %v1416
    %v1433 = vadd.f32 %v1235, %v1417
    %v1434 = vadd.f32 %v1236, %v1418
    %v1435 = vadd.f32 %v1237, %v1419
    %v1436 = vadd.f32 %v1238, %v1420
    %v1437 = vadd.f32 %v1239, %v1421
    %v1438 = vadd.f32 %v1240, %v1422
    %v1439 = vadd.f32 %v1241, %v1423
    %v1440 = vadd.f32 %v1242, %v1424
    %v1441 = vadd.f32 %v1243, %v1425
    %v1442 = vadd.f32 %v1244, %v1426
    %v1443 = vadd.f32 %v1245, %v1427
    %v1444 = vadd.f32 %v1246, %v1428
    %s1445 = scalar_lea.vmem %s1, 768
    %v1446 = vld [vmem:[%s1445] sm:$0xff]
    %v1447 = vld [vmem:[%s1445 + $0x8] sm:$0xff]
    %v1448 = vld [vmem:[%s1445 + $0x10] sm:$0xff]
    %v1449 = vld [vmem:[%s1445 + $0x18] sm:$0xff]
    %v1450 = vld [vmem:[%s1445 + $0x20] sm:$0xff]
    %v1451 = vld [vmem:[%s1445 + $0x28] sm:$0xff]
    %v1452 = vld [vmem:[%s1445 + $0x30] sm:$0xff]
    %v1453 = vld [vmem:[%s1445 + $0x38] sm:$0xff]
    %v1454 = vld [vmem:[%s1445 + $0x40] sm:$0xff]
    %v1455 = vld [vmem:[%s1445 + $0x48] sm:$0xff]
    %v1456 = vld [vmem:[%s1445 + $0x50] sm:$0xff]
    %v1457 = vld [vmem:[%s1445 + $0x58] sm:$0xff]
    %v1458 = vld [vmem:[%s1445 + $0x60] sm:$0xff]
    %v1459 = vld [vmem:[%s1445 + $0x68] sm:$0xff]
    %v1460 = vld [vmem:[%s1445 + $0x70] sm:$0xff]
    %v1461 = vld [vmem:[%s1445 + $0x78] sm:$0xff]
    %1462 = vmatprep.subr.mxu0 0.0
    %1463 = vmatpush1.msra.mxu0 %v240
    %1464 = vmatprep.subr.mxu0 0.0
    %1465 = vmatpush1.msra.mxu0 %v241
    %1466 = vmatprep.subr.mxu0 0.0
    %1467 = vmatpush1.msra.mxu0 %v242
    %1468 = vmatprep.subr.mxu0 0.0
    %1469 = vmatpush1.msra.mxu0 %v243
    %1470 = vmatprep.subr.mxu0 0.0
    %1471 = vmatpush1.msra.mxu0 %v244
    %1472 = vmatprep.subr.mxu0 0.0
    %1473 = vmatpush1.msra.mxu0 %v245
    %1474 = vmatprep.subr.mxu0 0.0
    %1475 = vmatpush1.msra.mxu0 %v246
    %1476 = vmatprep.subr.mxu0 0.0
    %1477 = vmatpush1.msra.mxu0 %v247
    %1478 = vmatprep.subr.mxu0 0.0
    %1479 = vmatpush1.msra.mxu0 %v248
    %1480 = vmatprep.subr.mxu0 0.0
    %1481 = vmatpush1.msra.mxu0 %v249
    %1482 = vmatprep.subr.mxu0 0.0
    %1483 = vmatpush1.msra.mxu0 %v250
    %1484 = vmatprep.subr.mxu0 0.0
    %1485 = vmatpush1.msra.mxu0 %v251
    %1486 = vmatprep.subr.mxu0 0.0
    %1487 = vmatpush1.msra.mxu0 %v252
    %1488 = vmatprep.subr.mxu0 0.0
    %1489 = vmatpush1.msra.mxu0 %v253
    %1490 = vmatprep.subr.mxu0 0.0
    %1491 = vmatpush1.msra.mxu0 %v254
    %1492 = vmatprep.subr.mxu0 0.0
    %1493 = vmatpush1.msra.mxu0 %v255
    %1494 = vmatprep.subr.mxu0 0.0
    %1495 = vmatpush1.msra.mxu0 0.0
    %1496 = vmatprep.subr.mxu0 0.0
    %1497 = vmatpush1.msra.mxu0 0.0
    %1498 = vmatprep.subr.mxu0 0.0
    %1499 = vmatpush1.msra.mxu0 0.0
    %1500 = vmatprep.subr.mxu0 0.0
    %1501 = vmatpush1.msra.mxu0 0.0
    %1502 = vmatprep.subr.mxu0 0.0
    %1503 = vmatpush1.msra.mxu0 0.0
    %1504 = vmatprep.subr.mxu0 0.0
    %1505 = vmatpush1.msra.mxu0 0.0
    %1506 = vmatprep.subr.mxu0 0.0
    %1507 = vmatpush1.msra.mxu0 0.0
    %1508 = vmatprep.subr.mxu0 0.0
    %1509 = vmatpush1.msra.mxu0 0.0
    %1510 = vmatprep.subr.mxu0 0.0
    %1511 = vmatpush1.msra.mxu0 0.0
    %1512 = vmatprep.subr.mxu0 0.0
    %1513 = vmatpush1.msra.mxu0 0.0
    %1514 = vmatprep.subr.mxu0 0.0
    %1515 = vmatpush1.msra.mxu0 0.0
    %1516 = vmatprep.subr.mxu0 0.0
    %1517 = vmatpush1.msra.mxu0 0.0
    %1518 = vmatprep.subr.mxu0 0.0
    %1519 = vmatpush1.msra.mxu0 0.0
    %1520 = vmatprep.subr.mxu0 0.0
    %1521 = vmatpush1.msra.mxu0 0.0
    %1522 = vmatprep.subr.mxu0 0.0
    %1523 = vmatpush1.msra.mxu0 0.0
    %1524 = vmatprep.subr.mxu0 0.0
    %1525 = vmatpush1.msra.mxu0 0.0
    %1526 = vmatprep.mubr.f32.mxu0 0.0
    %1527 = vmatmul.mubr.f32.gmra.mrb[0].mxu0 %v1446
    %v1528 = vpop.f32.mrb[0].mxu0
    %v1529 = vadd.f32 0.0, %v1528
    %v1530 = vpop.f32.mrb[0].mxu0
    %1531 = vmatprep.mubr.f32.mxu0 0.0
    %1532 = vmatmul.mubr.f32.gmra.mrb[0].mxu0 %v1447
    %v1533 = vpop.f32.mrb[0].mxu0
    %v1534 = vadd.f32 0.0, %v1533
    %v1535 = vpop.f32.mrb[0].mxu0
    %1536 = vmatprep.mubr.f32.mxu0 0.0
    %1537 = vmatmul.mubr.f32.gmra.mrb[0].mxu0 %v1448
    %v1538 = vpop.f32.mrb[0].mxu0
    %v1539 = vadd.f32 0.0, %v1538
    %v1540 = vpop.f32.mrb[0].mxu0
    %1541 = vmatprep.mubr.f32.mxu0 0.0
    %1542 = vmatmul.mubr.f32.gmra.mrb[0].mxu0 %v1449
    %v1543 = vpop.f32.mrb[0].mxu0
    %v1544 = vadd.f32 0.0, %v1543
    %v1545 = vpop.f32.mrb[0].mxu0
    %1546 = vmatprep.mubr.f32.mxu0 0.0
    %1547 = vmatmul.mubr.f32.gmra.mrb[0].mxu0 %v1450
    %v1548 = vpop.f32.mrb[0].mxu0
    %v1549 = vadd.f32 0.0, %v1548
    %v1550 = vpop.f32.mrb[0].mxu0
    %1551 = vmatprep.mubr.f32.mxu0 0.0
    %1552 = vmatmul.mubr.f32.gmra.mrb[0].mxu0 %v1451
    %v1553 = vpop.f32.mrb[0].mxu0
    %v1554 = vadd.f32 0.0, %v1553
    %v1555 = vpop.f32.mrb[0].mxu0
    %1556 = vmatprep.mubr.f32.mxu0 0.0
    %1557 = vmatmul.mubr.f32.gmra.mrb[0].mxu0 %v1452
    %v1558 = vpop.f32.mrb[0].mxu0
    %v1559 = vadd.f32 0.0, %v1558
    %v1560 = vpop.f32.mrb[0].mxu0
    %1561 = vmatprep.mubr.f32.mxu0 0.0
    %1562 = vmatmul.mubr.f32.gmra.mrb[0].mxu0 %v1453
    %v1563 = vpop.f32.mrb[0].mxu0
    %v1564 = vadd.f32 0.0, %v1563
    %v1565 = vpop.f32.mrb[0].mxu0
    %1566 = vmatprep.mubr.f32.mxu0 0.0
    %1567 = vmatmul.mubr.f32.gmra.mrb[0].mxu0 %v1454
    %v1568 = vpop.f32.mrb[0].mxu0
    %v1569 = vadd.f32 0.0, %v1568
    %v1570 = vpop.f32.mrb[0].mxu0
    %1571 = vmatprep.mubr.f32.mxu0 0.0
    %1572 = vmatmul.mubr.f32.gmra.mrb[0].mxu0 %v1455
    %v1573 = vpop.f32.mrb[0].mxu0
    %v1574 = vadd.f32 0.0, %v1573
    %v1575 = vpop.f32.mrb[0].mxu0
    %1576 = vmatprep.mubr.f32.mxu0 0.0
    %1577 = vmatmul.mubr.f32.gmra.mrb[0].mxu0 %v1456
    %v1578 = vpop.f32.mrb[0].mxu0
    %v1579 = vadd.f32 0.0, %v1578
    %v1580 = vpop.f32.mrb[0].mxu0
    %1581 = vmatprep.mubr.f32.mxu0 0.0
    %1582 = vmatmul.mubr.f32.gmra.mrb[0].mxu0 %v1457
    %v1583 = vpop.f32.mrb[0].mxu0
    %v1584 = vadd.f32 0.0, %v1583
    %v1585 = vpop.f32.mrb[0].mxu0
    %1586 = vmatprep.mubr.f32.mxu0 0.0
    %1587 = vmatmul.mubr.f32.gmra.mrb[0].mxu0 %v1458
    %v1588 = vpop.f32.mrb[0].mxu0
    %v1589 = vadd.f32 0.0, %v1588
    %v1590 = vpop.f32.mrb[0].mxu0
    %1591 = vmatprep.mubr.f32.mxu0 0.0
    %1592 = vmatmul.mubr.f32.gmra.mrb[0].mxu0 %v1459
    %v1593 = vpop.f32.mrb[0].mxu0
    %v1594 = vadd.f32 0.0, %v1593
    %v1595 = vpop.f32.mrb[0].mxu0
    %1596 = vmatprep.mubr.f32.mxu0 0.0
    %1597 = vmatmul.mubr.f32.gmra.mrb[0].mxu0 %v1460
    %v1598 = vpop.f32.mrb[0].mxu0
    %v1599 = vadd.f32 0.0, %v1598
    %v1600 = vpop.f32.mrb[0].mxu0
    %1601 = vmatprep.mubr.f32.mxu0 0.0
    %1602 = vmatmul.mubr.f32.gmra.mrb[0].mxu0 %v1461
    %v1603 = vpop.f32.mrb[0].mxu0
    %v1604 = vadd.f32 0.0, %v1603
    %v1605 = vpop.f32.mrb[0].mxu0
    %1606 = vdwg.mxu0
    %v1607 = vlaneseq
    %v1608 = vshrl.u32 %v1607, 7
    %v1609 = vsub.s32 6, %v1608
    %v1610 = vrot.slane %v256, %v1609
    %v1611 = vmul.f32 %v1529, %v1610
    %v1612 = vmul.f32 %v1534, %v1610
    %v1613 = vmul.f32 %v1539, %v1610
    %v1614 = vmul.f32 %v1544, %v1610
    %v1615 = vmul.f32 %v1549, %v1610
    %v1616 = vmul.f32 %v1554, %v1610
    %v1617 = vmul.f32 %v1559, %v1610
    %v1618 = vmul.f32 %v1564, %v1610
    %v1619 = vmul.f32 %v1569, %v1610
    %v1620 = vmul.f32 %v1574, %v1610
    %v1621 = vmul.f32 %v1579, %v1610
    %v1622 = vmul.f32 %v1584, %v1610
    %v1623 = vmul.f32 %v1589, %v1610
    %v1624 = vmul.f32 %v1594, %v1610
    %v1625 = vmul.f32 %v1599, %v1610
    %v1626 = vmul.f32 %v1604, %v1610
    %v1627 = vadd.f32 %v1429, %v1611
    %v1628 = vadd.f32 %v1430, %v1612
    %v1629 = vadd.f32 %v1431, %v1613
    %v1630 = vadd.f32 %v1432, %v1614
    %v1631 = vadd.f32 %v1433, %v1615
    %v1632 = vadd.f32 %v1434, %v1616
    %v1633 = vadd.f32 %v1435, %v1617
    %v1634 = vadd.f32 %v1436, %v1618
    %v1635 = vadd.f32 %v1437, %v1619
    %v1636 = vadd.f32 %v1438, %v1620
    %v1637 = vadd.f32 %v1439, %v1621
    %v1638 = vadd.f32 %v1440, %v1622
    %v1639 = vadd.f32 %v1441, %v1623
    %v1640 = vadd.f32 %v1442, %v1624
    %v1641 = vadd.f32 %v1443, %v1625
    %v1642 = vadd.f32 %v1444, %v1626
    %s1643 = scalar_lea.vmem %s1, 896
    %v1644 = vld [vmem:[%s1643] sm:$0xff]
    %v1645 = vld [vmem:[%s1643 + $0x8] sm:$0xff]
    %v1646 = vld [vmem:[%s1643 + $0x10] sm:$0xff]
    %v1647 = vld [vmem:[%s1643 + $0x18] sm:$0xff]
    %v1648 = vld [vmem:[%s1643 + $0x20] sm:$0xff]
    %v1649 = vld [vmem:[%s1643 + $0x28] sm:$0xff]
    %v1650 = vld [vmem:[%s1643 + $0x30] sm:$0xff]
    %v1651 = vld [vmem:[%s1643 + $0x38] sm:$0xff]
    %v1652 = vld [vmem:[%s1643 + $0x40] sm:$0xff]
    %v1653 = vld [vmem:[%s1643 + $0x48] sm:$0xff]
    %v1654 = vld [vmem:[%s1643 + $0x50] sm:$0xff]
    %v1655 = vld [vmem:[%s1643 + $0x58] sm:$0xff]
    %v1656 = vld [vmem:[%s1643 + $0x60] sm:$0xff]
    %v1657 = vld [vmem:[%s1643 + $0x68] sm:$0xff]
    %v1658 = vld [vmem:[%s1643 + $0x70] sm:$0xff]
    %v1659 = vld [vmem:[%s1643 + $0x78] sm:$0xff]
    %1660 = vmatprep.subr.mxu0 0.0
    %1661 = vmatpush1.msra.mxu0 %v240
    %1662 = vmatprep.subr.mxu0 0.0
    %1663 = vmatpush1.msra.mxu0 %v241
    %1664 = vmatprep.subr.mxu0 0.0
    %1665 = vmatpush1.msra.mxu0 %v242
    %1666 = vmatprep.subr.mxu0 0.0
    %1667 = vmatpush1.msra.mxu0 %v243
    %1668 = vmatprep.subr.mxu0 0.0
    %1669 = vmatpush1.msra.mxu0 %v244
    %1670 = vmatprep.subr.mxu0 0.0
    %1671 = vmatpush1.msra.mxu0 %v245
    %1672 = vmatprep.subr.mxu0 0.0
    %1673 = vmatpush1.msra.mxu0 %v246
    %1674 = vmatprep.subr.mxu0 0.0
    %1675 = vmatpush1.msra.mxu0 %v247
    %1676 = vmatprep.subr.mxu0 0.0
    %1677 = vmatpush1.msra.mxu0 %v248
    %1678 = vmatprep.subr.mxu0 0.0
    %1679 = vmatpush1.msra.mxu0 %v249
    %1680 = vmatprep.subr.mxu0 0.0
    %1681 = vmatpush1.msra.mxu0 %v250
    %1682 = vmatprep.subr.mxu0 0.0
    %1683 = vmatpush1.msra.mxu0 %v251
    %1684 = vmatprep.subr.mxu0 0.0
    %1685 = vmatpush1.msra.mxu0 %v252
    %1686 = vmatprep.subr.mxu0 0.0
    %1687 = vmatpush1.msra.mxu0 %v253
    %1688 = vmatprep.subr.mxu0 0.0
    %1689 = vmatpush1.msra.mxu0 %v254
    %1690 = vmatprep.subr.mxu0 0.0
    %1691 = vmatpush1.msra.mxu0 %v255
    %1692 = vmatprep.subr.mxu0 0.0
    %1693 = vmatpush1.msra.mxu0 0.0
    %1694 = vmatprep.subr.mxu0 0.0
    %1695 = vmatpush1.msra.mxu0 0.0
    %1696 = vmatprep.subr.mxu0 0.0
    %1697 = vmatpush1.msra.mxu0 0.0
    %1698 = vmatprep.subr.mxu0 0.0
    %1699 = vmatpush1.msra.mxu0 0.0
    %1700 = vmatprep.subr.mxu0 0.0
    %1701 = vmatpush1.msra.mxu0 0.0
    %1702 = vmatprep.subr.mxu0 0.0
    %1703 = vmatpush1.msra.mxu0 0.0
    %1704 = vmatprep.subr.mxu0 0.0
    %1705 = vmatpush1.msra.mxu0 0.0
    %1706 = vmatprep.subr.mxu0 0.0
    %1707 = vmatpush1.msra.mxu0 0.0
    %1708 = vmatprep.subr.mxu0 0.0
    %1709 = vmatpush1.msra.mxu0 0.0
    %1710 = vmatprep.subr.mxu0 0.0
    %1711 = vmatpush1.msra.mxu0 0.0
    %1712 = vmatprep.subr.mxu0 0.0
    %1713 = vmatpush1.msra.mxu0 0.0
    %1714 = vmatprep.subr.mxu0 0.0
    %1715 = vmatpush1.msra.mxu0 0.0
    %1716 = vmatprep.subr.mxu0 0.0
    %1717 = vmatpush1.msra.mxu0 0.0
    %1718 = vmatprep.subr.mxu0 0.0
    %1719 = vmatpush1.msra.mxu0 0.0
    %1720 = vmatprep.subr.mxu0 0.0
    %1721 = vmatpush1.msra.mxu0 0.0
    %1722 = vmatprep.subr.mxu0 0.0
    %1723 = vmatpush1.msra.mxu0 0.0
    %1724 = vmatprep.mubr.f32.mxu0 0.0
    %1725 = vmatmul.mubr.f32.gmra.mrb[0].mxu0 %v1644
    %v1726 = vpop.f32.mrb[0].mxu0
    %v1727 = vadd.f32 0.0, %v1726
    %v1728 = vpop.f32.mrb[0].mxu0
    %1729 = vmatprep.mubr.f32.mxu0 0.0
    %1730 = vmatmul.mubr.f32.gmra.mrb[0].mxu0 %v1645
    %v1731 = vpop.f32.mrb[0].mxu0
    %v1732 = vadd.f32 0.0, %v1731
    %v1733 = vpop.f32.mrb[0].mxu0
    %1734 = vmatprep.mubr.f32.mxu0 0.0
    %1735 = vmatmul.mubr.f32.gmra.mrb[0].mxu0 %v1646
    %v1736 = vpop.f32.mrb[0].mxu0
    %v1737 = vadd.f32 0.0, %v1736
    %v1738 = vpop.f32.mrb[0].mxu0
    %1739 = vmatprep.mubr.f32.mxu0 0.0
    %1740 = vmatmul.mubr.f32.gmra.mrb[0].mxu0 %v1647
    %v1741 = vpop.f32.mrb[0].mxu0
    %v1742 = vadd.f32 0.0, %v1741
    %v1743 = vpop.f32.mrb[0].mxu0
    %1744 = vmatprep.mubr.f32.mxu0 0.0
    %1745 = vmatmul.mubr.f32.gmra.mrb[0].mxu0 %v1648
    %v1746 = vpop.f32.mrb[0].mxu0
    %v1747 = vadd.f32 0.0, %v1746
    %v1748 = vpop.f32.mrb[0].mxu0
    %1749 = vmatprep.mubr.f32.mxu0 0.0
    %1750 = vmatmul.mubr.f32.gmra.mrb[0].mxu0 %v1649
    %v1751 = vpop.f32.mrb[0].mxu0
    %v1752 = vadd.f32 0.0, %v1751
    %v1753 = vpop.f32.mrb[0].mxu0
    %1754 = vmatprep.mubr.f32.mxu0 0.0
    %1755 = vmatmul.mubr.f32.gmra.mrb[0].mxu0 %v1650
    %v1756 = vpop.f32.mrb[0].mxu0
    %v1757 = vadd.f32 0.0, %v1756
    %v1758 = vpop.f32.mrb[0].mxu0
    %1759 = vmatprep.mubr.f32.mxu0 0.0
    %1760 = vmatmul.mubr.f32.gmra.mrb[0].mxu0 %v1651
    %v1761 = vpop.f32.mrb[0].mxu0
    %v1762 = vadd.f32 0.0, %v1761
    %v1763 = vpop.f32.mrb[0].mxu0
    %1764 = vmatprep.mubr.f32.mxu0 0.0
    %1765 = vmatmul.mubr.f32.gmra.mrb[0].mxu0 %v1652
    %v1766 = vpop.f32.mrb[0].mxu0
    %v1767 = vadd.f32 0.0, %v1766
    %v1768 = vpop.f32.mrb[0].mxu0
    %1769 = vmatprep.mubr.f32.mxu0 0.0
    %1770 = vmatmul.mubr.f32.gmra.mrb[0].mxu0 %v1653
    %v1771 = vpop.f32.mrb[0].mxu0
    %v1772 = vadd.f32 0.0, %v1771
    %v1773 = vpop.f32.mrb[0].mxu0
    %1774 = vmatprep.mubr.f32.mxu0 0.0
    %1775 = vmatmul.mubr.f32.gmra.mrb[0].mxu0 %v1654
    %v1776 = vpop.f32.mrb[0].mxu0
    %v1777 = vadd.f32 0.0, %v1776
    %v1778 = vpop.f32.mrb[0].mxu0
    %1779 = vmatprep.mubr.f32.mxu0 0.0
    %1780 = vmatmul.mubr.f32.gmra.mrb[0].mxu0 %v1655
    %v1781 = vpop.f32.mrb[0].mxu0
    %v1782 = vadd.f32 0.0, %v1781
    %v1783 = vpop.f32.mrb[0].mxu0
    %1784 = vmatprep.mubr.f32.mxu0 0.0
    %1785 = vmatmul.mubr.f32.gmra.mrb[0].mxu0 %v1656
    %v1786 = vpop.f32.mrb[0].mxu0
    %v1787 = vadd.f32 0.0, %v1786
    %v1788 = vpop.f32.mrb[0].mxu0
    %1789 = vmatprep.mubr.f32.mxu0 0.0
    %1790 = vmatmul.mubr.f32.gmra.mrb[0].mxu0 %v1657
    %v1791 = vpop.f32.mrb[0].mxu0
    %v1792 = vadd.f32 0.0, %v1791
    %v1793 = vpop.f32.mrb[0].mxu0
    %1794 = vmatprep.mubr.f32.mxu0 0.0
    %1795 = vmatmul.mubr.f32.gmra.mrb[0].mxu0 %v1658
    %v1796 = vpop.f32.mrb[0].mxu0
    %v1797 = vadd.f32 0.0, %v1796
    %v1798 = vpop.f32.mrb[0].mxu0
    %1799 = vmatprep.mubr.f32.mxu0 0.0
    %1800 = vmatmul.mubr.f32.gmra.mrb[0].mxu0 %v1659
    %v1801 = vpop.f32.mrb[0].mxu0
    %v1802 = vadd.f32 0.0, %v1801
    %v1803 = vpop.f32.mrb[0].mxu0
    %1804 = vdwg.mxu0
    %v1805 = vlaneseq
    %v1806 = vshrl.u32 %v1805, 7
    %v1807 = vsub.s32 7, %v1806
    %v1808 = vrot.slane %v256, %v1807
    %v1809 = vmul.f32 %v1727, %v1808
    %v1810 = vmul.f32 %v1732, %v1808
    %v1811 = vmul.f32 %v1737, %v1808
    %v1812 = vmul.f32 %v1742, %v1808
    %v1813 = vmul.f32 %v1747, %v1808
    %v1814 = vmul.f32 %v1752, %v1808
    %v1815 = vmul.f32 %v1757, %v1808
    %v1816 = vmul.f32 %v1762, %v1808
    %v1817 = vmul.f32 %v1767, %v1808
    %v1818 = vmul.f32 %v1772, %v1808
    %v1819 = vmul.f32 %v1777, %v1808
    %v1820 = vmul.f32 %v1782, %v1808
    %v1821 = vmul.f32 %v1787, %v1808
    %v1822 = vmul.f32 %v1792, %v1808
    %v1823 = vmul.f32 %v1797, %v1808
    %v1824 = vmul.f32 %v1802, %v1808
    %v1825 = vadd.f32 %v1627, %v1809
    %v1826 = vadd.f32 %v1628, %v1810
    %v1827 = vadd.f32 %v1629, %v1811
    %v1828 = vadd.f32 %v1630, %v1812
    %v1829 = vadd.f32 %v1631, %v1813
    %v1830 = vadd.f32 %v1632, %v1814
    %v1831 = vadd.f32 %v1633, %v1815
    %v1832 = vadd.f32 %v1634, %v1816
    %v1833 = vadd.f32 %v1635, %v1817
    %v1834 = vadd.f32 %v1636, %v1818
    %v1835 = vadd.f32 %v1637, %v1819
    %v1836 = vadd.f32 %v1638, %v1820
    %v1837 = vadd.f32 %v1639, %v1821
    %v1838 = vadd.f32 %v1640, %v1822
    %v1839 = vadd.f32 %v1641, %v1823
    %v1840 = vadd.f32 %v1642, %v1824
    %s1841 = scalar_lea.vmem %s1, 1024
    %v1842 = vld [vmem:[%s1841] sm:$0xff]
    %v1843 = vld [vmem:[%s1841 + $0x8] sm:$0xff]
    %v1844 = vld [vmem:[%s1841 + $0x10] sm:$0xff]
    %v1845 = vld [vmem:[%s1841 + $0x18] sm:$0xff]
    %v1846 = vld [vmem:[%s1841 + $0x20] sm:$0xff]
    %v1847 = vld [vmem:[%s1841 + $0x28] sm:$0xff]
    %v1848 = vld [vmem:[%s1841 + $0x30] sm:$0xff]
    %v1849 = vld [vmem:[%s1841 + $0x38] sm:$0xff]
    %v1850 = vld [vmem:[%s1841 + $0x40] sm:$0xff]
    %v1851 = vld [vmem:[%s1841 + $0x48] sm:$0xff]
    %v1852 = vld [vmem:[%s1841 + $0x50] sm:$0xff]
    %v1853 = vld [vmem:[%s1841 + $0x58] sm:$0xff]
    %v1854 = vld [vmem:[%s1841 + $0x60] sm:$0xff]
    %v1855 = vld [vmem:[%s1841 + $0x68] sm:$0xff]
    %v1856 = vld [vmem:[%s1841 + $0x70] sm:$0xff]
    %v1857 = vld [vmem:[%s1841 + $0x78] sm:$0xff]
    %1858 = vmatprep.subr.mxu0 0.0
    %1859 = vmatpush1.msra.mxu0 %v240
    %1860 = vmatprep.subr.mxu0 0.0
    %1861 = vmatpush1.msra.mxu0 %v241
    %1862 = vmatprep.subr.mxu0 0.0
    %1863 = vmatpush1.msra.mxu0 %v242
    %1864 = vmatprep.subr.mxu0 0.0
    %1865 = vmatpush1.msra.mxu0 %v243
    %1866 = vmatprep.subr.mxu0 0.0
    %1867 = vmatpush1.msra.mxu0 %v244
    %1868 = vmatprep.subr.mxu0 0.0
    %1869 = vmatpush1.msra.mxu0 %v245
    %1870 = vmatprep.subr.mxu0 0.0
    %1871 = vmatpush1.msra.mxu0 %v246
    %1872 = vmatprep.subr.mxu0 0.0
    %1873 = vmatpush1.msra.mxu0 %v247
    %1874 = vmatprep.subr.mxu0 0.0
    %1875 = vmatpush1.msra.mxu0 %v248
    %1876 = vmatprep.subr.mxu0 0.0
    %1877 = vmatpush1.msra.mxu0 %v249
    %1878 = vmatprep.subr.mxu0 0.0
    %1879 = vmatpush1.msra.mxu0 %v250
    %1880 = vmatprep.subr.mxu0 0.0
    %1881 = vmatpush1.msra.mxu0 %v251
    %1882 = vmatprep.subr.mxu0 0.0
    %1883 = vmatpush1.msra.mxu0 %v252
    %1884 = vmatprep.subr.mxu0 0.0
    %1885 = vmatpush1.msra.mxu0 %v253
    %1886 = vmatprep.subr.mxu0 0.0
    %1887 = vmatpush1.msra.mxu0 %v254
    %1888 = vmatprep.subr.mxu0 0.0
    %1889 = vmatpush1.msra.mxu0 %v255
    %1890 = vmatprep.subr.mxu0 0.0
    %1891 = vmatpush1.msra.mxu0 0.0
    %1892 = vmatprep.subr.mxu0 0.0
    %1893 = vmatpush1.msra.mxu0 0.0
    %1894 = vmatprep.subr.mxu0 0.0
    %1895 = vmatpush1.msra.mxu0 0.0
    %1896 = vmatprep.subr.mxu0 0.0
    %1897 = vmatpush1.msra.mxu0 0.0
    %1898 = vmatprep.subr.mxu0 0.0
    %1899 = vmatpush1.msra.mxu0 0.0
    %1900 = vmatprep.subr.mxu0 0.0
    %1901 = vmatpush1.msra.mxu0 0.0
    %1902 = vmatprep.subr.mxu0 0.0
    %1903 = vmatpush1.msra.mxu0 0.0
    %1904 = vmatprep.subr.mxu0 0.0
    %1905 = vmatpush1.msra.mxu0 0.0
    %1906 = vmatprep.subr.mxu0 0.0
    %1907 = vmatpush1.msra.mxu0 0.0
    %1908 = vmatprep.subr.mxu0 0.0
    %1909 = vmatpush1.msra.mxu0 0.0
    %1910 = vmatprep.subr.mxu0 0.0
    %1911 = vmatpush1.msra.mxu0 0.0
    %1912 = vmatprep.subr.mxu0 0.0
    %1913 = vmatpush1.msra.mxu0 0.0
    %1914 = vmatprep.subr.mxu0 0.0
    %1915 = vmatpush1.msra.mxu0 0.0
    %1916 = vmatprep.subr.mxu0 0.0
    %1917 = vmatpush1.msra.mxu0 0.0
    %1918 = vmatprep.subr.mxu0 0.0
    %1919 = vmatpush1.msra.mxu0 0.0
    %1920 = vmatprep.subr.mxu0 0.0
    %1921 = vmatpush1.msra.mxu0 0.0
    %1922 = vmatprep.mubr.f32.mxu0 0.0
    %1923 = vmatmul.mubr.f32.gmra.mrb[0].mxu0 %v1842
    %v1924 = vpop.f32.mrb[0].mxu0
    %v1925 = vadd.f32 0.0, %v1924
    %v1926 = vpop.f32.mrb[0].mxu0
    %1927 = vmatprep.mubr.f32.mxu0 0.0
    %1928 = vmatmul.mubr.f32.gmra.mrb[0].mxu0 %v1843
    %v1929 = vpop.f32.mrb[0].mxu0
    %v1930 = vadd.f32 0.0, %v1929
    %v1931 = vpop.f32.mrb[0].mxu0
    %1932 = vmatprep.mubr.f32.mxu0 0.0
    %1933 = vmatmul.mubr.f32.gmra.mrb[0].mxu0 %v1844
    %v1934 = vpop.f32.mrb[0].mxu0
    %v1935 = vadd.f32 0.0, %v1934
    %v1936 = vpop.f32.mrb[0].mxu0
    %1937 = vmatprep.mubr.f32.mxu0 0.0
    %1938 = vmatmul.mubr.f32.gmra.mrb[0].mxu0 %v1845
    %v1939 = vpop.f32.mrb[0].mxu0
    %v1940 = vadd.f32 0.0, %v1939
    %v1941 = vpop.f32.mrb[0].mxu0
    %1942 = vmatprep.mubr.f32.mxu0 0.0
    %1943 = vmatmul.mubr.f32.gmra.mrb[0].mxu0 %v1846
    %v1944 = vpop.f32.mrb[0].mxu0
    %v1945 = vadd.f32 0.0, %v1944
    %v1946 = vpop.f32.mrb[0].mxu0
    %1947 = vmatprep.mubr.f32.mxu0 0.0
    %1948 = vmatmul.mubr.f32.gmra.mrb[0].mxu0 %v1847
    %v1949 = vpop.f32.mrb[0].mxu0
    %v1950 = vadd.f32 0.0, %v1949
    %v1951 = vpop.f32.mrb[0].mxu0
    %1952 = vmatprep.mubr.f32.mxu0 0.0
    %1953 = vmatmul.mubr.f32.gmra.mrb[0].mxu0 %v1848
    %v1954 = vpop.f32.mrb[0].mxu0
    %v1955 = vadd.f32 0.0, %v1954
    %v1956 = vpop.f32.mrb[0].mxu0
    %1957 = vmatprep.mubr.f32.mxu0 0.0
    %1958 = vmatmul.mubr.f32.gmra.mrb[0].mxu0 %v1849
    %v1959 = vpop.f32.mrb[0].mxu0
    %v1960 = vadd.f32 0.0, %v1959
    %v1961 = vpop.f32.mrb[0].mxu0
    %1962 = vmatprep.mubr.f32.mxu0 0.0
    %1963 = vmatmul.mubr.f32.gmra.mrb[0].mxu0 %v1850
    %v1964 = vpop.f32.mrb[0].mxu0
    %v1965 = vadd.f32 0.0, %v1964
    %v1966 = vpop.f32.mrb[0].mxu0
    %1967 = vmatprep.mubr.f32.mxu0 0.0
    %1968 = vmatmul.mubr.f32.gmra.mrb[0].mxu0 %v1851
    %v1969 = vpop.f32.mrb[0].mxu0
    %v1970 = vadd.f32 0.0, %v1969
    %v1971 = vpop.f32.mrb[0].mxu0
    %1972 = vmatprep.mubr.f32.mxu0 0.0
    %1973 = vmatmul.mubr.f32.gmra.mrb[0].mxu0 %v1852
    %v1974 = vpop.f32.mrb[0].mxu0
    %v1975 = vadd.f32 0.0, %v1974
    %v1976 = vpop.f32.mrb[0].mxu0
    %1977 = vmatprep.mubr.f32.mxu0 0.0
    %1978 = vmatmul.mubr.f32.gmra.mrb[0].mxu0 %v1853
    %v1979 = vpop.f32.mrb[0].mxu0
    %v1980 = vadd.f32 0.0, %v1979
    %v1981 = vpop.f32.mrb[0].mxu0
    %1982 = vmatprep.mubr.f32.mxu0 0.0
    %1983 = vmatmul.mubr.f32.gmra.mrb[0].mxu0 %v1854
    %v1984 = vpop.f32.mrb[0].mxu0
    %v1985 = vadd.f32 0.0, %v1984
    %v1986 = vpop.f32.mrb[0].mxu0
    %1987 = vmatprep.mubr.f32.mxu0 0.0
    %1988 = vmatmul.mubr.f32.gmra.mrb[0].mxu0 %v1855
    %v1989 = vpop.f32.mrb[0].mxu0
    %v1990 = vadd.f32 0.0, %v1989
    %v1991 = vpop.f32.mrb[0].mxu0
    %1992 = vmatprep.mubr.f32.mxu0 0.0
    %1993 = vmatmul.mubr.f32.gmra.mrb[0].mxu0 %v1856
    %v1994 = vpop.f32.mrb[0].mxu0
    %v1995 = vadd.f32 0.0, %v1994
    %v1996 = vpop.f32.mrb[0].mxu0
    %1997 = vmatprep.mubr.f32.mxu0 0.0
    %1998 = vmatmul.mubr.f32.gmra.mrb[0].mxu0 %v1857
    %v1999 = vpop.f32.mrb[0].mxu0
    %v2000 = vadd.f32 0.0, %v1999
    %v2001 = vpop.f32.mrb[0].mxu0
    %2002 = vdwg.mxu0
    %v2003 = vlaneseq
    %v2004 = vshrl.u32 %v2003, 7
    %v2005 = vsub.s32 0, %v2004
    %v2006 = vrot.slane %v257, %v2005
    %v2007 = vmul.f32 %v1925, %v2006
    %v2008 = vmul.f32 %v1930, %v2006
    %v2009 = vmul.f32 %v1935, %v2006
    %v2010 = vmul.f32 %v1940, %v2006
    %v2011 = vmul.f32 %v1945, %v2006
    %v2012 = vmul.f32 %v1950, %v2006
    %v2013 = vmul.f32 %v1955, %v2006
    %v2014 = vmul.f32 %v1960, %v2006
    %v2015 = vmul.f32 %v1965, %v2006
    %v2016 = vmul.f32 %v1970, %v2006
    %v2017 = vmul.f32 %v1975, %v2006
    %v2018 = vmul.f32 %v1980, %v2006
    %v2019 = vmul.f32 %v1985, %v2006
    %v2020 = vmul.f32 %v1990, %v2006
    %v2021 = vmul.f32 %v1995, %v2006
    %v2022 = vmul.f32 %v2000, %v2006
    %v2023 = vadd.f32 %v1825, %v2007
    %v2024 = vadd.f32 %v1826, %v2008
    %v2025 = vadd.f32 %v1827, %v2009
    %v2026 = vadd.f32 %v1828, %v2010
    %v2027 = vadd.f32 %v1829, %v2011
    %v2028 = vadd.f32 %v1830, %v2012
    %v2029 = vadd.f32 %v1831, %v2013
    %v2030 = vadd.f32 %v1832, %v2014
    %v2031 = vadd.f32 %v1833, %v2015
    %v2032 = vadd.f32 %v1834, %v2016
    %v2033 = vadd.f32 %v1835, %v2017
    %v2034 = vadd.f32 %v1836, %v2018
    %v2035 = vadd.f32 %v1837, %v2019
    %v2036 = vadd.f32 %v1838, %v2020
    %v2037 = vadd.f32 %v1839, %v2021
    %v2038 = vadd.f32 %v1840, %v2022
    %v2039 = vld [vmem:[%s4 + $0x2] sm:$0x1]
    %v2040 = vlaneseq
    %v2041 = vshrl.u32 %v2040, 7
    %v2042 = vsub.s32 0, %v2041
    %v2043 = vrot.slane %v2039, %v2042
    %v2044 = vmul.f32 %v2023, %v2043
    %v2045 = vmul.f32 %v2024, %v2043
    %v2046 = vmul.f32 %v2025, %v2043
    %v2047 = vmul.f32 %v2026, %v2043
    %v2048 = vmul.f32 %v2027, %v2043
    %v2049 = vmul.f32 %v2028, %v2043
    %v2050 = vmul.f32 %v2029, %v2043
    %v2051 = vmul.f32 %v2030, %v2043
    %v2052 = vmul.f32 %v2031, %v2043
    %v2053 = vmul.f32 %v2032, %v2043
    %v2054 = vmul.f32 %v2033, %v2043
    %v2055 = vmul.f32 %v2034, %v2043
    %v2056 = vmul.f32 %v2035, %v2043
    %v2057 = vmul.f32 %v2036, %v2043
    %v2058 = vmul.f32 %v2037, %v2043
    %v2059 = vmul.f32 %v2038, %v2043
    %v2060 = vld [vmem:[%s4 + $0x3] sm:$0x1]
    %v2061 = vlaneseq
    %v2062 = vshrl.u32 %v2061, 7
    %v2063 = vsub.s32 0, %v2062
    %v2064 = vrot.slane %v2060, %v2063
    %v2065 = vadd.f32 %v2044, %v2064
    %v2066 = vadd.f32 %v2045, %v2064
    %v2067 = vadd.f32 %v2046, %v2064
    %v2068 = vadd.f32 %v2047, %v2064
    %v2069 = vadd.f32 %v2048, %v2064
    %v2070 = vadd.f32 %v2049, %v2064
    %v2071 = vadd.f32 %v2050, %v2064
    %v2072 = vadd.f32 %v2051, %v2064
    %v2073 = vadd.f32 %v2052, %v2064
    %v2074 = vadd.f32 %v2053, %v2064
    %v2075 = vadd.f32 %v2054, %v2064
    %v2076 = vadd.f32 %v2055, %v2064
    %v2077 = vadd.f32 %v2056, %v2064
    %v2078 = vadd.f32 %v2057, %v2064
    %v2079 = vadd.f32 %v2058, %v2064
    %v2080 = vadd.f32 %v2059, %v2064
    %v2081 = vmax.f32 %v2065, 0.0
    %v2082 = vmax.f32 %v2066, 0.0
    %v2083 = vmax.f32 %v2067, 0.0
    %v2084 = vmax.f32 %v2068, 0.0
    %v2085 = vmax.f32 %v2069, 0.0
    %v2086 = vmax.f32 %v2070, 0.0
    %v2087 = vmax.f32 %v2071, 0.0
    %v2088 = vmax.f32 %v2072, 0.0
    %v2089 = vmax.f32 %v2073, 0.0
    %v2090 = vmax.f32 %v2074, 0.0
    %v2091 = vmax.f32 %v2075, 0.0
    %v2092 = vmax.f32 %v2076, 0.0
    %v2093 = vmax.f32 %v2077, 0.0
    %v2094 = vmax.f32 %v2078, 0.0
    %v2095 = vmax.f32 %v2079, 0.0
    %v2096 = vmax.f32 %v2080, 0.0
    %s2097 = scalar_lea.vmem %s1, 1152
    %v2098 = vld [vmem:[%s2097] sm:$0xff]
    %v2099 = vld [vmem:[%s2097 + $0x8] sm:$0xff]
    %v2100 = vld [vmem:[%s2097 + $0x10] sm:$0xff]
    %v2101 = vld [vmem:[%s2097 + $0x18] sm:$0xff]
    %v2102 = vld [vmem:[%s2097 + $0x20] sm:$0xff]
    %v2103 = vld [vmem:[%s2097 + $0x28] sm:$0xff]
    %v2104 = vld [vmem:[%s2097 + $0x30] sm:$0xff]
    %v2105 = vld [vmem:[%s2097 + $0x38] sm:$0xff]
    %v2106 = vld [vmem:[%s2097 + $0x40] sm:$0xff]
    %v2107 = vld [vmem:[%s2097 + $0x48] sm:$0xff]
    %v2108 = vld [vmem:[%s2097 + $0x50] sm:$0xff]
    %v2109 = vld [vmem:[%s2097 + $0x58] sm:$0xff]
    %v2110 = vld [vmem:[%s2097 + $0x60] sm:$0xff]
    %v2111 = vld [vmem:[%s2097 + $0x68] sm:$0xff]
    %v2112 = vld [vmem:[%s2097 + $0x70] sm:$0xff]
    %v2113 = vld [vmem:[%s2097 + $0x78] sm:$0xff]
    %2114 = vmatprep.subr.mxu0 0.0
    %2115 = vmatpush1.msra.mxu0 %v2081
    %2116 = vmatprep.subr.mxu0 0.0
    %2117 = vmatpush1.msra.mxu0 %v2082
    %2118 = vmatprep.subr.mxu0 0.0
    %2119 = vmatpush1.msra.mxu0 %v2083
    %2120 = vmatprep.subr.mxu0 0.0
    %2121 = vmatpush1.msra.mxu0 %v2084
    %2122 = vmatprep.subr.mxu0 0.0
    %2123 = vmatpush1.msra.mxu0 %v2085
    %2124 = vmatprep.subr.mxu0 0.0
    %2125 = vmatpush1.msra.mxu0 %v2086
    %2126 = vmatprep.subr.mxu0 0.0
    %2127 = vmatpush1.msra.mxu0 %v2087
    %2128 = vmatprep.subr.mxu0 0.0
    %2129 = vmatpush1.msra.mxu0 %v2088
    %2130 = vmatprep.subr.mxu0 0.0
    %2131 = vmatpush1.msra.mxu0 %v2089
    %2132 = vmatprep.subr.mxu0 0.0
    %2133 = vmatpush1.msra.mxu0 %v2090
    %2134 = vmatprep.subr.mxu0 0.0
    %2135 = vmatpush1.msra.mxu0 %v2091
    %2136 = vmatprep.subr.mxu0 0.0
    %2137 = vmatpush1.msra.mxu0 %v2092
    %2138 = vmatprep.subr.mxu0 0.0
    %2139 = vmatpush1.msra.mxu0 %v2093
    %2140 = vmatprep.subr.mxu0 0.0
    %2141 = vmatpush1.msra.mxu0 %v2094
    %2142 = vmatprep.subr.mxu0 0.0
    %2143 = vmatpush1.msra.mxu0 %v2095
    %2144 = vmatprep.subr.mxu0 0.0
    %2145 = vmatpush1.msra.mxu0 %v2096
    %2146 = vmatprep.subr.mxu0 0.0
    %2147 = vmatpush1.msra.mxu0 0.0
    %2148 = vmatprep.subr.mxu0 0.0
    %2149 = vmatpush1.msra.mxu0 0.0
    %2150 = vmatprep.subr.mxu0 0.0
    %2151 = vmatpush1.msra.mxu0 0.0
    %2152 = vmatprep.subr.mxu0 0.0
    %2153 = vmatpush1.msra.mxu0 0.0
    %2154 = vmatprep.subr.mxu0 0.0
    %2155 = vmatpush1.msra.mxu0 0.0
    %2156 = vmatprep.subr.mxu0 0.0
    %2157 = vmatpush1.msra.mxu0 0.0
    %2158 = vmatprep.subr.mxu0 0.0
    %2159 = vmatpush1.msra.mxu0 0.0
    %2160 = vmatprep.subr.mxu0 0.0
    %2161 = vmatpush1.msra.mxu0 0.0
    %2162 = vmatprep.subr.mxu0 0.0
    %2163 = vmatpush1.msra.mxu0 0.0
    %2164 = vmatprep.subr.mxu0 0.0
    %2165 = vmatpush1.msra.mxu0 0.0
    %2166 = vmatprep.subr.mxu0 0.0
    %2167 = vmatpush1.msra.mxu0 0.0
    %2168 = vmatprep.subr.mxu0 0.0
    %2169 = vmatpush1.msra.mxu0 0.0
    %2170 = vmatprep.subr.mxu0 0.0
    %2171 = vmatpush1.msra.mxu0 0.0
    %2172 = vmatprep.subr.mxu0 0.0
    %2173 = vmatpush1.msra.mxu0 0.0
    %2174 = vmatprep.subr.mxu0 0.0
    %2175 = vmatpush1.msra.mxu0 0.0
    %2176 = vmatprep.subr.mxu0 0.0
    %2177 = vmatpush1.msra.mxu0 0.0
    %2178 = vmatprep.mubr.f32.mxu0 0.0
    %2179 = vmatmul.mubr.f32.gmra.mrb[0].mxu0 %v2098
    %v2180 = vpop.f32.mrb[0].mxu0
    %v2181 = vadd.f32 0.0, %v2180
    %v2182 = vpop.f32.mrb[0].mxu0
    %2183 = vmatprep.mubr.f32.mxu0 0.0
    %2184 = vmatmul.mubr.f32.gmra.mrb[0].mxu0 %v2099
    %v2185 = vpop.f32.mrb[0].mxu0
    %v2186 = vadd.f32 0.0, %v2185
    %v2187 = vpop.f32.mrb[0].mxu0
    %2188 = vmatprep.mubr.f32.mxu0 0.0
    %2189 = vmatmul.mubr.f32.gmra.mrb[0].mxu0 %v2100
    %v2190 = vpop.f32.mrb[0].mxu0
    %v2191 = vadd.f32 0.0, %v2190
    %v2192 = vpop.f32.mrb[0].mxu0
    %2193 = vmatprep.mubr.f32.mxu0 0.0
    %2194 = vmatmul.mubr.f32.gmra.mrb[0].mxu0 %v2101
    %v2195 = vpop.f32.mrb[0].mxu0
    %v2196 = vadd.f32 0.0, %v2195
    %v2197 = vpop.f32.mrb[0].mxu0
    %2198 = vmatprep.mubr.f32.mxu0 0.0
    %2199 = vmatmul.mubr.f32.gmra.mrb[0].mxu0 %v2102
    %v2200 = vpop.f32.mrb[0].mxu0
    %v2201 = vadd.f32 0.0, %v2200
    %v2202 = vpop.f32.mrb[0].mxu0
    %2203 = vmatprep.mubr.f32.mxu0 0.0
    %2204 = vmatmul.mubr.f32.gmra.mrb[0].mxu0 %v2103
    %v2205 = vpop.f32.mrb[0].mxu0
    %v2206 = vadd.f32 0.0, %v2205
    %v2207 = vpop.f32.mrb[0].mxu0
    %2208 = vmatprep.mubr.f32.mxu0 0.0
    %2209 = vmatmul.mubr.f32.gmra.mrb[0].mxu0 %v2104
    %v2210 = vpop.f32.mrb[0].mxu0
    %v2211 = vadd.f32 0.0, %v2210
    %v2212 = vpop.f32.mrb[0].mxu0
    %2213 = vmatprep.mubr.f32.mxu0 0.0
    %2214 = vmatmul.mubr.f32.gmra.mrb[0].mxu0 %v2105
    %v2215 = vpop.f32.mrb[0].mxu0
    %v2216 = vadd.f32 0.0, %v2215
    %v2217 = vpop.f32.mrb[0].mxu0
    %2218 = vmatprep.mubr.f32.mxu0 0.0
    %2219 = vmatmul.mubr.f32.gmra.mrb[0].mxu0 %v2106
    %v2220 = vpop.f32.mrb[0].mxu0
    %v2221 = vadd.f32 0.0, %v2220
    %v2222 = vpop.f32.mrb[0].mxu0
    %2223 = vmatprep.mubr.f32.mxu0 0.0
    %2224 = vmatmul.mubr.f32.gmra.mrb[0].mxu0 %v2107
    %v2225 = vpop.f32.mrb[0].mxu0
    %v2226 = vadd.f32 0.0, %v2225
    %v2227 = vpop.f32.mrb[0].mxu0
    %2228 = vmatprep.mubr.f32.mxu0 0.0
    %2229 = vmatmul.mubr.f32.gmra.mrb[0].mxu0 %v2108
    %v2230 = vpop.f32.mrb[0].mxu0
    %v2231 = vadd.f32 0.0, %v2230
    %v2232 = vpop.f32.mrb[0].mxu0
    %2233 = vmatprep.mubr.f32.mxu0 0.0
    %2234 = vmatmul.mubr.f32.gmra.mrb[0].mxu0 %v2109
    %v2235 = vpop.f32.mrb[0].mxu0
    %v2236 = vadd.f32 0.0, %v2235
    %v2237 = vpop.f32.mrb[0].mxu0
    %2238 = vmatprep.mubr.f32.mxu0 0.0
    %2239 = vmatmul.mubr.f32.gmra.mrb[0].mxu0 %v2110
    %v2240 = vpop.f32.mrb[0].mxu0
    %v2241 = vadd.f32 0.0, %v2240
    %v2242 = vpop.f32.mrb[0].mxu0
    %2243 = vmatprep.mubr.f32.mxu0 0.0
    %2244 = vmatmul.mubr.f32.gmra.mrb[0].mxu0 %v2111
    %v2245 = vpop.f32.mrb[0].mxu0
    %v2246 = vadd.f32 0.0, %v2245
    %v2247 = vpop.f32.mrb[0].mxu0
    %2248 = vmatprep.mubr.f32.mxu0 0.0
    %2249 = vmatmul.mubr.f32.gmra.mrb[0].mxu0 %v2112
    %v2250 = vpop.f32.mrb[0].mxu0
    %v2251 = vadd.f32 0.0, %v2250
    %v2252 = vpop.f32.mrb[0].mxu0
    %2253 = vmatprep.mubr.f32.mxu0 0.0
    %2254 = vmatmul.mubr.f32.gmra.mrb[0].mxu0 %v2113
    %v2255 = vpop.f32.mrb[0].mxu0
    %v2256 = vadd.f32 0.0, %v2255
    %v2257 = vpop.f32.mrb[0].mxu0
    %2258 = vdwg.mxu0
    %s2259 = scalar_lea.vmem %s2, 128
    %v2260 = vld [vmem:[%s2259] sm:$0xff]
    %v2261 = vld [vmem:[%s2259 + $0x8] sm:$0xff]
    %v2262 = vld [vmem:[%s2259 + $0x10] sm:$0xff]
    %v2263 = vld [vmem:[%s2259 + $0x18] sm:$0xff]
    %v2264 = vld [vmem:[%s2259 + $0x20] sm:$0xff]
    %v2265 = vld [vmem:[%s2259 + $0x28] sm:$0xff]
    %v2266 = vld [vmem:[%s2259 + $0x30] sm:$0xff]
    %v2267 = vld [vmem:[%s2259 + $0x38] sm:$0xff]
    %v2268 = vld [vmem:[%s2259 + $0x40] sm:$0xff]
    %v2269 = vld [vmem:[%s2259 + $0x48] sm:$0xff]
    %v2270 = vld [vmem:[%s2259 + $0x50] sm:$0xff]
    %v2271 = vld [vmem:[%s2259 + $0x58] sm:$0xff]
    %v2272 = vld [vmem:[%s2259 + $0x60] sm:$0xff]
    %v2273 = vld [vmem:[%s2259 + $0x68] sm:$0xff]
    %v2274 = vld [vmem:[%s2259 + $0x70] sm:$0xff]
    %v2275 = vld [vmem:[%s2259 + $0x78] sm:$0xff]
    %v2276 = vld [vmem:[%s4 + $0x4] sm:$0x1]
    %v2277 = vlaneseq
    %v2278 = vshrl.u32 %v2277, 7
    %v2279 = vsub.s32 0, %v2278
    %v2280 = vrot.slane %v2276, %v2279
    %2281 = vmatprep.subr.mxu0 0.0
    %2282 = vmatpush1.msra.mxu0 %v2260
    %2283 = vmatprep.subr.mxu0 0.0
    %2284 = vmatpush1.msra.mxu0 %v2261
    %2285 = vmatprep.subr.mxu0 0.0
    %2286 = vmatpush1.msra.mxu0 %v2262
    %2287 = vmatprep.subr.mxu0 0.0
    %2288 = vmatpush1.msra.mxu0 %v2263
    %2289 = vmatprep.subr.mxu0 0.0
    %2290 = vmatpush1.msra.mxu0 %v2264
    %2291 = vmatprep.subr.mxu0 0.0
    %2292 = vmatpush1.msra.mxu0 %v2265
    %2293 = vmatprep.subr.mxu0 0.0
    %2294 = vmatpush1.msra.mxu0 %v2266
    %2295 = vmatprep.subr.mxu0 0.0
    %2296 = vmatpush1.msra.mxu0 %v2267
    %2297 = vmatprep.subr.mxu0 0.0
    %2298 = vmatpush1.msra.mxu0 %v2268
    %2299 = vmatprep.subr.mxu0 0.0
    %2300 = vmatpush1.msra.mxu0 %v2269
    %2301 = vmatprep.subr.mxu0 0.0
    %2302 = vmatpush1.msra.mxu0 %v2270
    %2303 = vmatprep.subr.mxu0 0.0
    %2304 = vmatpush1.msra.mxu0 %v2271
    %2305 = vmatprep.subr.mxu0 0.0
    %2306 = vmatpush1.msra.mxu0 %v2272
    %2307 = vmatprep.subr.mxu0 0.0
    %2308 = vmatpush1.msra.mxu0 %v2273
    %2309 = vmatprep.subr.mxu0 0.0
    %2310 = vmatpush1.msra.mxu0 %v2274
    %2311 = vmatprep.subr.mxu0 0.0
    %2312 = vmatpush1.msra.mxu0 %v2275
    %2313 = vmatprep.subr.mxu0 0.0
    %2314 = vmatpush1.msra.mxu0 0.0
    %2315 = vmatprep.subr.mxu0 0.0
    %2316 = vmatpush1.msra.mxu0 0.0
    %2317 = vmatprep.subr.mxu0 0.0
    %2318 = vmatpush1.msra.mxu0 0.0
    %2319 = vmatprep.subr.mxu0 0.0
    %2320 = vmatpush1.msra.mxu0 0.0
    %2321 = vmatprep.subr.mxu0 0.0
    %2322 = vmatpush1.msra.mxu0 0.0
    %2323 = vmatprep.subr.mxu0 0.0
    %2324 = vmatpush1.msra.mxu0 0.0
    %2325 = vmatprep.subr.mxu0 0.0
    %2326 = vmatpush1.msra.mxu0 0.0
    %2327 = vmatprep.subr.mxu0 0.0
    %2328 = vmatpush1.msra.mxu0 0.0
    %2329 = vmatprep.subr.mxu0 0.0
    %2330 = vmatpush1.msra.mxu0 0.0
    %2331 = vmatprep.subr.mxu0 0.0
    %2332 = vmatpush1.msra.mxu0 0.0
    %2333 = vmatprep.subr.mxu0 0.0
    %2334 = vmatpush1.msra.mxu0 0.0
    %2335 = vmatprep.subr.mxu0 0.0
    %2336 = vmatpush1.msra.mxu0 0.0
    %2337 = vmatprep.subr.mxu0 0.0
    %2338 = vmatpush1.msra.mxu0 0.0
    %2339 = vmatprep.subr.mxu0 0.0
    %2340 = vmatpush1.msra.mxu0 0.0
    %2341 = vmatprep.subr.mxu0 0.0
    %2342 = vmatpush1.msra.mxu0 0.0
    %2343 = vmatprep.subr.mxu0 0.0
    %2344 = vmatpush1.msra.mxu0 0.0
    %2345 = vmatprep.mubr.f32.mxu0 0.0
    %2346 = vmatmul.mubr.f32.gmra.mrb[0].mxu0 %v2181
    %v2347 = vpop.f32.mrb[0].mxu0
    %v2348 = vadd.f32 %v2280, %v2347
    %v2349 = vpop.f32.mrb[0].mxu0
    %2350 = vmatprep.mubr.f32.mxu0 0.0
    %2351 = vmatmul.mubr.f32.gmra.mrb[0].mxu0 %v2186
    %v2352 = vpop.f32.mrb[0].mxu0
    %v2353 = vadd.f32 %v2280, %v2352
    %v2354 = vpop.f32.mrb[0].mxu0
    %2355 = vmatprep.mubr.f32.mxu0 0.0
    %2356 = vmatmul.mubr.f32.gmra.mrb[0].mxu0 %v2191
    %v2357 = vpop.f32.mrb[0].mxu0
    %v2358 = vadd.f32 %v2280, %v2357
    %v2359 = vpop.f32.mrb[0].mxu0
    %2360 = vmatprep.mubr.f32.mxu0 0.0
    %2361 = vmatmul.mubr.f32.gmra.mrb[0].mxu0 %v2196
    %v2362 = vpop.f32.mrb[0].mxu0
    %v2363 = vadd.f32 %v2280, %v2362
    %v2364 = vpop.f32.mrb[0].mxu0
    %2365 = vmatprep.mubr.f32.mxu0 0.0
    %2366 = vmatmul.mubr.f32.gmra.mrb[0].mxu0 %v2201
    %v2367 = vpop.f32.mrb[0].mxu0
    %v2368 = vadd.f32 %v2280, %v2367
    %v2369 = vpop.f32.mrb[0].mxu0
    %2370 = vmatprep.mubr.f32.mxu0 0.0
    %2371 = vmatmul.mubr.f32.gmra.mrb[0].mxu0 %v2206
    %v2372 = vpop.f32.mrb[0].mxu0
    %v2373 = vadd.f32 %v2280, %v2372
    %v2374 = vpop.f32.mrb[0].mxu0
    %2375 = vmatprep.mubr.f32.mxu0 0.0
    %2376 = vmatmul.mubr.f32.gmra.mrb[0].mxu0 %v2211
    %v2377 = vpop.f32.mrb[0].mxu0
    %v2378 = vadd.f32 %v2280, %v2377
    %v2379 = vpop.f32.mrb[0].mxu0
    %2380 = vmatprep.mubr.f32.mxu0 0.0
    %2381 = vmatmul.mubr.f32.gmra.mrb[0].mxu0 %v2216
    %v2382 = vpop.f32.mrb[0].mxu0
    %v2383 = vadd.f32 %v2280, %v2382
    %v2384 = vpop.f32.mrb[0].mxu0
    %2385 = vmatprep.mubr.f32.mxu0 0.0
    %2386 = vmatmul.mubr.f32.gmra.mrb[0].mxu0 %v2221
    %v2387 = vpop.f32.mrb[0].mxu0
    %v2388 = vadd.f32 %v2280, %v2387
    %v2389 = vpop.f32.mrb[0].mxu0
    %2390 = vmatprep.mubr.f32.mxu0 0.0
    %2391 = vmatmul.mubr.f32.gmra.mrb[0].mxu0 %v2226
    %v2392 = vpop.f32.mrb[0].mxu0
    %v2393 = vadd.f32 %v2280, %v2392
    %v2394 = vpop.f32.mrb[0].mxu0
    %2395 = vmatprep.mubr.f32.mxu0 0.0
    %2396 = vmatmul.mubr.f32.gmra.mrb[0].mxu0 %v2231
    %v2397 = vpop.f32.mrb[0].mxu0
    %v2398 = vadd.f32 %v2280, %v2397
    %v2399 = vpop.f32.mrb[0].mxu0
    %2400 = vmatprep.mubr.f32.mxu0 0.0
    %2401 = vmatmul.mubr.f32.gmra.mrb[0].mxu0 %v2236
    %v2402 = vpop.f32.mrb[0].mxu0
    %v2403 = vadd.f32 %v2280, %v2402
    %v2404 = vpop.f32.mrb[0].mxu0
    %2405 = vmatprep.mubr.f32.mxu0 0.0
    %2406 = vmatmul.mubr.f32.gmra.mrb[0].mxu0 %v2241
    %v2407 = vpop.f32.mrb[0].mxu0
    %v2408 = vadd.f32 %v2280, %v2407
    %v2409 = vpop.f32.mrb[0].mxu0
    %2410 = vmatprep.mubr.f32.mxu0 0.0
    %2411 = vmatmul.mubr.f32.gmra.mrb[0].mxu0 %v2246
    %v2412 = vpop.f32.mrb[0].mxu0
    %v2413 = vadd.f32 %v2280, %v2412
    %v2414 = vpop.f32.mrb[0].mxu0
    %2415 = vmatprep.mubr.f32.mxu0 0.0
    %2416 = vmatmul.mubr.f32.gmra.mrb[0].mxu0 %v2251
    %v2417 = vpop.f32.mrb[0].mxu0
    %v2418 = vadd.f32 %v2280, %v2417
    %v2419 = vpop.f32.mrb[0].mxu0
    %2420 = vmatprep.mubr.f32.mxu0 0.0
    %2421 = vmatmul.mubr.f32.gmra.mrb[0].mxu0 %v2256
    %v2422 = vpop.f32.mrb[0].mxu0
    %v2423 = vadd.f32 %v2280, %v2422
    %v2424 = vpop.f32.mrb[0].mxu0
    %2425 = vdwg.mxu0
    %v2426 = vmax.f32 %v2348, 0.0
    %v2427 = vmax.f32 %v2353, 0.0
    %v2428 = vmax.f32 %v2358, 0.0
    %v2429 = vmax.f32 %v2363, 0.0
    %v2430 = vmax.f32 %v2368, 0.0
    %v2431 = vmax.f32 %v2373, 0.0
    %v2432 = vmax.f32 %v2378, 0.0
    %v2433 = vmax.f32 %v2383, 0.0
    %v2434 = vmax.f32 %v2388, 0.0
    %v2435 = vmax.f32 %v2393, 0.0
    %v2436 = vmax.f32 %v2398, 0.0
    %v2437 = vmax.f32 %v2403, 0.0
    %v2438 = vmax.f32 %v2408, 0.0
    %v2439 = vmax.f32 %v2413, 0.0
    %v2440 = vmax.f32 %v2418, 0.0
    %v2441 = vmax.f32 %v2423, 0.0
    %s2442 = scalar_lea.vmem %s2, 256
    %v2443 = vld [vmem:[%s2442] sm:$0xff]
    %v2444 = vld [vmem:[%s2442 + $0x8] sm:$0xff]
    %v2445 = vld [vmem:[%s2442 + $0x10] sm:$0xff]
    %v2446 = vld [vmem:[%s2442 + $0x18] sm:$0xff]
    %v2447 = vld [vmem:[%s2442 + $0x20] sm:$0xff]
    %v2448 = vld [vmem:[%s2442 + $0x28] sm:$0xff]
    %v2449 = vld [vmem:[%s2442 + $0x30] sm:$0xff]
    %v2450 = vld [vmem:[%s2442 + $0x38] sm:$0xff]
    %v2451 = vld [vmem:[%s2442 + $0x40] sm:$0xff]
    %v2452 = vld [vmem:[%s2442 + $0x48] sm:$0xff]
    %v2453 = vld [vmem:[%s2442 + $0x50] sm:$0xff]
    %v2454 = vld [vmem:[%s2442 + $0x58] sm:$0xff]
    %v2455 = vld [vmem:[%s2442 + $0x60] sm:$0xff]
    %v2456 = vld [vmem:[%s2442 + $0x68] sm:$0xff]
    %v2457 = vld [vmem:[%s2442 + $0x70] sm:$0xff]
    %v2458 = vld [vmem:[%s2442 + $0x78] sm:$0xff]
    %v2459 = vld [vmem:[%s4 + $0x5] sm:$0x1]
    %v2460 = vlaneseq
    %v2461 = vshrl.u32 %v2460, 7
    %v2462 = vsub.s32 0, %v2461
    %v2463 = vrot.slane %v2459, %v2462
    %2464 = vmatprep.subr.mxu0 0.0
    %2465 = vmatpush1.msra.mxu0 %v2443
    %2466 = vmatprep.subr.mxu0 0.0
    %2467 = vmatpush1.msra.mxu0 %v2444
    %2468 = vmatprep.subr.mxu0 0.0
    %2469 = vmatpush1.msra.mxu0 %v2445
    %2470 = vmatprep.subr.mxu0 0.0
    %2471 = vmatpush1.msra.mxu0 %v2446
    %2472 = vmatprep.subr.mxu0 0.0
    %2473 = vmatpush1.msra.mxu0 %v2447
    %2474 = vmatprep.subr.mxu0 0.0
    %2475 = vmatpush1.msra.mxu0 %v2448
    %2476 = vmatprep.subr.mxu0 0.0
    %2477 = vmatpush1.msra.mxu0 %v2449
    %2478 = vmatprep.subr.mxu0 0.0
    %2479 = vmatpush1.msra.mxu0 %v2450
    %2480 = vmatprep.subr.mxu0 0.0
    %2481 = vmatpush1.msra.mxu0 %v2451
    %2482 = vmatprep.subr.mxu0 0.0
    %2483 = vmatpush1.msra.mxu0 %v2452
    %2484 = vmatprep.subr.mxu0 0.0
    %2485 = vmatpush1.msra.mxu0 %v2453
    %2486 = vmatprep.subr.mxu0 0.0
    %2487 = vmatpush1.msra.mxu0 %v2454
    %2488 = vmatprep.subr.mxu0 0.0
    %2489 = vmatpush1.msra.mxu0 %v2455
    %2490 = vmatprep.subr.mxu0 0.0
    %2491 = vmatpush1.msra.mxu0 %v2456
    %2492 = vmatprep.subr.mxu0 0.0
    %2493 = vmatpush1.msra.mxu0 %v2457
    %2494 = vmatprep.subr.mxu0 0.0
    %2495 = vmatpush1.msra.mxu0 %v2458
    %2496 = vmatprep.subr.mxu0 0.0
    %2497 = vmatpush1.msra.mxu0 0.0
    %2498 = vmatprep.subr.mxu0 0.0
    %2499 = vmatpush1.msra.mxu0 0.0
    %2500 = vmatprep.subr.mxu0 0.0
    %2501 = vmatpush1.msra.mxu0 0.0
    %2502 = vmatprep.subr.mxu0 0.0
    %2503 = vmatpush1.msra.mxu0 0.0
    %2504 = vmatprep.subr.mxu0 0.0
    %2505 = vmatpush1.msra.mxu0 0.0
    %2506 = vmatprep.subr.mxu0 0.0
    %2507 = vmatpush1.msra.mxu0 0.0
    %2508 = vmatprep.subr.mxu0 0.0
    %2509 = vmatpush1.msra.mxu0 0.0
    %2510 = vmatprep.subr.mxu0 0.0
    %2511 = vmatpush1.msra.mxu0 0.0
    %2512 = vmatprep.subr.mxu0 0.0
    %2513 = vmatpush1.msra.mxu0 0.0
    %2514 = vmatprep.subr.mxu0 0.0
    %2515 = vmatpush1.msra.mxu0 0.0
    %2516 = vmatprep.subr.mxu0 0.0
    %2517 = vmatpush1.msra.mxu0 0.0
    %2518 = vmatprep.subr.mxu0 0.0
    %2519 = vmatpush1.msra.mxu0 0.0
    %2520 = vmatprep.subr.mxu0 0.0
    %2521 = vmatpush1.msra.mxu0 0.0
    %2522 = vmatprep.subr.mxu0 0.0
    %2523 = vmatpush1.msra.mxu0 0.0
    %2524 = vmatprep.subr.mxu0 0.0
    %2525 = vmatpush1.msra.mxu0 0.0
    %2526 = vmatprep.subr.mxu0 0.0
    %2527 = vmatpush1.msra.mxu0 0.0
    %2528 = vmatprep.mubr.f32.mxu0 0.0
    %2529 = vmatmul.mubr.f32.gmra.mrb[0].mxu0 %v2426
    %v2530 = vpop.f32.mrb[0].mxu0
    %v2531 = vadd.f32 %v2463, %v2530
    %v2532 = vpop.f32.mrb[0].mxu0
    %2533 = vmatprep.mubr.f32.mxu0 0.0
    %2534 = vmatmul.mubr.f32.gmra.mrb[0].mxu0 %v2427
    %v2535 = vpop.f32.mrb[0].mxu0
    %v2536 = vadd.f32 %v2463, %v2535
    %v2537 = vpop.f32.mrb[0].mxu0
    %2538 = vmatprep.mubr.f32.mxu0 0.0
    %2539 = vmatmul.mubr.f32.gmra.mrb[0].mxu0 %v2428
    %v2540 = vpop.f32.mrb[0].mxu0
    %v2541 = vadd.f32 %v2463, %v2540
    %v2542 = vpop.f32.mrb[0].mxu0
    %2543 = vmatprep.mubr.f32.mxu0 0.0
    %2544 = vmatmul.mubr.f32.gmra.mrb[0].mxu0 %v2429
    %v2545 = vpop.f32.mrb[0].mxu0
    %v2546 = vadd.f32 %v2463, %v2545
    %v2547 = vpop.f32.mrb[0].mxu0
    %2548 = vmatprep.mubr.f32.mxu0 0.0
    %2549 = vmatmul.mubr.f32.gmra.mrb[0].mxu0 %v2430
    %v2550 = vpop.f32.mrb[0].mxu0
    %v2551 = vadd.f32 %v2463, %v2550
    %v2552 = vpop.f32.mrb[0].mxu0
    %2553 = vmatprep.mubr.f32.mxu0 0.0
    %2554 = vmatmul.mubr.f32.gmra.mrb[0].mxu0 %v2431
    %v2555 = vpop.f32.mrb[0].mxu0
    %v2556 = vadd.f32 %v2463, %v2555
    %v2557 = vpop.f32.mrb[0].mxu0
    %2558 = vmatprep.mubr.f32.mxu0 0.0
    %2559 = vmatmul.mubr.f32.gmra.mrb[0].mxu0 %v2432
    %v2560 = vpop.f32.mrb[0].mxu0
    %v2561 = vadd.f32 %v2463, %v2560
    %v2562 = vpop.f32.mrb[0].mxu0
    %2563 = vmatprep.mubr.f32.mxu0 0.0
    %2564 = vmatmul.mubr.f32.gmra.mrb[0].mxu0 %v2433
    %v2565 = vpop.f32.mrb[0].mxu0
    %v2566 = vadd.f32 %v2463, %v2565
    %v2567 = vpop.f32.mrb[0].mxu0
    %2568 = vmatprep.mubr.f32.mxu0 0.0
    %2569 = vmatmul.mubr.f32.gmra.mrb[0].mxu0 %v2434
    %v2570 = vpop.f32.mrb[0].mxu0
    %v2571 = vadd.f32 %v2463, %v2570
    %v2572 = vpop.f32.mrb[0].mxu0
    %2573 = vmatprep.mubr.f32.mxu0 0.0
    %2574 = vmatmul.mubr.f32.gmra.mrb[0].mxu0 %v2435
    %v2575 = vpop.f32.mrb[0].mxu0
    %v2576 = vadd.f32 %v2463, %v2575
    %v2577 = vpop.f32.mrb[0].mxu0
    %2578 = vmatprep.mubr.f32.mxu0 0.0
    %2579 = vmatmul.mubr.f32.gmra.mrb[0].mxu0 %v2436
    %v2580 = vpop.f32.mrb[0].mxu0
    %v2581 = vadd.f32 %v2463, %v2580
    %v2582 = vpop.f32.mrb[0].mxu0
    %2583 = vmatprep.mubr.f32.mxu0 0.0
    %2584 = vmatmul.mubr.f32.gmra.mrb[0].mxu0 %v2437
    %v2585 = vpop.f32.mrb[0].mxu0
    %v2586 = vadd.f32 %v2463, %v2585
    %v2587 = vpop.f32.mrb[0].mxu0
    %2588 = vmatprep.mubr.f32.mxu0 0.0
    %2589 = vmatmul.mubr.f32.gmra.mrb[0].mxu0 %v2438
    %v2590 = vpop.f32.mrb[0].mxu0
    %v2591 = vadd.f32 %v2463, %v2590
    %v2592 = vpop.f32.mrb[0].mxu0
    %2593 = vmatprep.mubr.f32.mxu0 0.0
    %2594 = vmatmul.mubr.f32.gmra.mrb[0].mxu0 %v2439
    %v2595 = vpop.f32.mrb[0].mxu0
    %v2596 = vadd.f32 %v2463, %v2595
    %v2597 = vpop.f32.mrb[0].mxu0
    %2598 = vmatprep.mubr.f32.mxu0 0.0
    %2599 = vmatmul.mubr.f32.gmra.mrb[0].mxu0 %v2440
    %v2600 = vpop.f32.mrb[0].mxu0
    %v2601 = vadd.f32 %v2463, %v2600
    %v2602 = vpop.f32.mrb[0].mxu0
    %2603 = vmatprep.mubr.f32.mxu0 0.0
    %2604 = vmatmul.mubr.f32.gmra.mrb[0].mxu0 %v2441
    %v2605 = vpop.f32.mrb[0].mxu0
    %v2606 = vadd.f32 %v2463, %v2605
    %v2607 = vpop.f32.mrb[0].mxu0
    %2608 = vdwg.mxu0
    %v2609 = vxor.u32 %v2531, 2147483648
    %v2610 = vxor.u32 %v2536, 2147483648
    %v2611 = vxor.u32 %v2541, 2147483648
    %v2612 = vxor.u32 %v2546, 2147483648
    %v2613 = vxor.u32 %v2551, 2147483648
    %v2614 = vxor.u32 %v2556, 2147483648
    %v2615 = vxor.u32 %v2561, 2147483648
    %v2616 = vxor.u32 %v2566, 2147483648
    %v2617 = vxor.u32 %v2571, 2147483648
    %v2618 = vxor.u32 %v2576, 2147483648
    %v2619 = vxor.u32 %v2581, 2147483648
    %v2620 = vxor.u32 %v2586, 2147483648
    %v2621 = vxor.u32 %v2591, 2147483648
    %v2622 = vxor.u32 %v2596, 2147483648
    %v2623 = vxor.u32 %v2601, 2147483648
    %v2624 = vxor.u32 %v2606, 2147483648
    %v2625 = vmul.f32 %v2609, 1.442695
    %v2626 = vpow.pop %v2625
    %v2627 = vmul.f32 %v2610, 1.442695
    %v2628 = vpow.pop %v2627
    %v2629 = vmul.f32 %v2611, 1.442695
    %v2630 = vpow.pop %v2629
    %v2631 = vmul.f32 %v2612, 1.442695
    %v2632 = vpow.pop %v2631
    %v2633 = vmul.f32 %v2613, 1.442695
    %v2634 = vpow.pop %v2633
    %v2635 = vmul.f32 %v2614, 1.442695
    %v2636 = vpow.pop %v2635
    %v2637 = vmul.f32 %v2615, 1.442695
    %v2638 = vpow.pop %v2637
    %v2639 = vmul.f32 %v2616, 1.442695
    %v2640 = vpow.pop %v2639
    %v2641 = vmul.f32 %v2617, 1.442695
    %v2642 = vpow.pop %v2641
    %v2643 = vmul.f32 %v2618, 1.442695
    %v2644 = vpow.pop %v2643
    %v2645 = vmul.f32 %v2619, 1.442695
    %v2646 = vpow.pop %v2645
    %v2647 = vmul.f32 %v2620, 1.442695
    %v2648 = vpow.pop %v2647
    %v2649 = vmul.f32 %v2621, 1.442695
    %v2650 = vpow.pop %v2649
    %v2651 = vmul.f32 %v2622, 1.442695
    %v2652 = vpow.pop %v2651
    %v2653 = vmul.f32 %v2623, 1.442695
    %v2654 = vpow.pop %v2653
    %v2655 = vmul.f32 %v2624, 1.442695
    %v2656 = vpow.pop %v2655
    %v2657 = vadd.f32 %v2626, 1.0
    %v2658 = vadd.f32 %v2628, 1.0
    %v2659 = vadd.f32 %v2630, 1.0
    %v2660 = vadd.f32 %v2632, 1.0
    %v2661 = vadd.f32 %v2634, 1.0
    %v2662 = vadd.f32 %v2636, 1.0
    %v2663 = vadd.f32 %v2638, 1.0
    %v2664 = vadd.f32 %v2640, 1.0
    %v2665 = vadd.f32 %v2642, 1.0
    %v2666 = vadd.f32 %v2644, 1.0
    %v2667 = vadd.f32 %v2646, 1.0
    %v2668 = vadd.f32 %v2648, 1.0
    %v2669 = vadd.f32 %v2650, 1.0
    %v2670 = vadd.f32 %v2652, 1.0
    %v2671 = vadd.f32 %v2654, 1.0
    %v2672 = vadd.f32 %v2656, 1.0
    %v2673 = vrcp.pop %v2657
    %v2674 = vmul.f32 1.0, %v2673
    %v2675 = vrcp.pop %v2658
    %v2676 = vmul.f32 1.0, %v2675
    %v2677 = vrcp.pop %v2659
    %v2678 = vmul.f32 1.0, %v2677
    %v2679 = vrcp.pop %v2660
    %v2680 = vmul.f32 1.0, %v2679
    %v2681 = vrcp.pop %v2661
    %v2682 = vmul.f32 1.0, %v2681
    %v2683 = vrcp.pop %v2662
    %v2684 = vmul.f32 1.0, %v2683
    %v2685 = vrcp.pop %v2663
    %v2686 = vmul.f32 1.0, %v2685
    %v2687 = vrcp.pop %v2664
    %v2688 = vmul.f32 1.0, %v2687
    %v2689 = vrcp.pop %v2665
    %v2690 = vmul.f32 1.0, %v2689
    %v2691 = vrcp.pop %v2666
    %v2692 = vmul.f32 1.0, %v2691
    %v2693 = vrcp.pop %v2667
    %v2694 = vmul.f32 1.0, %v2693
    %v2695 = vrcp.pop %v2668
    %v2696 = vmul.f32 1.0, %v2695
    %v2697 = vrcp.pop %v2669
    %v2698 = vmul.f32 1.0, %v2697
    %v2699 = vrcp.pop %v2670
    %v2700 = vmul.f32 1.0, %v2699
    %v2701 = vrcp.pop %v2671
    %v2702 = vmul.f32 1.0, %v2701
    %v2703 = vrcp.pop %v2672
    %v2704 = vmul.f32 1.0, %v2703
    %v2705 = vmul.f32 %v2081, %v2674
    %v2706 = vmul.f32 %v2082, %v2676
    %v2707 = vmul.f32 %v2083, %v2678
    %v2708 = vmul.f32 %v2084, %v2680
    %v2709 = vmul.f32 %v2085, %v2682
    %v2710 = vmul.f32 %v2086, %v2684
    %v2711 = vmul.f32 %v2087, %v2686
    %v2712 = vmul.f32 %v2088, %v2688
    %v2713 = vmul.f32 %v2089, %v2690
    %v2714 = vmul.f32 %v2090, %v2692
    %v2715 = vmul.f32 %v2091, %v2694
    %v2716 = vmul.f32 %v2092, %v2696
    %v2717 = vmul.f32 %v2093, %v2698
    %v2718 = vmul.f32 %v2094, %v2700
    %v2719 = vmul.f32 %v2095, %v2702
    %v2720 = vmul.f32 %v2096, %v2704
    %s2721 = scalar_lea.vmem %s2, 384
    %v2722 = vld [vmem:[%s2721] sm:$0xff]
    %v2723 = vld [vmem:[%s2721 + $0x8] sm:$0xff]
    %v2724 = vld [vmem:[%s2721 + $0x10] sm:$0xff]
    %v2725 = vld [vmem:[%s2721 + $0x18] sm:$0xff]
    %v2726 = vld [vmem:[%s2721 + $0x20] sm:$0xff]
    %v2727 = vld [vmem:[%s2721 + $0x28] sm:$0xff]
    %v2728 = vld [vmem:[%s2721 + $0x30] sm:$0xff]
    %v2729 = vld [vmem:[%s2721 + $0x38] sm:$0xff]
    %v2730 = vld [vmem:[%s2721 + $0x40] sm:$0xff]
    %v2731 = vld [vmem:[%s2721 + $0x48] sm:$0xff]
    %v2732 = vld [vmem:[%s2721 + $0x50] sm:$0xff]
    %v2733 = vld [vmem:[%s2721 + $0x58] sm:$0xff]
    %v2734 = vld [vmem:[%s2721 + $0x60] sm:$0xff]
    %v2735 = vld [vmem:[%s2721 + $0x68] sm:$0xff]
    %v2736 = vld [vmem:[%s2721 + $0x70] sm:$0xff]
    %v2737 = vld [vmem:[%s2721 + $0x78] sm:$0xff]
    %2738 = vmatprep.subr.mxu0 0.0
    %2739 = vmatpush1.msra.mxu0 %v2722
    %2740 = vmatprep.subr.mxu0 0.0
    %2741 = vmatpush1.msra.mxu0 %v2723
    %2742 = vmatprep.subr.mxu0 0.0
    %2743 = vmatpush1.msra.mxu0 %v2724
    %2744 = vmatprep.subr.mxu0 0.0
    %2745 = vmatpush1.msra.mxu0 %v2725
    %2746 = vmatprep.subr.mxu0 0.0
    %2747 = vmatpush1.msra.mxu0 %v2726
    %2748 = vmatprep.subr.mxu0 0.0
    %2749 = vmatpush1.msra.mxu0 %v2727
    %2750 = vmatprep.subr.mxu0 0.0
    %2751 = vmatpush1.msra.mxu0 %v2728
    %2752 = vmatprep.subr.mxu0 0.0
    %2753 = vmatpush1.msra.mxu0 %v2729
    %2754 = vmatprep.subr.mxu0 0.0
    %2755 = vmatpush1.msra.mxu0 %v2730
    %2756 = vmatprep.subr.mxu0 0.0
    %2757 = vmatpush1.msra.mxu0 %v2731
    %2758 = vmatprep.subr.mxu0 0.0
    %2759 = vmatpush1.msra.mxu0 %v2732
    %2760 = vmatprep.subr.mxu0 0.0
    %2761 = vmatpush1.msra.mxu0 %v2733
    %2762 = vmatprep.subr.mxu0 0.0
    %2763 = vmatpush1.msra.mxu0 %v2734
    %2764 = vmatprep.subr.mxu0 0.0
    %2765 = vmatpush1.msra.mxu0 %v2735
    %2766 = vmatprep.subr.mxu0 0.0
    %2767 = vmatpush1.msra.mxu0 %v2736
    %2768 = vmatprep.subr.mxu0 0.0
    %2769 = vmatpush1.msra.mxu0 %v2737
    %2770 = vmatprep.subr.mxu0 0.0
    %2771 = vmatpush1.msra.mxu0 0.0
    %2772 = vmatprep.subr.mxu0 0.0
    %2773 = vmatpush1.msra.mxu0 0.0
    %2774 = vmatprep.subr.mxu0 0.0
    %2775 = vmatpush1.msra.mxu0 0.0
    %2776 = vmatprep.subr.mxu0 0.0
    %2777 = vmatpush1.msra.mxu0 0.0
    %2778 = vmatprep.subr.mxu0 0.0
    %2779 = vmatpush1.msra.mxu0 0.0
    %2780 = vmatprep.subr.mxu0 0.0
    %2781 = vmatpush1.msra.mxu0 0.0
    %2782 = vmatprep.subr.mxu0 0.0
    %2783 = vmatpush1.msra.mxu0 0.0
    %2784 = vmatprep.subr.mxu0 0.0
    %2785 = vmatpush1.msra.mxu0 0.0
    %2786 = vmatprep.subr.mxu0 0.0
    %2787 = vmatpush1.msra.mxu0 0.0
    %2788 = vmatprep.subr.mxu0 0.0
    %2789 = vmatpush1.msra.mxu0 0.0
    %2790 = vmatprep.subr.mxu0 0.0
    %2791 = vmatpush1.msra.mxu0 0.0
    %2792 = vmatprep.subr.mxu0 0.0
    %2793 = vmatpush1.msra.mxu0 0.0
    %2794 = vmatprep.subr.mxu0 0.0
    %2795 = vmatpush1.msra.mxu0 0.0
    %2796 = vmatprep.subr.mxu0 0.0
    %2797 = vmatpush1.msra.mxu0 0.0
    %2798 = vmatprep.subr.mxu0 0.0
    %2799 = vmatpush1.msra.mxu0 0.0
    %2800 = vmatprep.subr.mxu0 0.0
    %2801 = vmatpush1.msra.mxu0 0.0
    %2802 = vmatprep.mubr.f32.mxu0 0.0
    %2803 = vmatmul.mubr.f32.gmra.mrb[0].mxu0 %v2705
    %v2804 = vpop.f32.mrb[0].mxu0
    %v2805 = vadd.f32 0.0, %v2804
    %v2806 = vpop.f32.mrb[0].mxu0
    %2807 = vmatprep.mubr.f32.mxu0 0.0
    %2808 = vmatmul.mubr.f32.gmra.mrb[0].mxu0 %v2706
    %v2809 = vpop.f32.mrb[0].mxu0
    %v2810 = vadd.f32 0.0, %v2809
    %v2811 = vpop.f32.mrb[0].mxu0
    %2812 = vmatprep.mubr.f32.mxu0 0.0
    %2813 = vmatmul.mubr.f32.gmra.mrb[0].mxu0 %v2707
    %v2814 = vpop.f32.mrb[0].mxu0
    %v2815 = vadd.f32 0.0, %v2814
    %v2816 = vpop.f32.mrb[0].mxu0
    %2817 = vmatprep.mubr.f32.mxu0 0.0
    %2818 = vmatmul.mubr.f32.gmra.mrb[0].mxu0 %v2708
    %v2819 = vpop.f32.mrb[0].mxu0
    %v2820 = vadd.f32 0.0, %v2819
    %v2821 = vpop.f32.mrb[0].mxu0
    %2822 = vmatprep.mubr.f32.mxu0 0.0
    %2823 = vmatmul.mubr.f32.gmra.mrb[0].mxu0 %v2709
    %v2824 = vpop.f32.mrb[0].mxu0
    %v2825 = vadd.f32 0.0, %v2824
    %v2826 = vpop.f32.mrb[0].mxu0
    %2827 = vmatprep.mubr.f32.mxu0 0.0
    %2828 = vmatmul.mubr.f32.gmra.mrb[0].mxu0 %v2710
    %v2829 = vpop.f32.mrb[0].mxu0
    %v2830 = vadd.f32 0.0, %v2829
    %v2831 = vpop.f32.mrb[0].mxu0
    %2832 = vmatprep.mubr.f32.mxu0 0.0
    %2833 = vmatmul.mubr.f32.gmra.mrb[0].mxu0 %v2711
    %v2834 = vpop.f32.mrb[0].mxu0
    %v2835 = vadd.f32 0.0, %v2834
    %v2836 = vpop.f32.mrb[0].mxu0
    %2837 = vmatprep.mubr.f32.mxu0 0.0
    %2838 = vmatmul.mubr.f32.gmra.mrb[0].mxu0 %v2712
    %v2839 = vpop.f32.mrb[0].mxu0
    %v2840 = vadd.f32 0.0, %v2839
    %v2841 = vpop.f32.mrb[0].mxu0
    %2842 = vmatprep.mubr.f32.mxu0 0.0
    %2843 = vmatmul.mubr.f32.gmra.mrb[0].mxu0 %v2713
    %v2844 = vpop.f32.mrb[0].mxu0
    %v2845 = vadd.f32 0.0, %v2844
    %v2846 = vpop.f32.mrb[0].mxu0
    %2847 = vmatprep.mubr.f32.mxu0 0.0
    %2848 = vmatmul.mubr.f32.gmra.mrb[0].mxu0 %v2714
    %v2849 = vpop.f32.mrb[0].mxu0
    %v2850 = vadd.f32 0.0, %v2849
    %v2851 = vpop.f32.mrb[0].mxu0
    %2852 = vmatprep.mubr.f32.mxu0 0.0
    %2853 = vmatmul.mubr.f32.gmra.mrb[0].mxu0 %v2715
    %v2854 = vpop.f32.mrb[0].mxu0
    %v2855 = vadd.f32 0.0, %v2854
    %v2856 = vpop.f32.mrb[0].mxu0
    %2857 = vmatprep.mubr.f32.mxu0 0.0
    %2858 = vmatmul.mubr.f32.gmra.mrb[0].mxu0 %v2716
    %v2859 = vpop.f32.mrb[0].mxu0
    %v2860 = vadd.f32 0.0, %v2859
    %v2861 = vpop.f32.mrb[0].mxu0
    %2862 = vmatprep.mubr.f32.mxu0 0.0
    %2863 = vmatmul.mubr.f32.gmra.mrb[0].mxu0 %v2717
    %v2864 = vpop.f32.mrb[0].mxu0
    %v2865 = vadd.f32 0.0, %v2864
    %v2866 = vpop.f32.mrb[0].mxu0
    %2867 = vmatprep.mubr.f32.mxu0 0.0
    %2868 = vmatmul.mubr.f32.gmra.mrb[0].mxu0 %v2718
    %v2869 = vpop.f32.mrb[0].mxu0
    %v2870 = vadd.f32 0.0, %v2869
    %v2871 = vpop.f32.mrb[0].mxu0
    %2872 = vmatprep.mubr.f32.mxu0 0.0
    %2873 = vmatmul.mubr.f32.gmra.mrb[0].mxu0 %v2719
    %v2874 = vpop.f32.mrb[0].mxu0
    %v2875 = vadd.f32 0.0, %v2874
    %v2876 = vpop.f32.mrb[0].mxu0
    %2877 = vmatprep.mubr.f32.mxu0 0.0
    %2878 = vmatmul.mubr.f32.gmra.mrb[0].mxu0 %v2720
    %v2879 = vpop.f32.mrb[0].mxu0
    %v2880 = vadd.f32 0.0, %v2879
    %v2881 = vpop.f32.mrb[0].mxu0
    %2882 = vdwg.mxu0
    %v2883 = vld [vmem:[%s4 + $0x6] sm:$0x1]
    %v2884 = vlaneseq
    %v2885 = vshrl.u32 %v2884, 7
    %v2886 = vsub.s32 0, %v2885
    %v2887 = vrot.slane %v2883, %v2886
    %v2888 = vmul.f32 %v2805, %v2887
    %v2889 = vmul.f32 %v2810, %v2887
    %v2890 = vmul.f32 %v2815, %v2887
    %v2891 = vmul.f32 %v2820, %v2887
    %v2892 = vmul.f32 %v2825, %v2887
    %v2893 = vmul.f32 %v2830, %v2887
    %v2894 = vmul.f32 %v2835, %v2887
    %v2895 = vmul.f32 %v2840, %v2887
    %v2896 = vmul.f32 %v2845, %v2887
    %v2897 = vmul.f32 %v2850, %v2887
    %v2898 = vmul.f32 %v2855, %v2887
    %v2899 = vmul.f32 %v2860, %v2887
    %v2900 = vmul.f32 %v2865, %v2887
    %v2901 = vmul.f32 %v2870, %v2887
    %v2902 = vmul.f32 %v2875, %v2887
    %v2903 = vmul.f32 %v2880, %v2887
    %v2904 = vld [vmem:[%s4 + $0x7] sm:$0x1]
    %v2905 = vlaneseq
    %v2906 = vshrl.u32 %v2905, 7
    %v2907 = vsub.s32 0, %v2906
    %v2908 = vrot.slane %v2904, %v2907
    %v2909 = vadd.f32 %v2888, %v2908
    %v2910 = vadd.f32 %v2889, %v2908
    %v2911 = vadd.f32 %v2890, %v2908
    %v2912 = vadd.f32 %v2891, %v2908
    %v2913 = vadd.f32 %v2892, %v2908
    %v2914 = vadd.f32 %v2893, %v2908
    %v2915 = vadd.f32 %v2894, %v2908
    %v2916 = vadd.f32 %v2895, %v2908
    %v2917 = vadd.f32 %v2896, %v2908
    %v2918 = vadd.f32 %v2897, %v2908
    %v2919 = vadd.f32 %v2898, %v2908
    %v2920 = vadd.f32 %v2899, %v2908
    %v2921 = vadd.f32 %v2900, %v2908
    %v2922 = vadd.f32 %v2901, %v2908
    %v2923 = vadd.f32 %v2902, %v2908
    %v2924 = vadd.f32 %v2903, %v2908
    %v2925 = vadd.f32 %v2909, %v240
    %v2926 = vadd.f32 %v2910, %v241
    %v2927 = vadd.f32 %v2911, %v242
    %v2928 = vadd.f32 %v2912, %v243
    %v2929 = vadd.f32 %v2913, %v244
    %v2930 = vadd.f32 %v2914, %v245
    %v2931 = vadd.f32 %v2915, %v246
    %v2932 = vadd.f32 %v2916, %v247
    %v2933 = vadd.f32 %v2917, %v248
    %v2934 = vadd.f32 %v2918, %v249
    %v2935 = vadd.f32 %v2919, %v250
    %v2936 = vadd.f32 %v2920, %v251
    %v2937 = vadd.f32 %v2921, %v252
    %v2938 = vadd.f32 %v2922, %v253
    %v2939 = vadd.f32 %v2923, %v254
    %v2940 = vadd.f32 %v2924, %v255
    %s2941 = scalar_lea.vmem %s2, 512
    %v2942 = vld [vmem:[%s2941] sm:$0xff]
    %v2943 = vld [vmem:[%s2941 + $0x8] sm:$0xff]
    %v2944 = vld [vmem:[%s2941 + $0x10] sm:$0xff]
    %v2945 = vld [vmem:[%s2941 + $0x18] sm:$0xff]
    %v2946 = vld [vmem:[%s2941 + $0x20] sm:$0xff]
    %v2947 = vld [vmem:[%s2941 + $0x28] sm:$0xff]
    %v2948 = vld [vmem:[%s2941 + $0x30] sm:$0xff]
    %v2949 = vld [vmem:[%s2941 + $0x38] sm:$0xff]
    %v2950 = vld [vmem:[%s2941 + $0x40] sm:$0xff]
    %v2951 = vld [vmem:[%s2941 + $0x48] sm:$0xff]
    %v2952 = vld [vmem:[%s2941 + $0x50] sm:$0xff]
    %v2953 = vld [vmem:[%s2941 + $0x58] sm:$0xff]
    %v2954 = vld [vmem:[%s2941 + $0x60] sm:$0xff]
    %v2955 = vld [vmem:[%s2941 + $0x68] sm:$0xff]
    %v2956 = vld [vmem:[%s2941 + $0x70] sm:$0xff]
    %v2957 = vld [vmem:[%s2941 + $0x78] sm:$0xff]
    %2958 = vmatprep.subr.mxu0 0.0
    %2959 = vmatpush1.msra.mxu0 %v2942
    %2960 = vmatprep.subr.mxu0 0.0
    %2961 = vmatpush1.msra.mxu0 %v2943
    %2962 = vmatprep.subr.mxu0 0.0
    %2963 = vmatpush1.msra.mxu0 %v2944
    %2964 = vmatprep.subr.mxu0 0.0
    %2965 = vmatpush1.msra.mxu0 %v2945
    %2966 = vmatprep.subr.mxu0 0.0
    %2967 = vmatpush1.msra.mxu0 %v2946
    %2968 = vmatprep.subr.mxu0 0.0
    %2969 = vmatpush1.msra.mxu0 %v2947
    %2970 = vmatprep.subr.mxu0 0.0
    %2971 = vmatpush1.msra.mxu0 %v2948
    %2972 = vmatprep.subr.mxu0 0.0
    %2973 = vmatpush1.msra.mxu0 %v2949
    %2974 = vmatprep.subr.mxu0 0.0
    %2975 = vmatpush1.msra.mxu0 %v2950
    %2976 = vmatprep.subr.mxu0 0.0
    %2977 = vmatpush1.msra.mxu0 %v2951
    %2978 = vmatprep.subr.mxu0 0.0
    %2979 = vmatpush1.msra.mxu0 %v2952
    %2980 = vmatprep.subr.mxu0 0.0
    %2981 = vmatpush1.msra.mxu0 %v2953
    %2982 = vmatprep.subr.mxu0 0.0
    %2983 = vmatpush1.msra.mxu0 %v2954
    %2984 = vmatprep.subr.mxu0 0.0
    %2985 = vmatpush1.msra.mxu0 %v2955
    %2986 = vmatprep.subr.mxu0 0.0
    %2987 = vmatpush1.msra.mxu0 %v2956
    %2988 = vmatprep.subr.mxu0 0.0
    %2989 = vmatpush1.msra.mxu0 %v2957
    %2990 = vmatprep.subr.mxu0 0.0
    %2991 = vmatpush1.msra.mxu0 0.0
    %2992 = vmatprep.subr.mxu0 0.0
    %2993 = vmatpush1.msra.mxu0 0.0
    %2994 = vmatprep.subr.mxu0 0.0
    %2995 = vmatpush1.msra.mxu0 0.0
    %2996 = vmatprep.subr.mxu0 0.0
    %2997 = vmatpush1.msra.mxu0 0.0
    %2998 = vmatprep.subr.mxu0 0.0
    %2999 = vmatpush1.msra.mxu0 0.0
    %3000 = vmatprep.subr.mxu0 0.0
    %3001 = vmatpush1.msra.mxu0 0.0
    %3002 = vmatprep.subr.mxu0 0.0
    %3003 = vmatpush1.msra.mxu0 0.0
    %3004 = vmatprep.subr.mxu0 0.0
    %3005 = vmatpush1.msra.mxu0 0.0
    %3006 = vmatprep.subr.mxu0 0.0
    %3007 = vmatpush1.msra.mxu0 0.0
    %3008 = vmatprep.subr.mxu0 0.0
    %3009 = vmatpush1.msra.mxu0 0.0
    %3010 = vmatprep.subr.mxu0 0.0
    %3011 = vmatpush1.msra.mxu0 0.0
    %3012 = vmatprep.subr.mxu0 0.0
    %3013 = vmatpush1.msra.mxu0 0.0
    %3014 = vmatprep.subr.mxu0 0.0
    %3015 = vmatpush1.msra.mxu0 0.0
    %3016 = vmatprep.subr.mxu0 0.0
    %3017 = vmatpush1.msra.mxu0 0.0
    %3018 = vmatprep.subr.mxu0 0.0
    %3019 = vmatpush1.msra.mxu0 0.0
    %3020 = vmatprep.subr.mxu0 0.0
    %3021 = vmatpush1.msra.mxu0 0.0
    %3022 = vmatprep.mubr.f32.mxu0 0.0
    %3023 = vmatmul.mubr.f32.gmra.mrb[0].mxu0 %v2925
    %v3024 = vpop.f32.mrb[0].mxu0
    %v3025 = vadd.f32 0.0, %v3024
    %v3026 = vpop.f32.mrb[0].mxu0
    %3027 = vmatprep.mubr.f32.mxu0 0.0
    %3028 = vmatmul.mubr.f32.gmra.mrb[0].mxu0 %v2926
    %v3029 = vpop.f32.mrb[0].mxu0
    %v3030 = vadd.f32 0.0, %v3029
    %v3031 = vpop.f32.mrb[0].mxu0
    %3032 = vmatprep.mubr.f32.mxu0 0.0
    %3033 = vmatmul.mubr.f32.gmra.mrb[0].mxu0 %v2927
    %v3034 = vpop.f32.mrb[0].mxu0
    %v3035 = vadd.f32 0.0, %v3034
    %v3036 = vpop.f32.mrb[0].mxu0
    %3037 = vmatprep.mubr.f32.mxu0 0.0
    %3038 = vmatmul.mubr.f32.gmra.mrb[0].mxu0 %v2928
    %v3039 = vpop.f32.mrb[0].mxu0
    %v3040 = vadd.f32 0.0, %v3039
    %v3041 = vpop.f32.mrb[0].mxu0
    %3042 = vmatprep.mubr.f32.mxu0 0.0
    %3043 = vmatmul.mubr.f32.gmra.mrb[0].mxu0 %v2929
    %v3044 = vpop.f32.mrb[0].mxu0
    %v3045 = vadd.f32 0.0, %v3044
    %v3046 = vpop.f32.mrb[0].mxu0
    %3047 = vmatprep.mubr.f32.mxu0 0.0
    %3048 = vmatmul.mubr.f32.gmra.mrb[0].mxu0 %v2930
    %v3049 = vpop.f32.mrb[0].mxu0
    %v3050 = vadd.f32 0.0, %v3049
    %v3051 = vpop.f32.mrb[0].mxu0
    %3052 = vmatprep.mubr.f32.mxu0 0.0
    %3053 = vmatmul.mubr.f32.gmra.mrb[0].mxu0 %v2931
    %v3054 = vpop.f32.mrb[0].mxu0
    %v3055 = vadd.f32 0.0, %v3054
    %v3056 = vpop.f32.mrb[0].mxu0
    %3057 = vmatprep.mubr.f32.mxu0 0.0
    %3058 = vmatmul.mubr.f32.gmra.mrb[0].mxu0 %v2932
    %v3059 = vpop.f32.mrb[0].mxu0
    %v3060 = vadd.f32 0.0, %v3059
    %v3061 = vpop.f32.mrb[0].mxu0
    %3062 = vmatprep.mubr.f32.mxu0 0.0
    %3063 = vmatmul.mubr.f32.gmra.mrb[0].mxu0 %v2933
    %v3064 = vpop.f32.mrb[0].mxu0
    %v3065 = vadd.f32 0.0, %v3064
    %v3066 = vpop.f32.mrb[0].mxu0
    %3067 = vmatprep.mubr.f32.mxu0 0.0
    %3068 = vmatmul.mubr.f32.gmra.mrb[0].mxu0 %v2934
    %v3069 = vpop.f32.mrb[0].mxu0
    %v3070 = vadd.f32 0.0, %v3069
    %v3071 = vpop.f32.mrb[0].mxu0
    %3072 = vmatprep.mubr.f32.mxu0 0.0
    %3073 = vmatmul.mubr.f32.gmra.mrb[0].mxu0 %v2935
    %v3074 = vpop.f32.mrb[0].mxu0
    %v3075 = vadd.f32 0.0, %v3074
    %v3076 = vpop.f32.mrb[0].mxu0
    %3077 = vmatprep.mubr.f32.mxu0 0.0
    %3078 = vmatmul.mubr.f32.gmra.mrb[0].mxu0 %v2936
    %v3079 = vpop.f32.mrb[0].mxu0
    %v3080 = vadd.f32 0.0, %v3079
    %v3081 = vpop.f32.mrb[0].mxu0
    %3082 = vmatprep.mubr.f32.mxu0 0.0
    %3083 = vmatmul.mubr.f32.gmra.mrb[0].mxu0 %v2937
    %v3084 = vpop.f32.mrb[0].mxu0
    %v3085 = vadd.f32 0.0, %v3084
    %v3086 = vpop.f32.mrb[0].mxu0
    %3087 = vmatprep.mubr.f32.mxu0 0.0
    %3088 = vmatmul.mubr.f32.gmra.mrb[0].mxu0 %v2938
    %v3089 = vpop.f32.mrb[0].mxu0
    %v3090 = vadd.f32 0.0, %v3089
    %v3091 = vpop.f32.mrb[0].mxu0
    %3092 = vmatprep.mubr.f32.mxu0 0.0
    %3093 = vmatmul.mubr.f32.gmra.mrb[0].mxu0 %v2939
    %v3094 = vpop.f32.mrb[0].mxu0
    %v3095 = vadd.f32 0.0, %v3094
    %v3096 = vpop.f32.mrb[0].mxu0
    %3097 = vmatprep.mubr.f32.mxu0 0.0
    %3098 = vmatmul.mubr.f32.gmra.mrb[0].mxu0 %v2940
    %v3099 = vpop.f32.mrb[0].mxu0
    %v3100 = vadd.f32 0.0, %v3099
    %v3101 = vpop.f32.mrb[0].mxu0
    %3102 = vdwg.mxu0
    %v3103 = vld [vmem:[%s4 + $0x8] sm:$0x1]
    %v3104 = vlaneseq
    %v3105 = vshrl.u32 %v3104, 7
    %v3106 = vsub.s32 0, %v3105
    %v3107 = vrot.slane %v3103, %v3106
    %v3108 = vmul.f32 %v3025, %v3107
    %v3109 = vmul.f32 %v3030, %v3107
    %v3110 = vmul.f32 %v3035, %v3107
    %v3111 = vmul.f32 %v3040, %v3107
    %v3112 = vmul.f32 %v3045, %v3107
    %v3113 = vmul.f32 %v3050, %v3107
    %v3114 = vmul.f32 %v3055, %v3107
    %v3115 = vmul.f32 %v3060, %v3107
    %v3116 = vmul.f32 %v3065, %v3107
    %v3117 = vmul.f32 %v3070, %v3107
    %v3118 = vmul.f32 %v3075, %v3107
    %v3119 = vmul.f32 %v3080, %v3107
    %v3120 = vmul.f32 %v3085, %v3107
    %v3121 = vmul.f32 %v3090, %v3107
    %v3122 = vmul.f32 %v3095, %v3107
    %v3123 = vmul.f32 %v3100, %v3107
    %v3124 = vld [vmem:[%s4 + $0x9] sm:$0x1]
    %v3125 = vlaneseq
    %v3126 = vshrl.u32 %v3125, 7
    %v3127 = vsub.s32 0, %v3126
    %v3128 = vrot.slane %v3124, %v3127
    %v3129 = vadd.f32 %v3108, %v3128
    %v3130 = vadd.f32 %v3109, %v3128
    %v3131 = vadd.f32 %v3110, %v3128
    %v3132 = vadd.f32 %v3111, %v3128
    %v3133 = vadd.f32 %v3112, %v3128
    %v3134 = vadd.f32 %v3113, %v3128
    %v3135 = vadd.f32 %v3114, %v3128
    %v3136 = vadd.f32 %v3115, %v3128
    %v3137 = vadd.f32 %v3116, %v3128
    %v3138 = vadd.f32 %v3117, %v3128
    %v3139 = vadd.f32 %v3118, %v3128
    %v3140 = vadd.f32 %v3119, %v3128
    %v3141 = vadd.f32 %v3120, %v3128
    %v3142 = vadd.f32 %v3121, %v3128
    %v3143 = vadd.f32 %v3122, %v3128
    %v3144 = vadd.f32 %v3123, %v3128
    %v3145 = vmax.f32 %v3129, 0.0
    %v3146 = vmax.f32 %v3130, 0.0
    %v3147 = vmax.f32 %v3131, 0.0
    %v3148 = vmax.f32 %v3132, 0.0
    %v3149 = vmax.f32 %v3133, 0.0
    %v3150 = vmax.f32 %v3134, 0.0
    %v3151 = vmax.f32 %v3135, 0.0
    %v3152 = vmax.f32 %v3136, 0.0
    %v3153 = vmax.f32 %v3137, 0.0
    %v3154 = vmax.f32 %v3138, 0.0
    %v3155 = vmax.f32 %v3139, 0.0
    %v3156 = vmax.f32 %v3140, 0.0
    %v3157 = vmax.f32 %v3141, 0.0
    %v3158 = vmax.f32 %v3142, 0.0
    %v3159 = vmax.f32 %v3143, 0.0
    %v3160 = vmax.f32 %v3144, 0.0
    %s3161 = scalar_lea.vmem %s3, 16
    %v3162 = vld [vmem:[%s3161] sm:$0xff]
    %v3163 = vld [vmem:[%s3161 + $0x8] sm:$0x1]
    %3164 = vmatprep.subr.mxu0 0.0
    %3165 = vmatpush1.msra.mxu0 %v3145
    %3166 = vmatprep.subr.mxu0 0.0
    %3167 = vmatpush1.msra.mxu0 %v3146
    %3168 = vmatprep.subr.mxu0 0.0
    %3169 = vmatpush1.msra.mxu0 %v3147
    %3170 = vmatprep.subr.mxu0 0.0
    %3171 = vmatpush1.msra.mxu0 %v3148
    %3172 = vmatprep.subr.mxu0 0.0
    %3173 = vmatpush1.msra.mxu0 %v3149
    %3174 = vmatprep.subr.mxu0 0.0
    %3175 = vmatpush1.msra.mxu0 %v3150
    %3176 = vmatprep.subr.mxu0 0.0
    %3177 = vmatpush1.msra.mxu0 %v3151
    %3178 = vmatprep.subr.mxu0 0.0
    %3179 = vmatpush1.msra.mxu0 %v3152
    %3180 = vmatprep.subr.mxu0 0.0
    %3181 = vmatpush1.msra.mxu0 %v3153
    %3182 = vmatprep.subr.mxu0 0.0
    %3183 = vmatpush1.msra.mxu0 %v3154
    %3184 = vmatprep.subr.mxu0 0.0
    %3185 = vmatpush1.msra.mxu0 %v3155
    %3186 = vmatprep.subr.mxu0 0.0
    %3187 = vmatpush1.msra.mxu0 %v3156
    %3188 = vmatprep.subr.mxu0 0.0
    %3189 = vmatpush1.msra.mxu0 %v3157
    %3190 = vmatprep.subr.mxu0 0.0
    %3191 = vmatpush1.msra.mxu0 %v3158
    %3192 = vmatprep.subr.mxu0 0.0
    %3193 = vmatpush1.msra.mxu0 %v3159
    %3194 = vmatprep.subr.mxu0 0.0
    %3195 = vmatpush1.msra.mxu0 %v3160
    %3196 = vmatprep.subr.mxu0 0.0
    %3197 = vmatpush1.msra.mxu0 0.0
    %3198 = vmatprep.subr.mxu0 0.0
    %3199 = vmatpush1.msra.mxu0 0.0
    %3200 = vmatprep.subr.mxu0 0.0
    %3201 = vmatpush1.msra.mxu0 0.0
    %3202 = vmatprep.subr.mxu0 0.0
    %3203 = vmatpush1.msra.mxu0 0.0
    %3204 = vmatprep.subr.mxu0 0.0
    %3205 = vmatpush1.msra.mxu0 0.0
    %3206 = vmatprep.subr.mxu0 0.0
    %3207 = vmatpush1.msra.mxu0 0.0
    %3208 = vmatprep.subr.mxu0 0.0
    %3209 = vmatpush1.msra.mxu0 0.0
    %3210 = vmatprep.subr.mxu0 0.0
    %3211 = vmatpush1.msra.mxu0 0.0
    %3212 = vmatprep.subr.mxu0 0.0
    %3213 = vmatpush1.msra.mxu0 0.0
    %3214 = vmatprep.subr.mxu0 0.0
    %3215 = vmatpush1.msra.mxu0 0.0
    %3216 = vmatprep.subr.mxu0 0.0
    %3217 = vmatpush1.msra.mxu0 0.0
    %3218 = vmatprep.subr.mxu0 0.0
    %3219 = vmatpush1.msra.mxu0 0.0
    %3220 = vmatprep.subr.mxu0 0.0
    %3221 = vmatpush1.msra.mxu0 0.0
    %3222 = vmatprep.subr.mxu0 0.0
    %3223 = vmatpush1.msra.mxu0 0.0
    %3224 = vmatprep.subr.mxu0 0.0
    %3225 = vmatpush1.msra.mxu0 0.0
    %3226 = vmatprep.subr.mxu0 0.0
    %3227 = vmatpush1.msra.mxu0 0.0
    %3228 = vmatprep.mubr.f32.mxu0 0.0
    %3229 = vmatmul.mubr.f32.gmra.mrb[0].mxu0 %v258
    %v3230 = vpop.f32.mrb[0].mxu0
    %v3231 = vadd.f32 0.0, %v3230
    %v3232 = vpop.f32.mrb[0].mxu0
    %3233 = vmatprep.mubr.f32.mxu0 0.0
    %3234 = vmatmul.mubr.f32.gmra.mrb[0].mxu0 %v259
    %v3235 = vpop.f32.mrb[0].mxu0
    %v3236 = vadd.f32 0.0, %v3235
    %v3237 = vpop.f32.mrb[0].mxu0
    %3238 = vmatprep.mubr.f32.mxu0 0.0
    %3239 = vmatmul.mubr.f32.gmra.mrb[0].mxu0 %v260
    %v3240 = vpop.f32.mrb[0].mxu0
    %v3241 = vadd.f32 0.0, %v3240
    %v3242 = vpop.f32.mrb[0].mxu0
    %3243 = vmatprep.mubr.f32.mxu0 0.0
    %3244 = vmatmul.mubr.f32.gmra.mrb[0].mxu0 %v261
    %v3245 = vpop.f32.mrb[0].mxu0
    %v3246 = vadd.f32 0.0, %v3245
    %v3247 = vpop.f32.mrb[0].mxu0
    %3248 = vmatprep.mubr.f32.mxu0 0.0
    %3249 = vmatmul.mubr.f32.gmra.mrb[0].mxu0 %v262
    %v3250 = vpop.f32.mrb[0].mxu0
    %v3251 = vadd.f32 0.0, %v3250
    %v3252 = vpop.f32.mrb[0].mxu0
    %3253 = vmatprep.mubr.f32.mxu0 0.0
    %3254 = vmatmul.mubr.f32.gmra.mrb[0].mxu0 %v263
    %v3255 = vpop.f32.mrb[0].mxu0
    %v3256 = vadd.f32 0.0, %v3255
    %v3257 = vpop.f32.mrb[0].mxu0
    %3258 = vmatprep.mubr.f32.mxu0 0.0
    %3259 = vmatmul.mubr.f32.gmra.mrb[0].mxu0 %v264
    %v3260 = vpop.f32.mrb[0].mxu0
    %v3261 = vadd.f32 0.0, %v3260
    %v3262 = vpop.f32.mrb[0].mxu0
    %3263 = vmatprep.mubr.f32.mxu0 0.0
    %3264 = vmatmul.mubr.f32.gmra.mrb[0].mxu0 %v265
    %v3265 = vpop.f32.mrb[0].mxu0
    %v3266 = vadd.f32 0.0, %v3265
    %v3267 = vpop.f32.mrb[0].mxu0
    %3268 = vmatprep.mubr.f32.mxu0 0.0
    %3269 = vmatmul.mubr.f32.gmra.mrb[0].mxu0 %v266
    %v3270 = vpop.f32.mrb[0].mxu0
    %v3271 = vadd.f32 0.0, %v3270
    %v3272 = vpop.f32.mrb[0].mxu0
    %3273 = vmatprep.mubr.f32.mxu0 0.0
    %3274 = vmatmul.mubr.f32.gmra.mrb[0].mxu0 %v267
    %v3275 = vpop.f32.mrb[0].mxu0
    %v3276 = vadd.f32 0.0, %v3275
    %v3277 = vpop.f32.mrb[0].mxu0
    %3278 = vmatprep.mubr.f32.mxu0 0.0
    %3279 = vmatmul.mubr.f32.gmra.mrb[0].mxu0 %v268
    %v3280 = vpop.f32.mrb[0].mxu0
    %v3281 = vadd.f32 0.0, %v3280
    %v3282 = vpop.f32.mrb[0].mxu0
    %3283 = vmatprep.mubr.f32.mxu0 0.0
    %3284 = vmatmul.mubr.f32.gmra.mrb[0].mxu0 %v269
    %v3285 = vpop.f32.mrb[0].mxu0
    %v3286 = vadd.f32 0.0, %v3285
    %v3287 = vpop.f32.mrb[0].mxu0
    %3288 = vmatprep.mubr.f32.mxu0 0.0
    %3289 = vmatmul.mubr.f32.gmra.mrb[0].mxu0 %v270
    %v3290 = vpop.f32.mrb[0].mxu0
    %v3291 = vadd.f32 0.0, %v3290
    %v3292 = vpop.f32.mrb[0].mxu0
    %3293 = vmatprep.mubr.f32.mxu0 0.0
    %3294 = vmatmul.mubr.f32.gmra.mrb[0].mxu0 %v271
    %v3295 = vpop.f32.mrb[0].mxu0
    %v3296 = vadd.f32 0.0, %v3295
    %v3297 = vpop.f32.mrb[0].mxu0
    %3298 = vmatprep.mubr.f32.mxu0 0.0
    %3299 = vmatmul.mubr.f32.gmra.mrb[0].mxu0 %v272
    %v3300 = vpop.f32.mrb[0].mxu0
    %v3301 = vadd.f32 0.0, %v3300
    %v3302 = vpop.f32.mrb[0].mxu0
    %3303 = vmatprep.mubr.f32.mxu0 0.0
    %3304 = vmatmul.mubr.f32.gmra.mrb[0].mxu0 %v273
    %v3305 = vpop.f32.mrb[0].mxu0
    %v3306 = vadd.f32 0.0, %v3305
    %v3307 = vpop.f32.mrb[0].mxu0
    %3308 = vdwg.mxu0
    %v3309 = vlaneseq
    %v3310 = vshrl.u32 %v3309, 7
    %v3311 = vsub.s32 0, %v3310
    %v3312 = vrot.slane %v3162, %v3311
    %v3313 = vmul.f32 %v3231, %v3312
    %v3314 = vmul.f32 %v3236, %v3312
    %v3315 = vmul.f32 %v3241, %v3312
    %v3316 = vmul.f32 %v3246, %v3312
    %v3317 = vmul.f32 %v3251, %v3312
    %v3318 = vmul.f32 %v3256, %v3312
    %v3319 = vmul.f32 %v3261, %v3312
    %v3320 = vmul.f32 %v3266, %v3312
    %v3321 = vmul.f32 %v3271, %v3312
    %v3322 = vmul.f32 %v3276, %v3312
    %v3323 = vmul.f32 %v3281, %v3312
    %v3324 = vmul.f32 %v3286, %v3312
    %v3325 = vmul.f32 %v3291, %v3312
    %v3326 = vmul.f32 %v3296, %v3312
    %v3327 = vmul.f32 %v3301, %v3312
    %v3328 = vmul.f32 %v3306, %v3312
    %v3329 = vadd.f32 %v3313, 0.0
    %v3330 = vadd.f32 %v3314, 0.0
    %v3331 = vadd.f32 %v3315, 0.0
    %v3332 = vadd.f32 %v3316, 0.0
    %v3333 = vadd.f32 %v3317, 0.0
    %v3334 = vadd.f32 %v3318, 0.0
    %v3335 = vadd.f32 %v3319, 0.0
    %v3336 = vadd.f32 %v3320, 0.0
    %v3337 = vadd.f32 %v3321, 0.0
    %v3338 = vadd.f32 %v3322, 0.0
    %v3339 = vadd.f32 %v3323, 0.0
    %v3340 = vadd.f32 %v3324, 0.0
    %v3341 = vadd.f32 %v3325, 0.0
    %v3342 = vadd.f32 %v3326, 0.0
    %v3343 = vadd.f32 %v3327, 0.0
    %v3344 = vadd.f32 %v3328, 0.0
    %3345 = vmatprep.subr.mxu0 0.0
    %3346 = vmatpush1.msra.mxu0 %v3145
    %3347 = vmatprep.subr.mxu0 0.0
    %3348 = vmatpush1.msra.mxu0 %v3146
    %3349 = vmatprep.subr.mxu0 0.0
    %3350 = vmatpush1.msra.mxu0 %v3147
    %3351 = vmatprep.subr.mxu0 0.0
    %3352 = vmatpush1.msra.mxu0 %v3148
    %3353 = vmatprep.subr.mxu0 0.0
    %3354 = vmatpush1.msra.mxu0 %v3149
    %3355 = vmatprep.subr.mxu0 0.0
    %3356 = vmatpush1.msra.mxu0 %v3150
    %3357 = vmatprep.subr.mxu0 0.0
    %3358 = vmatpush1.msra.mxu0 %v3151
    %3359 = vmatprep.subr.mxu0 0.0
    %3360 = vmatpush1.msra.mxu0 %v3152
    %3361 = vmatprep.subr.mxu0 0.0
    %3362 = vmatpush1.msra.mxu0 %v3153
    %3363 = vmatprep.subr.mxu0 0.0
    %3364 = vmatpush1.msra.mxu0 %v3154
    %3365 = vmatprep.subr.mxu0 0.0
    %3366 = vmatpush1.msra.mxu0 %v3155
    %3367 = vmatprep.subr.mxu0 0.0
    %3368 = vmatpush1.msra.mxu0 %v3156
    %3369 = vmatprep.subr.mxu0 0.0
    %3370 = vmatpush1.msra.mxu0 %v3157
    %3371 = vmatprep.subr.mxu0 0.0
    %3372 = vmatpush1.msra.mxu0 %v3158
    %3373 = vmatprep.subr.mxu0 0.0
    %3374 = vmatpush1.msra.mxu0 %v3159
    %3375 = vmatprep.subr.mxu0 0.0
    %3376 = vmatpush1.msra.mxu0 %v3160
    %3377 = vmatprep.subr.mxu0 0.0
    %3378 = vmatpush1.msra.mxu0 0.0
    %3379 = vmatprep.subr.mxu0 0.0
    %3380 = vmatpush1.msra.mxu0 0.0
    %3381 = vmatprep.subr.mxu0 0.0
    %3382 = vmatpush1.msra.mxu0 0.0
    %3383 = vmatprep.subr.mxu0 0.0
    %3384 = vmatpush1.msra.mxu0 0.0
    %3385 = vmatprep.subr.mxu0 0.0
    %3386 = vmatpush1.msra.mxu0 0.0
    %3387 = vmatprep.subr.mxu0 0.0
    %3388 = vmatpush1.msra.mxu0 0.0
    %3389 = vmatprep.subr.mxu0 0.0
    %3390 = vmatpush1.msra.mxu0 0.0
    %3391 = vmatprep.subr.mxu0 0.0
    %3392 = vmatpush1.msra.mxu0 0.0
    %3393 = vmatprep.subr.mxu0 0.0
    %3394 = vmatpush1.msra.mxu0 0.0
    %3395 = vmatprep.subr.mxu0 0.0
    %3396 = vmatpush1.msra.mxu0 0.0
    %3397 = vmatprep.subr.mxu0 0.0
    %3398 = vmatpush1.msra.mxu0 0.0
    %3399 = vmatprep.subr.mxu0 0.0
    %3400 = vmatpush1.msra.mxu0 0.0
    %3401 = vmatprep.subr.mxu0 0.0
    %3402 = vmatpush1.msra.mxu0 0.0
    %3403 = vmatprep.subr.mxu0 0.0
    %3404 = vmatpush1.msra.mxu0 0.0
    %3405 = vmatprep.subr.mxu0 0.0
    %3406 = vmatpush1.msra.mxu0 0.0
    %3407 = vmatprep.subr.mxu0 0.0
    %3408 = vmatpush1.msra.mxu0 0.0
    %3409 = vmatprep.mubr.f32.mxu0 0.0
    %3410 = vmatmul.mubr.f32.gmra.mrb[0].mxu0 %v456
    %v3411 = vpop.f32.mrb[0].mxu0
    %v3412 = vadd.f32 0.0, %v3411
    %v3413 = vpop.f32.mrb[0].mxu0
    %3414 = vmatprep.mubr.f32.mxu0 0.0
    %3415 = vmatmul.mubr.f32.gmra.mrb[0].mxu0 %v457
    %v3416 = vpop.f32.mrb[0].mxu0
    %v3417 = vadd.f32 0.0, %v3416
    %v3418 = vpop.f32.mrb[0].mxu0
    %3419 = vmatprep.mubr.f32.mxu0 0.0
    %3420 = vmatmul.mubr.f32.gmra.mrb[0].mxu0 %v458
    %v3421 = vpop.f32.mrb[0].mxu0
    %v3422 = vadd.f32 0.0, %v3421
    %v3423 = vpop.f32.mrb[0].mxu0
    %3424 = vmatprep.mubr.f32.mxu0 0.0
    %3425 = vmatmul.mubr.f32.gmra.mrb[0].mxu0 %v459
    %v3426 = vpop.f32.mrb[0].mxu0
    %v3427 = vadd.f32 0.0, %v3426
    %v3428 = vpop.f32.mrb[0].mxu0
    %3429 = vmatprep.mubr.f32.mxu0 0.0
    %3430 = vmatmul.mubr.f32.gmra.mrb[0].mxu0 %v460
    %v3431 = vpop.f32.mrb[0].mxu0
    %v3432 = vadd.f32 0.0, %v3431
    %v3433 = vpop.f32.mrb[0].mxu0
    %3434 = vmatprep.mubr.f32.mxu0 0.0
    %3435 = vmatmul.mubr.f32.gmra.mrb[0].mxu0 %v461
    %v3436 = vpop.f32.mrb[0].mxu0
    %v3437 = vadd.f32 0.0, %v3436
    %v3438 = vpop.f32.mrb[0].mxu0
    %3439 = vmatprep.mubr.f32.mxu0 0.0
    %3440 = vmatmul.mubr.f32.gmra.mrb[0].mxu0 %v462
    %v3441 = vpop.f32.mrb[0].mxu0
    %v3442 = vadd.f32 0.0, %v3441
    %v3443 = vpop.f32.mrb[0].mxu0
    %3444 = vmatprep.mubr.f32.mxu0 0.0
    %3445 = vmatmul.mubr.f32.gmra.mrb[0].mxu0 %v463
    %v3446 = vpop.f32.mrb[0].mxu0
    %v3447 = vadd.f32 0.0, %v3446
    %v3448 = vpop.f32.mrb[0].mxu0
    %3449 = vmatprep.mubr.f32.mxu0 0.0
    %3450 = vmatmul.mubr.f32.gmra.mrb[0].mxu0 %v464
    %v3451 = vpop.f32.mrb[0].mxu0
    %v3452 = vadd.f32 0.0, %v3451
    %v3453 = vpop.f32.mrb[0].mxu0
    %3454 = vmatprep.mubr.f32.mxu0 0.0
    %3455 = vmatmul.mubr.f32.gmra.mrb[0].mxu0 %v465
    %v3456 = vpop.f32.mrb[0].mxu0
    %v3457 = vadd.f32 0.0, %v3456
    %v3458 = vpop.f32.mrb[0].mxu0
    %3459 = vmatprep.mubr.f32.mxu0 0.0
    %3460 = vmatmul.mubr.f32.gmra.mrb[0].mxu0 %v466
    %v3461 = vpop.f32.mrb[0].mxu0
    %v3462 = vadd.f32 0.0, %v3461
    %v3463 = vpop.f32.mrb[0].mxu0
    %3464 = vmatprep.mubr.f32.mxu0 0.0
    %3465 = vmatmul.mubr.f32.gmra.mrb[0].mxu0 %v467
    %v3466 = vpop.f32.mrb[0].mxu0
    %v3467 = vadd.f32 0.0, %v3466
    %v3468 = vpop.f32.mrb[0].mxu0
    %3469 = vmatprep.mubr.f32.mxu0 0.0
    %3470 = vmatmul.mubr.f32.gmra.mrb[0].mxu0 %v468
    %v3471 = vpop.f32.mrb[0].mxu0
    %v3472 = vadd.f32 0.0, %v3471
    %v3473 = vpop.f32.mrb[0].mxu0
    %3474 = vmatprep.mubr.f32.mxu0 0.0
    %3475 = vmatmul.mubr.f32.gmra.mrb[0].mxu0 %v469
    %v3476 = vpop.f32.mrb[0].mxu0
    %v3477 = vadd.f32 0.0, %v3476
    %v3478 = vpop.f32.mrb[0].mxu0
    %3479 = vmatprep.mubr.f32.mxu0 0.0
    %3480 = vmatmul.mubr.f32.gmra.mrb[0].mxu0 %v470
    %v3481 = vpop.f32.mrb[0].mxu0
    %v3482 = vadd.f32 0.0, %v3481
    %v3483 = vpop.f32.mrb[0].mxu0
    %3484 = vmatprep.mubr.f32.mxu0 0.0
    %3485 = vmatmul.mubr.f32.gmra.mrb[0].mxu0 %v471
    %v3486 = vpop.f32.mrb[0].mxu0
    %v3487 = vadd.f32 0.0, %v3486
    %v3488 = vpop.f32.mrb[0].mxu0
    %3489 = vdwg.mxu0
    %v3490 = vlaneseq
    %v3491 = vshrl.u32 %v3490, 7
    %v3492 = vsub.s32 1, %v3491
    %v3493 = vrot.slane %v3162, %v3492
    %v3494 = vmul.f32 %v3412, %v3493
    %v3495 = vmul.f32 %v3417, %v3493
    %v3496 = vmul.f32 %v3422, %v3493
    %v3497 = vmul.f32 %v3427, %v3493
    %v3498 = vmul.f32 %v3432, %v3493
    %v3499 = vmul.f32 %v3437, %v3493
    %v3500 = vmul.f32 %v3442, %v3493
    %v3501 = vmul.f32 %v3447, %v3493
    %v3502 = vmul.f32 %v3452, %v3493
    %v3503 = vmul.f32 %v3457, %v3493
    %v3504 = vmul.f32 %v3462, %v3493
    %v3505 = vmul.f32 %v3467, %v3493
    %v3506 = vmul.f32 %v3472, %v3493
    %v3507 = vmul.f32 %v3477, %v3493
    %v3508 = vmul.f32 %v3482, %v3493
    %v3509 = vmul.f32 %v3487, %v3493
    %v3510 = vadd.f32 %v3329, %v3494
    %v3511 = vadd.f32 %v3330, %v3495
    %v3512 = vadd.f32 %v3331, %v3496
    %v3513 = vadd.f32 %v3332, %v3497
    %v3514 = vadd.f32 %v3333, %v3498
    %v3515 = vadd.f32 %v3334, %v3499
    %v3516 = vadd.f32 %v3335, %v3500
    %v3517 = vadd.f32 %v3336, %v3501
    %v3518 = vadd.f32 %v3337, %v3502
    %v3519 = vadd.f32 %v3338, %v3503
    %v3520 = vadd.f32 %v3339, %v3504
    %v3521 = vadd.f32 %v3340, %v3505
    %v3522 = vadd.f32 %v3341, %v3506
    %v3523 = vadd.f32 %v3342, %v3507
    %v3524 = vadd.f32 %v3343, %v3508
    %v3525 = vadd.f32 %v3344, %v3509
    %3526 = vmatprep.subr.mxu0 0.0
    %3527 = vmatpush1.msra.mxu0 %v3145
    %3528 = vmatprep.subr.mxu0 0.0
    %3529 = vmatpush1.msra.mxu0 %v3146
    %3530 = vmatprep.subr.mxu0 0.0
    %3531 = vmatpush1.msra.mxu0 %v3147
    %3532 = vmatprep.subr.mxu0 0.0
    %3533 = vmatpush1.msra.mxu0 %v3148
    %3534 = vmatprep.subr.mxu0 0.0
    %3535 = vmatpush1.msra.mxu0 %v3149
    %3536 = vmatprep.subr.mxu0 0.0
    %3537 = vmatpush1.msra.mxu0 %v3150
    %3538 = vmatprep.subr.mxu0 0.0
    %3539 = vmatpush1.msra.mxu0 %v3151
    %3540 = vmatprep.subr.mxu0 0.0
    %3541 = vmatpush1.msra.mxu0 %v3152
    %3542 = vmatprep.subr.mxu0 0.0
    %3543 = vmatpush1.msra.mxu0 %v3153
    %3544 = vmatprep.subr.mxu0 0.0
    %3545 = vmatpush1.msra.mxu0 %v3154
    %3546 = vmatprep.subr.mxu0 0.0
    %3547 = vmatpush1.msra.mxu0 %v3155
    %3548 = vmatprep.subr.mxu0 0.0
    %3549 = vmatpush1.msra.mxu0 %v3156
    %3550 = vmatprep.subr.mxu0 0.0
    %3551 = vmatpush1.msra.mxu0 %v3157
    %3552 = vmatprep.subr.mxu0 0.0
    %3553 = vmatpush1.msra.mxu0 %v3158
    %3554 = vmatprep.subr.mxu0 0.0
    %3555 = vmatpush1.msra.mxu0 %v3159
    %3556 = vmatprep.subr.mxu0 0.0
    %3557 = vmatpush1.msra.mxu0 %v3160
    %3558 = vmatprep.subr.mxu0 0.0
    %3559 = vmatpush1.msra.mxu0 0.0
    %3560 = vmatprep.subr.mxu0 0.0
    %3561 = vmatpush1.msra.mxu0 0.0
    %3562 = vmatprep.subr.mxu0 0.0
    %3563 = vmatpush1.msra.mxu0 0.0
    %3564 = vmatprep.subr.mxu0 0.0
    %3565 = vmatpush1.msra.mxu0 0.0
    %3566 = vmatprep.subr.mxu0 0.0
    %3567 = vmatpush1.msra.mxu0 0.0
    %3568 = vmatprep.subr.mxu0 0.0
    %3569 = vmatpush1.msra.mxu0 0.0
    %3570 = vmatprep.subr.mxu0 0.0
    %3571 = vmatpush1.msra.mxu0 0.0
    %3572 = vmatprep.subr.mxu0 0.0
    %3573 = vmatpush1.msra.mxu0 0.0
    %3574 = vmatprep.subr.mxu0 0.0
    %3575 = vmatpush1.msra.mxu0 0.0
    %3576 = vmatprep.subr.mxu0 0.0
    %3577 = vmatpush1.msra.mxu0 0.0
    %3578 = vmatprep.subr.mxu0 0.0
    %3579 = vmatpush1.msra.mxu0 0.0
    %3580 = vmatprep.subr.mxu0 0.0
    %3581 = vmatpush1.msra.mxu0 0.0
    %3582 = vmatprep.subr.mxu0 0.0
    %3583 = vmatpush1.msra.mxu0 0.0
    %3584 = vmatprep.subr.mxu0 0.0
    %3585 = vmatpush1.msra.mxu0 0.0
    %3586 = vmatprep.subr.mxu0 0.0
    %3587 = vmatpush1.msra.mxu0 0.0
    %3588 = vmatprep.subr.mxu0 0.0
    %3589 = vmatpush1.msra.mxu0 0.0
    %3590 = vmatprep.mubr.f32.mxu0 0.0
    %3591 = vmatmul.mubr.f32.gmra.mrb[0].mxu0 %v654
    %v3592 = vpop.f32.mrb[0].mxu0
    %v3593 = vadd.f32 0.0, %v3592
    %v3594 = vpop.f32.mrb[0].mxu0
    %3595 = vmatprep.mubr.f32.mxu0 0.0
    %3596 = vmatmul.mubr.f32.gmra.mrb[0].mxu0 %v655
    %v3597 = vpop.f32.mrb[0].mxu0
    %v3598 = vadd.f32 0.0, %v3597
    %v3599 = vpop.f32.mrb[0].mxu0
    %3600 = vmatprep.mubr.f32.mxu0 0.0
    %3601 = vmatmul.mubr.f32.gmra.mrb[0].mxu0 %v656
    %v3602 = vpop.f32.mrb[0].mxu0
    %v3603 = vadd.f32 0.0, %v3602
    %v3604 = vpop.f32.mrb[0].mxu0
    %3605 = vmatprep.mubr.f32.mxu0 0.0
    %3606 = vmatmul.mubr.f32.gmra.mrb[0].mxu0 %v657
    %v3607 = vpop.f32.mrb[0].mxu0
    %v3608 = vadd.f32 0.0, %v3607
    %v3609 = vpop.f32.mrb[0].mxu0
    %3610 = vmatprep.mubr.f32.mxu0 0.0
    %3611 = vmatmul.mubr.f32.gmra.mrb[0].mxu0 %v658
    %v3612 = vpop.f32.mrb[0].mxu0
    %v3613 = vadd.f32 0.0, %v3612
    %v3614 = vpop.f32.mrb[0].mxu0
    %3615 = vmatprep.mubr.f32.mxu0 0.0
    %3616 = vmatmul.mubr.f32.gmra.mrb[0].mxu0 %v659
    %v3617 = vpop.f32.mrb[0].mxu0
    %v3618 = vadd.f32 0.0, %v3617
    %v3619 = vpop.f32.mrb[0].mxu0
    %3620 = vmatprep.mubr.f32.mxu0 0.0
    %3621 = vmatmul.mubr.f32.gmra.mrb[0].mxu0 %v660
    %v3622 = vpop.f32.mrb[0].mxu0
    %v3623 = vadd.f32 0.0, %v3622
    %v3624 = vpop.f32.mrb[0].mxu0
    %3625 = vmatprep.mubr.f32.mxu0 0.0
    %3626 = vmatmul.mubr.f32.gmra.mrb[0].mxu0 %v661
    %v3627 = vpop.f32.mrb[0].mxu0
    %v3628 = vadd.f32 0.0, %v3627
    %v3629 = vpop.f32.mrb[0].mxu0
    %3630 = vmatprep.mubr.f32.mxu0 0.0
    %3631 = vmatmul.mubr.f32.gmra.mrb[0].mxu0 %v662
    %v3632 = vpop.f32.mrb[0].mxu0
    %v3633 = vadd.f32 0.0, %v3632
    %v3634 = vpop.f32.mrb[0].mxu0
    %3635 = vmatprep.mubr.f32.mxu0 0.0
    %3636 = vmatmul.mubr.f32.gmra.mrb[0].mxu0 %v663
    %v3637 = vpop.f32.mrb[0].mxu0
    %v3638 = vadd.f32 0.0, %v3637
    %v3639 = vpop.f32.mrb[0].mxu0
    %3640 = vmatprep.mubr.f32.mxu0 0.0
    %3641 = vmatmul.mubr.f32.gmra.mrb[0].mxu0 %v664
    %v3642 = vpop.f32.mrb[0].mxu0
    %v3643 = vadd.f32 0.0, %v3642
    %v3644 = vpop.f32.mrb[0].mxu0
    %3645 = vmatprep.mubr.f32.mxu0 0.0
    %3646 = vmatmul.mubr.f32.gmra.mrb[0].mxu0 %v665
    %v3647 = vpop.f32.mrb[0].mxu0
    %v3648 = vadd.f32 0.0, %v3647
    %v3649 = vpop.f32.mrb[0].mxu0
    %3650 = vmatprep.mubr.f32.mxu0 0.0
    %3651 = vmatmul.mubr.f32.gmra.mrb[0].mxu0 %v666
    %v3652 = vpop.f32.mrb[0].mxu0
    %v3653 = vadd.f32 0.0, %v3652
    %v3654 = vpop.f32.mrb[0].mxu0
    %3655 = vmatprep.mubr.f32.mxu0 0.0
    %3656 = vmatmul.mubr.f32.gmra.mrb[0].mxu0 %v667
    %v3657 = vpop.f32.mrb[0].mxu0
    %v3658 = vadd.f32 0.0, %v3657
    %v3659 = vpop.f32.mrb[0].mxu0
    %3660 = vmatprep.mubr.f32.mxu0 0.0
    %3661 = vmatmul.mubr.f32.gmra.mrb[0].mxu0 %v668
    %v3662 = vpop.f32.mrb[0].mxu0
    %v3663 = vadd.f32 0.0, %v3662
    %v3664 = vpop.f32.mrb[0].mxu0
    %3665 = vmatprep.mubr.f32.mxu0 0.0
    %3666 = vmatmul.mubr.f32.gmra.mrb[0].mxu0 %v669
    %v3667 = vpop.f32.mrb[0].mxu0
    %v3668 = vadd.f32 0.0, %v3667
    %v3669 = vpop.f32.mrb[0].mxu0
    %3670 = vdwg.mxu0
    %v3671 = vlaneseq
    %v3672 = vshrl.u32 %v3671, 7
    %v3673 = vsub.s32 2, %v3672
    %v3674 = vrot.slane %v3162, %v3673
    %v3675 = vmul.f32 %v3593, %v3674
    %v3676 = vmul.f32 %v3598, %v3674
    %v3677 = vmul.f32 %v3603, %v3674
    %v3678 = vmul.f32 %v3608, %v3674
    %v3679 = vmul.f32 %v3613, %v3674
    %v3680 = vmul.f32 %v3618, %v3674
    %v3681 = vmul.f32 %v3623, %v3674
    %v3682 = vmul.f32 %v3628, %v3674
    %v3683 = vmul.f32 %v3633, %v3674
    %v3684 = vmul.f32 %v3638, %v3674
    %v3685 = vmul.f32 %v3643, %v3674
    %v3686 = vmul.f32 %v3648, %v3674
    %v3687 = vmul.f32 %v3653, %v3674
    %v3688 = vmul.f32 %v3658, %v3674
    %v3689 = vmul.f32 %v3663, %v3674
    %v3690 = vmul.f32 %v3668, %v3674
    %v3691 = vadd.f32 %v3510, %v3675
    %v3692 = vadd.f32 %v3511, %v3676
    %v3693 = vadd.f32 %v3512, %v3677
    %v3694 = vadd.f32 %v3513, %v3678
    %v3695 = vadd.f32 %v3514, %v3679
    %v3696 = vadd.f32 %v3515, %v3680
    %v3697 = vadd.f32 %v3516, %v3681
    %v3698 = vadd.f32 %v3517, %v3682
    %v3699 = vadd.f32 %v3518, %v3683
    %v3700 = vadd.f32 %v3519, %v3684
    %v3701 = vadd.f32 %v3520, %v3685
    %v3702 = vadd.f32 %v3521, %v3686
    %v3703 = vadd.f32 %v3522, %v3687
    %v3704 = vadd.f32 %v3523, %v3688
    %v3705 = vadd.f32 %v3524, %v3689
    %v3706 = vadd.f32 %v3525, %v3690
    %3707 = vmatprep.subr.mxu0 0.0
    %3708 = vmatpush1.msra.mxu0 %v3145
    %3709 = vmatprep.subr.mxu0 0.0
    %3710 = vmatpush1.msra.mxu0 %v3146
    %3711 = vmatprep.subr.mxu0 0.0
    %3712 = vmatpush1.msra.mxu0 %v3147
    %3713 = vmatprep.subr.mxu0 0.0
    %3714 = vmatpush1.msra.mxu0 %v3148
    %3715 = vmatprep.subr.mxu0 0.0
    %3716 = vmatpush1.msra.mxu0 %v3149
    %3717 = vmatprep.subr.mxu0 0.0
    %3718 = vmatpush1.msra.mxu0 %v3150
    %3719 = vmatprep.subr.mxu0 0.0
    %3720 = vmatpush1.msra.mxu0 %v3151
    %3721 = vmatprep.subr.mxu0 0.0
    %3722 = vmatpush1.msra.mxu0 %v3152
    %3723 = vmatprep.subr.mxu0 0.0
    %3724 = vmatpush1.msra.mxu0 %v3153
    %3725 = vmatprep.subr.mxu0 0.0
    %3726 = vmatpush1.msra.mxu0 %v3154
    %3727 = vmatprep.subr.mxu0 0.0
    %3728 = vmatpush1.msra.mxu0 %v3155
    %3729 = vmatprep.subr.mxu0 0.0
    %3730 = vmatpush1.msra.mxu0 %v3156
    %3731 = vmatprep.subr.mxu0 0.0
    %3732 = vmatpush1.msra.mxu0 %v3157
    %3733 = vmatprep.subr.mxu0 0.0
    %3734 = vmatpush1.msra.mxu0 %v3158
    %3735 = vmatprep.subr.mxu0 0.0
    %3736 = vmatpush1.msra.mxu0 %v3159
    %3737 = vmatprep.subr.mxu0 0.0
    %3738 = vmatpush1.msra.mxu0 %v3160
    %3739 = vmatprep.subr.mxu0 0.0
    %3740 = vmatpush1.msra.mxu0 0.0
    %3741 = vmatprep.subr.mxu0 0.0
    %3742 = vmatpush1.msra.mxu0 0.0
    %3743 = vmatprep.subr.mxu0 0.0
    %3744 = vmatpush1.msra.mxu0 0.0
    %3745 = vmatprep.subr.mxu0 0.0
    %3746 = vmatpush1.msra.mxu0 0.0
    %3747 = vmatprep.subr.mxu0 0.0
    %3748 = vmatpush1.msra.mxu0 0.0
    %3749 = vmatprep.subr.mxu0 0.0
    %3750 = vmatpush1.msra.mxu0 0.0
    %3751 = vmatprep.subr.mxu0 0.0
    %3752 = vmatpush1.msra.mxu0 0.0
    %3753 = vmatprep.subr.mxu0 0.0
    %3754 = vmatpush1.msra.mxu0 0.0
    %3755 = vmatprep.subr.mxu0 0.0
    %3756 = vmatpush1.msra.mxu0 0.0
    %3757 = vmatprep.subr.mxu0 0.0
    %3758 = vmatpush1.msra.mxu0 0.0
    %3759 = vmatprep.subr.mxu0 0.0
    %3760 = vmatpush1.msra.mxu0 0.0
    %3761 = vmatprep.subr.mxu0 0.0
    %3762 = vmatpush1.msra.mxu0 0.0
    %3763 = vmatprep.subr.mxu0 0.0
    %3764 = vmatpush1.msra.mxu0 0.0
    %3765 = vmatprep.subr.mxu0 0.0
    %3766 = vmatpush1.msra.mxu0 0.0
    %3767 = vmatprep.subr.mxu0 0.0
    %3768 = vmatpush1.msra.mxu0 0.0
    %3769 = vmatprep.subr.mxu0 0.0
    %3770 = vmatpush1.msra.mxu0 0.0
    %3771 = vmatprep.mubr.f32.mxu0 0.0
    %3772 = vmatmul.mubr.f32.gmra.mrb[0].mxu0 %v852
    %v3773 = vpop.f32.mrb[0].mxu0
    %v3774 = vadd.f32 0.0, %v3773
    %v3775 = vpop.f32.mrb[0].mxu0
    %3776 = vmatprep.mubr.f32.mxu0 0.0
    %3777 = vmatmul.mubr.f32.gmra.mrb[0].mxu0 %v853
    %v3778 = vpop.f32.mrb[0].mxu0
    %v3779 = vadd.f32 0.0, %v3778
    %v3780 = vpop.f32.mrb[0].mxu0
    %3781 = vmatprep.mubr.f32.mxu0 0.0
    %3782 = vmatmul.mubr.f32.gmra.mrb[0].mxu0 %v854
    %v3783 = vpop.f32.mrb[0].mxu0
    %v3784 = vadd.f32 0.0, %v3783
    %v3785 = vpop.f32.mrb[0].mxu0
    %3786 = vmatprep.mubr.f32.mxu0 0.0
    %3787 = vmatmul.mubr.f32.gmra.mrb[0].mxu0 %v855
    %v3788 = vpop.f32.mrb[0].mxu0
    %v3789 = vadd.f32 0.0, %v3788
    %v3790 = vpop.f32.mrb[0].mxu0
    %3791 = vmatprep.mubr.f32.mxu0 0.0
    %3792 = vmatmul.mubr.f32.gmra.mrb[0].mxu0 %v856
    %v3793 = vpop.f32.mrb[0].mxu0
    %v3794 = vadd.f32 0.0, %v3793
    %v3795 = vpop.f32.mrb[0].mxu0
    %3796 = vmatprep.mubr.f32.mxu0 0.0
    %3797 = vmatmul.mubr.f32.gmra.mrb[0].mxu0 %v857
    %v3798 = vpop.f32.mrb[0].mxu0
    %v3799 = vadd.f32 0.0, %v3798
    %v3800 = vpop.f32.mrb[0].mxu0
    %3801 = vmatprep.mubr.f32.mxu0 0.0
    %3802 = vmatmul.mubr.f32.gmra.mrb[0].mxu0 %v858
    %v3803 = vpop.f32.mrb[0].mxu0
    %v3804 = vadd.f32 0.0, %v3803
    %v3805 = vpop.f32.mrb[0].mxu0
    %3806 = vmatprep.mubr.f32.mxu0 0.0
    %3807 = vmatmul.mubr.f32.gmra.mrb[0].mxu0 %v859
    %v3808 = vpop.f32.mrb[0].mxu0
    %v3809 = vadd.f32 0.0, %v3808
    %v3810 = vpop.f32.mrb[0].mxu0
    %3811 = vmatprep.mubr.f32.mxu0 0.0
    %3812 = vmatmul.mubr.f32.gmra.mrb[0].mxu0 %v860
    %v3813 = vpop.f32.mrb[0].mxu0
    %v3814 = vadd.f32 0.0, %v3813
    %v3815 = vpop.f32.mrb[0].mxu0
    %3816 = vmatprep.mubr.f32.mxu0 0.0
    %3817 = vmatmul.mubr.f32.gmra.mrb[0].mxu0 %v861
    %v3818 = vpop.f32.mrb[0].mxu0
    %v3819 = vadd.f32 0.0, %v3818
    %v3820 = vpop.f32.mrb[0].mxu0
    %3821 = vmatprep.mubr.f32.mxu0 0.0
    %3822 = vmatmul.mubr.f32.gmra.mrb[0].mxu0 %v862
    %v3823 = vpop.f32.mrb[0].mxu0
    %v3824 = vadd.f32 0.0, %v3823
    %v3825 = vpop.f32.mrb[0].mxu0
    %3826 = vmatprep.mubr.f32.mxu0 0.0
    %3827 = vmatmul.mubr.f32.gmra.mrb[0].mxu0 %v863
    %v3828 = vpop.f32.mrb[0].mxu0
    %v3829 = vadd.f32 0.0, %v3828
    %v3830 = vpop.f32.mrb[0].mxu0
    %3831 = vmatprep.mubr.f32.mxu0 0.0
    %3832 = vmatmul.mubr.f32.gmra.mrb[0].mxu0 %v864
    %v3833 = vpop.f32.mrb[0].mxu0
    %v3834 = vadd.f32 0.0, %v3833
    %v3835 = vpop.f32.mrb[0].mxu0
    %3836 = vmatprep.mubr.f32.mxu0 0.0
    %3837 = vmatmul.mubr.f32.gmra.mrb[0].mxu0 %v865
    %v3838 = vpop.f32.mrb[0].mxu0
    %v3839 = vadd.f32 0.0, %v3838
    %v3840 = vpop.f32.mrb[0].mxu0
    %3841 = vmatprep.mubr.f32.mxu0 0.0
    %3842 = vmatmul.mubr.f32.gmra.mrb[0].mxu0 %v866
    %v3843 = vpop.f32.mrb[0].mxu0
    %v3844 = vadd.f32 0.0, %v3843
    %v3845 = vpop.f32.mrb[0].mxu0
    %3846 = vmatprep.mubr.f32.mxu0 0.0
    %3847 = vmatmul.mubr.f32.gmra.mrb[0].mxu0 %v867
    %v3848 = vpop.f32.mrb[0].mxu0
    %v3849 = vadd.f32 0.0, %v3848
    %v3850 = vpop.f32.mrb[0].mxu0
    %3851 = vdwg.mxu0
    %v3852 = vlaneseq
    %v3853 = vshrl.u32 %v3852, 7
    %v3854 = vsub.s32 3, %v3853
    %v3855 = vrot.slane %v3162, %v3854
    %v3856 = vmul.f32 %v3774, %v3855
    %v3857 = vmul.f32 %v3779, %v3855
    %v3858 = vmul.f32 %v3784, %v3855
    %v3859 = vmul.f32 %v3789, %v3855
    %v3860 = vmul.f32 %v3794, %v3855
    %v3861 = vmul.f32 %v3799, %v3855
    %v3862 = vmul.f32 %v3804, %v3855
    %v3863 = vmul.f32 %v3809, %v3855
    %v3864 = vmul.f32 %v3814, %v3855
    %v3865 = vmul.f32 %v3819, %v3855
    %v3866 = vmul.f32 %v3824, %v3855
    %v3867 = vmul.f32 %v3829, %v3855
    %v3868 = vmul.f32 %v3834, %v3855
    %v3869 = vmul.f32 %v3839, %v3855
    %v3870 = vmul.f32 %v3844, %v3855
    %v3871 = vmul.f32 %v3849, %v3855
    %v3872 = vadd.f32 %v3691, %v3856
    %v3873 = vadd.f32 %v3692, %v3857
    %v3874 = vadd.f32 %v3693, %v3858
    %v3875 = vadd.f32 %v3694, %v3859
    %v3876 = vadd.f32 %v3695, %v3860
    %v3877 = vadd.f32 %v3696, %v3861
    %v3878 = vadd.f32 %v3697, %v3862
    %v3879 = vadd.f32 %v3698, %v3863
    %v3880 = vadd.f32 %v3699, %v3864
    %v3881 = vadd.f32 %v3700, %v3865
    %v3882 = vadd.f32 %v3701, %v3866
    %v3883 = vadd.f32 %v3702, %v3867
    %v3884 = vadd.f32 %v3703, %v3868
    %v3885 = vadd.f32 %v3704, %v3869
    %v3886 = vadd.f32 %v3705, %v3870
    %v3887 = vadd.f32 %v3706, %v3871
    %3888 = vmatprep.subr.mxu0 0.0
    %3889 = vmatpush1.msra.mxu0 %v3145
    %3890 = vmatprep.subr.mxu0 0.0
    %3891 = vmatpush1.msra.mxu0 %v3146
    %3892 = vmatprep.subr.mxu0 0.0
    %3893 = vmatpush1.msra.mxu0 %v3147
    %3894 = vmatprep.subr.mxu0 0.0
    %3895 = vmatpush1.msra.mxu0 %v3148
    %3896 = vmatprep.subr.mxu0 0.0
    %3897 = vmatpush1.msra.mxu0 %v3149
    %3898 = vmatprep.subr.mxu0 0.0
    %3899 = vmatpush1.msra.mxu0 %v3150
    %3900 = vmatprep.subr.mxu0 0.0
    %3901 = vmatpush1.msra.mxu0 %v3151
    %3902 = vmatprep.subr.mxu0 0.0
    %3903 = vmatpush1.msra.mxu0 %v3152
    %3904 = vmatprep.subr.mxu0 0.0
    %3905 = vmatpush1.msra.mxu0 %v3153
    %3906 = vmatprep.subr.mxu0 0.0
    %3907 = vmatpush1.msra.mxu0 %v3154
    %3908 = vmatprep.subr.mxu0 0.0
    %3909 = vmatpush1.msra.mxu0 %v3155
    %3910 = vmatprep.subr.mxu0 0.0
    %3911 = vmatpush1.msra.mxu0 %v3156
    %3912 = vmatprep.subr.mxu0 0.0
    %3913 = vmatpush1.msra.mxu0 %v3157
    %3914 = vmatprep.subr.mxu0 0.0
    %3915 = vmatpush1.msra.mxu0 %v3158
    %3916 = vmatprep.subr.mxu0 0.0
    %3917 = vmatpush1.msra.mxu0 %v3159
    %3918 = vmatprep.subr.mxu0 0.0
    %3919 = vmatpush1.msra.mxu0 %v3160
    %3920 = vmatprep.subr.mxu0 0.0
    %3921 = vmatpush1.msra.mxu0 0.0
    %3922 = vmatprep.subr.mxu0 0.0
    %3923 = vmatpush1.msra.mxu0 0.0
    %3924 = vmatprep.subr.mxu0 0.0
    %3925 = vmatpush1.msra.mxu0 0.0
    %3926 = vmatprep.subr.mxu0 0.0
    %3927 = vmatpush1.msra.mxu0 0.0
    %3928 = vmatprep.subr.mxu0 0.0
    %3929 = vmatpush1.msra.mxu0 0.0
    %3930 = vmatprep.subr.mxu0 0.0
    %3931 = vmatpush1.msra.mxu0 0.0
    %3932 = vmatprep.subr.mxu0 0.0
    %3933 = vmatpush1.msra.mxu0 0.0
    %3934 = vmatprep.subr.mxu0 0.0
    %3935 = vmatpush1.msra.mxu0 0.0
    %3936 = vmatprep.subr.mxu0 0.0
    %3937 = vmatpush1.msra.mxu0 0.0
    %3938 = vmatprep.subr.mxu0 0.0
    %3939 = vmatpush1.msra.mxu0 0.0
    %3940 = vmatprep.subr.mxu0 0.0
    %3941 = vmatpush1.msra.mxu0 0.0
    %3942 = vmatprep.subr.mxu0 0.0
    %3943 = vmatpush1.msra.mxu0 0.0
    %3944 = vmatprep.subr.mxu0 0.0
    %3945 = vmatpush1.msra.mxu0 0.0
    %3946 = vmatprep.subr.mxu0 0.0
    %3947 = vmatpush1.msra.mxu0 0.0
    %3948 = vmatprep.subr.mxu0 0.0
    %3949 = vmatpush1.msra.mxu0 0.0
    %3950 = vmatprep.subr.mxu0 0.0
    %3951 = vmatpush1.msra.mxu0 0.0
    %3952 = vmatprep.mubr.f32.mxu0 0.0
    %3953 = vmatmul.mubr.f32.gmra.mrb[0].mxu0 %v1050
    %v3954 = vpop.f32.mrb[0].mxu0
    %v3955 = vadd.f32 0.0, %v3954
    %v3956 = vpop.f32.mrb[0].mxu0
    %3957 = vmatprep.mubr.f32.mxu0 0.0
    %3958 = vmatmul.mubr.f32.gmra.mrb[0].mxu0 %v1051
    %v3959 = vpop.f32.mrb[0].mxu0
    %v3960 = vadd.f32 0.0, %v3959
    %v3961 = vpop.f32.mrb[0].mxu0
    %3962 = vmatprep.mubr.f32.mxu0 0.0
    %3963 = vmatmul.mubr.f32.gmra.mrb[0].mxu0 %v1052
    %v3964 = vpop.f32.mrb[0].mxu0
    %v3965 = vadd.f32 0.0, %v3964
    %v3966 = vpop.f32.mrb[0].mxu0
    %3967 = vmatprep.mubr.f32.mxu0 0.0
    %3968 = vmatmul.mubr.f32.gmra.mrb[0].mxu0 %v1053
    %v3969 = vpop.f32.mrb[0].mxu0
    %v3970 = vadd.f32 0.0, %v3969
    %v3971 = vpop.f32.mrb[0].mxu0
    %3972 = vmatprep.mubr.f32.mxu0 0.0
    %3973 = vmatmul.mubr.f32.gmra.mrb[0].mxu0 %v1054
    %v3974 = vpop.f32.mrb[0].mxu0
    %v3975 = vadd.f32 0.0, %v3974
    %v3976 = vpop.f32.mrb[0].mxu0
    %3977 = vmatprep.mubr.f32.mxu0 0.0
    %3978 = vmatmul.mubr.f32.gmra.mrb[0].mxu0 %v1055
    %v3979 = vpop.f32.mrb[0].mxu0
    %v3980 = vadd.f32 0.0, %v3979
    %v3981 = vpop.f32.mrb[0].mxu0
    %3982 = vmatprep.mubr.f32.mxu0 0.0
    %3983 = vmatmul.mubr.f32.gmra.mrb[0].mxu0 %v1056
    %v3984 = vpop.f32.mrb[0].mxu0
    %v3985 = vadd.f32 0.0, %v3984
    %v3986 = vpop.f32.mrb[0].mxu0
    %3987 = vmatprep.mubr.f32.mxu0 0.0
    %3988 = vmatmul.mubr.f32.gmra.mrb[0].mxu0 %v1057
    %v3989 = vpop.f32.mrb[0].mxu0
    %v3990 = vadd.f32 0.0, %v3989
    %v3991 = vpop.f32.mrb[0].mxu0
    %3992 = vmatprep.mubr.f32.mxu0 0.0
    %3993 = vmatmul.mubr.f32.gmra.mrb[0].mxu0 %v1058
    %v3994 = vpop.f32.mrb[0].mxu0
    %v3995 = vadd.f32 0.0, %v3994
    %v3996 = vpop.f32.mrb[0].mxu0
    %3997 = vmatprep.mubr.f32.mxu0 0.0
    %3998 = vmatmul.mubr.f32.gmra.mrb[0].mxu0 %v1059
    %v3999 = vpop.f32.mrb[0].mxu0
    %v4000 = vadd.f32 0.0, %v3999
    %v4001 = vpop.f32.mrb[0].mxu0
    %4002 = vmatprep.mubr.f32.mxu0 0.0
    %4003 = vmatmul.mubr.f32.gmra.mrb[0].mxu0 %v1060
    %v4004 = vpop.f32.mrb[0].mxu0
    %v4005 = vadd.f32 0.0, %v4004
    %v4006 = vpop.f32.mrb[0].mxu0
    %4007 = vmatprep.mubr.f32.mxu0 0.0
    %4008 = vmatmul.mubr.f32.gmra.mrb[0].mxu0 %v1061
    %v4009 = vpop.f32.mrb[0].mxu0
    %v4010 = vadd.f32 0.0, %v4009
    %v4011 = vpop.f32.mrb[0].mxu0
    %4012 = vmatprep.mubr.f32.mxu0 0.0
    %4013 = vmatmul.mubr.f32.gmra.mrb[0].mxu0 %v1062
    %v4014 = vpop.f32.mrb[0].mxu0
    %v4015 = vadd.f32 0.0, %v4014
    %v4016 = vpop.f32.mrb[0].mxu0
    %4017 = vmatprep.mubr.f32.mxu0 0.0
    %4018 = vmatmul.mubr.f32.gmra.mrb[0].mxu0 %v1063
    %v4019 = vpop.f32.mrb[0].mxu0
    %v4020 = vadd.f32 0.0, %v4019
    %v4021 = vpop.f32.mrb[0].mxu0
    %4022 = vmatprep.mubr.f32.mxu0 0.0
    %4023 = vmatmul.mubr.f32.gmra.mrb[0].mxu0 %v1064
    %v4024 = vpop.f32.mrb[0].mxu0
    %v4025 = vadd.f32 0.0, %v4024
    %v4026 = vpop.f32.mrb[0].mxu0
    %4027 = vmatprep.mubr.f32.mxu0 0.0
    %4028 = vmatmul.mubr.f32.gmra.mrb[0].mxu0 %v1065
    %v4029 = vpop.f32.mrb[0].mxu0
    %v4030 = vadd.f32 0.0, %v4029
    %v4031 = vpop.f32.mrb[0].mxu0
    %4032 = vdwg.mxu0
    %v4033 = vlaneseq
    %v4034 = vshrl.u32 %v4033, 7
    %v4035 = vsub.s32 4, %v4034
    %v4036 = vrot.slane %v3162, %v4035
    %v4037 = vmul.f32 %v3955, %v4036
    %v4038 = vmul.f32 %v3960, %v4036
    %v4039 = vmul.f32 %v3965, %v4036
    %v4040 = vmul.f32 %v3970, %v4036
    %v4041 = vmul.f32 %v3975, %v4036
    %v4042 = vmul.f32 %v3980, %v4036
    %v4043 = vmul.f32 %v3985, %v4036
    %v4044 = vmul.f32 %v3990, %v4036
    %v4045 = vmul.f32 %v3995, %v4036
    %v4046 = vmul.f32 %v4000, %v4036
    %v4047 = vmul.f32 %v4005, %v4036
    %v4048 = vmul.f32 %v4010, %v4036
    %v4049 = vmul.f32 %v4015, %v4036
    %v4050 = vmul.f32 %v4020, %v4036
    %v4051 = vmul.f32 %v4025, %v4036
    %v4052 = vmul.f32 %v4030, %v4036
    %v4053 = vadd.f32 %v3872, %v4037
    %v4054 = vadd.f32 %v3873, %v4038
    %v4055 = vadd.f32 %v3874, %v4039
    %v4056 = vadd.f32 %v3875, %v4040
    %v4057 = vadd.f32 %v3876, %v4041
    %v4058 = vadd.f32 %v3877, %v4042
    %v4059 = vadd.f32 %v3878, %v4043
    %v4060 = vadd.f32 %v3879, %v4044
    %v4061 = vadd.f32 %v3880, %v4045
    %v4062 = vadd.f32 %v3881, %v4046
    %v4063 = vadd.f32 %v3882, %v4047
    %v4064 = vadd.f32 %v3883, %v4048
    %v4065 = vadd.f32 %v3884, %v4049
    %v4066 = vadd.f32 %v3885, %v4050
    %v4067 = vadd.f32 %v3886, %v4051
    %v4068 = vadd.f32 %v3887, %v4052
    %4069 = vmatprep.subr.mxu0 0.0
    %4070 = vmatpush1.msra.mxu0 %v3145
    %4071 = vmatprep.subr.mxu0 0.0
    %4072 = vmatpush1.msra.mxu0 %v3146
    %4073 = vmatprep.subr.mxu0 0.0
    %4074 = vmatpush1.msra.mxu0 %v3147
    %4075 = vmatprep.subr.mxu0 0.0
    %4076 = vmatpush1.msra.mxu0 %v3148
    %4077 = vmatprep.subr.mxu0 0.0
    %4078 = vmatpush1.msra.mxu0 %v3149
    %4079 = vmatprep.subr.mxu0 0.0
    %4080 = vmatpush1.msra.mxu0 %v3150
    %4081 = vmatprep.subr.mxu0 0.0
    %4082 = vmatpush1.msra.mxu0 %v3151
    %4083 = vmatprep.subr.mxu0 0.0
    %4084 = vmatpush1.msra.mxu0 %v3152
    %4085 = vmatprep.subr.mxu0 0.0
    %4086 = vmatpush1.msra.mxu0 %v3153
    %4087 = vmatprep.subr.mxu0 0.0
    %4088 = vmatpush1.msra.mxu0 %v3154
    %4089 = vmatprep.subr.mxu0 0.0
    %4090 = vmatpush1.msra.mxu0 %v3155
    %4091 = vmatprep.subr.mxu0 0.0
    %4092 = vmatpush1.msra.mxu0 %v3156
    %4093 = vmatprep.subr.mxu0 0.0
    %4094 = vmatpush1.msra.mxu0 %v3157
    %4095 = vmatprep.subr.mxu0 0.0
    %4096 = vmatpush1.msra.mxu0 %v3158
    %4097 = vmatprep.subr.mxu0 0.0
    %4098 = vmatpush1.msra.mxu0 %v3159
    %4099 = vmatprep.subr.mxu0 0.0
    %4100 = vmatpush1.msra.mxu0 %v3160
    %4101 = vmatprep.subr.mxu0 0.0
    %4102 = vmatpush1.msra.mxu0 0.0
    %4103 = vmatprep.subr.mxu0 0.0
    %4104 = vmatpush1.msra.mxu0 0.0
    %4105 = vmatprep.subr.mxu0 0.0
    %4106 = vmatpush1.msra.mxu0 0.0
    %4107 = vmatprep.subr.mxu0 0.0
    %4108 = vmatpush1.msra.mxu0 0.0
    %4109 = vmatprep.subr.mxu0 0.0
    %4110 = vmatpush1.msra.mxu0 0.0
    %4111 = vmatprep.subr.mxu0 0.0
    %4112 = vmatpush1.msra.mxu0 0.0
    %4113 = vmatprep.subr.mxu0 0.0
    %4114 = vmatpush1.msra.mxu0 0.0
    %4115 = vmatprep.subr.mxu0 0.0
    %4116 = vmatpush1.msra.mxu0 0.0
    %4117 = vmatprep.subr.mxu0 0.0
    %4118 = vmatpush1.msra.mxu0 0.0
    %4119 = vmatprep.subr.mxu0 0.0
    %4120 = vmatpush1.msra.mxu0 0.0
    %4121 = vmatprep.subr.mxu0 0.0
    %4122 = vmatpush1.msra.mxu0 0.0
    %4123 = vmatprep.subr.mxu0 0.0
    %4124 = vmatpush1.msra.mxu0 0.0
    %4125 = vmatprep.subr.mxu0 0.0
    %4126 = vmatpush1.msra.mxu0 0.0
    %4127 = vmatprep.subr.mxu0 0.0
    %4128 = vmatpush1.msra.mxu0 0.0
    %4129 = vmatprep.subr.mxu0 0.0
    %4130 = vmatpush1.msra.mxu0 0.0
    %4131 = vmatprep.subr.mxu0 0.0
    %4132 = vmatpush1.msra.mxu0 0.0
    %4133 = vmatprep.mubr.f32.mxu0 0.0
    %4134 = vmatmul.mubr.f32.gmra.mrb[0].mxu0 %v1248
    %v4135 = vpop.f32.mrb[0].mxu0
    %v4136 = vadd.f32 0.0, %v4135
    %v4137 = vpop.f32.mrb[0].mxu0
    %4138 = vmatprep.mubr.f32.mxu0 0.0
    %4139 = vmatmul.mubr.f32.gmra.mrb[0].mxu0 %v1249
    %v4140 = vpop.f32.mrb[0].mxu0
    %v4141 = vadd.f32 0.0, %v4140
    %v4142 = vpop.f32.mrb[0].mxu0
    %4143 = vmatprep.mubr.f32.mxu0 0.0
    %4144 = vmatmul.mubr.f32.gmra.mrb[0].mxu0 %v1250
    %v4145 = vpop.f32.mrb[0].mxu0
    %v4146 = vadd.f32 0.0, %v4145
    %v4147 = vpop.f32.mrb[0].mxu0
    %4148 = vmatprep.mubr.f32.mxu0 0.0
    %4149 = vmatmul.mubr.f32.gmra.mrb[0].mxu0 %v1251
    %v4150 = vpop.f32.mrb[0].mxu0
    %v4151 = vadd.f32 0.0, %v4150
    %v4152 = vpop.f32.mrb[0].mxu0
    %4153 = vmatprep.mubr.f32.mxu0 0.0
    %4154 = vmatmul.mubr.f32.gmra.mrb[0].mxu0 %v1252
    %v4155 = vpop.f32.mrb[0].mxu0
    %v4156 = vadd.f32 0.0, %v4155
    %v4157 = vpop.f32.mrb[0].mxu0
    %4158 = vmatprep.mubr.f32.mxu0 0.0
    %4159 = vmatmul.mubr.f32.gmra.mrb[0].mxu0 %v1253
    %v4160 = vpop.f32.mrb[0].mxu0
    %v4161 = vadd.f32 0.0, %v4160
    %v4162 = vpop.f32.mrb[0].mxu0
    %4163 = vmatprep.mubr.f32.mxu0 0.0
    %4164 = vmatmul.mubr.f32.gmra.mrb[0].mxu0 %v1254
    %v4165 = vpop.f32.mrb[0].mxu0
    %v4166 = vadd.f32 0.0, %v4165
    %v4167 = vpop.f32.mrb[0].mxu0
    %4168 = vmatprep.mubr.f32.mxu0 0.0
    %4169 = vmatmul.mubr.f32.gmra.mrb[0].mxu0 %v1255
    %v4170 = vpop.f32.mrb[0].mxu0
    %v4171 = vadd.f32 0.0, %v4170
    %v4172 = vpop.f32.mrb[0].mxu0
    %4173 = vmatprep.mubr.f32.mxu0 0.0
    %4174 = vmatmul.mubr.f32.gmra.mrb[0].mxu0 %v1256
    %v4175 = vpop.f32.mrb[0].mxu0
    %v4176 = vadd.f32 0.0, %v4175
    %v4177 = vpop.f32.mrb[0].mxu0
    %4178 = vmatprep.mubr.f32.mxu0 0.0
    %4179 = vmatmul.mubr.f32.gmra.mrb[0].mxu0 %v1257
    %v4180 = vpop.f32.mrb[0].mxu0
    %v4181 = vadd.f32 0.0, %v4180
    %v4182 = vpop.f32.mrb[0].mxu0
    %4183 = vmatprep.mubr.f32.mxu0 0.0
    %4184 = vmatmul.mubr.f32.gmra.mrb[0].mxu0 %v1258
    %v4185 = vpop.f32.mrb[0].mxu0
    %v4186 = vadd.f32 0.0, %v4185
    %v4187 = vpop.f32.mrb[0].mxu0
    %4188 = vmatprep.mubr.f32.mxu0 0.0
    %4189 = vmatmul.mubr.f32.gmra.mrb[0].mxu0 %v1259
    %v4190 = vpop.f32.mrb[0].mxu0
    %v4191 = vadd.f32 0.0, %v4190
    %v4192 = vpop.f32.mrb[0].mxu0
    %4193 = vmatprep.mubr.f32.mxu0 0.0
    %4194 = vmatmul.mubr.f32.gmra.mrb[0].mxu0 %v1260
    %v4195 = vpop.f32.mrb[0].mxu0
    %v4196 = vadd.f32 0.0, %v4195
    %v4197 = vpop.f32.mrb[0].mxu0
    %4198 = vmatprep.mubr.f32.mxu0 0.0
    %4199 = vmatmul.mubr.f32.gmra.mrb[0].mxu0 %v1261
    %v4200 = vpop.f32.mrb[0].mxu0
    %v4201 = vadd.f32 0.0, %v4200
    %v4202 = vpop.f32.mrb[0].mxu0
    %4203 = vmatprep.mubr.f32.mxu0 0.0
    %4204 = vmatmul.mubr.f32.gmra.mrb[0].mxu0 %v1262
    %v4205 = vpop.f32.mrb[0].mxu0
    %v4206 = vadd.f32 0.0, %v4205
    %v4207 = vpop.f32.mrb[0].mxu0
    %4208 = vmatprep.mubr.f32.mxu0 0.0
    %4209 = vmatmul.mubr.f32.gmra.mrb[0].mxu0 %v1263
    %v4210 = vpop.f32.mrb[0].mxu0
    %v4211 = vadd.f32 0.0, %v4210
    %v4212 = vpop.f32.mrb[0].mxu0
    %4213 = vdwg.mxu0
    %v4214 = vlaneseq
    %v4215 = vshrl.u32 %v4214, 7
    %v4216 = vsub.s32 5, %v4215
    %v4217 = vrot.slane %v3162, %v4216
    %v4218 = vmul.f32 %v4136, %v4217
    %v4219 = vmul.f32 %v4141, %v4217
    %v4220 = vmul.f32 %v4146, %v4217
    %v4221 = vmul.f32 %v4151, %v4217
    %v4222 = vmul.f32 %v4156, %v4217
    %v4223 = vmul.f32 %v4161, %v4217
    %v4224 = vmul.f32 %v4166, %v4217
    %v4225 = vmul.f32 %v4171, %v4217
    %v4226 = vmul.f32 %v4176, %v4217
    %v4227 = vmul.f32 %v4181, %v4217
    %v4228 = vmul.f32 %v4186, %v4217
    %v4229 = vmul.f32 %v4191, %v4217
    %v4230 = vmul.f32 %v4196, %v4217
    %v4231 = vmul.f32 %v4201, %v4217
    %v4232 = vmul.f32 %v4206, %v4217
    %v4233 = vmul.f32 %v4211, %v4217
    %v4234 = vadd.f32 %v4053, %v4218
    %v4235 = vadd.f32 %v4054, %v4219
    %v4236 = vadd.f32 %v4055, %v4220
    %v4237 = vadd.f32 %v4056, %v4221
    %v4238 = vadd.f32 %v4057, %v4222
    %v4239 = vadd.f32 %v4058, %v4223
    %v4240 = vadd.f32 %v4059, %v4224
    %v4241 = vadd.f32 %v4060, %v4225
    %v4242 = vadd.f32 %v4061, %v4226
    %v4243 = vadd.f32 %v4062, %v4227
    %v4244 = vadd.f32 %v4063, %v4228
    %v4245 = vadd.f32 %v4064, %v4229
    %v4246 = vadd.f32 %v4065, %v4230
    %v4247 = vadd.f32 %v4066, %v4231
    %v4248 = vadd.f32 %v4067, %v4232
    %v4249 = vadd.f32 %v4068, %v4233
    %4250 = vmatprep.subr.mxu0 0.0
    %4251 = vmatpush1.msra.mxu0 %v3145
    %4252 = vmatprep.subr.mxu0 0.0
    %4253 = vmatpush1.msra.mxu0 %v3146
    %4254 = vmatprep.subr.mxu0 0.0
    %4255 = vmatpush1.msra.mxu0 %v3147
    %4256 = vmatprep.subr.mxu0 0.0
    %4257 = vmatpush1.msra.mxu0 %v3148
    %4258 = vmatprep.subr.mxu0 0.0
    %4259 = vmatpush1.msra.mxu0 %v3149
    %4260 = vmatprep.subr.mxu0 0.0
    %4261 = vmatpush1.msra.mxu0 %v3150
    %4262 = vmatprep.subr.mxu0 0.0
    %4263 = vmatpush1.msra.mxu0 %v3151
    %4264 = vmatprep.subr.mxu0 0.0
    %4265 = vmatpush1.msra.mxu0 %v3152
    %4266 = vmatprep.subr.mxu0 0.0
    %4267 = vmatpush1.msra.mxu0 %v3153
    %4268 = vmatprep.subr.mxu0 0.0
    %4269 = vmatpush1.msra.mxu0 %v3154
    %4270 = vmatprep.subr.mxu0 0.0
    %4271 = vmatpush1.msra.mxu0 %v3155
    %4272 = vmatprep.subr.mxu0 0.0
    %4273 = vmatpush1.msra.mxu0 %v3156
    %4274 = vmatprep.subr.mxu0 0.0
    %4275 = vmatpush1.msra.mxu0 %v3157
    %4276 = vmatprep.subr.mxu0 0.0
    %4277 = vmatpush1.msra.mxu0 %v3158
    %4278 = vmatprep.subr.mxu0 0.0
    %4279 = vmatpush1.msra.mxu0 %v3159
    %4280 = vmatprep.subr.mxu0 0.0
    %4281 = vmatpush1.msra.mxu0 %v3160
    %4282 = vmatprep.subr.mxu0 0.0
    %4283 = vmatpush1.msra.mxu0 0.0
    %4284 = vmatprep.subr.mxu0 0.0
    %4285 = vmatpush1.msra.mxu0 0.0
    %4286 = vmatprep.subr.mxu0 0.0
    %4287 = vmatpush1.msra.mxu0 0.0
    %4288 = vmatprep.subr.mxu0 0.0
    %4289 = vmatpush1.msra.mxu0 0.0
    %4290 = vmatprep.subr.mxu0 0.0
    %4291 = vmatpush1.msra.mxu0 0.0
    %4292 = vmatprep.subr.mxu0 0.0
    %4293 = vmatpush1.msra.mxu0 0.0
    %4294 = vmatprep.subr.mxu0 0.0
    %4295 = vmatpush1.msra.mxu0 0.0
    %4296 = vmatprep.subr.mxu0 0.0
    %4297 = vmatpush1.msra.mxu0 0.0
    %4298 = vmatprep.subr.mxu0 0.0
    %4299 = vmatpush1.msra.mxu0 0.0
    %4300 = vmatprep.subr.mxu0 0.0
    %4301 = vmatpush1.msra.mxu0 0.0
    %4302 = vmatprep.subr.mxu0 0.0
    %4303 = vmatpush1.msra.mxu0 0.0
    %4304 = vmatprep.subr.mxu0 0.0
    %4305 = vmatpush1.msra.mxu0 0.0
    %4306 = vmatprep.subr.mxu0 0.0
    %4307 = vmatpush1.msra.mxu0 0.0
    %4308 = vmatprep.subr.mxu0 0.0
    %4309 = vmatpush1.msra.mxu0 0.0
    %4310 = vmatprep.subr.mxu0 0.0
    %4311 = vmatpush1.msra.mxu0 0.0
    %4312 = vmatprep.subr.mxu0 0.0
    %4313 = vmatpush1.msra.mxu0 0.0
    %4314 = vmatprep.mubr.f32.mxu0 0.0
    %4315 = vmatmul.mubr.f32.gmra.mrb[0].mxu0 %v1446
    %v4316 = vpop.f32.mrb[0].mxu0
    %v4317 = vadd.f32 0.0, %v4316
    %v4318 = vpop.f32.mrb[0].mxu0
    %4319 = vmatprep.mubr.f32.mxu0 0.0
    %4320 = vmatmul.mubr.f32.gmra.mrb[0].mxu0 %v1447
    %v4321 = vpop.f32.mrb[0].mxu0
    %v4322 = vadd.f32 0.0, %v4321
    %v4323 = vpop.f32.mrb[0].mxu0
    %4324 = vmatprep.mubr.f32.mxu0 0.0
    %4325 = vmatmul.mubr.f32.gmra.mrb[0].mxu0 %v1448
    %v4326 = vpop.f32.mrb[0].mxu0
    %v4327 = vadd.f32 0.0, %v4326
    %v4328 = vpop.f32.mrb[0].mxu0
    %4329 = vmatprep.mubr.f32.mxu0 0.0
    %4330 = vmatmul.mubr.f32.gmra.mrb[0].mxu0 %v1449
    %v4331 = vpop.f32.mrb[0].mxu0
    %v4332 = vadd.f32 0.0, %v4331
    %v4333 = vpop.f32.mrb[0].mxu0
    %4334 = vmatprep.mubr.f32.mxu0 0.0
    %4335 = vmatmul.mubr.f32.gmra.mrb[0].mxu0 %v1450
    %v4336 = vpop.f32.mrb[0].mxu0
    %v4337 = vadd.f32 0.0, %v4336
    %v4338 = vpop.f32.mrb[0].mxu0
    %4339 = vmatprep.mubr.f32.mxu0 0.0
    %4340 = vmatmul.mubr.f32.gmra.mrb[0].mxu0 %v1451
    %v4341 = vpop.f32.mrb[0].mxu0
    %v4342 = vadd.f32 0.0, %v4341
    %v4343 = vpop.f32.mrb[0].mxu0
    %4344 = vmatprep.mubr.f32.mxu0 0.0
    %4345 = vmatmul.mubr.f32.gmra.mrb[0].mxu0 %v1452
    %v4346 = vpop.f32.mrb[0].mxu0
    %v4347 = vadd.f32 0.0, %v4346
    %v4348 = vpop.f32.mrb[0].mxu0
    %4349 = vmatprep.mubr.f32.mxu0 0.0
    %4350 = vmatmul.mubr.f32.gmra.mrb[0].mxu0 %v1453
    %v4351 = vpop.f32.mrb[0].mxu0
    %v4352 = vadd.f32 0.0, %v4351
    %v4353 = vpop.f32.mrb[0].mxu0
    %4354 = vmatprep.mubr.f32.mxu0 0.0
    %4355 = vmatmul.mubr.f32.gmra.mrb[0].mxu0 %v1454
    %v4356 = vpop.f32.mrb[0].mxu0
    %v4357 = vadd.f32 0.0, %v4356
    %v4358 = vpop.f32.mrb[0].mxu0
    %4359 = vmatprep.mubr.f32.mxu0 0.0
    %4360 = vmatmul.mubr.f32.gmra.mrb[0].mxu0 %v1455
    %v4361 = vpop.f32.mrb[0].mxu0
    %v4362 = vadd.f32 0.0, %v4361
    %v4363 = vpop.f32.mrb[0].mxu0
    %4364 = vmatprep.mubr.f32.mxu0 0.0
    %4365 = vmatmul.mubr.f32.gmra.mrb[0].mxu0 %v1456
    %v4366 = vpop.f32.mrb[0].mxu0
    %v4367 = vadd.f32 0.0, %v4366
    %v4368 = vpop.f32.mrb[0].mxu0
    %4369 = vmatprep.mubr.f32.mxu0 0.0
    %4370 = vmatmul.mubr.f32.gmra.mrb[0].mxu0 %v1457
    %v4371 = vpop.f32.mrb[0].mxu0
    %v4372 = vadd.f32 0.0, %v4371
    %v4373 = vpop.f32.mrb[0].mxu0
    %4374 = vmatprep.mubr.f32.mxu0 0.0
    %4375 = vmatmul.mubr.f32.gmra.mrb[0].mxu0 %v1458
    %v4376 = vpop.f32.mrb[0].mxu0
    %v4377 = vadd.f32 0.0, %v4376
    %v4378 = vpop.f32.mrb[0].mxu0
    %4379 = vmatprep.mubr.f32.mxu0 0.0
    %4380 = vmatmul.mubr.f32.gmra.mrb[0].mxu0 %v1459
    %v4381 = vpop.f32.mrb[0].mxu0
    %v4382 = vadd.f32 0.0, %v4381
    %v4383 = vpop.f32.mrb[0].mxu0
    %4384 = vmatprep.mubr.f32.mxu0 0.0
    %4385 = vmatmul.mubr.f32.gmra.mrb[0].mxu0 %v1460
    %v4386 = vpop.f32.mrb[0].mxu0
    %v4387 = vadd.f32 0.0, %v4386
    %v4388 = vpop.f32.mrb[0].mxu0
    %4389 = vmatprep.mubr.f32.mxu0 0.0
    %4390 = vmatmul.mubr.f32.gmra.mrb[0].mxu0 %v1461
    %v4391 = vpop.f32.mrb[0].mxu0
    %v4392 = vadd.f32 0.0, %v4391
    %v4393 = vpop.f32.mrb[0].mxu0
    %4394 = vdwg.mxu0
    %v4395 = vlaneseq
    %v4396 = vshrl.u32 %v4395, 7
    %v4397 = vsub.s32 6, %v4396
    %v4398 = vrot.slane %v3162, %v4397
    %v4399 = vmul.f32 %v4317, %v4398
    %v4400 = vmul.f32 %v4322, %v4398
    %v4401 = vmul.f32 %v4327, %v4398
    %v4402 = vmul.f32 %v4332, %v4398
    %v4403 = vmul.f32 %v4337, %v4398
    %v4404 = vmul.f32 %v4342, %v4398
    %v4405 = vmul.f32 %v4347, %v4398
    %v4406 = vmul.f32 %v4352, %v4398
    %v4407 = vmul.f32 %v4357, %v4398
    %v4408 = vmul.f32 %v4362, %v4398
    %v4409 = vmul.f32 %v4367, %v4398
    %v4410 = vmul.f32 %v4372, %v4398
    %v4411 = vmul.f32 %v4377, %v4398
    %v4412 = vmul.f32 %v4382, %v4398
    %v4413 = vmul.f32 %v4387, %v4398
    %v4414 = vmul.f32 %v4392, %v4398
    %v4415 = vadd.f32 %v4234, %v4399
    %v4416 = vadd.f32 %v4235, %v4400
    %v4417 = vadd.f32 %v4236, %v4401
    %v4418 = vadd.f32 %v4237, %v4402
    %v4419 = vadd.f32 %v4238, %v4403
    %v4420 = vadd.f32 %v4239, %v4404
    %v4421 = vadd.f32 %v4240, %v4405
    %v4422 = vadd.f32 %v4241, %v4406
    %v4423 = vadd.f32 %v4242, %v4407
    %v4424 = vadd.f32 %v4243, %v4408
    %v4425 = vadd.f32 %v4244, %v4409
    %v4426 = vadd.f32 %v4245, %v4410
    %v4427 = vadd.f32 %v4246, %v4411
    %v4428 = vadd.f32 %v4247, %v4412
    %v4429 = vadd.f32 %v4248, %v4413
    %v4430 = vadd.f32 %v4249, %v4414
    %4431 = vmatprep.subr.mxu0 0.0
    %4432 = vmatpush1.msra.mxu0 %v3145
    %4433 = vmatprep.subr.mxu0 0.0
    %4434 = vmatpush1.msra.mxu0 %v3146
    %4435 = vmatprep.subr.mxu0 0.0
    %4436 = vmatpush1.msra.mxu0 %v3147
    %4437 = vmatprep.subr.mxu0 0.0
    %4438 = vmatpush1.msra.mxu0 %v3148
    %4439 = vmatprep.subr.mxu0 0.0
    %4440 = vmatpush1.msra.mxu0 %v3149
    %4441 = vmatprep.subr.mxu0 0.0
    %4442 = vmatpush1.msra.mxu0 %v3150
    %4443 = vmatprep.subr.mxu0 0.0
    %4444 = vmatpush1.msra.mxu0 %v3151
    %4445 = vmatprep.subr.mxu0 0.0
    %4446 = vmatpush1.msra.mxu0 %v3152
    %4447 = vmatprep.subr.mxu0 0.0
    %4448 = vmatpush1.msra.mxu0 %v3153
    %4449 = vmatprep.subr.mxu0 0.0
    %4450 = vmatpush1.msra.mxu0 %v3154
    %4451 = vmatprep.subr.mxu0 0.0
    %4452 = vmatpush1.msra.mxu0 %v3155
    %4453 = vmatprep.subr.mxu0 0.0
    %4454 = vmatpush1.msra.mxu0 %v3156
    %4455 = vmatprep.subr.mxu0 0.0
    %4456 = vmatpush1.msra.mxu0 %v3157
    %4457 = vmatprep.subr.mxu0 0.0
    %4458 = vmatpush1.msra.mxu0 %v3158
    %4459 = vmatprep.subr.mxu0 0.0
    %4460 = vmatpush1.msra.mxu0 %v3159
    %4461 = vmatprep.subr.mxu0 0.0
    %4462 = vmatpush1.msra.mxu0 %v3160
    %4463 = vmatprep.subr.mxu0 0.0
    %4464 = vmatpush1.msra.mxu0 0.0
    %4465 = vmatprep.subr.mxu0 0.0
    %4466 = vmatpush1.msra.mxu0 0.0
    %4467 = vmatprep.subr.mxu0 0.0
    %4468 = vmatpush1.msra.mxu0 0.0
    %4469 = vmatprep.subr.mxu0 0.0
    %4470 = vmatpush1.msra.mxu0 0.0
    %4471 = vmatprep.subr.mxu0 0.0
    %4472 = vmatpush1.msra.mxu0 0.0
    %4473 = vmatprep.subr.mxu0 0.0
    %4474 = vmatpush1.msra.mxu0 0.0
    %4475 = vmatprep.subr.mxu0 0.0
    %4476 = vmatpush1.msra.mxu0 0.0
    %4477 = vmatprep.subr.mxu0 0.0
    %4478 = vmatpush1.msra.mxu0 0.0
    %4479 = vmatprep.subr.mxu0 0.0
    %4480 = vmatpush1.msra.mxu0 0.0
    %4481 = vmatprep.subr.mxu0 0.0
    %4482 = vmatpush1.msra.mxu0 0.0
    %4483 = vmatprep.subr.mxu0 0.0
    %4484 = vmatpush1.msra.mxu0 0.0
    %4485 = vmatprep.subr.mxu0 0.0
    %4486 = vmatpush1.msra.mxu0 0.0
    %4487 = vmatprep.subr.mxu0 0.0
    %4488 = vmatpush1.msra.mxu0 0.0
    %4489 = vmatprep.subr.mxu0 0.0
    %4490 = vmatpush1.msra.mxu0 0.0
    %4491 = vmatprep.subr.mxu0 0.0
    %4492 = vmatpush1.msra.mxu0 0.0
    %4493 = vmatprep.subr.mxu0 0.0
    %4494 = vmatpush1.msra.mxu0 0.0
    %4495 = vmatprep.mubr.f32.mxu0 0.0
    %4496 = vmatmul.mubr.f32.gmra.mrb[0].mxu0 %v1644
    %v4497 = vpop.f32.mrb[0].mxu0
    %v4498 = vadd.f32 0.0, %v4497
    %v4499 = vpop.f32.mrb[0].mxu0
    %4500 = vmatprep.mubr.f32.mxu0 0.0
    %4501 = vmatmul.mubr.f32.gmra.mrb[0].mxu0 %v1645
    %v4502 = vpop.f32.mrb[0].mxu0
    %v4503 = vadd.f32 0.0, %v4502
    %v4504 = vpop.f32.mrb[0].mxu0
    %4505 = vmatprep.mubr.f32.mxu0 0.0
    %4506 = vmatmul.mubr.f32.gmra.mrb[0].mxu0 %v1646
    %v4507 = vpop.f32.mrb[0].mxu0
    %v4508 = vadd.f32 0.0, %v4507
    %v4509 = vpop.f32.mrb[0].mxu0
    %4510 = vmatprep.mubr.f32.mxu0 0.0
    %4511 = vmatmul.mubr.f32.gmra.mrb[0].mxu0 %v1647
    %v4512 = vpop.f32.mrb[0].mxu0
    %v4513 = vadd.f32 0.0, %v4512
    %v4514 = vpop.f32.mrb[0].mxu0
    %4515 = vmatprep.mubr.f32.mxu0 0.0
    %4516 = vmatmul.mubr.f32.gmra.mrb[0].mxu0 %v1648
    %v4517 = vpop.f32.mrb[0].mxu0
    %v4518 = vadd.f32 0.0, %v4517
    %v4519 = vpop.f32.mrb[0].mxu0
    %4520 = vmatprep.mubr.f32.mxu0 0.0
    %4521 = vmatmul.mubr.f32.gmra.mrb[0].mxu0 %v1649
    %v4522 = vpop.f32.mrb[0].mxu0
    %v4523 = vadd.f32 0.0, %v4522
    %v4524 = vpop.f32.mrb[0].mxu0
    %4525 = vmatprep.mubr.f32.mxu0 0.0
    %4526 = vmatmul.mubr.f32.gmra.mrb[0].mxu0 %v1650
    %v4527 = vpop.f32.mrb[0].mxu0
    %v4528 = vadd.f32 0.0, %v4527
    %v4529 = vpop.f32.mrb[0].mxu0
    %4530 = vmatprep.mubr.f32.mxu0 0.0
    %4531 = vmatmul.mubr.f32.gmra.mrb[0].mxu0 %v1651
    %v4532 = vpop.f32.mrb[0].mxu0
    %v4533 = vadd.f32 0.0, %v4532
    %v4534 = vpop.f32.mrb[0].mxu0
    %4535 = vmatprep.mubr.f32.mxu0 0.0
    %4536 = vmatmul.mubr.f32.gmra.mrb[0].mxu0 %v1652
    %v4537 = vpop.f32.mrb[0].mxu0
    %v4538 = vadd.f32 0.0, %v4537
    %v4539 = vpop.f32.mrb[0].mxu0
    %4540 = vmatprep.mubr.f32.mxu0 0.0
    %4541 = vmatmul.mubr.f32.gmra.mrb[0].mxu0 %v1653
    %v4542 = vpop.f32.mrb[0].mxu0
    %v4543 = vadd.f32 0.0, %v4542
    %v4544 = vpop.f32.mrb[0].mxu0
    %4545 = vmatprep.mubr.f32.mxu0 0.0
    %4546 = vmatmul.mubr.f32.gmra.mrb[0].mxu0 %v1654
    %v4547 = vpop.f32.mrb[0].mxu0
    %v4548 = vadd.f32 0.0, %v4547
    %v4549 = vpop.f32.mrb[0].mxu0
    %4550 = vmatprep.mubr.f32.mxu0 0.0
    %4551 = vmatmul.mubr.f32.gmra.mrb[0].mxu0 %v1655
    %v4552 = vpop.f32.mrb[0].mxu0
    %v4553 = vadd.f32 0.0, %v4552
    %v4554 = vpop.f32.mrb[0].mxu0
    %4555 = vmatprep.mubr.f32.mxu0 0.0
    %4556 = vmatmul.mubr.f32.gmra.mrb[0].mxu0 %v1656
    %v4557 = vpop.f32.mrb[0].mxu0
    %v4558 = vadd.f32 0.0, %v4557
    %v4559 = vpop.f32.mrb[0].mxu0
    %4560 = vmatprep.mubr.f32.mxu0 0.0
    %4561 = vmatmul.mubr.f32.gmra.mrb[0].mxu0 %v1657
    %v4562 = vpop.f32.mrb[0].mxu0
    %v4563 = vadd.f32 0.0, %v4562
    %v4564 = vpop.f32.mrb[0].mxu0
    %4565 = vmatprep.mubr.f32.mxu0 0.0
    %4566 = vmatmul.mubr.f32.gmra.mrb[0].mxu0 %v1658
    %v4567 = vpop.f32.mrb[0].mxu0
    %v4568 = vadd.f32 0.0, %v4567
    %v4569 = vpop.f32.mrb[0].mxu0
    %4570 = vmatprep.mubr.f32.mxu0 0.0
    %4571 = vmatmul.mubr.f32.gmra.mrb[0].mxu0 %v1659
    %v4572 = vpop.f32.mrb[0].mxu0
    %v4573 = vadd.f32 0.0, %v4572
    %v4574 = vpop.f32.mrb[0].mxu0
    %4575 = vdwg.mxu0
    %v4576 = vlaneseq
    %v4577 = vshrl.u32 %v4576, 7
    %v4578 = vsub.s32 7, %v4577
    %v4579 = vrot.slane %v3162, %v4578
    %v4580 = vmul.f32 %v4498, %v4579
    %v4581 = vmul.f32 %v4503, %v4579
    %v4582 = vmul.f32 %v4508, %v4579
    %v4583 = vmul.f32 %v4513, %v4579
    %v4584 = vmul.f32 %v4518, %v4579
    %v4585 = vmul.f32 %v4523, %v4579
    %v4586 = vmul.f32 %v4528, %v4579
    %v4587 = vmul.f32 %v4533, %v4579
    %v4588 = vmul.f32 %v4538, %v4579
    %v4589 = vmul.f32 %v4543, %v4579
    %v4590 = vmul.f32 %v4548, %v4579
    %v4591 = vmul.f32 %v4553, %v4579
    %v4592 = vmul.f32 %v4558, %v4579
    %v4593 = vmul.f32 %v4563, %v4579
    %v4594 = vmul.f32 %v4568, %v4579
    %v4595 = vmul.f32 %v4573, %v4579
    %v4596 = vadd.f32 %v4415, %v4580
    %v4597 = vadd.f32 %v4416, %v4581
    %v4598 = vadd.f32 %v4417, %v4582
    %v4599 = vadd.f32 %v4418, %v4583
    %v4600 = vadd.f32 %v4419, %v4584
    %v4601 = vadd.f32 %v4420, %v4585
    %v4602 = vadd.f32 %v4421, %v4586
    %v4603 = vadd.f32 %v4422, %v4587
    %v4604 = vadd.f32 %v4423, %v4588
    %v4605 = vadd.f32 %v4424, %v4589
    %v4606 = vadd.f32 %v4425, %v4590
    %v4607 = vadd.f32 %v4426, %v4591
    %v4608 = vadd.f32 %v4427, %v4592
    %v4609 = vadd.f32 %v4428, %v4593
    %v4610 = vadd.f32 %v4429, %v4594
    %v4611 = vadd.f32 %v4430, %v4595
    %4612 = vmatprep.subr.mxu0 0.0
    %4613 = vmatpush1.msra.mxu0 %v3145
    %4614 = vmatprep.subr.mxu0 0.0
    %4615 = vmatpush1.msra.mxu0 %v3146
    %4616 = vmatprep.subr.mxu0 0.0
    %4617 = vmatpush1.msra.mxu0 %v3147
    %4618 = vmatprep.subr.mxu0 0.0
    %4619 = vmatpush1.msra.mxu0 %v3148
    %4620 = vmatprep.subr.mxu0 0.0
    %4621 = vmatpush1.msra.mxu0 %v3149
    %4622 = vmatprep.subr.mxu0 0.0
    %4623 = vmatpush1.msra.mxu0 %v3150
    %4624 = vmatprep.subr.mxu0 0.0
    %4625 = vmatpush1.msra.mxu0 %v3151
    %4626 = vmatprep.subr.mxu0 0.0
    %4627 = vmatpush1.msra.mxu0 %v3152
    %4628 = vmatprep.subr.mxu0 0.0
    %4629 = vmatpush1.msra.mxu0 %v3153
    %4630 = vmatprep.subr.mxu0 0.0
    %4631 = vmatpush1.msra.mxu0 %v3154
    %4632 = vmatprep.subr.mxu0 0.0
    %4633 = vmatpush1.msra.mxu0 %v3155
    %4634 = vmatprep.subr.mxu0 0.0
    %4635 = vmatpush1.msra.mxu0 %v3156
    %4636 = vmatprep.subr.mxu0 0.0
    %4637 = vmatpush1.msra.mxu0 %v3157
    %4638 = vmatprep.subr.mxu0 0.0
    %4639 = vmatpush1.msra.mxu0 %v3158
    %4640 = vmatprep.subr.mxu0 0.0
    %4641 = vmatpush1.msra.mxu0 %v3159
    %4642 = vmatprep.subr.mxu0 0.0
    %4643 = vmatpush1.msra.mxu0 %v3160
    %4644 = vmatprep.subr.mxu0 0.0
    %4645 = vmatpush1.msra.mxu0 0.0
    %4646 = vmatprep.subr.mxu0 0.0
    %4647 = vmatpush1.msra.mxu0 0.0
    %4648 = vmatprep.subr.mxu0 0.0
    %4649 = vmatpush1.msra.mxu0 0.0
    %4650 = vmatprep.subr.mxu0 0.0
    %4651 = vmatpush1.msra.mxu0 0.0
    %4652 = vmatprep.subr.mxu0 0.0
    %4653 = vmatpush1.msra.mxu0 0.0
    %4654 = vmatprep.subr.mxu0 0.0
    %4655 = vmatpush1.msra.mxu0 0.0
    %4656 = vmatprep.subr.mxu0 0.0
    %4657 = vmatpush1.msra.mxu0 0.0
    %4658 = vmatprep.subr.mxu0 0.0
    %4659 = vmatpush1.msra.mxu0 0.0
    %4660 = vmatprep.subr.mxu0 0.0
    %4661 = vmatpush1.msra.mxu0 0.0
    %4662 = vmatprep.subr.mxu0 0.0
    %4663 = vmatpush1.msra.mxu0 0.0
    %4664 = vmatprep.subr.mxu0 0.0
    %4665 = vmatpush1.msra.mxu0 0.0
    %4666 = vmatprep.subr.mxu0 0.0
    %4667 = vmatpush1.msra.mxu0 0.0
    %4668 = vmatprep.subr.mxu0 0.0
    %4669 = vmatpush1.msra.mxu0 0.0
    %4670 = vmatprep.subr.mxu0 0.0
    %4671 = vmatpush1.msra.mxu0 0.0
    %4672 = vmatprep.subr.mxu0 0.0
    %4673 = vmatpush1.msra.mxu0 0.0
    %4674 = vmatprep.subr.mxu0 0.0
    %4675 = vmatpush1.msra.mxu0 0.0
    %4676 = vmatprep.mubr.f32.mxu0 0.0
    %4677 = vmatmul.mubr.f32.gmra.mrb[0].mxu0 %v1842
    %v4678 = vpop.f32.mrb[0].mxu0
    %v4679 = vadd.f32 0.0, %v4678
    %v4680 = vpop.f32.mrb[0].mxu0
    %4681 = vmatprep.mubr.f32.mxu0 0.0
    %4682 = vmatmul.mubr.f32.gmra.mrb[0].mxu0 %v1843
    %v4683 = vpop.f32.mrb[0].mxu0
    %v4684 = vadd.f32 0.0, %v4683
    %v4685 = vpop.f32.mrb[0].mxu0
    %4686 = vmatprep.mubr.f32.mxu0 0.0
    %4687 = vmatmul.mubr.f32.gmra.mrb[0].mxu0 %v1844
    %v4688 = vpop.f32.mrb[0].mxu0
    %v4689 = vadd.f32 0.0, %v4688
    %v4690 = vpop.f32.mrb[0].mxu0
    %4691 = vmatprep.mubr.f32.mxu0 0.0
    %4692 = vmatmul.mubr.f32.gmra.mrb[0].mxu0 %v1845
    %v4693 = vpop.f32.mrb[0].mxu0
    %v4694 = vadd.f32 0.0, %v4693
    %v4695 = vpop.f32.mrb[0].mxu0
    %4696 = vmatprep.mubr.f32.mxu0 0.0
    %4697 = vmatmul.mubr.f32.gmra.mrb[0].mxu0 %v1846
    %v4698 = vpop.f32.mrb[0].mxu0
    %v4699 = vadd.f32 0.0, %v4698
    %v4700 = vpop.f32.mrb[0].mxu0
    %4701 = vmatprep.mubr.f32.mxu0 0.0
    %4702 = vmatmul.mubr.f32.gmra.mrb[0].mxu0 %v1847
    %v4703 = vpop.f32.mrb[0].mxu0
    %v4704 = vadd.f32 0.0, %v4703
    %v4705 = vpop.f32.mrb[0].mxu0
    %4706 = vmatprep.mubr.f32.mxu0 0.0
    %4707 = vmatmul.mubr.f32.gmra.mrb[0].mxu0 %v1848
    %v4708 = vpop.f32.mrb[0].mxu0
    %v4709 = vadd.f32 0.0, %v4708
    %v4710 = vpop.f32.mrb[0].mxu0
    %4711 = vmatprep.mubr.f32.mxu0 0.0
    %4712 = vmatmul.mubr.f32.gmra.mrb[0].mxu0 %v1849
    %v4713 = vpop.f32.mrb[0].mxu0
    %v4714 = vadd.f32 0.0, %v4713
    %v4715 = vpop.f32.mrb[0].mxu0
    %4716 = vmatprep.mubr.f32.mxu0 0.0
    %4717 = vmatmul.mubr.f32.gmra.mrb[0].mxu0 %v1850
    %v4718 = vpop.f32.mrb[0].mxu0
    %v4719 = vadd.f32 0.0, %v4718
    %v4720 = vpop.f32.mrb[0].mxu0
    %4721 = vmatprep.mubr.f32.mxu0 0.0
    %4722 = vmatmul.mubr.f32.gmra.mrb[0].mxu0 %v1851
    %v4723 = vpop.f32.mrb[0].mxu0
    %v4724 = vadd.f32 0.0, %v4723
    %v4725 = vpop.f32.mrb[0].mxu0
    %4726 = vmatprep.mubr.f32.mxu0 0.0
    %4727 = vmatmul.mubr.f32.gmra.mrb[0].mxu0 %v1852
    %v4728 = vpop.f32.mrb[0].mxu0
    %v4729 = vadd.f32 0.0, %v4728
    %v4730 = vpop.f32.mrb[0].mxu0
    %4731 = vmatprep.mubr.f32.mxu0 0.0
    %4732 = vmatmul.mubr.f32.gmra.mrb[0].mxu0 %v1853
    %v4733 = vpop.f32.mrb[0].mxu0
    %v4734 = vadd.f32 0.0, %v4733
    %v4735 = vpop.f32.mrb[0].mxu0
    %4736 = vmatprep.mubr.f32.mxu0 0.0
    %4737 = vmatmul.mubr.f32.gmra.mrb[0].mxu0 %v1854
    %v4738 = vpop.f32.mrb[0].mxu0
    %v4739 = vadd.f32 0.0, %v4738
    %v4740 = vpop.f32.mrb[0].mxu0
    %4741 = vmatprep.mubr.f32.mxu0 0.0
    %4742 = vmatmul.mubr.f32.gmra.mrb[0].mxu0 %v1855
    %v4743 = vpop.f32.mrb[0].mxu0
    %v4744 = vadd.f32 0.0, %v4743
    %v4745 = vpop.f32.mrb[0].mxu0
    %4746 = vmatprep.mubr.f32.mxu0 0.0
    %4747 = vmatmul.mubr.f32.gmra.mrb[0].mxu0 %v1856
    %v4748 = vpop.f32.mrb[0].mxu0
    %v4749 = vadd.f32 0.0, %v4748
    %v4750 = vpop.f32.mrb[0].mxu0
    %4751 = vmatprep.mubr.f32.mxu0 0.0
    %4752 = vmatmul.mubr.f32.gmra.mrb[0].mxu0 %v1857
    %v4753 = vpop.f32.mrb[0].mxu0
    %v4754 = vadd.f32 0.0, %v4753
    %v4755 = vpop.f32.mrb[0].mxu0
    %4756 = vdwg.mxu0
    %v4757 = vlaneseq
    %v4758 = vshrl.u32 %v4757, 7
    %v4759 = vsub.s32 0, %v4758
    %v4760 = vrot.slane %v3163, %v4759
    %v4761 = vmul.f32 %v4679, %v4760
    %v4762 = vmul.f32 %v4684, %v4760
    %v4763 = vmul.f32 %v4689, %v4760
    %v4764 = vmul.f32 %v4694, %v4760
    %v4765 = vmul.f32 %v4699, %v4760
    %v4766 = vmul.f32 %v4704, %v4760
    %v4767 = vmul.f32 %v4709, %v4760
    %v4768 = vmul.f32 %v4714, %v4760
    %v4769 = vmul.f32 %v4719, %v4760
    %v4770 = vmul.f32 %v4724, %v4760
    %v4771 = vmul.f32 %v4729, %v4760
    %v4772 = vmul.f32 %v4734, %v4760
    %v4773 = vmul.f32 %v4739, %v4760
    %v4774 = vmul.f32 %v4744, %v4760
    %v4775 = vmul.f32 %v4749, %v4760
    %v4776 = vmul.f32 %v4754, %v4760
    %v4777 = vadd.f32 %v4596, %v4761
    %v4778 = vadd.f32 %v4597, %v4762
    %v4779 = vadd.f32 %v4598, %v4763
    %v4780 = vadd.f32 %v4599, %v4764
    %v4781 = vadd.f32 %v4600, %v4765
    %v4782 = vadd.f32 %v4601, %v4766
    %v4783 = vadd.f32 %v4602, %v4767
    %v4784 = vadd.f32 %v4603, %v4768
    %v4785 = vadd.f32 %v4604, %v4769
    %v4786 = vadd.f32 %v4605, %v4770
    %v4787 = vadd.f32 %v4606, %v4771
    %v4788 = vadd.f32 %v4607, %v4772
    %v4789 = vadd.f32 %v4608, %v4773
    %v4790 = vadd.f32 %v4609, %v4774
    %v4791 = vadd.f32 %v4610, %v4775
    %v4792 = vadd.f32 %v4611, %v4776
    %v4793 = vld [vmem:[%s4 + $0xa] sm:$0x1]
    %v4794 = vlaneseq
    %v4795 = vshrl.u32 %v4794, 7
    %v4796 = vsub.s32 0, %v4795
    %v4797 = vrot.slane %v4793, %v4796
    %v4798 = vmul.f32 %v4777, %v4797
    %v4799 = vmul.f32 %v4778, %v4797
    %v4800 = vmul.f32 %v4779, %v4797
    %v4801 = vmul.f32 %v4780, %v4797
    %v4802 = vmul.f32 %v4781, %v4797
    %v4803 = vmul.f32 %v4782, %v4797
    %v4804 = vmul.f32 %v4783, %v4797
    %v4805 = vmul.f32 %v4784, %v4797
    %v4806 = vmul.f32 %v4785, %v4797
    %v4807 = vmul.f32 %v4786, %v4797
    %v4808 = vmul.f32 %v4787, %v4797
    %v4809 = vmul.f32 %v4788, %v4797
    %v4810 = vmul.f32 %v4789, %v4797
    %v4811 = vmul.f32 %v4790, %v4797
    %v4812 = vmul.f32 %v4791, %v4797
    %v4813 = vmul.f32 %v4792, %v4797
    %v4814 = vld [vmem:[%s4 + $0xb] sm:$0x1]
    %v4815 = vlaneseq
    %v4816 = vshrl.u32 %v4815, 7
    %v4817 = vsub.s32 0, %v4816
    %v4818 = vrot.slane %v4814, %v4817
    %v4819 = vadd.f32 %v4798, %v4818
    %v4820 = vadd.f32 %v4799, %v4818
    %v4821 = vadd.f32 %v4800, %v4818
    %v4822 = vadd.f32 %v4801, %v4818
    %v4823 = vadd.f32 %v4802, %v4818
    %v4824 = vadd.f32 %v4803, %v4818
    %v4825 = vadd.f32 %v4804, %v4818
    %v4826 = vadd.f32 %v4805, %v4818
    %v4827 = vadd.f32 %v4806, %v4818
    %v4828 = vadd.f32 %v4807, %v4818
    %v4829 = vadd.f32 %v4808, %v4818
    %v4830 = vadd.f32 %v4809, %v4818
    %v4831 = vadd.f32 %v4810, %v4818
    %v4832 = vadd.f32 %v4811, %v4818
    %v4833 = vadd.f32 %v4812, %v4818
    %v4834 = vadd.f32 %v4813, %v4818
    %v4835 = vmax.f32 %v4819, 0.0
    %v4836 = vmax.f32 %v4820, 0.0
    %v4837 = vmax.f32 %v4821, 0.0
    %v4838 = vmax.f32 %v4822, 0.0
    %v4839 = vmax.f32 %v4823, 0.0
    %v4840 = vmax.f32 %v4824, 0.0
    %v4841 = vmax.f32 %v4825, 0.0
    %v4842 = vmax.f32 %v4826, 0.0
    %v4843 = vmax.f32 %v4827, 0.0
    %v4844 = vmax.f32 %v4828, 0.0
    %v4845 = vmax.f32 %v4829, 0.0
    %v4846 = vmax.f32 %v4830, 0.0
    %v4847 = vmax.f32 %v4831, 0.0
    %v4848 = vmax.f32 %v4832, 0.0
    %v4849 = vmax.f32 %v4833, 0.0
    %v4850 = vmax.f32 %v4834, 0.0
    %4851 = vmatprep.subr.mxu0 0.0
    %4852 = vmatpush1.msra.mxu0 %v4835
    %4853 = vmatprep.subr.mxu0 0.0
    %4854 = vmatpush1.msra.mxu0 %v4836
    %4855 = vmatprep.subr.mxu0 0.0
    %4856 = vmatpush1.msra.mxu0 %v4837
    %4857 = vmatprep.subr.mxu0 0.0
    %4858 = vmatpush1.msra.mxu0 %v4838
    %4859 = vmatprep.subr.mxu0 0.0
    %4860 = vmatpush1.msra.mxu0 %v4839
    %4861 = vmatprep.subr.mxu0 0.0
    %4862 = vmatpush1.msra.mxu0 %v4840
    %4863 = vmatprep.subr.mxu0 0.0
    %4864 = vmatpush1.msra.mxu0 %v4841
    %4865 = vmatprep.subr.mxu0 0.0
    %4866 = vmatpush1.msra.mxu0 %v4842
    %4867 = vmatprep.subr.mxu0 0.0
    %4868 = vmatpush1.msra.mxu0 %v4843
    %4869 = vmatprep.subr.mxu0 0.0
    %4870 = vmatpush1.msra.mxu0 %v4844
    %4871 = vmatprep.subr.mxu0 0.0
    %4872 = vmatpush1.msra.mxu0 %v4845
    %4873 = vmatprep.subr.mxu0 0.0
    %4874 = vmatpush1.msra.mxu0 %v4846
    %4875 = vmatprep.subr.mxu0 0.0
    %4876 = vmatpush1.msra.mxu0 %v4847
    %4877 = vmatprep.subr.mxu0 0.0
    %4878 = vmatpush1.msra.mxu0 %v4848
    %4879 = vmatprep.subr.mxu0 0.0
    %4880 = vmatpush1.msra.mxu0 %v4849
    %4881 = vmatprep.subr.mxu0 0.0
    %4882 = vmatpush1.msra.mxu0 %v4850
    %4883 = vmatprep.subr.mxu0 0.0
    %4884 = vmatpush1.msra.mxu0 0.0
    %4885 = vmatprep.subr.mxu0 0.0
    %4886 = vmatpush1.msra.mxu0 0.0
    %4887 = vmatprep.subr.mxu0 0.0
    %4888 = vmatpush1.msra.mxu0 0.0
    %4889 = vmatprep.subr.mxu0 0.0
    %4890 = vmatpush1.msra.mxu0 0.0
    %4891 = vmatprep.subr.mxu0 0.0
    %4892 = vmatpush1.msra.mxu0 0.0
    %4893 = vmatprep.subr.mxu0 0.0
    %4894 = vmatpush1.msra.mxu0 0.0
    %4895 = vmatprep.subr.mxu0 0.0
    %4896 = vmatpush1.msra.mxu0 0.0
    %4897 = vmatprep.subr.mxu0 0.0
    %4898 = vmatpush1.msra.mxu0 0.0
    %4899 = vmatprep.subr.mxu0 0.0
    %4900 = vmatpush1.msra.mxu0 0.0
    %4901 = vmatprep.subr.mxu0 0.0
    %4902 = vmatpush1.msra.mxu0 0.0
    %4903 = vmatprep.subr.mxu0 0.0
    %4904 = vmatpush1.msra.mxu0 0.0
    %4905 = vmatprep.subr.mxu0 0.0
    %4906 = vmatpush1.msra.mxu0 0.0
    %4907 = vmatprep.subr.mxu0 0.0
    %4908 = vmatpush1.msra.mxu0 0.0
    %4909 = vmatprep.subr.mxu0 0.0
    %4910 = vmatpush1.msra.mxu0 0.0
    %4911 = vmatprep.subr.mxu0 0.0
    %4912 = vmatpush1.msra.mxu0 0.0
    %4913 = vmatprep.subr.mxu0 0.0
    %4914 = vmatpush1.msra.mxu0 0.0
    %4915 = vmatprep.mubr.f32.mxu0 0.0
    %4916 = vmatmul.mubr.f32.gmra.mrb[0].mxu0 %v2098
    %v4917 = vpop.f32.mrb[0].mxu0
    %v4918 = vadd.f32 0.0, %v4917
    %v4919 = vpop.f32.mrb[0].mxu0
    %4920 = vmatprep.mubr.f32.mxu0 0.0
    %4921 = vmatmul.mubr.f32.gmra.mrb[0].mxu0 %v2099
    %v4922 = vpop.f32.mrb[0].mxu0
    %v4923 = vadd.f32 0.0, %v4922
    %v4924 = vpop.f32.mrb[0].mxu0
    %4925 = vmatprep.mubr.f32.mxu0 0.0
    %4926 = vmatmul.mubr.f32.gmra.mrb[0].mxu0 %v2100
    %v4927 = vpop.f32.mrb[0].mxu0
    %v4928 = vadd.f32 0.0, %v4927
    %v4929 = vpop.f32.mrb[0].mxu0
    %4930 = vmatprep.mubr.f32.mxu0 0.0
    %4931 = vmatmul.mubr.f32.gmra.mrb[0].mxu0 %v2101
    %v4932 = vpop.f32.mrb[0].mxu0
    %v4933 = vadd.f32 0.0, %v4932
    %v4934 = vpop.f32.mrb[0].mxu0
    %4935 = vmatprep.mubr.f32.mxu0 0.0
    %4936 = vmatmul.mubr.f32.gmra.mrb[0].mxu0 %v2102
    %v4937 = vpop.f32.mrb[0].mxu0
    %v4938 = vadd.f32 0.0, %v4937
    %v4939 = vpop.f32.mrb[0].mxu0
    %4940 = vmatprep.mubr.f32.mxu0 0.0
    %4941 = vmatmul.mubr.f32.gmra.mrb[0].mxu0 %v2103
    %v4942 = vpop.f32.mrb[0].mxu0
    %v4943 = vadd.f32 0.0, %v4942
    %v4944 = vpop.f32.mrb[0].mxu0
    %4945 = vmatprep.mubr.f32.mxu0 0.0
    %4946 = vmatmul.mubr.f32.gmra.mrb[0].mxu0 %v2104
    %v4947 = vpop.f32.mrb[0].mxu0
    %v4948 = vadd.f32 0.0, %v4947
    %v4949 = vpop.f32.mrb[0].mxu0
    %4950 = vmatprep.mubr.f32.mxu0 0.0
    %4951 = vmatmul.mubr.f32.gmra.mrb[0].mxu0 %v2105
    %v4952 = vpop.f32.mrb[0].mxu0
    %v4953 = vadd.f32 0.0, %v4952
    %v4954 = vpop.f32.mrb[0].mxu0
    %4955 = vmatprep.mubr.f32.mxu0 0.0
    %4956 = vmatmul.mubr.f32.gmra.mrb[0].mxu0 %v2106
    %v4957 = vpop.f32.mrb[0].mxu0
    %v4958 = vadd.f32 0.0, %v4957
    %v4959 = vpop.f32.mrb[0].mxu0
    %4960 = vmatprep.mubr.f32.mxu0 0.0
    %4961 = vmatmul.mubr.f32.gmra.mrb[0].mxu0 %v2107
    %v4962 = vpop.f32.mrb[0].mxu0
    %v4963 = vadd.f32 0.0, %v4962
    %v4964 = vpop.f32.mrb[0].mxu0
    %4965 = vmatprep.mubr.f32.mxu0 0.0
    %4966 = vmatmul.mubr.f32.gmra.mrb[0].mxu0 %v2108
    %v4967 = vpop.f32.mrb[0].mxu0
    %v4968 = vadd.f32 0.0, %v4967
    %v4969 = vpop.f32.mrb[0].mxu0
    %4970 = vmatprep.mubr.f32.mxu0 0.0
    %4971 = vmatmul.mubr.f32.gmra.mrb[0].mxu0 %v2109
    %v4972 = vpop.f32.mrb[0].mxu0
    %v4973 = vadd.f32 0.0, %v4972
    %v4974 = vpop.f32.mrb[0].mxu0
    %4975 = vmatprep.mubr.f32.mxu0 0.0
    %4976 = vmatmul.mubr.f32.gmra.mrb[0].mxu0 %v2110
    %v4977 = vpop.f32.mrb[0].mxu0
    %v4978 = vadd.f32 0.0, %v4977
    %v4979 = vpop.f32.mrb[0].mxu0
    %4980 = vmatprep.mubr.f32.mxu0 0.0
    %4981 = vmatmul.mubr.f32.gmra.mrb[0].mxu0 %v2111
    %v4982 = vpop.f32.mrb[0].mxu0
    %v4983 = vadd.f32 0.0, %v4982
    %v4984 = vpop.f32.mrb[0].mxu0
    %4985 = vmatprep.mubr.f32.mxu0 0.0
    %4986 = vmatmul.mubr.f32.gmra.mrb[0].mxu0 %v2112
    %v4987 = vpop.f32.mrb[0].mxu0
    %v4988 = vadd.f32 0.0, %v4987
    %v4989 = vpop.f32.mrb[0].mxu0
    %4990 = vmatprep.mubr.f32.mxu0 0.0
    %4991 = vmatmul.mubr.f32.gmra.mrb[0].mxu0 %v2113
    %v4992 = vpop.f32.mrb[0].mxu0
    %v4993 = vadd.f32 0.0, %v4992
    %v4994 = vpop.f32.mrb[0].mxu0
    %4995 = vdwg.mxu0
    %s4996 = scalar_lea.vmem %s2, 640
    %v4997 = vld [vmem:[%s4996] sm:$0xff]
    %v4998 = vld [vmem:[%s4996 + $0x8] sm:$0xff]
    %v4999 = vld [vmem:[%s4996 + $0x10] sm:$0xff]
    %v5000 = vld [vmem:[%s4996 + $0x18] sm:$0xff]
    %v5001 = vld [vmem:[%s4996 + $0x20] sm:$0xff]
    %v5002 = vld [vmem:[%s4996 + $0x28] sm:$0xff]
    %v5003 = vld [vmem:[%s4996 + $0x30] sm:$0xff]
    %v5004 = vld [vmem:[%s4996 + $0x38] sm:$0xff]
    %v5005 = vld [vmem:[%s4996 + $0x40] sm:$0xff]
    %v5006 = vld [vmem:[%s4996 + $0x48] sm:$0xff]
    %v5007 = vld [vmem:[%s4996 + $0x50] sm:$0xff]
    %v5008 = vld [vmem:[%s4996 + $0x58] sm:$0xff]
    %v5009 = vld [vmem:[%s4996 + $0x60] sm:$0xff]
    %v5010 = vld [vmem:[%s4996 + $0x68] sm:$0xff]
    %v5011 = vld [vmem:[%s4996 + $0x70] sm:$0xff]
    %v5012 = vld [vmem:[%s4996 + $0x78] sm:$0xff]
    %v5013 = vld [vmem:[%s4 + $0xc] sm:$0x1]
    %v5014 = vlaneseq
    %v5015 = vshrl.u32 %v5014, 7
    %v5016 = vsub.s32 0, %v5015
    %v5017 = vrot.slane %v5013, %v5016
    %5018 = vmatprep.subr.mxu0 0.0
    %5019 = vmatpush1.msra.mxu0 %v4997
    %5020 = vmatprep.subr.mxu0 0.0
    %5021 = vmatpush1.msra.mxu0 %v4998
    %5022 = vmatprep.subr.mxu0 0.0
    %5023 = vmatpush1.msra.mxu0 %v4999
    %5024 = vmatprep.subr.mxu0 0.0
    %5025 = vmatpush1.msra.mxu0 %v5000
    %5026 = vmatprep.subr.mxu0 0.0
    %5027 = vmatpush1.msra.mxu0 %v5001
    %5028 = vmatprep.subr.mxu0 0.0
    %5029 = vmatpush1.msra.mxu0 %v5002
    %5030 = vmatprep.subr.mxu0 0.0
    %5031 = vmatpush1.msra.mxu0 %v5003
    %5032 = vmatprep.subr.mxu0 0.0
    %5033 = vmatpush1.msra.mxu0 %v5004
    %5034 = vmatprep.subr.mxu0 0.0
    %5035 = vmatpush1.msra.mxu0 %v5005
    %5036 = vmatprep.subr.mxu0 0.0
    %5037 = vmatpush1.msra.mxu0 %v5006
    %5038 = vmatprep.subr.mxu0 0.0
    %5039 = vmatpush1.msra.mxu0 %v5007
    %5040 = vmatprep.subr.mxu0 0.0
    %5041 = vmatpush1.msra.mxu0 %v5008
    %5042 = vmatprep.subr.mxu0 0.0
    %5043 = vmatpush1.msra.mxu0 %v5009
    %5044 = vmatprep.subr.mxu0 0.0
    %5045 = vmatpush1.msra.mxu0 %v5010
    %5046 = vmatprep.subr.mxu0 0.0
    %5047 = vmatpush1.msra.mxu0 %v5011
    %5048 = vmatprep.subr.mxu0 0.0
    %5049 = vmatpush1.msra.mxu0 %v5012
    %5050 = vmatprep.subr.mxu0 0.0
    %5051 = vmatpush1.msra.mxu0 0.0
    %5052 = vmatprep.subr.mxu0 0.0
    %5053 = vmatpush1.msra.mxu0 0.0
    %5054 = vmatprep.subr.mxu0 0.0
    %5055 = vmatpush1.msra.mxu0 0.0
    %5056 = vmatprep.subr.mxu0 0.0
    %5057 = vmatpush1.msra.mxu0 0.0
    %5058 = vmatprep.subr.mxu0 0.0
    %5059 = vmatpush1.msra.mxu0 0.0
    %5060 = vmatprep.subr.mxu0 0.0
    %5061 = vmatpush1.msra.mxu0 0.0
    %5062 = vmatprep.subr.mxu0 0.0
    %5063 = vmatpush1.msra.mxu0 0.0
    %5064 = vmatprep.subr.mxu0 0.0
    %5065 = vmatpush1.msra.mxu0 0.0
    %5066 = vmatprep.subr.mxu0 0.0
    %5067 = vmatpush1.msra.mxu0 0.0
    %5068 = vmatprep.subr.mxu0 0.0
    %5069 = vmatpush1.msra.mxu0 0.0
    %5070 = vmatprep.subr.mxu0 0.0
    %5071 = vmatpush1.msra.mxu0 0.0
    %5072 = vmatprep.subr.mxu0 0.0
    %5073 = vmatpush1.msra.mxu0 0.0
    %5074 = vmatprep.subr.mxu0 0.0
    %5075 = vmatpush1.msra.mxu0 0.0
    %5076 = vmatprep.subr.mxu0 0.0
    %5077 = vmatpush1.msra.mxu0 0.0
    %5078 = vmatprep.subr.mxu0 0.0
    %5079 = vmatpush1.msra.mxu0 0.0
    %5080 = vmatprep.subr.mxu0 0.0
    %5081 = vmatpush1.msra.mxu0 0.0
    %5082 = vmatprep.mubr.f32.mxu0 0.0
    %5083 = vmatmul.mubr.f32.gmra.mrb[0].mxu0 %v4918
    %v5084 = vpop.f32.mrb[0].mxu0
    %v5085 = vadd.f32 %v5017, %v5084
    %v5086 = vpop.f32.mrb[0].mxu0
    %5087 = vmatprep.mubr.f32.mxu0 0.0
    %5088 = vmatmul.mubr.f32.gmra.mrb[0].mxu0 %v4923
    %v5089 = vpop.f32.mrb[0].mxu0
    %v5090 = vadd.f32 %v5017, %v5089
    %v5091 = vpop.f32.mrb[0].mxu0
    %5092 = vmatprep.mubr.f32.mxu0 0.0
    %5093 = vmatmul.mubr.f32.gmra.mrb[0].mxu0 %v4928
    %v5094 = vpop.f32.mrb[0].mxu0
    %v5095 = vadd.f32 %v5017, %v5094
    %v5096 = vpop.f32.mrb[0].mxu0
    %5097 = vmatprep.mubr.f32.mxu0 0.0
    %5098 = vmatmul.mubr.f32.gmra.mrb[0].mxu0 %v4933
    %v5099 = vpop.f32.mrb[0].mxu0
    %v5100 = vadd.f32 %v5017, %v5099
    %v5101 = vpop.f32.mrb[0].mxu0
    %5102 = vmatprep.mubr.f32.mxu0 0.0
    %5103 = vmatmul.mubr.f32.gmra.mrb[0].mxu0 %v4938
    %v5104 = vpop.f32.mrb[0].mxu0
    %v5105 = vadd.f32 %v5017, %v5104
    %v5106 = vpop.f32.mrb[0].mxu0
    %5107 = vmatprep.mubr.f32.mxu0 0.0
    %5108 = vmatmul.mubr.f32.gmra.mrb[0].mxu0 %v4943
    %v5109 = vpop.f32.mrb[0].mxu0
    %v5110 = vadd.f32 %v5017, %v5109
    %v5111 = vpop.f32.mrb[0].mxu0
    %5112 = vmatprep.mubr.f32.mxu0 0.0
    %5113 = vmatmul.mubr.f32.gmra.mrb[0].mxu0 %v4948
    %v5114 = vpop.f32.mrb[0].mxu0
    %v5115 = vadd.f32 %v5017, %v5114
    %v5116 = vpop.f32.mrb[0].mxu0
    %5117 = vmatprep.mubr.f32.mxu0 0.0
    %5118 = vmatmul.mubr.f32.gmra.mrb[0].mxu0 %v4953
    %v5119 = vpop.f32.mrb[0].mxu0
    %v5120 = vadd.f32 %v5017, %v5119
    %v5121 = vpop.f32.mrb[0].mxu0
    %5122 = vmatprep.mubr.f32.mxu0 0.0
    %5123 = vmatmul.mubr.f32.gmra.mrb[0].mxu0 %v4958
    %v5124 = vpop.f32.mrb[0].mxu0
    %v5125 = vadd.f32 %v5017, %v5124
    %v5126 = vpop.f32.mrb[0].mxu0
    %5127 = vmatprep.mubr.f32.mxu0 0.0
    %5128 = vmatmul.mubr.f32.gmra.mrb[0].mxu0 %v4963
    %v5129 = vpop.f32.mrb[0].mxu0
    %v5130 = vadd.f32 %v5017, %v5129
    %v5131 = vpop.f32.mrb[0].mxu0
    %5132 = vmatprep.mubr.f32.mxu0 0.0
    %5133 = vmatmul.mubr.f32.gmra.mrb[0].mxu0 %v4968
    %v5134 = vpop.f32.mrb[0].mxu0
    %v5135 = vadd.f32 %v5017, %v5134
    %v5136 = vpop.f32.mrb[0].mxu0
    %5137 = vmatprep.mubr.f32.mxu0 0.0
    %5138 = vmatmul.mubr.f32.gmra.mrb[0].mxu0 %v4973
    %v5139 = vpop.f32.mrb[0].mxu0
    %v5140 = vadd.f32 %v5017, %v5139
    %v5141 = vpop.f32.mrb[0].mxu0
    %5142 = vmatprep.mubr.f32.mxu0 0.0
    %5143 = vmatmul.mubr.f32.gmra.mrb[0].mxu0 %v4978
    %v5144 = vpop.f32.mrb[0].mxu0
    %v5145 = vadd.f32 %v5017, %v5144
    %v5146 = vpop.f32.mrb[0].mxu0
    %5147 = vmatprep.mubr.f32.mxu0 0.0
    %5148 = vmatmul.mubr.f32.gmra.mrb[0].mxu0 %v4983
    %v5149 = vpop.f32.mrb[0].mxu0
    %v5150 = vadd.f32 %v5017, %v5149
    %v5151 = vpop.f32.mrb[0].mxu0
    %5152 = vmatprep.mubr.f32.mxu0 0.0
    %5153 = vmatmul.mubr.f32.gmra.mrb[0].mxu0 %v4988
    %v5154 = vpop.f32.mrb[0].mxu0
    %v5155 = vadd.f32 %v5017, %v5154
    %v5156 = vpop.f32.mrb[0].mxu0
    %5157 = vmatprep.mubr.f32.mxu0 0.0
    %5158 = vmatmul.mubr.f32.gmra.mrb[0].mxu0 %v4993
    %v5159 = vpop.f32.mrb[0].mxu0
    %v5160 = vadd.f32 %v5017, %v5159
    %v5161 = vpop.f32.mrb[0].mxu0
    %5162 = vdwg.mxu0
    %v5163 = vmax.f32 %v5085, 0.0
    %v5164 = vmax.f32 %v5090, 0.0
    %v5165 = vmax.f32 %v5095, 0.0
    %v5166 = vmax.f32 %v5100, 0.0
    %v5167 = vmax.f32 %v5105, 0.0
    %v5168 = vmax.f32 %v5110, 0.0
    %v5169 = vmax.f32 %v5115, 0.0
    %v5170 = vmax.f32 %v5120, 0.0
    %v5171 = vmax.f32 %v5125, 0.0
    %v5172 = vmax.f32 %v5130, 0.0
    %v5173 = vmax.f32 %v5135, 0.0
    %v5174 = vmax.f32 %v5140, 0.0
    %v5175 = vmax.f32 %v5145, 0.0
    %v5176 = vmax.f32 %v5150, 0.0
    %v5177 = vmax.f32 %v5155, 0.0
    %v5178 = vmax.f32 %v5160, 0.0
    %s5179 = scalar_lea.vmem %s2, 768
    %v5180 = vld [vmem:[%s5179] sm:$0xff]
    %v5181 = vld [vmem:[%s5179 + $0x8] sm:$0xff]
    %v5182 = vld [vmem:[%s5179 + $0x10] sm:$0xff]
    %v5183 = vld [vmem:[%s5179 + $0x18] sm:$0xff]
    %v5184 = vld [vmem:[%s5179 + $0x20] sm:$0xff]
    %v5185 = vld [vmem:[%s5179 + $0x28] sm:$0xff]
    %v5186 = vld [vmem:[%s5179 + $0x30] sm:$0xff]
    %v5187 = vld [vmem:[%s5179 + $0x38] sm:$0xff]
    %v5188 = vld [vmem:[%s5179 + $0x40] sm:$0xff]
    %v5189 = vld [vmem:[%s5179 + $0x48] sm:$0xff]
    %v5190 = vld [vmem:[%s5179 + $0x50] sm:$0xff]
    %v5191 = vld [vmem:[%s5179 + $0x58] sm:$0xff]
    %v5192 = vld [vmem:[%s5179 + $0x60] sm:$0xff]
    %v5193 = vld [vmem:[%s5179 + $0x68] sm:$0xff]
    %v5194 = vld [vmem:[%s5179 + $0x70] sm:$0xff]
    %v5195 = vld [vmem:[%s5179 + $0x78] sm:$0xff]
    %v5196 = vld [vmem:[%s4 + $0xd] sm:$0x1]
    %v5197 = vlaneseq
    %v5198 = vshrl.u32 %v5197, 7
    %v5199 = vsub.s32 0, %v5198
    %v5200 = vrot.slane %v5196, %v5199
    %5201 = vmatprep.subr.mxu0 0.0
    %5202 = vmatpush1.msra.mxu0 %v5180
    %5203 = vmatprep.subr.mxu0 0.0
    %5204 = vmatpush1.msra.mxu0 %v5181
    %5205 = vmatprep.subr.mxu0 0.0
    %5206 = vmatpush1.msra.mxu0 %v5182
    %5207 = vmatprep.subr.mxu0 0.0
    %5208 = vmatpush1.msra.mxu0 %v5183
    %5209 = vmatprep.subr.mxu0 0.0
    %5210 = vmatpush1.msra.mxu0 %v5184
    %5211 = vmatprep.subr.mxu0 0.0
    %5212 = vmatpush1.msra.mxu0 %v5185
    %5213 = vmatprep.subr.mxu0 0.0
    %5214 = vmatpush1.msra.mxu0 %v5186
    %5215 = vmatprep.subr.mxu0 0.0
    %5216 = vmatpush1.msra.mxu0 %v5187
    %5217 = vmatprep.subr.mxu0 0.0
    %5218 = vmatpush1.msra.mxu0 %v5188
    %5219 = vmatprep.subr.mxu0 0.0
    %5220 = vmatpush1.msra.mxu0 %v5189
    %5221 = vmatprep.subr.mxu0 0.0
    %5222 = vmatpush1.msra.mxu0 %v5190
    %5223 = vmatprep.subr.mxu0 0.0
    %5224 = vmatpush1.msra.mxu0 %v5191
    %5225 = vmatprep.subr.mxu0 0.0
    %5226 = vmatpush1.msra.mxu0 %v5192
    %5227 = vmatprep.subr.mxu0 0.0
    %5228 = vmatpush1.msra.mxu0 %v5193
    %5229 = vmatprep.subr.mxu0 0.0
    %5230 = vmatpush1.msra.mxu0 %v5194
    %5231 = vmatprep.subr.mxu0 0.0
    %5232 = vmatpush1.msra.mxu0 %v5195
    %5233 = vmatprep.subr.mxu0 0.0
    %5234 = vmatpush1.msra.mxu0 0.0
    %5235 = vmatprep.subr.mxu0 0.0
    %5236 = vmatpush1.msra.mxu0 0.0
    %5237 = vmatprep.subr.mxu0 0.0
    %5238 = vmatpush1.msra.mxu0 0.0
    %5239 = vmatprep.subr.mxu0 0.0
    %5240 = vmatpush1.msra.mxu0 0.0
    %5241 = vmatprep.subr.mxu0 0.0
    %5242 = vmatpush1.msra.mxu0 0.0
    %5243 = vmatprep.subr.mxu0 0.0
    %5244 = vmatpush1.msra.mxu0 0.0
    %5245 = vmatprep.subr.mxu0 0.0
    %5246 = vmatpush1.msra.mxu0 0.0
    %5247 = vmatprep.subr.mxu0 0.0
    %5248 = vmatpush1.msra.mxu0 0.0
    %5249 = vmatprep.subr.mxu0 0.0
    %5250 = vmatpush1.msra.mxu0 0.0
    %5251 = vmatprep.subr.mxu0 0.0
    %5252 = vmatpush1.msra.mxu0 0.0
    %5253 = vmatprep.subr.mxu0 0.0
    %5254 = vmatpush1.msra.mxu0 0.0
    %5255 = vmatprep.subr.mxu0 0.0
    %5256 = vmatpush1.msra.mxu0 0.0
    %5257 = vmatprep.subr.mxu0 0.0
    %5258 = vmatpush1.msra.mxu0 0.0
    %5259 = vmatprep.subr.mxu0 0.0
    %5260 = vmatpush1.msra.mxu0 0.0
    %5261 = vmatprep.subr.mxu0 0.0
    %5262 = vmatpush1.msra.mxu0 0.0
    %5263 = vmatprep.subr.mxu0 0.0
    %5264 = vmatpush1.msra.mxu0 0.0
    %5265 = vmatprep.mubr.f32.mxu0 0.0
    %5266 = vmatmul.mubr.f32.gmra.mrb[0].mxu0 %v5163
    %v5267 = vpop.f32.mrb[0].mxu0
    %v5268 = vadd.f32 %v5200, %v5267
    %v5269 = vpop.f32.mrb[0].mxu0
    %5270 = vmatprep.mubr.f32.mxu0 0.0
    %5271 = vmatmul.mubr.f32.gmra.mrb[0].mxu0 %v5164
    %v5272 = vpop.f32.mrb[0].mxu0
    %v5273 = vadd.f32 %v5200, %v5272
    %v5274 = vpop.f32.mrb[0].mxu0
    %5275 = vmatprep.mubr.f32.mxu0 0.0
    %5276 = vmatmul.mubr.f32.gmra.mrb[0].mxu0 %v5165
    %v5277 = vpop.f32.mrb[0].mxu0
    %v5278 = vadd.f32 %v5200, %v5277
    %v5279 = vpop.f32.mrb[0].mxu0
    %5280 = vmatprep.mubr.f32.mxu0 0.0
    %5281 = vmatmul.mubr.f32.gmra.mrb[0].mxu0 %v5166
    %v5282 = vpop.f32.mrb[0].mxu0
    %v5283 = vadd.f32 %v5200, %v5282
    %v5284 = vpop.f32.mrb[0].mxu0
    %5285 = vmatprep.mubr.f32.mxu0 0.0
    %5286 = vmatmul.mubr.f32.gmra.mrb[0].mxu0 %v5167
    %v5287 = vpop.f32.mrb[0].mxu0
    %v5288 = vadd.f32 %v5200, %v5287
    %v5289 = vpop.f32.mrb[0].mxu0
    %5290 = vmatprep.mubr.f32.mxu0 0.0
    %5291 = vmatmul.mubr.f32.gmra.mrb[0].mxu0 %v5168
    %v5292 = vpop.f32.mrb[0].mxu0
    %v5293 = vadd.f32 %v5200, %v5292
    %v5294 = vpop.f32.mrb[0].mxu0
    %5295 = vmatprep.mubr.f32.mxu0 0.0
    %5296 = vmatmul.mubr.f32.gmra.mrb[0].mxu0 %v5169
    %v5297 = vpop.f32.mrb[0].mxu0
    %v5298 = vadd.f32 %v5200, %v5297
    %v5299 = vpop.f32.mrb[0].mxu0
    %5300 = vmatprep.mubr.f32.mxu0 0.0
    %5301 = vmatmul.mubr.f32.gmra.mrb[0].mxu0 %v5170
    %v5302 = vpop.f32.mrb[0].mxu0
    %v5303 = vadd.f32 %v5200, %v5302
    %v5304 = vpop.f32.mrb[0].mxu0
    %5305 = vmatprep.mubr.f32.mxu0 0.0
    %5306 = vmatmul.mubr.f32.gmra.mrb[0].mxu0 %v5171
    %v5307 = vpop.f32.mrb[0].mxu0
    %v5308 = vadd.f32 %v5200, %v5307
    %v5309 = vpop.f32.mrb[0].mxu0
    %5310 = vmatprep.mubr.f32.mxu0 0.0
    %5311 = vmatmul.mubr.f32.gmra.mrb[0].mxu0 %v5172
    %v5312 = vpop.f32.mrb[0].mxu0
    %v5313 = vadd.f32 %v5200, %v5312
    %v5314 = vpop.f32.mrb[0].mxu0
    %5315 = vmatprep.mubr.f32.mxu0 0.0
    %5316 = vmatmul.mubr.f32.gmra.mrb[0].mxu0 %v5173
    %v5317 = vpop.f32.mrb[0].mxu0
    %v5318 = vadd.f32 %v5200, %v5317
    %v5319 = vpop.f32.mrb[0].mxu0
    %5320 = vmatprep.mubr.f32.mxu0 0.0
    %5321 = vmatmul.mubr.f32.gmra.mrb[0].mxu0 %v5174
    %v5322 = vpop.f32.mrb[0].mxu0
    %v5323 = vadd.f32 %v5200, %v5322
    %v5324 = vpop.f32.mrb[0].mxu0
    %5325 = vmatprep.mubr.f32.mxu0 0.0
    %5326 = vmatmul.mubr.f32.gmra.mrb[0].mxu0 %v5175
    %v5327 = vpop.f32.mrb[0].mxu0
    %v5328 = vadd.f32 %v5200, %v5327
    %v5329 = vpop.f32.mrb[0].mxu0
    %5330 = vmatprep.mubr.f32.mxu0 0.0
    %5331 = vmatmul.mubr.f32.gmra.mrb[0].mxu0 %v5176
    %v5332 = vpop.f32.mrb[0].mxu0
    %v5333 = vadd.f32 %v5200, %v5332
    %v5334 = vpop.f32.mrb[0].mxu0
    %5335 = vmatprep.mubr.f32.mxu0 0.0
    %5336 = vmatmul.mubr.f32.gmra.mrb[0].mxu0 %v5177
    %v5337 = vpop.f32.mrb[0].mxu0
    %v5338 = vadd.f32 %v5200, %v5337
    %v5339 = vpop.f32.mrb[0].mxu0
    %5340 = vmatprep.mubr.f32.mxu0 0.0
    %5341 = vmatmul.mubr.f32.gmra.mrb[0].mxu0 %v5178
    %v5342 = vpop.f32.mrb[0].mxu0
    %v5343 = vadd.f32 %v5200, %v5342
    %v5344 = vpop.f32.mrb[0].mxu0
    %5345 = vdwg.mxu0
    %v5346 = vxor.u32 %v5268, 2147483648
    %v5347 = vxor.u32 %v5273, 2147483648
    %v5348 = vxor.u32 %v5278, 2147483648
    %v5349 = vxor.u32 %v5283, 2147483648
    %v5350 = vxor.u32 %v5288, 2147483648
    %v5351 = vxor.u32 %v5293, 2147483648
    %v5352 = vxor.u32 %v5298, 2147483648
    %v5353 = vxor.u32 %v5303, 2147483648
    %v5354 = vxor.u32 %v5308, 2147483648
    %v5355 = vxor.u32 %v5313, 2147483648
    %v5356 = vxor.u32 %v5318, 2147483648
    %v5357 = vxor.u32 %v5323, 2147483648
    %v5358 = vxor.u32 %v5328, 2147483648
    %v5359 = vxor.u32 %v5333, 2147483648
    %v5360 = vxor.u32 %v5338, 2147483648
    %v5361 = vxor.u32 %v5343, 2147483648
    %v5362 = vmul.f32 %v5346, 1.442695
    %v5363 = vpow.pop %v5362
    %v5364 = vmul.f32 %v5347, 1.442695
    %v5365 = vpow.pop %v5364
    %v5366 = vmul.f32 %v5348, 1.442695
    %v5367 = vpow.pop %v5366
    %v5368 = vmul.f32 %v5349, 1.442695
    %v5369 = vpow.pop %v5368
    %v5370 = vmul.f32 %v5350, 1.442695
    %v5371 = vpow.pop %v5370
    %v5372 = vmul.f32 %v5351, 1.442695
    %v5373 = vpow.pop %v5372
    %v5374 = vmul.f32 %v5352, 1.442695
    %v5375 = vpow.pop %v5374
    %v5376 = vmul.f32 %v5353, 1.442695
    %v5377 = vpow.pop %v5376
    %v5378 = vmul.f32 %v5354, 1.442695
    %v5379 = vpow.pop %v5378
    %v5380 = vmul.f32 %v5355, 1.442695
    %v5381 = vpow.pop %v5380
    %v5382 = vmul.f32 %v5356, 1.442695
    %v5383 = vpow.pop %v5382
    %v5384 = vmul.f32 %v5357, 1.442695
    %v5385 = vpow.pop %v5384
    %v5386 = vmul.f32 %v5358, 1.442695
    %v5387 = vpow.pop %v5386
    %v5388 = vmul.f32 %v5359, 1.442695
    %v5389 = vpow.pop %v5388
    %v5390 = vmul.f32 %v5360, 1.442695
    %v5391 = vpow.pop %v5390
    %v5392 = vmul.f32 %v5361, 1.442695
    %v5393 = vpow.pop %v5392
    %v5394 = vadd.f32 %v5363, 1.0
    %v5395 = vadd.f32 %v5365, 1.0
    %v5396 = vadd.f32 %v5367, 1.0
    %v5397 = vadd.f32 %v5369, 1.0
    %v5398 = vadd.f32 %v5371, 1.0
    %v5399 = vadd.f32 %v5373, 1.0
    %v5400 = vadd.f32 %v5375, 1.0
    %v5401 = vadd.f32 %v5377, 1.0
    %v5402 = vadd.f32 %v5379, 1.0
    %v5403 = vadd.f32 %v5381, 1.0
    %v5404 = vadd.f32 %v5383, 1.0
    %v5405 = vadd.f32 %v5385, 1.0
    %v5406 = vadd.f32 %v5387, 1.0
    %v5407 = vadd.f32 %v5389, 1.0
    %v5408 = vadd.f32 %v5391, 1.0
    %v5409 = vadd.f32 %v5393, 1.0
    %v5410 = vrcp.pop %v5394
    %v5411 = vmul.f32 1.0, %v5410
    %v5412 = vrcp.pop %v5395
    %v5413 = vmul.f32 1.0, %v5412
    %v5414 = vrcp.pop %v5396
    %v5415 = vmul.f32 1.0, %v5414
    %v5416 = vrcp.pop %v5397
    %v5417 = vmul.f32 1.0, %v5416
    %v5418 = vrcp.pop %v5398
    %v5419 = vmul.f32 1.0, %v5418
    %v5420 = vrcp.pop %v5399
    %v5421 = vmul.f32 1.0, %v5420
    %v5422 = vrcp.pop %v5400
    %v5423 = vmul.f32 1.0, %v5422
    %v5424 = vrcp.pop %v5401
    %v5425 = vmul.f32 1.0, %v5424
    %v5426 = vrcp.pop %v5402
    %v5427 = vmul.f32 1.0, %v5426
    %v5428 = vrcp.pop %v5403
    %v5429 = vmul.f32 1.0, %v5428
    %v5430 = vrcp.pop %v5404
    %v5431 = vmul.f32 1.0, %v5430
    %v5432 = vrcp.pop %v5405
    %v5433 = vmul.f32 1.0, %v5432
    %v5434 = vrcp.pop %v5406
    %v5435 = vmul.f32 1.0, %v5434
    %v5436 = vrcp.pop %v5407
    %v5437 = vmul.f32 1.0, %v5436
    %v5438 = vrcp.pop %v5408
    %v5439 = vmul.f32 1.0, %v5438
    %v5440 = vrcp.pop %v5409
    %v5441 = vmul.f32 1.0, %v5440
    %v5442 = vmul.f32 %v4835, %v5411
    %v5443 = vmul.f32 %v4836, %v5413
    %v5444 = vmul.f32 %v4837, %v5415
    %v5445 = vmul.f32 %v4838, %v5417
    %v5446 = vmul.f32 %v4839, %v5419
    %v5447 = vmul.f32 %v4840, %v5421
    %v5448 = vmul.f32 %v4841, %v5423
    %v5449 = vmul.f32 %v4842, %v5425
    %v5450 = vmul.f32 %v4843, %v5427
    %v5451 = vmul.f32 %v4844, %v5429
    %v5452 = vmul.f32 %v4845, %v5431
    %v5453 = vmul.f32 %v4846, %v5433
    %v5454 = vmul.f32 %v4847, %v5435
    %v5455 = vmul.f32 %v4848, %v5437
    %v5456 = vmul.f32 %v4849, %v5439
    %v5457 = vmul.f32 %v4850, %v5441
    %s5458 = scalar_lea.vmem %s2, 896
    %v5459 = vld [vmem:[%s5458] sm:$0xff]
    %v5460 = vld [vmem:[%s5458 + $0x8] sm:$0xff]
    %v5461 = vld [vmem:[%s5458 + $0x10] sm:$0xff]
    %v5462 = vld [vmem:[%s5458 + $0x18] sm:$0xff]
    %v5463 = vld [vmem:[%s5458 + $0x20] sm:$0xff]
    %v5464 = vld [vmem:[%s5458 + $0x28] sm:$0xff]
    %v5465 = vld [vmem:[%s5458 + $0x30] sm:$0xff]
    %v5466 = vld [vmem:[%s5458 + $0x38] sm:$0xff]
    %v5467 = vld [vmem:[%s5458 + $0x40] sm:$0xff]
    %v5468 = vld [vmem:[%s5458 + $0x48] sm:$0xff]
    %v5469 = vld [vmem:[%s5458 + $0x50] sm:$0xff]
    %v5470 = vld [vmem:[%s5458 + $0x58] sm:$0xff]
    %v5471 = vld [vmem:[%s5458 + $0x60] sm:$0xff]
    %v5472 = vld [vmem:[%s5458 + $0x68] sm:$0xff]
    %v5473 = vld [vmem:[%s5458 + $0x70] sm:$0xff]
    %v5474 = vld [vmem:[%s5458 + $0x78] sm:$0xff]
    %5475 = vmatprep.subr.mxu0 0.0
    %5476 = vmatpush1.msra.mxu0 %v5459
    %5477 = vmatprep.subr.mxu0 0.0
    %5478 = vmatpush1.msra.mxu0 %v5460
    %5479 = vmatprep.subr.mxu0 0.0
    %5480 = vmatpush1.msra.mxu0 %v5461
    %5481 = vmatprep.subr.mxu0 0.0
    %5482 = vmatpush1.msra.mxu0 %v5462
    %5483 = vmatprep.subr.mxu0 0.0
    %5484 = vmatpush1.msra.mxu0 %v5463
    %5485 = vmatprep.subr.mxu0 0.0
    %5486 = vmatpush1.msra.mxu0 %v5464
    %5487 = vmatprep.subr.mxu0 0.0
    %5488 = vmatpush1.msra.mxu0 %v5465
    %5489 = vmatprep.subr.mxu0 0.0
    %5490 = vmatpush1.msra.mxu0 %v5466
    %5491 = vmatprep.subr.mxu0 0.0
    %5492 = vmatpush1.msra.mxu0 %v5467
    %5493 = vmatprep.subr.mxu0 0.0
    %5494 = vmatpush1.msra.mxu0 %v5468
    %5495 = vmatprep.subr.mxu0 0.0
    %5496 = vmatpush1.msra.mxu0 %v5469
    %5497 = vmatprep.subr.mxu0 0.0
    %5498 = vmatpush1.msra.mxu0 %v5470
    %5499 = vmatprep.subr.mxu0 0.0
    %5500 = vmatpush1.msra.mxu0 %v5471
    %5501 = vmatprep.subr.mxu0 0.0
    %5502 = vmatpush1.msra.mxu0 %v5472
    %5503 = vmatprep.subr.mxu0 0.0
    %5504 = vmatpush1.msra.mxu0 %v5473
    %5505 = vmatprep.subr.mxu0 0.0
    %5506 = vmatpush1.msra.mxu0 %v5474
    %5507 = vmatprep.subr.mxu0 0.0
    %5508 = vmatpush1.msra.mxu0 0.0
    %5509 = vmatprep.subr.mxu0 0.0
    %5510 = vmatpush1.msra.mxu0 0.0
    %5511 = vmatprep.subr.mxu0 0.0
    %5512 = vmatpush1.msra.mxu0 0.0
    %5513 = vmatprep.subr.mxu0 0.0
    %5514 = vmatpush1.msra.mxu0 0.0
    %5515 = vmatprep.subr.mxu0 0.0
    %5516 = vmatpush1.msra.mxu0 0.0
    %5517 = vmatprep.subr.mxu0 0.0
    %5518 = vmatpush1.msra.mxu0 0.0
    %5519 = vmatprep.subr.mxu0 0.0
    %5520 = vmatpush1.msra.mxu0 0.0
    %5521 = vmatprep.subr.mxu0 0.0
    %5522 = vmatpush1.msra.mxu0 0.0
    %5523 = vmatprep.subr.mxu0 0.0
    %5524 = vmatpush1.msra.mxu0 0.0
    %5525 = vmatprep.subr.mxu0 0.0
    %5526 = vmatpush1.msra.mxu0 0.0
    %5527 = vmatprep.subr.mxu0 0.0
    %5528 = vmatpush1.msra.mxu0 0.0
    %5529 = vmatprep.subr.mxu0 0.0
    %5530 = vmatpush1.msra.mxu0 0.0
    %5531 = vmatprep.subr.mxu0 0.0
    %5532 = vmatpush1.msra.mxu0 0.0
    %5533 = vmatprep.subr.mxu0 0.0
    %5534 = vmatpush1.msra.mxu0 0.0
    %5535 = vmatprep.subr.mxu0 0.0
    %5536 = vmatpush1.msra.mxu0 0.0
    %5537 = vmatprep.subr.mxu0 0.0
    %5538 = vmatpush1.msra.mxu0 0.0
    %5539 = vmatprep.mubr.f32.mxu0 0.0
    %5540 = vmatmul.mubr.f32.gmra.mrb[0].mxu0 %v5442
    %v5541 = vpop.f32.mrb[0].mxu0
    %v5542 = vadd.f32 0.0, %v5541
    %v5543 = vpop.f32.mrb[0].mxu0
    %5544 = vmatprep.mubr.f32.mxu0 0.0
    %5545 = vmatmul.mubr.f32.gmra.mrb[0].mxu0 %v5443
    %v5546 = vpop.f32.mrb[0].mxu0
    %v5547 = vadd.f32 0.0, %v5546
    %v5548 = vpop.f32.mrb[0].mxu0
    %5549 = vmatprep.mubr.f32.mxu0 0.0
    %5550 = vmatmul.mubr.f32.gmra.mrb[0].mxu0 %v5444
    %v5551 = vpop.f32.mrb[0].mxu0
    %v5552 = vadd.f32 0.0, %v5551
    %v5553 = vpop.f32.mrb[0].mxu0
    %5554 = vmatprep.mubr.f32.mxu0 0.0
    %5555 = vmatmul.mubr.f32.gmra.mrb[0].mxu0 %v5445
    %v5556 = vpop.f32.mrb[0].mxu0
    %v5557 = vadd.f32 0.0, %v5556
    %v5558 = vpop.f32.mrb[0].mxu0
    %5559 = vmatprep.mubr.f32.mxu0 0.0
    %5560 = vmatmul.mubr.f32.gmra.mrb[0].mxu0 %v5446
    %v5561 = vpop.f32.mrb[0].mxu0
    %v5562 = vadd.f32 0.0, %v5561
    %v5563 = vpop.f32.mrb[0].mxu0
    %5564 = vmatprep.mubr.f32.mxu0 0.0
    %5565 = vmatmul.mubr.f32.gmra.mrb[0].mxu0 %v5447
    %v5566 = vpop.f32.mrb[0].mxu0
    %v5567 = vadd.f32 0.0, %v5566
    %v5568 = vpop.f32.mrb[0].mxu0
    %5569 = vmatprep.mubr.f32.mxu0 0.0
    %5570 = vmatmul.mubr.f32.gmra.mrb[0].mxu0 %v5448
    %v5571 = vpop.f32.mrb[0].mxu0
    %v5572 = vadd.f32 0.0, %v5571
    %v5573 = vpop.f32.mrb[0].mxu0
    %5574 = vmatprep.mubr.f32.mxu0 0.0
    %5575 = vmatmul.mubr.f32.gmra.mrb[0].mxu0 %v5449
    %v5576 = vpop.f32.mrb[0].mxu0
    %v5577 = vadd.f32 0.0, %v5576
    %v5578 = vpop.f32.mrb[0].mxu0
    %5579 = vmatprep.mubr.f32.mxu0 0.0
    %5580 = vmatmul.mubr.f32.gmra.mrb[0].mxu0 %v5450
    %v5581 = vpop.f32.mrb[0].mxu0
    %v5582 = vadd.f32 0.0, %v5581
    %v5583 = vpop.f32.mrb[0].mxu0
    %5584 = vmatprep.mubr.f32.mxu0 0.0
    %5585 = vmatmul.mubr.f32.gmra.mrb[0].mxu0 %v5451
    %v5586 = vpop.f32.mrb[0].mxu0
    %v5587 = vadd.f32 0.0, %v5586
    %v5588 = vpop.f32.mrb[0].mxu0
    %5589 = vmatprep.mubr.f32.mxu0 0.0
    %5590 = vmatmul.mubr.f32.gmra.mrb[0].mxu0 %v5452
    %v5591 = vpop.f32.mrb[0].mxu0
    %v5592 = vadd.f32 0.0, %v5591
    %v5593 = vpop.f32.mrb[0].mxu0
    %5594 = vmatprep.mubr.f32.mxu0 0.0
    %5595 = vmatmul.mubr.f32.gmra.mrb[0].mxu0 %v5453
    %v5596 = vpop.f32.mrb[0].mxu0
    %v5597 = vadd.f32 0.0, %v5596
    %v5598 = vpop.f32.mrb[0].mxu0
    %5599 = vmatprep.mubr.f32.mxu0 0.0
    %5600 = vmatmul.mubr.f32.gmra.mrb[0].mxu0 %v5454
    %v5601 = vpop.f32.mrb[0].mxu0
    %v5602 = vadd.f32 0.0, %v5601
    %v5603 = vpop.f32.mrb[0].mxu0
    %5604 = vmatprep.mubr.f32.mxu0 0.0
    %5605 = vmatmul.mubr.f32.gmra.mrb[0].mxu0 %v5455
    %v5606 = vpop.f32.mrb[0].mxu0
    %v5607 = vadd.f32 0.0, %v5606
    %v5608 = vpop.f32.mrb[0].mxu0
    %5609 = vmatprep.mubr.f32.mxu0 0.0
    %5610 = vmatmul.mubr.f32.gmra.mrb[0].mxu0 %v5456
    %v5611 = vpop.f32.mrb[0].mxu0
    %v5612 = vadd.f32 0.0, %v5611
    %v5613 = vpop.f32.mrb[0].mxu0
    %5614 = vmatprep.mubr.f32.mxu0 0.0
    %5615 = vmatmul.mubr.f32.gmra.mrb[0].mxu0 %v5457
    %v5616 = vpop.f32.mrb[0].mxu0
    %v5617 = vadd.f32 0.0, %v5616
    %v5618 = vpop.f32.mrb[0].mxu0
    %5619 = vdwg.mxu0
    %v5620 = vld [vmem:[%s4 + $0xe] sm:$0x1]
    %v5621 = vlaneseq
    %v5622 = vshrl.u32 %v5621, 7
    %v5623 = vsub.s32 0, %v5622
    %v5624 = vrot.slane %v5620, %v5623
    %v5625 = vmul.f32 %v5542, %v5624
    %v5626 = vmul.f32 %v5547, %v5624
    %v5627 = vmul.f32 %v5552, %v5624
    %v5628 = vmul.f32 %v5557, %v5624
    %v5629 = vmul.f32 %v5562, %v5624
    %v5630 = vmul.f32 %v5567, %v5624
    %v5631 = vmul.f32 %v5572, %v5624
    %v5632 = vmul.f32 %v5577, %v5624
    %v5633 = vmul.f32 %v5582, %v5624
    %v5634 = vmul.f32 %v5587, %v5624
    %v5635 = vmul.f32 %v5592, %v5624
    %v5636 = vmul.f32 %v5597, %v5624
    %v5637 = vmul.f32 %v5602, %v5624
    %v5638 = vmul.f32 %v5607, %v5624
    %v5639 = vmul.f32 %v5612, %v5624
    %v5640 = vmul.f32 %v5617, %v5624
    %v5641 = vld [vmem:[%s4 + $0xf] sm:$0x1]
    %v5642 = vlaneseq
    %v5643 = vshrl.u32 %v5642, 7
    %v5644 = vsub.s32 0, %v5643
    %v5645 = vrot.slane %v5641, %v5644
    %v5646 = vadd.f32 %v5625, %v5645
    %v5647 = vadd.f32 %v5626, %v5645
    %v5648 = vadd.f32 %v5627, %v5645
    %v5649 = vadd.f32 %v5628, %v5645
    %v5650 = vadd.f32 %v5629, %v5645
    %v5651 = vadd.f32 %v5630, %v5645
    %v5652 = vadd.f32 %v5631, %v5645
    %v5653 = vadd.f32 %v5632, %v5645
    %v5654 = vadd.f32 %v5633, %v5645
    %v5655 = vadd.f32 %v5634, %v5645
    %v5656 = vadd.f32 %v5635, %v5645
    %v5657 = vadd.f32 %v5636, %v5645
    %v5658 = vadd.f32 %v5637, %v5645
    %v5659 = vadd.f32 %v5638, %v5645
    %v5660 = vadd.f32 %v5639, %v5645
    %v5661 = vadd.f32 %v5640, %v5645
    %s5662 = scalar_lea.vmem %s2, 1024
    %v5663 = vld [vmem:[%s5662] sm:$0xff]
    %v5664 = vld [vmem:[%s5662 + $0x8] sm:$0xff]
    %v5665 = vld [vmem:[%s5662 + $0x10] sm:$0xff]
    %v5666 = vld [vmem:[%s5662 + $0x18] sm:$0xff]
    %v5667 = vld [vmem:[%s5662 + $0x20] sm:$0xff]
    %v5668 = vld [vmem:[%s5662 + $0x28] sm:$0xff]
    %v5669 = vld [vmem:[%s5662 + $0x30] sm:$0xff]
    %v5670 = vld [vmem:[%s5662 + $0x38] sm:$0xff]
    %v5671 = vld [vmem:[%s5662 + $0x40] sm:$0xff]
    %v5672 = vld [vmem:[%s5662 + $0x48] sm:$0xff]
    %v5673 = vld [vmem:[%s5662 + $0x50] sm:$0xff]
    %v5674 = vld [vmem:[%s5662 + $0x58] sm:$0xff]
    %v5675 = vld [vmem:[%s5662 + $0x60] sm:$0xff]
    %v5676 = vld [vmem:[%s5662 + $0x68] sm:$0xff]
    %v5677 = vld [vmem:[%s5662 + $0x70] sm:$0xff]
    %v5678 = vld [vmem:[%s5662 + $0x78] sm:$0xff]
    %5679 = vmatprep.subr.mxu0 0.0
    %5680 = vmatpush1.msra.mxu0 %v5663
    %5681 = vmatprep.subr.mxu0 0.0
    %5682 = vmatpush1.msra.mxu0 %v5664
    %5683 = vmatprep.subr.mxu0 0.0
    %5684 = vmatpush1.msra.mxu0 %v5665
    %5685 = vmatprep.subr.mxu0 0.0
    %5686 = vmatpush1.msra.mxu0 %v5666
    %5687 = vmatprep.subr.mxu0 0.0
    %5688 = vmatpush1.msra.mxu0 %v5667
    %5689 = vmatprep.subr.mxu0 0.0
    %5690 = vmatpush1.msra.mxu0 %v5668
    %5691 = vmatprep.subr.mxu0 0.0
    %5692 = vmatpush1.msra.mxu0 %v5669
    %5693 = vmatprep.subr.mxu0 0.0
    %5694 = vmatpush1.msra.mxu0 %v5670
    %5695 = vmatprep.subr.mxu0 0.0
    %5696 = vmatpush1.msra.mxu0 %v5671
    %5697 = vmatprep.subr.mxu0 0.0
    %5698 = vmatpush1.msra.mxu0 %v5672
    %5699 = vmatprep.subr.mxu0 0.0
    %5700 = vmatpush1.msra.mxu0 %v5673
    %5701 = vmatprep.subr.mxu0 0.0
    %5702 = vmatpush1.msra.mxu0 %v5674
    %5703 = vmatprep.subr.mxu0 0.0
    %5704 = vmatpush1.msra.mxu0 %v5675
    %5705 = vmatprep.subr.mxu0 0.0
    %5706 = vmatpush1.msra.mxu0 %v5676
    %5707 = vmatprep.subr.mxu0 0.0
    %5708 = vmatpush1.msra.mxu0 %v5677
    %5709 = vmatprep.subr.mxu0 0.0
    %5710 = vmatpush1.msra.mxu0 %v5678
    %5711 = vmatprep.subr.mxu0 0.0
    %5712 = vmatpush1.msra.mxu0 0.0
    %5713 = vmatprep.subr.mxu0 0.0
    %5714 = vmatpush1.msra.mxu0 0.0
    %5715 = vmatprep.subr.mxu0 0.0
    %5716 = vmatpush1.msra.mxu0 0.0
    %5717 = vmatprep.subr.mxu0 0.0
    %5718 = vmatpush1.msra.mxu0 0.0
    %5719 = vmatprep.subr.mxu0 0.0
    %5720 = vmatpush1.msra.mxu0 0.0
    %5721 = vmatprep.subr.mxu0 0.0
    %5722 = vmatpush1.msra.mxu0 0.0
    %5723 = vmatprep.subr.mxu0 0.0
    %5724 = vmatpush1.msra.mxu0 0.0
    %5725 = vmatprep.subr.mxu0 0.0
    %5726 = vmatpush1.msra.mxu0 0.0
    %5727 = vmatprep.subr.mxu0 0.0
    %5728 = vmatpush1.msra.mxu0 0.0
    %5729 = vmatprep.subr.mxu0 0.0
    %5730 = vmatpush1.msra.mxu0 0.0
    %5731 = vmatprep.subr.mxu0 0.0
    %5732 = vmatpush1.msra.mxu0 0.0
    %5733 = vmatprep.subr.mxu0 0.0
    %5734 = vmatpush1.msra.mxu0 0.0
    %5735 = vmatprep.subr.mxu0 0.0
    %5736 = vmatpush1.msra.mxu0 0.0
    %5737 = vmatprep.subr.mxu0 0.0
    %5738 = vmatpush1.msra.mxu0 0.0
    %5739 = vmatprep.subr.mxu0 0.0
    %5740 = vmatpush1.msra.mxu0 0.0
    %5741 = vmatprep.subr.mxu0 0.0
    %5742 = vmatpush1.msra.mxu0 0.0
    %5743 = vmatprep.mubr.f32.mxu0 0.0
    %5744 = vmatmul.mubr.f32.gmra.mrb[0].mxu0 %v5646
    %v5745 = vpop.f32.mrb[0].mxu0
    %v5746 = vadd.f32 0.0, %v5745
    %v5747 = vpop.f32.mrb[0].mxu0
    %5748 = vmatprep.mubr.f32.mxu0 0.0
    %5749 = vmatmul.mubr.f32.gmra.mrb[0].mxu0 %v5647
    %v5750 = vpop.f32.mrb[0].mxu0
    %v5751 = vadd.f32 0.0, %v5750
    %v5752 = vpop.f32.mrb[0].mxu0
    %5753 = vmatprep.mubr.f32.mxu0 0.0
    %5754 = vmatmul.mubr.f32.gmra.mrb[0].mxu0 %v5648
    %v5755 = vpop.f32.mrb[0].mxu0
    %v5756 = vadd.f32 0.0, %v5755
    %v5757 = vpop.f32.mrb[0].mxu0
    %5758 = vmatprep.mubr.f32.mxu0 0.0
    %5759 = vmatmul.mubr.f32.gmra.mrb[0].mxu0 %v5649
    %v5760 = vpop.f32.mrb[0].mxu0
    %v5761 = vadd.f32 0.0, %v5760
    %v5762 = vpop.f32.mrb[0].mxu0
    %5763 = vmatprep.mubr.f32.mxu0 0.0
    %5764 = vmatmul.mubr.f32.gmra.mrb[0].mxu0 %v5650
    %v5765 = vpop.f32.mrb[0].mxu0
    %v5766 = vadd.f32 0.0, %v5765
    %v5767 = vpop.f32.mrb[0].mxu0
    %5768 = vmatprep.mubr.f32.mxu0 0.0
    %5769 = vmatmul.mubr.f32.gmra.mrb[0].mxu0 %v5651
    %v5770 = vpop.f32.mrb[0].mxu0
    %v5771 = vadd.f32 0.0, %v5770
    %v5772 = vpop.f32.mrb[0].mxu0
    %5773 = vmatprep.mubr.f32.mxu0 0.0
    %5774 = vmatmul.mubr.f32.gmra.mrb[0].mxu0 %v5652
    %v5775 = vpop.f32.mrb[0].mxu0
    %v5776 = vadd.f32 0.0, %v5775
    %v5777 = vpop.f32.mrb[0].mxu0
    %5778 = vmatprep.mubr.f32.mxu0 0.0
    %5779 = vmatmul.mubr.f32.gmra.mrb[0].mxu0 %v5653
    %v5780 = vpop.f32.mrb[0].mxu0
    %v5781 = vadd.f32 0.0, %v5780
    %v5782 = vpop.f32.mrb[0].mxu0
    %5783 = vmatprep.mubr.f32.mxu0 0.0
    %5784 = vmatmul.mubr.f32.gmra.mrb[0].mxu0 %v5654
    %v5785 = vpop.f32.mrb[0].mxu0
    %v5786 = vadd.f32 0.0, %v5785
    %v5787 = vpop.f32.mrb[0].mxu0
    %5788 = vmatprep.mubr.f32.mxu0 0.0
    %5789 = vmatmul.mubr.f32.gmra.mrb[0].mxu0 %v5655
    %v5790 = vpop.f32.mrb[0].mxu0
    %v5791 = vadd.f32 0.0, %v5790
    %v5792 = vpop.f32.mrb[0].mxu0
    %5793 = vmatprep.mubr.f32.mxu0 0.0
    %5794 = vmatmul.mubr.f32.gmra.mrb[0].mxu0 %v5656
    %v5795 = vpop.f32.mrb[0].mxu0
    %v5796 = vadd.f32 0.0, %v5795
    %v5797 = vpop.f32.mrb[0].mxu0
    %5798 = vmatprep.mubr.f32.mxu0 0.0
    %5799 = vmatmul.mubr.f32.gmra.mrb[0].mxu0 %v5657
    %v5800 = vpop.f32.mrb[0].mxu0
    %v5801 = vadd.f32 0.0, %v5800
    %v5802 = vpop.f32.mrb[0].mxu0
    %5803 = vmatprep.mubr.f32.mxu0 0.0
    %5804 = vmatmul.mubr.f32.gmra.mrb[0].mxu0 %v5658
    %v5805 = vpop.f32.mrb[0].mxu0
    %v5806 = vadd.f32 0.0, %v5805
    %v5807 = vpop.f32.mrb[0].mxu0
    %5808 = vmatprep.mubr.f32.mxu0 0.0
    %5809 = vmatmul.mubr.f32.gmra.mrb[0].mxu0 %v5659
    %v5810 = vpop.f32.mrb[0].mxu0
    %v5811 = vadd.f32 0.0, %v5810
    %v5812 = vpop.f32.mrb[0].mxu0
    %5813 = vmatprep.mubr.f32.mxu0 0.0
    %5814 = vmatmul.mubr.f32.gmra.mrb[0].mxu0 %v5660
    %v5815 = vpop.f32.mrb[0].mxu0
    %v5816 = vadd.f32 0.0, %v5815
    %v5817 = vpop.f32.mrb[0].mxu0
    %5818 = vmatprep.mubr.f32.mxu0 0.0
    %5819 = vmatmul.mubr.f32.gmra.mrb[0].mxu0 %v5661
    %v5820 = vpop.f32.mrb[0].mxu0
    %v5821 = vadd.f32 0.0, %v5820
    %v5822 = vpop.f32.mrb[0].mxu0
    %5823 = vdwg.mxu0
    %v5824 = vld [vmem:[%s4 + $0x10] sm:$0x1]
    %v5825 = vlaneseq
    %v5826 = vshrl.u32 %v5825, 7
    %v5827 = vsub.s32 0, %v5826
    %v5828 = vrot.slane %v5824, %v5827
    %v5829 = vmul.f32 %v5746, %v5828
    %v5830 = vmul.f32 %v5751, %v5828
    %v5831 = vmul.f32 %v5756, %v5828
    %v5832 = vmul.f32 %v5761, %v5828
    %v5833 = vmul.f32 %v5766, %v5828
    %v5834 = vmul.f32 %v5771, %v5828
    %v5835 = vmul.f32 %v5776, %v5828
    %v5836 = vmul.f32 %v5781, %v5828
    %v5837 = vmul.f32 %v5786, %v5828
    %v5838 = vmul.f32 %v5791, %v5828
    %v5839 = vmul.f32 %v5796, %v5828
    %v5840 = vmul.f32 %v5801, %v5828
    %v5841 = vmul.f32 %v5806, %v5828
    %v5842 = vmul.f32 %v5811, %v5828
    %v5843 = vmul.f32 %v5816, %v5828
    %v5844 = vmul.f32 %v5821, %v5828
    %v5845 = vld [vmem:[%s4 + $0x11] sm:$0x1]
    %v5846 = vlaneseq
    %v5847 = vshrl.u32 %v5846, 7
    %v5848 = vsub.s32 0, %v5847
    %v5849 = vrot.slane %v5845, %v5848
    %v5850 = vadd.f32 %v5829, %v5849
    %v5851 = vadd.f32 %v5830, %v5849
    %v5852 = vadd.f32 %v5831, %v5849
    %v5853 = vadd.f32 %v5832, %v5849
    %v5854 = vadd.f32 %v5833, %v5849
    %v5855 = vadd.f32 %v5834, %v5849
    %v5856 = vadd.f32 %v5835, %v5849
    %v5857 = vadd.f32 %v5836, %v5849
    %v5858 = vadd.f32 %v5837, %v5849
    %v5859 = vadd.f32 %v5838, %v5849
    %v5860 = vadd.f32 %v5839, %v5849
    %v5861 = vadd.f32 %v5840, %v5849
    %v5862 = vadd.f32 %v5841, %v5849
    %v5863 = vadd.f32 %v5842, %v5849
    %v5864 = vadd.f32 %v5843, %v5849
    %v5865 = vadd.f32 %v5844, %v5849
    %v5866 = vmax.f32 %v5850, 0.0
    %v5867 = vmax.f32 %v5851, 0.0
    %v5868 = vmax.f32 %v5852, 0.0
    %v5869 = vmax.f32 %v5853, 0.0
    %v5870 = vmax.f32 %v5854, 0.0
    %v5871 = vmax.f32 %v5855, 0.0
    %v5872 = vmax.f32 %v5856, 0.0
    %v5873 = vmax.f32 %v5857, 0.0
    %v5874 = vmax.f32 %v5858, 0.0
    %v5875 = vmax.f32 %v5859, 0.0
    %v5876 = vmax.f32 %v5860, 0.0
    %v5877 = vmax.f32 %v5861, 0.0
    %v5878 = vmax.f32 %v5862, 0.0
    %v5879 = vmax.f32 %v5863, 0.0
    %v5880 = vmax.f32 %v5864, 0.0
    %v5881 = vmax.f32 %v5865, 0.0
    %5882 = vst [vmem:[#allocation2] sm:$0xff] %v5866
    %5883 = vst [vmem:[#allocation2 + $0x8] sm:$0xff] %v5867
    %5884 = vst [vmem:[#allocation2 + $0x10] sm:$0xff] %v5868
    %5885 = vst [vmem:[#allocation2 + $0x18] sm:$0xff] %v5869
    %5886 = vst [vmem:[#allocation2 + $0x20] sm:$0xff] %v5870
    %5887 = vst [vmem:[#allocation2 + $0x28] sm:$0xff] %v5871
    %5888 = vst [vmem:[#allocation2 + $0x30] sm:$0xff] %v5872
    %5889 = vst [vmem:[#allocation2 + $0x38] sm:$0xff] %v5873
    %5890 = vst [vmem:[#allocation2 + $0x40] sm:$0xff] %v5874
    %5891 = vst [vmem:[#allocation2 + $0x48] sm:$0xff] %v5875
    %5892 = vst [vmem:[#allocation2 + $0x50] sm:$0xff] %v5876
    %5893 = vst [vmem:[#allocation2 + $0x58] sm:$0xff] %v5877
    %5894 = vst [vmem:[#allocation2 + $0x60] sm:$0xff] %v5878
    %5895 = vst [vmem:[#allocation2 + $0x68] sm:$0xff] %v5879
    %5896 = vst [vmem:[#allocation2 + $0x70] sm:$0xff] %v5880
    %5897 = vst [vmem:[#allocation2 + $0x78] sm:$0xff] %v5881
    // Predicated region
    $region22: #{efficientnet_forward.1} parent=1 // pred_check
      _
    $region23: #{efficientnet_forward.1} parent=1 // pred_check_branch
      %5899 = sbr.rel (0) target = $region25
    $region24: #{efficientnet_forward.1} parent=1 // pred_region
      %s5901 = ssub.s32 2048, 2048
      %5902 = vsyncadd [#allocation3], %s5901
      %s5903 = sshll.u32 [#allocation2], 4
      %s5904 = int_to_ptr.vmem [resolvable:$true] %s5903
      %5909 = dma.vmem_to_hbm [thread:$0]  %s5904, 2048, %s5, [#allocation3], 128, 128, 8
    $region25: #{efficientnet_forward.1} parent=1 // pred_fallthru
      _
    // Predicated region
    $region26: #{efficientnet_forward.1} parent=1 // pred_check
      _
    $region27: #{efficientnet_forward.1} parent=1 // pred_check_branch
      %5911 = sbr.rel (0) target = $region29
    $region28: #{efficientnet_forward.1} parent=1 // pred_region
      %5912 = dma.done [#allocation3], 2048
    $region29: #{efficientnet_forward.1} parent=1 // pred_fallthru
      _
    %5913 = vsyncpa [#allocation3], 1

</llo_original>
